<compile_context>
chip_gen: v7x
topology: tpu7x:2x2x1
jax: 0.10.0
libtpu: 0.0.40
codegen_flags: <defaults>
</compile_context>

<pallas_src>
import functools

import jax
import jax.numpy as jnp
from jax.experimental import pallas as pl

EPS = 1e-5  # nn.BatchNorm2d default


# ----------------------------- Pallas kernels ------------------------------

def _bn_cols(y):
    # training-mode BatchNorm2d with weight=1, bias=0: biased batch statistics
    # over the row axis (N*H*W), independently per channel column.
    mean = jnp.mean(y, axis=0, keepdims=True)
    yc = y - mean
    var = jnp.mean(yc * yc, axis=0, keepdims=True)
    return yc * jax.lax.rsqrt(var + EPS)


def _conv_dual_kernel(p_ref, w_ref, b_ref, o_ref, *, cout):
    """[conv3x3 | shortcut conv1x1] in one matmul, + bias + selective ReLU + BN.

    Output columns [0:cout]   = BN(ReLU(conv3x3(x)))
    Output columns [cout:2c]  = BN(conv1x1(x))          (shortcut: no ReLU)
    """
    y = jnp.dot(p_ref[...], w_ref[...], preferred_element_type=jnp.float32)
    y = y + b_ref[...]
    col = jax.lax.broadcasted_iota(jnp.int32, y.shape, 1)
    y = jnp.where(col < cout, jnp.maximum(y, 0.0), y)
    o_ref[...] = _bn_cols(y)          # column-wise stats == per-half stats


def _conv_bn_add_kernel(p_ref, w_ref, b_ref, res_ref, o_ref):
    """conv3x3 + bias + ReLU + BN + residual add, fused."""
    y = jnp.dot(p_ref[...], w_ref[...], preferred_element_type=jnp.float32)
    y = y + b_ref[...]
    o_ref[...] = _bn_cols(jnp.maximum(y, 0.0)) + res_ref[...]


def _conv_bn_kernel(p_ref, w_ref, b_ref, o_ref):
    """conv3x3 + bias + ReLU + BN, fused (conv-bridge block)."""
    y = jnp.dot(p_ref[...], w_ref[...], preferred_element_type=jnp.float32)
    y = y + b_ref[...]
    o_ref[...] = _bn_cols(jnp.maximum(y, 0.0))


def _mm_bias_kernel(x_ref, w_ref, b_ref, o_ref, *, activation):
    """Plain matmul + bias (+ optional fused activation)."""
    y = jnp.dot(x_ref[...], w_ref[...], preferred_element_type=jnp.float32)
    y = y + b_ref[...]
    if activation == "relu":
        y = jnp.maximum(y, 0.0)
    elif activation == "sigmoid":
        y = jax.nn.sigmoid(y)
    o_ref[...] = y


def _max4_kernel(a_ref, b_ref, c_ref, d_ref, o_ref):
    o_ref[...] = jnp.maximum(jnp.maximum(a_ref[...], b_ref[...]),
                             jnp.maximum(c_ref[...], d_ref[...]))


# ----------------------------- kernel wrappers ------------------------------

def _pad_k(x, w):
    """Zero-pad the contraction dim to a multiple of 8 (layout only, exact)."""
    K = x.shape[1]
    Kp = max(8, ((K + 7) // 8) * 8)
    if Kp != K:
        x = jnp.pad(x, ((0, 0), (0, Kp - K)))
        w = jnp.pad(w, ((0, Kp - K), (0, 0)))
    return x, w


def fused_conv_dual(patches, w_cat, b_cat, cout):
    """First conv of a shortcut ConvBlock + the folded 1x1 shortcut conv."""
    M = patches.shape[0]
    patches, w_cat = _pad_k(patches, w_cat)
    kern = functools.partial(_conv_dual_kernel, cout=cout)
    y = pl.pallas_call(
        kern, out_shape=jax.ShapeDtypeStruct((M, 2 * cout), jnp.float32)
    )(patches, w_cat, b_cat.reshape(1, 2 * cout))
    return y[:, :cout], y[:, cout:]          # (main path, shortcut path)


def fused_conv_bn(patches, w, b, residual=None):
    """conv3x3 + bias + ReLU + BN (+ optional fused residual add)."""
    M = patches.shape[0]
    cout = w.shape[1]
    patches, w = _pad_k(patches, w)
    out_shape = jax.ShapeDtypeStruct((M, cout), jnp.float32)
    if residual is None:
        return pl.pallas_call(_conv_bn_kernel, out_shape=out_shape)(
            patches, w, b.reshape(1, cout))
    return pl.pallas_call(_conv_bn_add_kernel, out_shape=out_shape)(
        patches, w, b.reshape(1, cout), residual)


def mm_bias(x, w, b, activation=None):
    """(M,K) @ (K,Cout) + b with optional fused activation, single block."""
    M = x.shape[0]
    cout = w.shape[1]
    x, w = _pad_k(x, w)
    kern = functools.partial(_mm_bias_kernel, activation=activation)
    return pl.pallas_call(
        kern, out_shape=jax.ShapeDtypeStruct((M, cout), jnp.float32)
    )(x, w, b.reshape(1, cout))


def maxpool2(x):
    """nn.MaxPool2d(kernel_size=2) on NHWC input, lane-dense slab layout."""
    N, H, W, C = x.shape
    a = x[:, 0::2, 0::2, :]
    b = x[:, 0::2, 1::2, :]
    c = x[:, 1::2, 0::2, :]
    d = x[:, 1::2, 1::2, :]
    n_el = a.size
    lanes = 128 if n_el % 128 == 0 else C      # 128-wide dense stores when possible
    shp2 = (n_el // lanes, lanes)
    y = pl.pallas_call(
        _max4_kernel, out_shape=jax.ShapeDtypeStruct(shp2, x.dtype)
    )(a.reshape(shp2), b.reshape(shp2), c.reshape(shp2), d.reshape(shp2))
    return y.reshape(N, H // 2, W // 2, C)


# ------------------------------- conv wrappers ------------------------------

def im2col3x3(x):
    """3x3 same-pad patch extraction -> (N*H*W, 9*C).  Stays in XLA: pad +
    9 strided slices + concat fuse into a single XLA fusion per conv."""
    N, H, W, C = x.shape
    xp = jnp.pad(x, ((0, 0), (1, 1), (1, 1), (0, 0)))
    cols = [xp[:, dh:dh + H, dw:dw + W, :] for dh in range(3) for dw in range(3)]
    return jnp.concatenate(cols, axis=-1).reshape(N * H * W, 9 * C)


def conv2d_1x1(x, w, b, activation=None):
    """1x1 conv (optionally with fused activation). x:(N,H,W,Cin) w:(Cin,Cout)."""
    N, H, W, Cin = x.shape
    Cout = w.shape[-1]
    y = mm_bias(x.reshape(-1, Cin), w, b, activation)
    return y.reshape(N, H, W, Cout)


def conv_transpose2x2(x, w, b):
    """ConvTranspose2d(kernel=2, stride=2). x:(N,H,W,Cin) w:(Cin,2,2,Cout)."""
    N, H, W, Cin = x.shape
    Cout = w.shape[-1]
    w2 = w.reshape(Cin, 4 * Cout)                      # (kh,kw) major, oc minor
    y = mm_bias(x.reshape(N * H * W, Cin), w2, jnp.tile(b, 4))   # (M, 4*Cout)
    y = y.reshape(N, H, W, 2, 2, Cout)
    return jnp.transpose(y, (0, 1, 3, 2, 4, 5)).reshape(N, 2 * H, 2 * W, Cout)


# ------------------------------- module blocks ------------------------------

def conv_block(p, x, pool=False):
    """ConvBlock(shortcut=True): 2 fused pallas_calls (+1 max-pool kernel)."""
    if pool:
        x = maxpool2(x)
    N, H, W, Cin = x.shape
    Cout = p["w1"].shape[-1]

    patches = im2col3x3(x)
    # Fold the bias-free 1x1 shortcut conv into the first 3x3 conv's matmul:
    # the 1x1 input is exactly the center tap (rows 4*Cin:5*Cin of im2col).
    w1r = p["w1"].reshape(9 * Cin, Cout)
    wsc_rows = jnp.zeros((9 * Cin, Cout), jnp.float32).at[4 * Cin:5 * Cin].set(p["wsc"])
    w_cat = jnp.concatenate([w1r, wsc_rows], axis=1)              # (9Cin, 2Cout)
    b_cat = jnp.concatenate([p["b1"], jnp.zeros((Cout,), jnp.float32)])
    out1, sc = fused_conv_dual(patches, w_cat, b_cat, Cout)

    patches2 = im2col3x3(out1.reshape(N, H, W, Cout))
    out = fused_conv_bn(patches2, p["w2"].reshape(9 * Cout, Cout), p["b2"],
                        residual=sc)                              # add fused in
    return out.reshape(N, H, W, Cout)


def conv_bridge_block(p, x):
    N, H, W, C = x.shape
    out = fused_conv_bn(im2col3x3(x), p["w"].reshape(9 * C, C), p["b"])
    return out.reshape(N, H, W, C)


def up_conv_block(p, x, skip):
    up = conv_transpose2x2(x, p["up_w"], p["up_b"])
    bridge = conv_bridge_block(p["bridge"], skip)
    out = jnp.concatenate([up, bridge], axis=-1)     # channel concat (dim=1 NCHW)
    return conv_block(p["conv"], out, pool=False)


def unet_forward(p, x, final_activation=None):
    x = conv_block(p["first"], x, pool=False)
    acts = []
    for dp in p["down"]:
        acts.append(x)
        x = conv_block(dp, x, pool=True)
    acts.reverse()
    for up_p, skip in zip(p["up"], acts):
        x = up_conv_block(up_p, x, skip)
    return conv2d_1x1(x, p["final_w"], p["final_b"], activation=final_activation)


def wnet_forward(params, x_nchw):
    x = jnp.transpose(x_nchw, (0, 2, 3, 1))                      # NCHW -> NHWC
    x1 = unet_forward(params["unet1"], x)
    x2 = unet_forward(params["unet2"], jnp.concatenate([x, x1], axis=-1),
                      final_activation="sigmoid")                # sigmoid fused
    return jnp.transpose(x2, (0, 3, 1, 2))                       # NHWC -> NCHW


# ---------------------------- deterministic init ----------------------------

class KeyGen:
    def __init__(self, key):
        self.key = key

    def __call__(self):
        self.key, sub = jax.random.split(self.key)
        return sub


def _conv_w(kg, kh, kw, cin, cout):
    # kaiming_normal_(mode='fan_out', nonlinearity='relu')
    std = (2.0 / (cout * kh * kw)) ** 0.5
    return jax.random.normal(kg(), (kh, kw, cin, cout), jnp.float32) * std


def _bias(kg, fan_in, cout):
    bound = 1.0 / (fan_in ** 0.5)
    return jax.random.uniform(kg(), (cout,), jnp.float32, -bound, bound)


def init_conv_block(kg, in_c, out_c):
    return {
        "w1": _conv_w(kg, 3, 3, in_c, out_c),
        "b1": _bias(kg, 9 * in_c, out_c),
        "w2": _conv_w(kg, 3, 3, out_c, out_c),
        "b2": _bias(kg, 9 * out_c, out_c),
        "wsc": _conv_w(kg, 1, 1, in_c, out_c).reshape(in_c, out_c),  # bias=False
    }


def init_bridge(kg, c):
    return {"w": _conv_w(kg, 3, 3, c, c), "b": _bias(kg, 9 * c, c)}


def init_up_conv_block(kg, in_c, out_c):
    std = (2.0 / (4 * in_c)) ** 0.5
    return {
        "up_w": jax.random.normal(kg(), (in_c, 2, 2, out_c), jnp.float32) * std,
        "up_b": _bias(kg, 4 * in_c, out_c),
        "bridge": init_bridge(kg, out_c),
        "conv": init_conv_block(kg, 2 * out_c, out_c),
    }


def init_unet(kg, in_c, n_classes, layers):
    p = {"first": init_conv_block(kg, in_c, layers[0])}
    p["down"] = [init_conv_block(kg, layers[i], layers[i + 1])
                 for i in range(len(layers) - 1)]
    rl = list(reversed(layers))
    p["up"] = [init_up_conv_block(kg, rl[i], rl[i + 1])
               for i in range(len(layers) - 1)]
    p["final_w"] = _conv_w(kg, 1, 1, layers[0], n_classes).reshape(layers[0], n_classes)
    p["final_b"] = _bias(kg, layers[0], n_classes)
    return p


def init_wnet(key, in_c=1, n_classes=1, layers=(8, 16, 32)):
    kg = KeyGen(key)
    return {
        "unet1": init_unet(kg, in_c, n_classes, layers),
        "unet2": init_unet(kg, in_c + n_classes, n_classes, layers),
    }


# ----------------------------------- main -----------------------------------

if __name__ == "__main__":
    key = jax.random.PRNGKey(0)
    pkey, xkey = jax.random.split(key)
    params = init_wnet(pkey, in_c=1, n_classes=1, layers=(8, 16, 32))
    # PyTorch-style NCHW input: batch=2, in_c=1, 16x16 spatial
    x = jax.random.normal(xkey, (2, 1, 16, 16), jnp.float32)

    fwd = jax.jit(wnet_forward)
    y = fwd(params, x)
    jax.block_until_ready(y)
    assert y.shape == (2, 1, 16, 16), y.shape
    assert bool(jnp.all(jnp.isfinite(y)))
    print("KERNEL_OK")
</pallas_src>

<mosaic_0001>
module attributes {stable_mosaic.version = 11 : i64} {
  func.func @_conv_bn_add_kernel(%arg0: memref<512x72xf32, #tpu.memory_space<vmem>>, %arg1: memref<72x8xf32, #tpu.memory_space<vmem>>, %arg2: memref<1x8xf32, #tpu.memory_space<vmem>>, %arg3: memref<512x8xf32, #tpu.memory_space<vmem>>, %arg4: memref<512x8xf32, #tpu.memory_space<vmem>>) attributes {dimension_semantics = [], scalar_prefetch = 0 : i64, scratch_operands = 0 : i64, tpu.core_type = #tpu.core_type<tc>} {
    %c0 = arith.constant 0 : index
    %c0_0 = arith.constant 0 : index
    %0 = vector.load %arg0[%c0, %c0_0] : memref<512x72xf32, #tpu.memory_space<vmem>>, vector<512x72xf32>
    %c0_1 = arith.constant 0 : index
    %c0_2 = arith.constant 0 : index
    %1 = vector.load %arg1[%c0_1, %c0_2] : memref<72x8xf32, #tpu.memory_space<vmem>>, vector<72x8xf32>
    %cst = arith.constant dense<0.000000e+00> : vector<512x8xf32>
    %2 = tpu.matmul %0, %1, %cst {dimension_numbers = #tpu.dot_dimension_numbers<[1], [0], [0], [1], [0, 0, 1, 1], [], []>} : vector<512x72xf32>, vector<72x8xf32>, vector<512x8xf32> -> vector<512x8xf32>
    %c0_3 = arith.constant 0 : index
    %c0_4 = arith.constant 0 : index
    %3 = vector.load %arg2[%c0_3, %c0_4] : memref<1x8xf32, #tpu.memory_space<vmem>>, vector<1x8xf32>
    %4 = vector.broadcast %3 : vector<1x8xf32> to vector<512x8xf32>
    %5 = arith.addf %2, %4 : vector<512x8xf32>
    %cst_5 = arith.constant 0.000000e+00 : f32
    %6 = vector.broadcast %cst_5 : f32 to vector<512x8xf32>
    %7 = arith.maximumf %5, %6 : vector<512x8xf32>
    %cst_6 = arith.constant dense<0.000000e+00> : vector<8xf32>
    %8 = vector.multi_reduction <add>, %7, %cst_6 [0] : vector<512x8xf32> to vector<8xf32>
    %9 = vector.shape_cast %8 : vector<8xf32> to vector<1x8xf32>
    %cst_7 = arith.constant 5.120000e+02 : f32
    %10 = vector.broadcast %cst_7 : f32 to vector<1x8xf32>
    %11 = arith.divf %9, %10 : vector<1x8xf32>
    %12 = vector.broadcast %11 : vector<1x8xf32> to vector<512x8xf32>
    %13 = arith.subf %7, %12 : vector<512x8xf32>
    %14 = arith.mulf %13, %13 : vector<512x8xf32>
    %cst_8 = arith.constant dense<0.000000e+00> : vector<8xf32>
    %15 = vector.multi_reduction <add>, %14, %cst_8 [0] : vector<512x8xf32> to vector<8xf32>
    %16 = vector.shape_cast %15 : vector<8xf32> to vector<1x8xf32>
    %cst_9 = arith.constant 5.120000e+02 : f32
    %17 = vector.broadcast %cst_9 : f32 to vector<1x8xf32>
    %18 = arith.divf %16, %17 : vector<1x8xf32>
    %cst_10 = arith.constant 9.99999974E-6 : f32
    %19 = vector.broadcast %cst_10 : f32 to vector<1x8xf32>
    %20 = arith.addf %18, %19 : vector<1x8xf32>
    %21 = math.rsqrt %20 : vector<1x8xf32>
    %22 = vector.broadcast %21 : vector<1x8xf32> to vector<512x8xf32>
    %23 = arith.mulf %13, %22 : vector<512x8xf32>
    %c0_11 = arith.constant 0 : index
    %c0_12 = arith.constant 0 : index
    %24 = vector.load %arg3[%c0_11, %c0_12] : memref<512x8xf32, #tpu.memory_space<vmem>>, vector<512x8xf32>
    %25 = arith.addf %23, %24 : vector<512x8xf32>
    %c0_13 = arith.constant 0 : index
    %c0_14 = arith.constant 0 : index
    %26 = vector.load %arg4[%c0_13, %c0_14] : memref<512x8xf32, #tpu.memory_space<vmem>>, vector<512x8xf32>
    tpu.vector_store %arg4[%c0_13, %c0_14], %25 {strides = array<i32>} : memref<512x8xf32, #tpu.memory_space<vmem>>, vector<512x8xf32>,
    return
  }
}

module attributes {stable_mosaic.version = 11 : i64} {
  func.func @_conv_dual_kernel(%arg0: memref<512x16xf32, #tpu.memory_space<vmem>>, %arg1: memref<16x16xf32, #tpu.memory_space<vmem>>, %arg2: memref<1x16xf32, #tpu.memory_space<vmem>>, %arg3: memref<512x16xf32, #tpu.memory_space<vmem>>) attributes {dimension_semantics = [], scalar_prefetch = 0 : i64, scratch_operands = 0 : i64, tpu.core_type = #tpu.core_type<tc>} {
    %c0 = arith.constant 0 : index
    %c0_0 = arith.constant 0 : index
    %0 = vector.load %arg0[%c0, %c0_0] : memref<512x16xf32, #tpu.memory_space<vmem>>, vector<512x16xf32>
    %c0_1 = arith.constant 0 : index
    %c0_2 = arith.constant 0 : index
    %1 = vector.load %arg1[%c0_1, %c0_2] : memref<16x16xf32, #tpu.memory_space<vmem>>, vector<16x16xf32>
    %cst = arith.constant dense<0.000000e+00> : vector<512x16xf32>
    %2 = tpu.matmul %0, %1, %cst {dimension_numbers = #tpu.dot_dimension_numbers<[1], [0], [0], [1], [0, 0, 1, 1], [], []>} : vector<512x16xf32>, vector<16x16xf32>, vector<512x16xf32> -> vector<512x16xf32>
    %c0_3 = arith.constant 0 : index
    %c0_4 = arith.constant 0 : index
    %3 = vector.load %arg2[%c0_3, %c0_4] : memref<1x16xf32, #tpu.memory_space<vmem>>, vector<1x16xf32>
    %4 = vector.broadcast %3 : vector<1x16xf32> to vector<512x16xf32>
    %5 = arith.addf %2, %4 : vector<512x16xf32>
    %6 = tpu.iota {dimensions = array<i32: 1>} : vector<512x16xi32>
    %c8_i32 = arith.constant 8 : i32
    %7 = vector.broadcast %c8_i32 : i32 to vector<512x16xi32>
    %8 = arith.cmpi slt, %6, %7 : vector<512x16xi32>
    %cst_5 = arith.constant 0.000000e+00 : f32
    %9 = vector.broadcast %cst_5 : f32 to vector<512x16xf32>
    %10 = arith.maximumf %5, %9 : vector<512x16xf32>
    %11 = arith.select %8, %10, %5 : vector<512x16xi1>, vector<512x16xf32>
    %cst_6 = arith.constant dense<0.000000e+00> : vector<16xf32>
    %12 = vector.multi_reduction <add>, %11, %cst_6 [0] : vector<512x16xf32> to vector<16xf32>
    %13 = vector.shape_cast %12 : vector<16xf32> to vector<1x16xf32>
    %cst_7 = arith.constant 5.120000e+02 : f32
    %14 = vector.broadcast %cst_7 : f32 to vector<1x16xf32>
    %15 = arith.divf %13, %14 : vector<1x16xf32>
    %16 = vector.broadcast %15 : vector<1x16xf32> to vector<512x16xf32>
    %17 = arith.subf %11, %16 : vector<512x16xf32>
    %18 = arith.mulf %17, %17 : vector<512x16xf32>
    %cst_8 = arith.constant dense<0.000000e+00> : vector<16xf32>
    %19 = vector.multi_reduction <add>, %18, %cst_8 [0] : vector<512x16xf32> to vector<16xf32>
    %20 = vector.shape_cast %19 : vector<16xf32> to vector<1x16xf32>
    %cst_9 = arith.constant 5.120000e+02 : f32
    %21 = vector.broadcast %cst_9 : f32 to vector<1x16xf32>
    %22 = arith.divf %20, %21 : vector<1x16xf32>
    %cst_10 = arith.constant 9.99999974E-6 : f32
    %23 = vector.broadcast %cst_10 : f32 to vector<1x16xf32>
    %24 = arith.addf %22, %23 : vector<1x16xf32>
    %25 = math.rsqrt %24 : vector<1x16xf32>
    %26 = vector.broadcast %25 : vector<1x16xf32> to vector<512x16xf32>
    %27 = arith.mulf %17, %26 : vector<512x16xf32>
    %c0_11 = arith.constant 0 : index
    %c0_12 = arith.constant 0 : index
    %28 = vector.load %arg3[%c0_11, %c0_12] : memref<512x16xf32, #tpu.memory_space<vmem>>, vector<512x16xf32>
    tpu.vector_store %arg3[%c0_11, %c0_12], %27 {strides = array<i32>} : memref<512x16xf32, #tpu.memory_space<vmem>>, vector<512x16xf32>,
    return
  }
}

module attributes {stable_mosaic.version = 11 : i64} {
  func.func @_max4_kernel(%arg0: memref<8x128xf32, #tpu.memory_space<vmem>>, %arg1: memref<8x128xf32, #tpu.memory_space<vmem>>, %arg2: memref<8x128xf32, #tpu.memory_space<vmem>>, %arg3: memref<8x128xf32, #tpu.memory_space<vmem>>, %arg4: memref<8x128xf32, #tpu.memory_space<vmem>>) attributes {dimension_semantics = [], scalar_prefetch = 0 : i64, scratch_operands = 0 : i64, tpu.core_type = #tpu.core_type<tc>} {
    %c0 = arith.constant 0 : index
    %c0_0 = arith.constant 0 : index
    %0 = vector.load %arg0[%c0, %c0_0] : memref<8x128xf32, #tpu.memory_space<vmem>>, vector<8x128xf32>
    %c0_1 = arith.constant 0 : index
    %c0_2 = arith.constant 0 : index
    %1 = vector.load %arg1[%c0_1, %c0_2] : memref<8x128xf32, #tpu.memory_space<vmem>>, vector<8x128xf32>
    %2 = arith.maximumf %0, %1 : vector<8x128xf32>
    %c0_3 = arith.constant 0 : index
    %c0_4 = arith.constant 0 : index
    %3 = vector.load %arg2[%c0_3, %c0_4] : memref<8x128xf32, #tpu.memory_space<vmem>>, vector<8x128xf32>
    %c0_5 = arith.constant 0 : index
    %c0_6 = arith.constant 0 : index
    %4 = vector.load %arg3[%c0_5, %c0_6] : memref<8x128xf32, #tpu.memory_space<vmem>>, vector<8x128xf32>
    %5 = arith.maximumf %3, %4 : vector<8x128xf32>
    %6 = arith.maximumf %2, %5 : vector<8x128xf32>
    %c0_7 = arith.constant 0 : index
    %c0_8 = arith.constant 0 : index
    %7 = vector.load %arg4[%c0_7, %c0_8] : memref<8x128xf32, #tpu.memory_space<vmem>>, vector<8x128xf32>
    tpu.vector_store %arg4[%c0_7, %c0_8], %6 {strides = array<i32>} : memref<8x128xf32, #tpu.memory_space<vmem>>, vector<8x128xf32>,
    return
  }
}

module attributes {stable_mosaic.version = 11 : i64} {
  func.func @_conv_dual_kernel(%arg0: memref<128x72xf32, #tpu.memory_space<vmem>>, %arg1: memref<72x32xf32, #tpu.memory_space<vmem>>, %arg2: memref<1x32xf32, #tpu.memory_space<vmem>>, %arg3: memref<128x32xf32, #tpu.memory_space<vmem>>) attributes {dimension_semantics = [], scalar_prefetch = 0 : i64, scratch_operands = 0 : i64, tpu.core_type = #tpu.core_type<tc>} {
    %c0 = arith.constant 0 : index
    %c0_0 = arith.constant 0 : index
    %0 = vector.load %arg0[%c0, %c0_0] : memref<128x72xf32, #tpu.memory_space<vmem>>, vector<128x72xf32>
    %c0_1 = arith.constant 0 : index
    %c0_2 = arith.constant 0 : index
    %1 = vector.load %arg1[%c0_1, %c0_2] : memref<72x32xf32, #tpu.memory_space<vmem>>, vector<72x32xf32>
    %cst = arith.constant dense<0.000000e+00> : vector<128x32xf32>
    %2 = tpu.matmul %0, %1, %cst {dimension_numbers = #tpu.dot_dimension_numbers<[1], [0], [0], [1], [0, 0, 1, 1], [], []>} : vector<128x72xf32>, vector<72x32xf32>, vector<128x32xf32> -> vector<128x32xf32>
    %c0_3 = arith.constant 0 : index
    %c0_4 = arith.constant 0 : index
    %3 = vector.load %arg2[%c0_3, %c0_4] : memref<1x32xf32, #tpu.memory_space<vmem>>, vector<1x32xf32>
    %4 = vector.broadcast %3 : vector<1x32xf32> to vector<128x32xf32>
    %5 = arith.addf %2, %4 : vector<128x32xf32>
    %6 = tpu.iota {dimensions = array<i32: 1>} : vector<128x32xi32>
    %c16_i32 = arith.constant 16 : i32
    %7 = vector.broadcast %c16_i32 : i32 to vector<128x32xi32>
    %8 = arith.cmpi slt, %6, %7 : vector<128x32xi32>
    %cst_5 = arith.constant 0.000000e+00 : f32
    %9 = vector.broadcast %cst_5 : f32 to vector<128x32xf32>
    %10 = arith.maximumf %5, %9 : vector<128x32xf32>
    %11 = arith.select %8, %10, %5 : vector<128x32xi1>, vector<128x32xf32>
    %cst_6 = arith.constant dense<0.000000e+00> : vector<32xf32>
    %12 = vector.multi_reduction <add>, %11, %cst_6 [0] : vector<128x32xf32> to vector<32xf32>
    %13 = vector.shape_cast %12 : vector<32xf32> to vector<1x32xf32>
    %cst_7 = arith.constant 1.280000e+02 : f32
    %14 = vector.broadcast %cst_7 : f32 to vector<1x32xf32>
    %15 = arith.divf %13, %14 : vector<1x32xf32>
    %16 = vector.broadcast %15 : vector<1x32xf32> to vector<128x32xf32>
    %17 = arith.subf %11, %16 : vector<128x32xf32>
    %18 = arith.mulf %17, %17 : vector<128x32xf32>
    %cst_8 = arith.constant dense<0.000000e+00> : vector<32xf32>
    %19 = vector.multi_reduction <add>, %18, %cst_8 [0] : vector<128x32xf32> to vector<32xf32>
    %20 = vector.shape_cast %19 : vector<32xf32> to vector<1x32xf32>
    %cst_9 = arith.constant 1.280000e+02 : f32
    %21 = vector.broadcast %cst_9 : f32 to vector<1x32xf32>
    %22 = arith.divf %20, %21 : vector<1x32xf32>
    %cst_10 = arith.constant 9.99999974E-6 : f32
    %23 = vector.broadcast %cst_10 : f32 to vector<1x32xf32>
    %24 = arith.addf %22, %23 : vector<1x32xf32>
    %25 = math.rsqrt %24 : vector<1x32xf32>
    %26 = vector.broadcast %25 : vector<1x32xf32> to vector<128x32xf32>
    %27 = arith.mulf %17, %26 : vector<128x32xf32>
    %c0_11 = arith.constant 0 : index
    %c0_12 = arith.constant 0 : index
    %28 = vector.load %arg3[%c0_11, %c0_12] : memref<128x32xf32, #tpu.memory_space<vmem>>, vector<128x32xf32>
    tpu.vector_store %arg3[%c0_11, %c0_12], %27 {strides = array<i32>} : memref<128x32xf32, #tpu.memory_space<vmem>>, vector<128x32xf32>,
    return
  }
}

module attributes {stable_mosaic.version = 11 : i64} {
  func.func @_conv_bn_add_kernel(%arg0: memref<128x144xf32, #tpu.memory_space<vmem>>, %arg1: memref<144x16xf32, #tpu.memory_space<vmem>>, %arg2: memref<1x16xf32, #tpu.memory_space<vmem>>, %arg3: memref<128x16xf32, #tpu.memory_space<vmem>>, %arg4: memref<128x16xf32, #tpu.memory_space<vmem>>) attributes {dimension_semantics = [], scalar_prefetch = 0 : i64, scratch_operands = 0 : i64, tpu.core_type = #tpu.core_type<tc>} {
    %c0 = arith.constant 0 : index
    %c0_0 = arith.constant 0 : index
    %0 = vector.load %arg0[%c0, %c0_0] : memref<128x144xf32, #tpu.memory_space<vmem>>, vector<128x144xf32>
    %c0_1 = arith.constant 0 : index
    %c0_2 = arith.constant 0 : index
    %1 = vector.load %arg1[%c0_1, %c0_2] : memref<144x16xf32, #tpu.memory_space<vmem>>, vector<144x16xf32>
    %cst = arith.constant dense<0.000000e+00> : vector<128x16xf32>
    %2 = tpu.matmul %0, %1, %cst {dimension_numbers = #tpu.dot_dimension_numbers<[1], [0], [0], [1], [0, 0, 1, 1], [], []>} : vector<128x144xf32>, vector<144x16xf32>, vector<128x16xf32> -> vector<128x16xf32>
    %c0_3 = arith.constant 0 : index
    %c0_4 = arith.constant 0 : index
    %3 = vector.load %arg2[%c0_3, %c0_4] : memref<1x16xf32, #tpu.memory_space<vmem>>, vector<1x16xf32>
    %4 = vector.broadcast %3 : vector<1x16xf32> to vector<128x16xf32>
    %5 = arith.addf %2, %4 : vector<128x16xf32>
    %cst_5 = arith.constant 0.000000e+00 : f32
    %6 = vector.broadcast %cst_5 : f32 to vector<128x16xf32>
    %7 = arith.maximumf %5, %6 : vector<128x16xf32>
    %cst_6 = arith.constant dense<0.000000e+00> : vector<16xf32>
    %8 = vector.multi_reduction <add>, %7, %cst_6 [0] : vector<128x16xf32> to vector<16xf32>
    %9 = vector.shape_cast %8 : vector<16xf32> to vector<1x16xf32>
    %cst_7 = arith.constant 1.280000e+02 : f32
    %10 = vector.broadcast %cst_7 : f32 to vector<1x16xf32>
    %11 = arith.divf %9, %10 : vector<1x16xf32>
    %12 = vector.broadcast %11 : vector<1x16xf32> to vector<128x16xf32>
    %13 = arith.subf %7, %12 : vector<128x16xf32>
    %14 = arith.mulf %13, %13 : vector<128x16xf32>
    %cst_8 = arith.constant dense<0.000000e+00> : vector<16xf32>
    %15 = vector.multi_reduction <add>, %14, %cst_8 [0] : vector<128x16xf32> to vector<16xf32>
    %16 = vector.shape_cast %15 : vector<16xf32> to vector<1x16xf32>
    %cst_9 = arith.constant 1.280000e+02 : f32
    %17 = vector.broadcast %cst_9 : f32 to vector<1x16xf32>
    %18 = arith.divf %16, %17 : vector<1x16xf32>
    %cst_10 = arith.constant 9.99999974E-6 : f32
    %19 = vector.broadcast %cst_10 : f32 to vector<1x16xf32>
    %20 = arith.addf %18, %19 : vector<1x16xf32>
    %21 = math.rsqrt %20 : vector<1x16xf32>
    %22 = vector.broadcast %21 : vector<1x16xf32> to vector<128x16xf32>
    %23 = arith.mulf %13, %22 : vector<128x16xf32>
    %c0_11 = arith.constant 0 : index
    %c0_12 = arith.constant 0 : index
    %24 = vector.load %arg3[%c0_11, %c0_12] : memref<128x16xf32, #tpu.memory_space<vmem>>, vector<128x16xf32>
    %25 = arith.addf %23, %24 : vector<128x16xf32>
    %c0_13 = arith.constant 0 : index
    %c0_14 = arith.constant 0 : index
    %26 = vector.load %arg4[%c0_13, %c0_14] : memref<128x16xf32, #tpu.memory_space<vmem>>, vector<128x16xf32>
    tpu.vector_store %arg4[%c0_13, %c0_14], %25 {strides = array<i32>} : memref<128x16xf32, #tpu.memory_space<vmem>>, vector<128x16xf32>,
    return
  }
}

module attributes {stable_mosaic.version = 11 : i64} {
  func.func @_max4_kernel(%arg0: memref<4x128xf32, #tpu.memory_space<vmem>>, %arg1: memref<4x128xf32, #tpu.memory_space<vmem>>, %arg2: memref<4x128xf32, #tpu.memory_space<vmem>>, %arg3: memref<4x128xf32, #tpu.memory_space<vmem>>, %arg4: memref<4x128xf32, #tpu.memory_space<vmem>>) attributes {dimension_semantics = [], scalar_prefetch = 0 : i64, scratch_operands = 0 : i64, tpu.core_type = #tpu.core_type<tc>} {
    %c0 = arith.constant 0 : index
    %c0_0 = arith.constant 0 : index
    %0 = vector.load %arg0[%c0, %c0_0] : memref<4x128xf32, #tpu.memory_space<vmem>>, vector<4x128xf32>
    %c0_1 = arith.constant 0 : index
    %c0_2 = arith.constant 0 : index
    %1 = vector.load %arg1[%c0_1, %c0_2] : memref<4x128xf32, #tpu.memory_space<vmem>>, vector<4x128xf32>
    %2 = arith.maximumf %0, %1 : vector<4x128xf32>
    %c0_3 = arith.constant 0 : index
    %c0_4 = arith.constant 0 : index
    %3 = vector.load %arg2[%c0_3, %c0_4] : memref<4x128xf32, #tpu.memory_space<vmem>>, vector<4x128xf32>
    %c0_5 = arith.constant 0 : index
    %c0_6 = arith.constant 0 : index
    %4 = vector.load %arg3[%c0_5, %c0_6] : memref<4x128xf32, #tpu.memory_space<vmem>>, vector<4x128xf32>
    %5 = arith.maximumf %3, %4 : vector<4x128xf32>
    %6 = arith.maximumf %2, %5 : vector<4x128xf32>
    %c0_7 = arith.constant 0 : index
    %c0_8 = arith.constant 0 : index
    %7 = vector.load %arg4[%c0_7, %c0_8] : memref<4x128xf32, #tpu.memory_space<vmem>>, vector<4x128xf32>
    tpu.vector_store %arg4[%c0_7, %c0_8], %6 {strides = array<i32>} : memref<4x128xf32, #tpu.memory_space<vmem>>, vector<4x128xf32>,
    return
  }
}

module attributes {stable_mosaic.version = 11 : i64} {
  func.func @_conv_dual_kernel(%arg0: memref<32x144xf32, #tpu.memory_space<vmem>>, %arg1: memref<144x64xf32, #tpu.memory_space<vmem>>, %arg2: memref<1x64xf32, #tpu.memory_space<vmem>>, %arg3: memref<32x64xf32, #tpu.memory_space<vmem>>) attributes {dimension_semantics = [], scalar_prefetch = 0 : i64, scratch_operands = 0 : i64, tpu.core_type = #tpu.core_type<tc>} {
    %c0 = arith.constant 0 : index
    %c0_0 = arith.constant 0 : index
    %0 = vector.load %arg0[%c0, %c0_0] : memref<32x144xf32, #tpu.memory_space<vmem>>, vector<32x144xf32>
    %c0_1 = arith.constant 0 : index
    %c0_2 = arith.constant 0 : index
    %1 = vector.load %arg1[%c0_1, %c0_2] : memref<144x64xf32, #tpu.memory_space<vmem>>, vector<144x64xf32>
    %cst = arith.constant dense<0.000000e+00> : vector<32x64xf32>
    %2 = tpu.matmul %0, %1, %cst {dimension_numbers = #tpu.dot_dimension_numbers<[1], [0], [0], [1], [0, 0, 1, 1], [], []>} : vector<32x144xf32>, vector<144x64xf32>, vector<32x64xf32> -> vector<32x64xf32>
    %c0_3 = arith.constant 0 : index
    %c0_4 = arith.constant 0 : index
    %3 = vector.load %arg2[%c0_3, %c0_4] : memref<1x64xf32, #tpu.memory_space<vmem>>, vector<1x64xf32>
    %4 = vector.broadcast %3 : vector<1x64xf32> to vector<32x64xf32>
    %5 = arith.addf %2, %4 : vector<32x64xf32>
    %6 = tpu.iota {dimensions = array<i32: 1>} : vector<32x64xi32>
    %c32_i32 = arith.constant 32 : i32
    %7 = vector.broadcast %c32_i32 : i32 to vector<32x64xi32>
    %8 = arith.cmpi slt, %6, %7 : vector<32x64xi32>
    %cst_5 = arith.constant 0.000000e+00 : f32
    %9 = vector.broadcast %cst_5 : f32 to vector<32x64xf32>
    %10 = arith.maximumf %5, %9 : vector<32x64xf32>
    %11 = arith.select %8, %10, %5 : vector<32x64xi1>, vector<32x64xf32>
    %cst_6 = arith.constant dense<0.000000e+00> : vector<64xf32>
    %12 = vector.multi_reduction <add>, %11, %cst_6 [0] : vector<32x64xf32> to vector<64xf32>
    %13 = vector.shape_cast %12 : vector<64xf32> to vector<1x64xf32>
    %cst_7 = arith.constant 3.200000e+01 : f32
    %14 = vector.broadcast %cst_7 : f32 to vector<1x64xf32>
    %15 = arith.divf %13, %14 : vector<1x64xf32>
    %16 = vector.broadcast %15 : vector<1x64xf32> to vector<32x64xf32>
    %17 = arith.subf %11, %16 : vector<32x64xf32>
    %18 = arith.mulf %17, %17 : vector<32x64xf32>
    %cst_8 = arith.constant dense<0.000000e+00> : vector<64xf32>
    %19 = vector.multi_reduction <add>, %18, %cst_8 [0] : vector<32x64xf32> to vector<64xf32>
    %20 = vector.shape_cast %19 : vector<64xf32> to vector<1x64xf32>
    %cst_9 = arith.constant 3.200000e+01 : f32
    %21 = vector.broadcast %cst_9 : f32 to vector<1x64xf32>
    %22 = arith.divf %20, %21 : vector<1x64xf32>
    %cst_10 = arith.constant 9.99999974E-6 : f32
    %23 = vector.broadcast %cst_10 : f32 to vector<1x64xf32>
    %24 = arith.addf %22, %23 : vector<1x64xf32>
    %25 = math.rsqrt %24 : vector<1x64xf32>
    %26 = vector.broadcast %25 : vector<1x64xf32> to vector<32x64xf32>
    %27 = arith.mulf %17, %26 : vector<32x64xf32>
    %c0_11 = arith.constant 0 : index
    %c0_12 = arith.constant 0 : index
    %28 = vector.load %arg3[%c0_11, %c0_12] : memref<32x64xf32, #tpu.memory_space<vmem>>, vector<32x64xf32>
    tpu.vector_store %arg3[%c0_11, %c0_12], %27 {strides = array<i32>} : memref<32x64xf32, #tpu.memory_space<vmem>>, vector<32x64xf32>,
    return
  }
}

module attributes {stable_mosaic.version = 11 : i64} {
  func.func @_conv_bn_add_kernel(%arg0: memref<32x288xf32, #tpu.memory_space<vmem>>, %arg1: memref<288x32xf32, #tpu.memory_space<vmem>>, %arg2: memref<1x32xf32, #tpu.memory_space<vmem>>, %arg3: memref<32x32xf32, #tpu.memory_space<vmem>>, %arg4: memref<32x32xf32, #tpu.memory_space<vmem>>) attributes {dimension_semantics = [], scalar_prefetch = 0 : i64, scratch_operands = 0 : i64, tpu.core_type = #tpu.core_type<tc>} {
    %c0 = arith.constant 0 : index
    %c0_0 = arith.constant 0 : index
    %0 = vector.load %arg0[%c0, %c0_0] : memref<32x288xf32, #tpu.memory_space<vmem>>, vector<32x288xf32>
    %c0_1 = arith.constant 0 : index
    %c0_2 = arith.constant 0 : index
    %1 = vector.load %arg1[%c0_1, %c0_2] : memref<288x32xf32, #tpu.memory_space<vmem>>, vector<288x32xf32>
    %cst = arith.constant dense<0.000000e+00> : vector<32x32xf32>
    %2 = tpu.matmul %0, %1, %cst {dimension_numbers = #tpu.dot_dimension_numbers<[1], [0], [0], [1], [0, 0, 1, 1], [], []>} : vector<32x288xf32>, vector<288x32xf32>, vector<32x32xf32> -> vector<32x32xf32>
    %c0_3 = arith.constant 0 : index
    %c0_4 = arith.constant 0 : index
    %3 = vector.load %arg2[%c0_3, %c0_4] : memref<1x32xf32, #tpu.memory_space<vmem>>, vector<1x32xf32>
    %4 = vector.broadcast %3 : vector<1x32xf32> to vector<32x32xf32>
    %5 = arith.addf %2, %4 : vector<32x32xf32>
    %cst_5 = arith.constant 0.000000e+00 : f32
    %6 = vector.broadcast %cst_5 : f32 to vector<32x32xf32>
    %7 = arith.maximumf %5, %6 : vector<32x32xf32>
    %cst_6 = arith.constant dense<0.000000e+00> : vector<32xf32>
    %8 = vector.multi_reduction <add>, %7, %cst_6 [0] : vector<32x32xf32> to vector<32xf32>
    %9 = vector.shape_cast %8 : vector<32xf32> to vector<1x32xf32>
    %cst_7 = arith.constant 3.200000e+01 : f32
    %10 = vector.broadcast %cst_7 : f32 to vector<1x32xf32>
    %11 = arith.divf %9, %10 : vector<1x32xf32>
    %12 = vector.broadcast %11 : vector<1x32xf32> to vector<32x32xf32>
    %13 = arith.subf %7, %12 : vector<32x32xf32>
    %14 = arith.mulf %13, %13 : vector<32x32xf32>
    %cst_8 = arith.constant dense<0.000000e+00> : vector<32xf32>
    %15 = vector.multi_reduction <add>, %14, %cst_8 [0] : vector<32x32xf32> to vector<32xf32>
    %16 = vector.shape_cast %15 : vector<32xf32> to vector<1x32xf32>
    %cst_9 = arith.constant 3.200000e+01 : f32
    %17 = vector.broadcast %cst_9 : f32 to vector<1x32xf32>
    %18 = arith.divf %16, %17 : vector<1x32xf32>
    %cst_10 = arith.constant 9.99999974E-6 : f32
    %19 = vector.broadcast %cst_10 : f32 to vector<1x32xf32>
    %20 = arith.addf %18, %19 : vector<1x32xf32>
    %21 = math.rsqrt %20 : vector<1x32xf32>
    %22 = vector.broadcast %21 : vector<1x32xf32> to vector<32x32xf32>
    %23 = arith.mulf %13, %22 : vector<32x32xf32>
    %c0_11 = arith.constant 0 : index
    %c0_12 = arith.constant 0 : index
    %24 = vector.load %arg3[%c0_11, %c0_12] : memref<32x32xf32, #tpu.memory_space<vmem>>, vector<32x32xf32>
    %25 = arith.addf %23, %24 : vector<32x32xf32>
    %c0_13 = arith.constant 0 : index
    %c0_14 = arith.constant 0 : index
    %26 = vector.load %arg4[%c0_13, %c0_14] : memref<32x32xf32, #tpu.memory_space<vmem>>, vector<32x32xf32>
    tpu.vector_store %arg4[%c0_13, %c0_14], %25 {strides = array<i32>} : memref<32x32xf32, #tpu.memory_space<vmem>>, vector<32x32xf32>,
    return
  }
}

module attributes {stable_mosaic.version = 11 : i64} {
  func.func @_mm_bias_kernel(%arg0: memref<32x32xf32, #tpu.memory_space<vmem>>, %arg1: memref<32x64xf32, #tpu.memory_space<vmem>>, %arg2: memref<1x64xf32, #tpu.memory_space<vmem>>, %arg3: memref<32x64xf32, #tpu.memory_space<vmem>>) attributes {dimension_semantics = [], scalar_prefetch = 0 : i64, scratch_operands = 0 : i64, tpu.core_type = #tpu.core_type<tc>} {
    %c0 = arith.constant 0 : index
    %c0_0 = arith.constant 0 : index
    %0 = vector.load %arg0[%c0, %c0_0] : memref<32x32xf32, #tpu.memory_space<vmem>>, vector<32x32xf32>
    %c0_1 = arith.constant 0 : index
    %c0_2 = arith.constant 0 : index
    %1 = vector.load %arg1[%c0_1, %c0_2] : memref<32x64xf32, #tpu.memory_space<vmem>>, vector<32x64xf32>
    %cst = arith.constant dense<0.000000e+00> : vector<32x64xf32>
    %2 = tpu.matmul %0, %1, %cst {dimension_numbers = #tpu.dot_dimension_numbers<[1], [0], [0], [1], [0, 0, 1, 1], [], []>} : vector<32x32xf32>, vector<32x64xf32>, vector<32x64xf32> -> vector<32x64xf32>
    %c0_3 = arith.constant 0 : index
    %c0_4 = arith.constant 0 : index
    %3 = vector.load %arg2[%c0_3, %c0_4] : memref<1x64xf32, #tpu.memory_space<vmem>>, vector<1x64xf32>
    %4 = vector.broadcast %3 : vector<1x64xf32> to vector<32x64xf32>
    %5 = arith.addf %2, %4 : vector<32x64xf32>
    %c0_5 = arith.constant 0 : index
    %c0_6 = arith.constant 0 : index
    %6 = vector.load %arg3[%c0_5, %c0_6] : memref<32x64xf32, #tpu.memory_space<vmem>>, vector<32x64xf32>
    tpu.vector_store %arg3[%c0_5, %c0_6], %5 {strides = array<i32>} : memref<32x64xf32, #tpu.memory_space<vmem>>, vector<32x64xf32>,
    return
  }
}

module attributes {stable_mosaic.version = 11 : i64} {
  func.func @_conv_bn_kernel(%arg0: memref<128x144xf32, #tpu.memory_space<vmem>>, %arg1: memref<144x16xf32, #tpu.memory_space<vmem>>, %arg2: memref<1x16xf32, #tpu.memory_space<vmem>>, %arg3: memref<128x16xf32, #tpu.memory_space<vmem>>) attributes {dimension_semantics = [], scalar_prefetch = 0 : i64, scratch_operands = 0 : i64, tpu.core_type = #tpu.core_type<tc>} {
    %c0 = arith.constant 0 : index
    %c0_0 = arith.constant 0 : index
    %0 = vector.load %arg0[%c0, %c0_0] : memref<128x144xf32, #tpu.memory_space<vmem>>, vector<128x144xf32>
    %c0_1 = arith.constant 0 : index
    %c0_2 = arith.constant 0 : index
    %1 = vector.load %arg1[%c0_1, %c0_2] : memref<144x16xf32, #tpu.memory_space<vmem>>, vector<144x16xf32>
    %cst = arith.constant dense<0.000000e+00> : vector<128x16xf32>
    %2 = tpu.matmul %0, %1, %cst {dimension_numbers = #tpu.dot_dimension_numbers<[1], [0], [0], [1], [0, 0, 1, 1], [], []>} : vector<128x144xf32>, vector<144x16xf32>, vector<128x16xf32> -> vector<128x16xf32>
    %c0_3 = arith.constant 0 : index
    %c0_4 = arith.constant 0 : index
    %3 = vector.load %arg2[%c0_3, %c0_4] : memref<1x16xf32, #tpu.memory_space<vmem>>, vector<1x16xf32>
    %4 = vector.broadcast %3 : vector<1x16xf32> to vector<128x16xf32>
    %5 = arith.addf %2, %4 : vector<128x16xf32>
    %cst_5 = arith.constant 0.000000e+00 : f32
    %6 = vector.broadcast %cst_5 : f32 to vector<128x16xf32>
    %7 = arith.maximumf %5, %6 : vector<128x16xf32>
    %cst_6 = arith.constant dense<0.000000e+00> : vector<16xf32>
    %8 = vector.multi_reduction <add>, %7, %cst_6 [0] : vector<128x16xf32> to vector<16xf32>
    %9 = vector.shape_cast %8 : vector<16xf32> to vector<1x16xf32>
    %cst_7 = arith.constant 1.280000e+02 : f32
    %10 = vector.broadcast %cst_7 : f32 to vector<1x16xf32>
    %11 = arith.divf %9, %10 : vector<1x16xf32>
    %12 = vector.broadcast %11 : vector<1x16xf32> to vector<128x16xf32>
    %13 = arith.subf %7, %12 : vector<128x16xf32>
    %14 = arith.mulf %13, %13 : vector<128x16xf32>
    %cst_8 = arith.constant dense<0.000000e+00> : vector<16xf32>
    %15 = vector.multi_reduction <add>, %14, %cst_8 [0] : vector<128x16xf32> to vector<16xf32>
    %16 = vector.shape_cast %15 : vector<16xf32> to vector<1x16xf32>
    %cst_9 = arith.constant 1.280000e+02 : f32
    %17 = vector.broadcast %cst_9 : f32 to vector<1x16xf32>
    %18 = arith.divf %16, %17 : vector<1x16xf32>
    %cst_10 = arith.constant 9.99999974E-6 : f32
    %19 = vector.broadcast %cst_10 : f32 to vector<1x16xf32>
    %20 = arith.addf %18, %19 : vector<1x16xf32>
    %21 = math.rsqrt %20 : vector<1x16xf32>
    %22 = vector.broadcast %21 : vector<1x16xf32> to vector<128x16xf32>
    %23 = arith.mulf %13, %22 : vector<128x16xf32>
    %c0_11 = arith.constant 0 : index
    %c0_12 = arith.constant 0 : index
    %24 = vector.load %arg3[%c0_11, %c0_12] : memref<128x16xf32, #tpu.memory_space<vmem>>, vector<128x16xf32>
    tpu.vector_store %arg3[%c0_11, %c0_12], %23 {strides = array<i32>} : memref<128x16xf32, #tpu.memory_space<vmem>>, vector<128x16xf32>,
    return
  }
}

module attributes {stable_mosaic.version = 11 : i64} {
  func.func @_conv_dual_kernel(%arg0: memref<128x288xf32, #tpu.memory_space<vmem>>, %arg1: memref<288x32xf32, #tpu.memory_space<vmem>>, %arg2: memref<1x32xf32, #tpu.memory_space<vmem>>, %arg3: memref<128x32xf32, #tpu.memory_space<vmem>>) attributes {dimension_semantics = [], scalar_prefetch = 0 : i64, scratch_operands = 0 : i64, tpu.core_type = #tpu.core_type<tc>} {
    %c0 = arith.constant 0 : index
    %c0_0 = arith.constant 0 : index
    %0 = vector.load %arg0[%c0, %c0_0] : memref<128x288xf32, #tpu.memory_space<vmem>>, vector<128x288xf32>
    %c0_1 = arith.constant 0 : index
    %c0_2 = arith.constant 0 : index
    %1 = vector.load %arg1[%c0_1, %c0_2] : memref<288x32xf32, #tpu.memory_space<vmem>>, vector<288x32xf32>
    %cst = arith.constant dense<0.000000e+00> : vector<128x32xf32>
    %2 = tpu.matmul %0, %1, %cst {dimension_numbers = #tpu.dot_dimension_numbers<[1], [0], [0], [1], [0, 0, 1, 1], [], []>} : vector<128x288xf32>, vector<288x32xf32>, vector<128x32xf32> -> vector<128x32xf32>
    %c0_3 = arith.constant 0 : index
    %c0_4 = arith.constant 0 : index
    %3 = vector.load %arg2[%c0_3, %c0_4] : memref<1x32xf32, #tpu.memory_space<vmem>>, vector<1x32xf32>
    %4 = vector.broadcast %3 : vector<1x32xf32> to vector<128x32xf32>
    %5 = arith.addf %2, %4 : vector<128x32xf32>
    %6 = tpu.iota {dimensions = array<i32: 1>} : vector<128x32xi32>
    %c16_i32 = arith.constant 16 : i32
    %7 = vector.broadcast %c16_i32 : i32 to vector<128x32xi32>
    %8 = arith.cmpi slt, %6, %7 : vector<128x32xi32>
    %cst_5 = arith.constant 0.000000e+00 : f32
    %9 = vector.broadcast %cst_5 : f32 to vector<128x32xf32>
    %10 = arith.maximumf %5, %9 : vector<128x32xf32>
    %11 = arith.select %8, %10, %5 : vector<128x32xi1>, vector<128x32xf32>
    %cst_6 = arith.constant dense<0.000000e+00> : vector<32xf32>
    %12 = vector.multi_reduction <add>, %11, %cst_6 [0] : vector<128x32xf32> to vector<32xf32>
    %13 = vector.shape_cast %12 : vector<32xf32> to vector<1x32xf32>
    %cst_7 = arith.constant 1.280000e+02 : f32
    %14 = vector.broadcast %cst_7 : f32 to vector<1x32xf32>
    %15 = arith.divf %13, %14 : vector<1x32xf32>
    %16 = vector.broadcast %15 : vector<1x32xf32> to vector<128x32xf32>
    %17 = arith.subf %11, %16 : vector<128x32xf32>
    %18 = arith.mulf %17, %17 : vector<128x32xf32>
    %cst_8 = arith.constant dense<0.000000e+00> : vector<32xf32>
    %19 = vector.multi_reduction <add>, %18, %cst_8 [0] : vector<128x32xf32> to vector<32xf32>
    %20 = vector.shape_cast %19 : vector<32xf32> to vector<1x32xf32>
    %cst_9 = arith.constant 1.280000e+02 : f32
    %21 = vector.broadcast %cst_9 : f32 to vector<1x32xf32>
    %22 = arith.divf %20, %21 : vector<1x32xf32>
    %cst_10 = arith.constant 9.99999974E-6 : f32
    %23 = vector.broadcast %cst_10 : f32 to vector<1x32xf32>
    %24 = arith.addf %22, %23 : vector<1x32xf32>
    %25 = math.rsqrt %24 : vector<1x32xf32>
    %26 = vector.broadcast %25 : vector<1x32xf32> to vector<128x32xf32>
    %27 = arith.mulf %17, %26 : vector<128x32xf32>
    %c0_11 = arith.constant 0 : index
    %c0_12 = arith.constant 0 : index
    %28 = vector.load %arg3[%c0_11, %c0_12] : memref<128x32xf32, #tpu.memory_space<vmem>>, vector<128x32xf32>
    tpu.vector_store %arg3[%c0_11, %c0_12], %27 {strides = array<i32>} : memref<128x32xf32, #tpu.memory_space<vmem>>, vector<128x32xf32>,
    return
  }
}

module attributes {stable_mosaic.version = 11 : i64} {
  func.func @_mm_bias_kernel(%arg0: memref<128x16xf32, #tpu.memory_space<vmem>>, %arg1: memref<16x32xf32, #tpu.memory_space<vmem>>, %arg2: memref<1x32xf32, #tpu.memory_space<vmem>>, %arg3: memref<128x32xf32, #tpu.memory_space<vmem>>) attributes {dimension_semantics = [], scalar_prefetch = 0 : i64, scratch_operands = 0 : i64, tpu.core_type = #tpu.core_type<tc>} {
    %c0 = arith.constant 0 : index
    %c0_0 = arith.constant 0 : index
    %0 = vector.load %arg0[%c0, %c0_0] : memref<128x16xf32, #tpu.memory_space<vmem>>, vector<128x16xf32>
    %c0_1 = arith.constant 0 : index
    %c0_2 = arith.constant 0 : index
    %1 = vector.load %arg1[%c0_1, %c0_2] : memref<16x32xf32, #tpu.memory_space<vmem>>, vector<16x32xf32>
    %cst = arith.constant dense<0.000000e+00> : vector<128x32xf32>
    %2 = tpu.matmul %0, %1, %cst {dimension_numbers = #tpu.dot_dimension_numbers<[1], [0], [0], [1], [0, 0, 1, 1], [], []>} : vector<128x16xf32>, vector<16x32xf32>, vector<128x32xf32> -> vector<128x32xf32>
    %c0_3 = arith.constant 0 : index
    %c0_4 = arith.constant 0 : index
    %3 = vector.load %arg2[%c0_3, %c0_4] : memref<1x32xf32, #tpu.memory_space<vmem>>, vector<1x32xf32>
    %4 = vector.broadcast %3 : vector<1x32xf32> to vector<128x32xf32>
    %5 = arith.addf %2, %4 : vector<128x32xf32>
    %c0_5 = arith.constant 0 : index
    %c0_6 = arith.constant 0 : index
    %6 = vector.load %arg3[%c0_5, %c0_6] : memref<128x32xf32, #tpu.memory_space<vmem>>, vector<128x32xf32>
    tpu.vector_store %arg3[%c0_5, %c0_6], %5 {strides = array<i32>} : memref<128x32xf32, #tpu.memory_space<vmem>>, vector<128x32xf32>,
    return
  }
}

module attributes {stable_mosaic.version = 11 : i64} {
  func.func @_conv_bn_kernel(%arg0: memref<512x72xf32, #tpu.memory_space<vmem>>, %arg1: memref<72x8xf32, #tpu.memory_space<vmem>>, %arg2: memref<1x8xf32, #tpu.memory_space<vmem>>, %arg3: memref<512x8xf32, #tpu.memory_space<vmem>>) attributes {dimension_semantics = [], scalar_prefetch = 0 : i64, scratch_operands = 0 : i64, tpu.core_type = #tpu.core_type<tc>} {
    %c0 = arith.constant 0 : index
    %c0_0 = arith.constant 0 : index
    %0 = vector.load %arg0[%c0, %c0_0] : memref<512x72xf32, #tpu.memory_space<vmem>>, vector<512x72xf32>
    %c0_1 = arith.constant 0 : index
    %c0_2 = arith.constant 0 : index
    %1 = vector.load %arg1[%c0_1, %c0_2] : memref<72x8xf32, #tpu.memory_space<vmem>>, vector<72x8xf32>
    %cst = arith.constant dense<0.000000e+00> : vector<512x8xf32>
    %2 = tpu.matmul %0, %1, %cst {dimension_numbers = #tpu.dot_dimension_numbers<[1], [0], [0], [1], [0, 0, 1, 1], [], []>} : vector<512x72xf32>, vector<72x8xf32>, vector<512x8xf32> -> vector<512x8xf32>
    %c0_3 = arith.constant 0 : index
    %c0_4 = arith.constant 0 : index
    %3 = vector.load %arg2[%c0_3, %c0_4] : memref<1x8xf32, #tpu.memory_space<vmem>>, vector<1x8xf32>
    %4 = vector.broadcast %3 : vector<1x8xf32> to vector<512x8xf32>
    %5 = arith.addf %2, %4 : vector<512x8xf32>
    %cst_5 = arith.constant 0.000000e+00 : f32
    %6 = vector.broadcast %cst_5 : f32 to vector<512x8xf32>
    %7 = arith.maximumf %5, %6 : vector<512x8xf32>
    %cst_6 = arith.constant dense<0.000000e+00> : vector<8xf32>
    %8 = vector.multi_reduction <add>, %7, %cst_6 [0] : vector<512x8xf32> to vector<8xf32>
    %9 = vector.shape_cast %8 : vector<8xf32> to vector<1x8xf32>
    %cst_7 = arith.constant 5.120000e+02 : f32
    %10 = vector.broadcast %cst_7 : f32 to vector<1x8xf32>
    %11 = arith.divf %9, %10 : vector<1x8xf32>
    %12 = vector.broadcast %11 : vector<1x8xf32> to vector<512x8xf32>
    %13 = arith.subf %7, %12 : vector<512x8xf32>
    %14 = arith.mulf %13, %13 : vector<512x8xf32>
    %cst_8 = arith.constant dense<0.000000e+00> : vector<8xf32>
    %15 = vector.multi_reduction <add>, %14, %cst_8 [0] : vector<512x8xf32> to vector<8xf32>
    %16 = vector.shape_cast %15 : vector<8xf32> to vector<1x8xf32>
    %cst_9 = arith.constant 5.120000e+02 : f32
    %17 = vector.broadcast %cst_9 : f32 to vector<1x8xf32>
    %18 = arith.divf %16, %17 : vector<1x8xf32>
    %cst_10 = arith.constant 9.99999974E-6 : f32
    %19 = vector.broadcast %cst_10 : f32 to vector<1x8xf32>
    %20 = arith.addf %18, %19 : vector<1x8xf32>
    %21 = math.rsqrt %20 : vector<1x8xf32>
    %22 = vector.broadcast %21 : vector<1x8xf32> to vector<512x8xf32>
    %23 = arith.mulf %13, %22 : vector<512x8xf32>
    %c0_11 = arith.constant 0 : index
    %c0_12 = arith.constant 0 : index
    %24 = vector.load %arg3[%c0_11, %c0_12] : memref<512x8xf32, #tpu.memory_space<vmem>>, vector<512x8xf32>
    tpu.vector_store %arg3[%c0_11, %c0_12], %23 {strides = array<i32>} : memref<512x8xf32, #tpu.memory_space<vmem>>, vector<512x8xf32>,
    return
  }
}

module attributes {stable_mosaic.version = 11 : i64} {
  func.func @_conv_dual_kernel(%arg0: memref<512x144xf32, #tpu.memory_space<vmem>>, %arg1: memref<144x16xf32, #tpu.memory_space<vmem>>, %arg2: memref<1x16xf32, #tpu.memory_space<vmem>>, %arg3: memref<512x16xf32, #tpu.memory_space<vmem>>) attributes {dimension_semantics = [], scalar_prefetch = 0 : i64, scratch_operands = 0 : i64, tpu.core_type = #tpu.core_type<tc>} {
    %c0 = arith.constant 0 : index
    %c0_0 = arith.constant 0 : index
    %0 = vector.load %arg0[%c0, %c0_0] : memref<512x144xf32, #tpu.memory_space<vmem>>, vector<512x144xf32>
    %c0_1 = arith.constant 0 : index
    %c0_2 = arith.constant 0 : index
    %1 = vector.load %arg1[%c0_1, %c0_2] : memref<144x16xf32, #tpu.memory_space<vmem>>, vector<144x16xf32>
    %cst = arith.constant dense<0.000000e+00> : vector<512x16xf32>
    %2 = tpu.matmul %0, %1, %cst {dimension_numbers = #tpu.dot_dimension_numbers<[1], [0], [0], [1], [0, 0, 1, 1], [], []>} : vector<512x144xf32>, vector<144x16xf32>, vector<512x16xf32> -> vector<512x16xf32>
    %c0_3 = arith.constant 0 : index
    %c0_4 = arith.constant 0 : index
    %3 = vector.load %arg2[%c0_3, %c0_4] : memref<1x16xf32, #tpu.memory_space<vmem>>, vector<1x16xf32>
    %4 = vector.broadcast %3 : vector<1x16xf32> to vector<512x16xf32>
    %5 = arith.addf %2, %4 : vector<512x16xf32>
    %6 = tpu.iota {dimensions = array<i32: 1>} : vector<512x16xi32>
    %c8_i32 = arith.constant 8 : i32
    %7 = vector.broadcast %c8_i32 : i32 to vector<512x16xi32>
    %8 = arith.cmpi slt, %6, %7 : vector<512x16xi32>
    %cst_5 = arith.constant 0.000000e+00 : f32
    %9 = vector.broadcast %cst_5 : f32 to vector<512x16xf32>
    %10 = arith.maximumf %5, %9 : vector<512x16xf32>
    %11 = arith.select %8, %10, %5 : vector<512x16xi1>, vector<512x16xf32>
    %cst_6 = arith.constant dense<0.000000e+00> : vector<16xf32>
    %12 = vector.multi_reduction <add>, %11, %cst_6 [0] : vector<512x16xf32> to vector<16xf32>
    %13 = vector.shape_cast %12 : vector<16xf32> to vector<1x16xf32>
    %cst_7 = arith.constant 5.120000e+02 : f32
    %14 = vector.broadcast %cst_7 : f32 to vector<1x16xf32>
    %15 = arith.divf %13, %14 : vector<1x16xf32>
    %16 = vector.broadcast %15 : vector<1x16xf32> to vector<512x16xf32>
    %17 = arith.subf %11, %16 : vector<512x16xf32>
    %18 = arith.mulf %17, %17 : vector<512x16xf32>
    %cst_8 = arith.constant dense<0.000000e+00> : vector<16xf32>
    %19 = vector.multi_reduction <add>, %18, %cst_8 [0] : vector<512x16xf32> to vector<16xf32>
    %20 = vector.shape_cast %19 : vector<16xf32> to vector<1x16xf32>
    %cst_9 = arith.constant 5.120000e+02 : f32
    %21 = vector.broadcast %cst_9 : f32 to vector<1x16xf32>
    %22 = arith.divf %20, %21 : vector<1x16xf32>
    %cst_10 = arith.constant 9.99999974E-6 : f32
    %23 = vector.broadcast %cst_10 : f32 to vector<1x16xf32>
    %24 = arith.addf %22, %23 : vector<1x16xf32>
    %25 = math.rsqrt %24 : vector<1x16xf32>
    %26 = vector.broadcast %25 : vector<1x16xf32> to vector<512x16xf32>
    %27 = arith.mulf %17, %26 : vector<512x16xf32>
    %c0_11 = arith.constant 0 : index
    %c0_12 = arith.constant 0 : index
    %28 = vector.load %arg3[%c0_11, %c0_12] : memref<512x16xf32, #tpu.memory_space<vmem>>, vector<512x16xf32>
    tpu.vector_store %arg3[%c0_11, %c0_12], %27 {strides = array<i32>} : memref<512x16xf32, #tpu.memory_space<vmem>>, vector<512x16xf32>,
    return
  }
}

module attributes {stable_mosaic.version = 11 : i64} {
  func.func @_mm_bias_kernel(%arg0: memref<512x8xf32, #tpu.memory_space<vmem>>, %arg1: memref<8x1xf32, #tpu.memory_space<vmem>>, %arg2: memref<1x1xf32, #tpu.memory_space<vmem>>, %arg3: memref<512x1xf32, #tpu.memory_space<vmem>>) attributes {dimension_semantics = [], scalar_prefetch = 0 : i64, scratch_operands = 0 : i64, tpu.core_type = #tpu.core_type<tc>} {
    %c0 = arith.constant 0 : index
    %c0_0 = arith.constant 0 : index
    %0 = vector.load %arg0[%c0, %c0_0] : memref<512x8xf32, #tpu.memory_space<vmem>>, vector<512x8xf32>
    %c0_1 = arith.constant 0 : index
    %c0_2 = arith.constant 0 : index
    %1 = vector.load %arg1[%c0_1, %c0_2] : memref<8x1xf32, #tpu.memory_space<vmem>>, vector<8x1xf32>
    %cst = arith.constant dense<0.000000e+00> : vector<512x1xf32>
    %2 = tpu.matmul %0, %1, %cst {dimension_numbers = #tpu.dot_dimension_numbers<[1], [0], [0], [1], [0, 0, 1, 1], [], []>} : vector<512x8xf32>, vector<8x1xf32>, vector<512x1xf32> -> vector<512x1xf32>
    %c0_3 = arith.constant 0 : index
    %c0_4 = arith.constant 0 : index
    %3 = vector.load %arg2[%c0_3, %c0_4] : memref<1x1xf32, #tpu.memory_space<vmem>>, vector<1x1xf32>
    %4 = vector.broadcast %3 : vector<1x1xf32> to vector<512x1xf32>
    %5 = arith.addf %2, %4 : vector<512x1xf32>
    %c0_5 = arith.constant 0 : index
    %c0_6 = arith.constant 0 : index
    %6 = vector.load %arg3[%c0_5, %c0_6] : memref<512x1xf32, #tpu.memory_space<vmem>>, vector<512x1xf32>
    tpu.vector_store %arg3[%c0_5, %c0_6], %5 {strides = array<i32>} : memref<512x1xf32, #tpu.memory_space<vmem>>, vector<512x1xf32>,
    return
  }
}

module attributes {stable_mosaic.version = 11 : i64} {
  func.func @_conv_dual_kernel(%arg0: memref<512x24xf32, #tpu.memory_space<vmem>>, %arg1: memref<24x16xf32, #tpu.memory_space<vmem>>, %arg2: memref<1x16xf32, #tpu.memory_space<vmem>>, %arg3: memref<512x16xf32, #tpu.memory_space<vmem>>) attributes {dimension_semantics = [], scalar_prefetch = 0 : i64, scratch_operands = 0 : i64, tpu.core_type = #tpu.core_type<tc>} {
    %c0 = arith.constant 0 : index
    %c0_0 = arith.constant 0 : index
    %0 = vector.load %arg0[%c0, %c0_0] : memref<512x24xf32, #tpu.memory_space<vmem>>, vector<512x24xf32>
    %c0_1 = arith.constant 0 : index
    %c0_2 = arith.constant 0 : index
    %1 = vector.load %arg1[%c0_1, %c0_2] : memref<24x16xf32, #tpu.memory_space<vmem>>, vector<24x16xf32>
    %cst = arith.constant dense<0.000000e+00> : vector<512x16xf32>
    %2 = tpu.matmul %0, %1, %cst {dimension_numbers = #tpu.dot_dimension_numbers<[1], [0], [0], [1], [0, 0, 1, 1], [], []>} : vector<512x24xf32>, vector<24x16xf32>, vector<512x16xf32> -> vector<512x16xf32>
    %c0_3 = arith.constant 0 : index
    %c0_4 = arith.constant 0 : index
    %3 = vector.load %arg2[%c0_3, %c0_4] : memref<1x16xf32, #tpu.memory_space<vmem>>, vector<1x16xf32>
    %4 = vector.broadcast %3 : vector<1x16xf32> to vector<512x16xf32>
    %5 = arith.addf %2, %4 : vector<512x16xf32>
    %6 = tpu.iota {dimensions = array<i32: 1>} : vector<512x16xi32>
    %c8_i32 = arith.constant 8 : i32
    %7 = vector.broadcast %c8_i32 : i32 to vector<512x16xi32>
    %8 = arith.cmpi slt, %6, %7 : vector<512x16xi32>
    %cst_5 = arith.constant 0.000000e+00 : f32
    %9 = vector.broadcast %cst_5 : f32 to vector<512x16xf32>
    %10 = arith.maximumf %5, %9 : vector<512x16xf32>
    %11 = arith.select %8, %10, %5 : vector<512x16xi1>, vector<512x16xf32>
    %cst_6 = arith.constant dense<0.000000e+00> : vector<16xf32>
    %12 = vector.multi_reduction <add>, %11, %cst_6 [0] : vector<512x16xf32> to vector<16xf32>
    %13 = vector.shape_cast %12 : vector<16xf32> to vector<1x16xf32>
    %cst_7 = arith.constant 5.120000e+02 : f32
    %14 = vector.broadcast %cst_7 : f32 to vector<1x16xf32>
    %15 = arith.divf %13, %14 : vector<1x16xf32>
    %16 = vector.broadcast %15 : vector<1x16xf32> to vector<512x16xf32>
    %17 = arith.subf %11, %16 : vector<512x16xf32>
    %18 = arith.mulf %17, %17 : vector<512x16xf32>
    %cst_8 = arith.constant dense<0.000000e+00> : vector<16xf32>
    %19 = vector.multi_reduction <add>, %18, %cst_8 [0] : vector<512x16xf32> to vector<16xf32>
    %20 = vector.shape_cast %19 : vector<16xf32> to vector<1x16xf32>
    %cst_9 = arith.constant 5.120000e+02 : f32
    %21 = vector.broadcast %cst_9 : f32 to vector<1x16xf32>
    %22 = arith.divf %20, %21 : vector<1x16xf32>
    %cst_10 = arith.constant 9.99999974E-6 : f32
    %23 = vector.broadcast %cst_10 : f32 to vector<1x16xf32>
    %24 = arith.addf %22, %23 : vector<1x16xf32>
    %25 = math.rsqrt %24 : vector<1x16xf32>
    %26 = vector.broadcast %25 : vector<1x16xf32> to vector<512x16xf32>
    %27 = arith.mulf %17, %26 : vector<512x16xf32>
    %c0_11 = arith.constant 0 : index
    %c0_12 = arith.constant 0 : index
    %28 = vector.load %arg3[%c0_11, %c0_12] : memref<512x16xf32, #tpu.memory_space<vmem>>, vector<512x16xf32>
    tpu.vector_store %arg3[%c0_11, %c0_12], %27 {strides = array<i32>} : memref<512x16xf32, #tpu.memory_space<vmem>>, vector<512x16xf32>,
    return
  }
}

module attributes {stable_mosaic.version = 11 : i64} {
  func.func @_mm_bias_kernel(%arg0: memref<512x8xf32, #tpu.memory_space<vmem>>, %arg1: memref<8x1xf32, #tpu.memory_space<vmem>>, %arg2: memref<1x1xf32, #tpu.memory_space<vmem>>, %arg3: memref<512x1xf32, #tpu.memory_space<vmem>>) attributes {dimension_semantics = [], scalar_prefetch = 0 : i64, scratch_operands = 0 : i64, tpu.core_type = #tpu.core_type<tc>} {
    %c0 = arith.constant 0 : index
    %c0_0 = arith.constant 0 : index
    %0 = vector.load %arg0[%c0, %c0_0] : memref<512x8xf32, #tpu.memory_space<vmem>>, vector<512x8xf32>
    %c0_1 = arith.constant 0 : index
    %c0_2 = arith.constant 0 : index
    %1 = vector.load %arg1[%c0_1, %c0_2] : memref<8x1xf32, #tpu.memory_space<vmem>>, vector<8x1xf32>
    %cst = arith.constant dense<0.000000e+00> : vector<512x1xf32>
    %2 = tpu.matmul %0, %1, %cst {dimension_numbers = #tpu.dot_dimension_numbers<[1], [0], [0], [1], [0, 0, 1, 1], [], []>} : vector<512x8xf32>, vector<8x1xf32>, vector<512x1xf32> -> vector<512x1xf32>
    %c0_3 = arith.constant 0 : index
    %c0_4 = arith.constant 0 : index
    %3 = vector.load %arg2[%c0_3, %c0_4] : memref<1x1xf32, #tpu.memory_space<vmem>>, vector<1x1xf32>
    %4 = vector.broadcast %3 : vector<1x1xf32> to vector<512x1xf32>
    %5 = arith.addf %2, %4 : vector<512x1xf32>
    %6 = arith.negf %5 : vector<512x1xf32>
    %7 = math.exp %6 : vector<512x1xf32>
    %cst_5 = arith.constant 1.000000e+00 : f32
    %8 = vector.broadcast %cst_5 : f32 to vector<512x1xf32>
    %9 = arith.addf %8, %7 : vector<512x1xf32>
    %10 = arith.divf %8, %9 : vector<512x1xf32>
    %c0_6 = arith.constant 0 : index
    %c0_7 = arith.constant 0 : index
    %11 = vector.load %arg3[%c0_6, %c0_7] : memref<512x1xf32, #tpu.memory_space<vmem>>, vector<512x1xf32>
    tpu.vector_store %arg3[%c0_6, %c0_7], %10 {strides = array<i32>} : memref<512x1xf32, #tpu.memory_space<vmem>>, vector<512x1xf32>,
    return
  }
}

</mosaic_0001>

<llo_original>
// kernel: wnet_forward.34
$region0: #{wnet_forward.34}
  #allocation0 [shape = 'u32[]', space=smem, size = 0x4, offset = 0x4, fixed_abs, tag = 'smem constant byte address 0x4 - core index']
  #allocation1 [shape = 'u32[144,128]{1,0:T(1,128)}', space=vmem, size = 0x12000, scoped, tag = 'internal scratch']
  %s0 = inlined_call_operand.vmem [shape: f32[512,16], index: 0, kind: input, shape index: {}]
  %s1 = inlined_call_operand.vmem [shape: f32[16,16], index: 1, kind: input, shape index: {}]
  %s2 = inlined_call_operand.vmem [shape: f32[1,16], index: 2, kind: input, shape index: {}]
  %s3 = inlined_call_operand.vmem [shape: f32[512,16], index: 3, kind: output, shape index: {}]
  %s4 = sld [smem:[#allocation0]]
  $region22: #{wnet_forward.34} parent=0
    _
  %s6 = ssub.s32 1, %s4
  %s7 = scalar_select 0, %s6, %s4
  // Predicated region
  $region2: #{wnet_forward.34} parent=0 // pred_check
    _
  $region3: #{wnet_forward.34} parent=0 // pred_check_branch
    %9 = sbr.rel (0) target = $region5
  $region4: #{wnet_forward.34} parent=0 // pred_region
    _
  $region5: #{wnet_forward.34} parent=0 // pred_fallthru
    _
  // Predicated region
  $region6: #{wnet_forward.34} parent=0 // pred_check
    _
  $region7: #{wnet_forward.34} parent=0 // pred_check_branch
    %11 = sbr.rel (0) target = $region9
  $region8: #{wnet_forward.34} parent=0 // pred_region
    _
  $region9: #{wnet_forward.34} parent=0 // pred_fallthru
    _
  // Predicated region
  $region10: #{wnet_forward.34} parent=0 // pred_check
    _
  $region11: #{wnet_forward.34} parent=0 // pred_check_branch
    %13 = sbr.rel (0) target = $region13
  $region12: #{wnet_forward.34} parent=0 // pred_region
    _
  $region13: #{wnet_forward.34} parent=0 // pred_fallthru
    _
  %v14 = vld [vmem:[%s0] sm:$0xff]
  %v15 = vld [vmem:[%s0 + $0x8] sm:$0xff]
  %v16 = vld [vmem:[%s0 + $0x10] sm:$0xff]
  %v17 = vld [vmem:[%s0 + $0x18] sm:$0xff]
  %v18 = vld [vmem:[%s0 + $0x20] sm:$0xff]
  %v19 = vld [vmem:[%s0 + $0x28] sm:$0xff]
  %v20 = vld [vmem:[%s0 + $0x30] sm:$0xff]
  %v21 = vld [vmem:[%s0 + $0x38] sm:$0xff]
  %v22 = vld [vmem:[%s0 + $0x40] sm:$0xff]
  %v23 = vld [vmem:[%s0 + $0x48] sm:$0xff]
  %v24 = vld [vmem:[%s0 + $0x50] sm:$0xff]
  %v25 = vld [vmem:[%s0 + $0x58] sm:$0xff]
  %v26 = vld [vmem:[%s0 + $0x60] sm:$0xff]
  %v27 = vld [vmem:[%s0 + $0x68] sm:$0xff]
  %v28 = vld [vmem:[%s0 + $0x70] sm:$0xff]
  %v29 = vld [vmem:[%s0 + $0x78] sm:$0xff]
  %v30 = vld [vmem:[%s0 + $0x80] sm:$0xff]
  %v31 = vld [vmem:[%s0 + $0x88] sm:$0xff]
  %v32 = vld [vmem:[%s0 + $0x90] sm:$0xff]
  %v33 = vld [vmem:[%s0 + $0x98] sm:$0xff]
  %v34 = vld [vmem:[%s0 + $0xa0] sm:$0xff]
  %v35 = vld [vmem:[%s0 + $0xa8] sm:$0xff]
  %v36 = vld [vmem:[%s0 + $0xb0] sm:$0xff]
  %v37 = vld [vmem:[%s0 + $0xb8] sm:$0xff]
  %v38 = vld [vmem:[%s0 + $0xc0] sm:$0xff]
  %v39 = vld [vmem:[%s0 + $0xc8] sm:$0xff]
  %v40 = vld [vmem:[%s0 + $0xd0] sm:$0xff]
  %v41 = vld [vmem:[%s0 + $0xd8] sm:$0xff]
  %v42 = vld [vmem:[%s0 + $0xe0] sm:$0xff]
  %v43 = vld [vmem:[%s0 + $0xe8] sm:$0xff]
  %v44 = vld [vmem:[%s0 + $0xf0] sm:$0xff]
  %v45 = vld [vmem:[%s0 + $0xf8] sm:$0xff]
  %v46 = vld [vmem:[%s0 + $0x100] sm:$0xff]
  %v47 = vld [vmem:[%s0 + $0x108] sm:$0xff]
  %v48 = vld [vmem:[%s0 + $0x110] sm:$0xff]
  %v49 = vld [vmem:[%s0 + $0x118] sm:$0xff]
  %v50 = vld [vmem:[%s0 + $0x120] sm:$0xff]
  %v51 = vld [vmem:[%s0 + $0x128] sm:$0xff]
  %v52 = vld [vmem:[%s0 + $0x130] sm:$0xff]
  %v53 = vld [vmem:[%s0 + $0x138] sm:$0xff]
  %v54 = vld [vmem:[%s0 + $0x140] sm:$0xff]
  %v55 = vld [vmem:[%s0 + $0x148] sm:$0xff]
  %v56 = vld [vmem:[%s0 + $0x150] sm:$0xff]
  %v57 = vld [vmem:[%s0 + $0x158] sm:$0xff]
  %v58 = vld [vmem:[%s0 + $0x160] sm:$0xff]
  %v59 = vld [vmem:[%s0 + $0x168] sm:$0xff]
  %v60 = vld [vmem:[%s0 + $0x170] sm:$0xff]
  %v61 = vld [vmem:[%s0 + $0x178] sm:$0xff]
  %v62 = vld [vmem:[%s0 + $0x180] sm:$0xff]
  %v63 = vld [vmem:[%s0 + $0x188] sm:$0xff]
  %v64 = vld [vmem:[%s0 + $0x190] sm:$0xff]
  %v65 = vld [vmem:[%s0 + $0x198] sm:$0xff]
  %v66 = vld [vmem:[%s0 + $0x1a0] sm:$0xff]
  %v67 = vld [vmem:[%s0 + $0x1a8] sm:$0xff]
  %v68 = vld [vmem:[%s0 + $0x1b0] sm:$0xff]
  %v69 = vld [vmem:[%s0 + $0x1b8] sm:$0xff]
  %v70 = vld [vmem:[%s0 + $0x1c0] sm:$0xff]
  %v71 = vld [vmem:[%s0 + $0x1c8] sm:$0xff]
  %v72 = vld [vmem:[%s0 + $0x1d0] sm:$0xff]
  %v73 = vld [vmem:[%s0 + $0x1d8] sm:$0xff]
  %v74 = vld [vmem:[%s0 + $0x1e0] sm:$0xff]
  %v75 = vld [vmem:[%s0 + $0x1e8] sm:$0xff]
  %v76 = vld [vmem:[%s0 + $0x1f0] sm:$0xff]
  %v77 = vld [vmem:[%s0 + $0x1f8] sm:$0xff]
  %v78 = vld [vmem:[%s1] sm:$0xff]
  %v79 = vld [vmem:[%s1 + $0x8] sm:$0xff]
  %v80 = vld [vmem:[%s2] sm:$0x1]
  %v82 = vlaneseq
  %v83 = vshrl.u32 %v82, 7
  %v84 = vsub.s32 0, %v83
  %v85 = vrot.slane %v80, %v84
  %vm87 = vcmask 130048
  %v89 = vsel %vm87, %v14, 0
  %v92 = vsel %vm87, %v15, 0
  %v95 = vsel %vm87, %v16, 0
  %v98 = vsel %vm87, %v17, 0
  %v101 = vsel %vm87, %v18, 0
  %v104 = vsel %vm87, %v19, 0
  %v107 = vsel %vm87, %v20, 0
  %v110 = vsel %vm87, %v21, 0
  %v113 = vsel %vm87, %v22, 0
  %v116 = vsel %vm87, %v23, 0
  %v119 = vsel %vm87, %v24, 0
  %v122 = vsel %vm87, %v25, 0
  %v125 = vsel %vm87, %v26, 0
  %v128 = vsel %vm87, %v27, 0
  %v131 = vsel %vm87, %v28, 0
  %v134 = vsel %vm87, %v29, 0
  %v137 = vsel %vm87, %v30, 0
  %v140 = vsel %vm87, %v31, 0
  %v143 = vsel %vm87, %v32, 0
  %v146 = vsel %vm87, %v33, 0
  %v149 = vsel %vm87, %v34, 0
  %v152 = vsel %vm87, %v35, 0
  %v155 = vsel %vm87, %v36, 0
  %v158 = vsel %vm87, %v37, 0
  %v161 = vsel %vm87, %v38, 0
  %v164 = vsel %vm87, %v39, 0
  %v167 = vsel %vm87, %v40, 0
  %v170 = vsel %vm87, %v41, 0
  %v173 = vsel %vm87, %v42, 0
  %v176 = vsel %vm87, %v43, 0
  %v179 = vsel %vm87, %v44, 0
  %v182 = vsel %vm87, %v45, 0
  %v185 = vsel %vm87, %v46, 0
  %v188 = vsel %vm87, %v47, 0
  %v191 = vsel %vm87, %v48, 0
  %v194 = vsel %vm87, %v49, 0
  %v197 = vsel %vm87, %v50, 0
  %v200 = vsel %vm87, %v51, 0
  %v203 = vsel %vm87, %v52, 0
  %v206 = vsel %vm87, %v53, 0
  %v209 = vsel %vm87, %v54, 0
  %v212 = vsel %vm87, %v55, 0
  %v215 = vsel %vm87, %v56, 0
  %v218 = vsel %vm87, %v57, 0
  %v221 = vsel %vm87, %v58, 0
  %v224 = vsel %vm87, %v59, 0
  %v227 = vsel %vm87, %v60, 0
  %v230 = vsel %vm87, %v61, 0
  %v233 = vsel %vm87, %v62, 0
  %v236 = vsel %vm87, %v63, 0
  %v239 = vsel %vm87, %v64, 0
  %v242 = vsel %vm87, %v65, 0
  %v245 = vsel %vm87, %v66, 0
  %v248 = vsel %vm87, %v67, 0
  %v251 = vsel %vm87, %v68, 0
  %v254 = vsel %vm87, %v69, 0
  %v257 = vsel %vm87, %v70, 0
  %v260 = vsel %vm87, %v71, 0
  %v263 = vsel %vm87, %v72, 0
  %v266 = vsel %vm87, %v73, 0
  %v269 = vsel %vm87, %v74, 0
  %v272 = vsel %vm87, %v75, 0
  %v275 = vsel %vm87, %v76, 0
  %v278 = vsel %vm87, %v77, 0
  %280 = vmatprep.subr.mxu0 0.0
  %281 = vmatpush1.msra.mxu0 %v78
  %282 = vmatprep.subr.mxu0 0.0
  %283 = vmatpush1.msra.mxu0 %v79
  %284 = vmatprep.subr.mxu0 0.0
  %285 = vmatpush1.msra.mxu0 0.0
  %286 = vmatprep.subr.mxu0 0.0
  %287 = vmatpush1.msra.mxu0 0.0
  %288 = vmatprep.subr.mxu0 0.0
  %289 = vmatpush1.msra.mxu0 0.0
  %290 = vmatprep.subr.mxu0 0.0
  %291 = vmatpush1.msra.mxu0 0.0
  %292 = vmatprep.subr.mxu0 0.0
  %293 = vmatpush1.msra.mxu0 0.0
  %294 = vmatprep.subr.mxu0 0.0
  %295 = vmatpush1.msra.mxu0 0.0
  %296 = vmatprep.subr.mxu0 0.0
  %297 = vmatpush1.msra.mxu0 0.0
  %298 = vmatprep.subr.mxu0 0.0
  %299 = vmatpush1.msra.mxu0 0.0
  %300 = vmatprep.subr.mxu0 0.0
  %301 = vmatpush1.msra.mxu0 0.0
  %302 = vmatprep.subr.mxu0 0.0
  %303 = vmatpush1.msra.mxu0 0.0
  %304 = vmatprep.subr.mxu0 0.0
  %305 = vmatpush1.msra.mxu0 0.0
  %306 = vmatprep.subr.mxu0 0.0
  %307 = vmatpush1.msra.mxu0 0.0
  %308 = vmatprep.subr.mxu0 0.0
  %309 = vmatpush1.msra.mxu0 0.0
  %310 = vmatprep.subr.mxu0 0.0
  %311 = vmatpush1.msra.mxu0 0.0
  %312 = vmatprep.subr.mxu0 0.0
  %313 = vmatpush1.msra.mxu0 0.0
  %314 = vmatprep.subr.mxu0 0.0
  %315 = vmatpush1.msra.mxu0 0.0
  %316 = vmatprep.subr.mxu0 0.0
  %317 = vmatpush1.msra.mxu0 0.0
  %318 = vmatprep.subr.mxu0 0.0
  %319 = vmatpush1.msra.mxu0 0.0
  %320 = vmatprep.subr.mxu0 0.0
  %321 = vmatpush1.msra.mxu0 0.0
  %322 = vmatprep.subr.mxu0 0.0
  %323 = vmatpush1.msra.mxu0 0.0
  %324 = vmatprep.subr.mxu0 0.0
  %325 = vmatpush1.msra.mxu0 0.0
  %326 = vmatprep.subr.mxu0 0.0
  %327 = vmatpush1.msra.mxu0 0.0
  %328 = vmatprep.subr.mxu0 0.0
  %329 = vmatpush1.msra.mxu0 0.0
  %330 = vmatprep.subr.mxu0 0.0
  %331 = vmatpush1.msra.mxu0 0.0
  %332 = vmatprep.subr.mxu0 0.0
  %333 = vmatpush1.msra.mxu0 0.0
  %334 = vmatprep.subr.mxu0 0.0
  %335 = vmatpush1.msra.mxu0 0.0
  %336 = vmatprep.subr.mxu0 0.0
  %337 = vmatpush1.msra.mxu0 0.0
  %338 = vmatprep.subr.mxu0 0.0
  %339 = vmatpush1.msra.mxu0 0.0
  %340 = vmatprep.subr.mxu0 0.0
  %341 = vmatpush1.msra.mxu0 0.0
  %342 = vmatprep.subr.mxu0 0.0
  %343 = vmatpush1.msra.mxu0 0.0
  %344 = vmatprep.mubr.f32.mxu0 0.0
  %345 = vmatmul.mubr.f32.gmra.mrb[0].mxu0 %v89
  %v346 = vpop.f32.mrb[0].mxu0
  %v347 = vadd.f32 %v85, %v346
  %v348 = vpop.f32.mrb[0].mxu0
  %349 = vmatprep.mubr.f32.mxu0 0.0
  %350 = vmatmul.mubr.f32.gmra.mrb[0].mxu0 %v92
  %v351 = vpop.f32.mrb[0].mxu0
  %v352 = vadd.f32 %v85, %v351
  %v353 = vpop.f32.mrb[0].mxu0
  %354 = vmatprep.mubr.f32.mxu0 0.0
  %355 = vmatmul.mubr.f32.gmra.mrb[0].mxu0 %v95
  %v356 = vpop.f32.mrb[0].mxu0
  %v357 = vadd.f32 %v85, %v356
  %v358 = vpop.f32.mrb[0].mxu0
  %359 = vmatprep.mubr.f32.mxu0 0.0
  %360 = vmatmul.mubr.f32.gmra.mrb[0].mxu0 %v98
  %v361 = vpop.f32.mrb[0].mxu0
  %v362 = vadd.f32 %v85, %v361
  %v363 = vpop.f32.mrb[0].mxu0
  %364 = vmatprep.mubr.f32.mxu0 0.0
  %365 = vmatmul.mubr.f32.gmra.mrb[0].mxu0 %v101
  %v366 = vpop.f32.mrb[0].mxu0
  %v367 = vadd.f32 %v85, %v366
  %v368 = vpop.f32.mrb[0].mxu0
  %369 = vmatprep.mubr.f32.mxu0 0.0
  %370 = vmatmul.mubr.f32.gmra.mrb[0].mxu0 %v104
  %v371 = vpop.f32.mrb[0].mxu0
  %v372 = vadd.f32 %v85, %v371
  %v373 = vpop.f32.mrb[0].mxu0
  %374 = vmatprep.mubr.f32.mxu0 0.0
  %375 = vmatmul.mubr.f32.gmra.mrb[0].mxu0 %v107
  %v376 = vpop.f32.mrb[0].mxu0
  %v377 = vadd.f32 %v85, %v376
  %v378 = vpop.f32.mrb[0].mxu0
  %379 = vmatprep.mubr.f32.mxu0 0.0
  %380 = vmatmul.mubr.f32.gmra.mrb[0].mxu0 %v110
  %v381 = vpop.f32.mrb[0].mxu0
  %v382 = vadd.f32 %v85, %v381
  %v383 = vpop.f32.mrb[0].mxu0
  %384 = vmatprep.mubr.f32.mxu0 0.0
  %385 = vmatmul.mubr.f32.gmra.mrb[0].mxu0 %v113
  %v386 = vpop.f32.mrb[0].mxu0
  %v387 = vadd.f32 %v85, %v386
  %v388 = vpop.f32.mrb[0].mxu0
  %389 = vmatprep.mubr.f32.mxu0 0.0
  %390 = vmatmul.mubr.f32.gmra.mrb[0].mxu0 %v116
  %v391 = vpop.f32.mrb[0].mxu0
  %v392 = vadd.f32 %v85, %v391
  %v393 = vpop.f32.mrb[0].mxu0
  %394 = vmatprep.mubr.f32.mxu0 0.0
  %395 = vmatmul.mubr.f32.gmra.mrb[0].mxu0 %v119
  %v396 = vpop.f32.mrb[0].mxu0
  %v397 = vadd.f32 %v85, %v396
  %v398 = vpop.f32.mrb[0].mxu0
  %399 = vmatprep.mubr.f32.mxu0 0.0
  %400 = vmatmul.mubr.f32.gmra.mrb[0].mxu0 %v122
  %v401 = vpop.f32.mrb[0].mxu0
  %v402 = vadd.f32 %v85, %v401
  %v403 = vpop.f32.mrb[0].mxu0
  %404 = vmatprep.mubr.f32.mxu0 0.0
  %405 = vmatmul.mubr.f32.gmra.mrb[0].mxu0 %v125
  %v406 = vpop.f32.mrb[0].mxu0
  %v407 = vadd.f32 %v85, %v406
  %v408 = vpop.f32.mrb[0].mxu0
  %409 = vmatprep.mubr.f32.mxu0 0.0
  %410 = vmatmul.mubr.f32.gmra.mrb[0].mxu0 %v128
  %v411 = vpop.f32.mrb[0].mxu0
  %v412 = vadd.f32 %v85, %v411
  %v413 = vpop.f32.mrb[0].mxu0
  %414 = vmatprep.mubr.f32.mxu0 0.0
  %415 = vmatmul.mubr.f32.gmra.mrb[0].mxu0 %v131
  %v416 = vpop.f32.mrb[0].mxu0
  %v417 = vadd.f32 %v85, %v416
  %v418 = vpop.f32.mrb[0].mxu0
  %419 = vmatprep.mubr.f32.mxu0 0.0
  %420 = vmatmul.mubr.f32.gmra.mrb[0].mxu0 %v134
  %v421 = vpop.f32.mrb[0].mxu0
  %v422 = vadd.f32 %v85, %v421
  %v423 = vpop.f32.mrb[0].mxu0
  %424 = vmatprep.mubr.f32.mxu0 0.0
  %425 = vmatmul.mubr.f32.gmra.mrb[0].mxu0 %v137
  %v426 = vpop.f32.mrb[0].mxu0
  %v427 = vadd.f32 %v85, %v426
  %v428 = vpop.f32.mrb[0].mxu0
  %429 = vmatprep.mubr.f32.mxu0 0.0
  %430 = vmatmul.mubr.f32.gmra.mrb[0].mxu0 %v140
  %v431 = vpop.f32.mrb[0].mxu0
  %v432 = vadd.f32 %v85, %v431
  %v433 = vpop.f32.mrb[0].mxu0
  %434 = vmatprep.mubr.f32.mxu0 0.0
  %435 = vmatmul.mubr.f32.gmra.mrb[0].mxu0 %v143
  %v436 = vpop.f32.mrb[0].mxu0
  %v437 = vadd.f32 %v85, %v436
  %v438 = vpop.f32.mrb[0].mxu0
  %439 = vmatprep.mubr.f32.mxu0 0.0
  %440 = vmatmul.mubr.f32.gmra.mrb[0].mxu0 %v146
  %v441 = vpop.f32.mrb[0].mxu0
  %v442 = vadd.f32 %v85, %v441
  %v443 = vpop.f32.mrb[0].mxu0
  %444 = vmatprep.mubr.f32.mxu0 0.0
  %445 = vmatmul.mubr.f32.gmra.mrb[0].mxu0 %v149
  %v446 = vpop.f32.mrb[0].mxu0
  %v447 = vadd.f32 %v85, %v446
  %v448 = vpop.f32.mrb[0].mxu0
  %449 = vmatprep.mubr.f32.mxu0 0.0
  %450 = vmatmul.mubr.f32.gmra.mrb[0].mxu0 %v152
  %v451 = vpop.f32.mrb[0].mxu0
  %v452 = vadd.f32 %v85, %v451
  %v453 = vpop.f32.mrb[0].mxu0
  %454 = vmatprep.mubr.f32.mxu0 0.0
  %455 = vmatmul.mubr.f32.gmra.mrb[0].mxu0 %v155
  %v456 = vpop.f32.mrb[0].mxu0
  %v457 = vadd.f32 %v85, %v456
  %v458 = vpop.f32.mrb[0].mxu0
  %459 = vmatprep.mubr.f32.mxu0 0.0
  %460 = vmatmul.mubr.f32.gmra.mrb[0].mxu0 %v158
  %v461 = vpop.f32.mrb[0].mxu0
  %v462 = vadd.f32 %v85, %v461
  %v463 = vpop.f32.mrb[0].mxu0
  %464 = vmatprep.mubr.f32.mxu0 0.0
  %465 = vmatmul.mubr.f32.gmra.mrb[0].mxu0 %v161
  %v466 = vpop.f32.mrb[0].mxu0
  %v467 = vadd.f32 %v85, %v466
  %v468 = vpop.f32.mrb[0].mxu0
  %469 = vmatprep.mubr.f32.mxu0 0.0
  %470 = vmatmul.mubr.f32.gmra.mrb[0].mxu0 %v164
  %v471 = vpop.f32.mrb[0].mxu0
  %v472 = vadd.f32 %v85, %v471
  %v473 = vpop.f32.mrb[0].mxu0
  %474 = vmatprep.mubr.f32.mxu0 0.0
  %475 = vmatmul.mubr.f32.gmra.mrb[0].mxu0 %v167
  %v476 = vpop.f32.mrb[0].mxu0
  %v477 = vadd.f32 %v85, %v476
  %v478 = vpop.f32.mrb[0].mxu0
  %479 = vmatprep.mubr.f32.mxu0 0.0
  %480 = vmatmul.mubr.f32.gmra.mrb[0].mxu0 %v170
  %v481 = vpop.f32.mrb[0].mxu0
  %v482 = vadd.f32 %v85, %v481
  %v483 = vpop.f32.mrb[0].mxu0
  %484 = vmatprep.mubr.f32.mxu0 0.0
  %485 = vmatmul.mubr.f32.gmra.mrb[0].mxu0 %v173
  %v486 = vpop.f32.mrb[0].mxu0
  %v487 = vadd.f32 %v85, %v486
  %v488 = vpop.f32.mrb[0].mxu0
  %489 = vmatprep.mubr.f32.mxu0 0.0
  %490 = vmatmul.mubr.f32.gmra.mrb[0].mxu0 %v176
  %v491 = vpop.f32.mrb[0].mxu0
  %v492 = vadd.f32 %v85, %v491
  %v493 = vpop.f32.mrb[0].mxu0
  %494 = vmatprep.mubr.f32.mxu0 0.0
  %495 = vmatmul.mubr.f32.gmra.mrb[0].mxu0 %v179
  %v496 = vpop.f32.mrb[0].mxu0
  %v497 = vadd.f32 %v85, %v496
  %v498 = vpop.f32.mrb[0].mxu0
  %499 = vmatprep.mubr.f32.mxu0 0.0
  %500 = vmatmul.mubr.f32.gmra.mrb[0].mxu0 %v182
  %v501 = vpop.f32.mrb[0].mxu0
  %v502 = vadd.f32 %v85, %v501
  %v503 = vpop.f32.mrb[0].mxu0
  %504 = vmatprep.mubr.f32.mxu0 0.0
  %505 = vmatmul.mubr.f32.gmra.mrb[0].mxu0 %v185
  %v506 = vpop.f32.mrb[0].mxu0
  %v507 = vadd.f32 %v85, %v506
  %v508 = vpop.f32.mrb[0].mxu0
  %509 = vmatprep.mubr.f32.mxu0 0.0
  %510 = vmatmul.mubr.f32.gmra.mrb[0].mxu0 %v188
  %v511 = vpop.f32.mrb[0].mxu0
  %v512 = vadd.f32 %v85, %v511
  %v513 = vpop.f32.mrb[0].mxu0
  %514 = vmatprep.mubr.f32.mxu0 0.0
  %515 = vmatmul.mubr.f32.gmra.mrb[0].mxu0 %v191
  %v516 = vpop.f32.mrb[0].mxu0
  %v517 = vadd.f32 %v85, %v516
  %v518 = vpop.f32.mrb[0].mxu0
  %519 = vmatprep.mubr.f32.mxu0 0.0
  %520 = vmatmul.mubr.f32.gmra.mrb[0].mxu0 %v194
  %v521 = vpop.f32.mrb[0].mxu0
  %v522 = vadd.f32 %v85, %v521
  %v523 = vpop.f32.mrb[0].mxu0
  %524 = vmatprep.mubr.f32.mxu0 0.0
  %525 = vmatmul.mubr.f32.gmra.mrb[0].mxu0 %v197
  %v526 = vpop.f32.mrb[0].mxu0
  %v527 = vadd.f32 %v85, %v526
  %v528 = vpop.f32.mrb[0].mxu0
  %529 = vmatprep.mubr.f32.mxu0 0.0
  %530 = vmatmul.mubr.f32.gmra.mrb[0].mxu0 %v200
  %v531 = vpop.f32.mrb[0].mxu0
  %v532 = vadd.f32 %v85, %v531
  %v533 = vpop.f32.mrb[0].mxu0
  %534 = vmatprep.mubr.f32.mxu0 0.0
  %535 = vmatmul.mubr.f32.gmra.mrb[0].mxu0 %v203
  %v536 = vpop.f32.mrb[0].mxu0
  %v537 = vadd.f32 %v85, %v536
  %v538 = vpop.f32.mrb[0].mxu0
  %539 = vmatprep.mubr.f32.mxu0 0.0
  %540 = vmatmul.mubr.f32.gmra.mrb[0].mxu0 %v206
  %v541 = vpop.f32.mrb[0].mxu0
  %v542 = vadd.f32 %v85, %v541
  %v543 = vpop.f32.mrb[0].mxu0
  %544 = vmatprep.mubr.f32.mxu0 0.0
  %545 = vmatmul.mubr.f32.gmra.mrb[0].mxu0 %v209
  %v546 = vpop.f32.mrb[0].mxu0
  %v547 = vadd.f32 %v85, %v546
  %v548 = vpop.f32.mrb[0].mxu0
  %549 = vmatprep.mubr.f32.mxu0 0.0
  %550 = vmatmul.mubr.f32.gmra.mrb[0].mxu0 %v212
  %v551 = vpop.f32.mrb[0].mxu0
  %v552 = vadd.f32 %v85, %v551
  %v553 = vpop.f32.mrb[0].mxu0
  %554 = vmatprep.mubr.f32.mxu0 0.0
  %555 = vmatmul.mubr.f32.gmra.mrb[0].mxu0 %v215
  %v556 = vpop.f32.mrb[0].mxu0
  %v557 = vadd.f32 %v85, %v556
  %v558 = vpop.f32.mrb[0].mxu0
  %559 = vmatprep.mubr.f32.mxu0 0.0
  %560 = vmatmul.mubr.f32.gmra.mrb[0].mxu0 %v218
  %v561 = vpop.f32.mrb[0].mxu0
  %v562 = vadd.f32 %v85, %v561
  %v563 = vpop.f32.mrb[0].mxu0
  %564 = vmatprep.mubr.f32.mxu0 0.0
  %565 = vmatmul.mubr.f32.gmra.mrb[0].mxu0 %v221
  %v566 = vpop.f32.mrb[0].mxu0
  %v567 = vadd.f32 %v85, %v566
  %v568 = vpop.f32.mrb[0].mxu0
  %569 = vmatprep.mubr.f32.mxu0 0.0
  %570 = vmatmul.mubr.f32.gmra.mrb[0].mxu0 %v224
  %v571 = vpop.f32.mrb[0].mxu0
  %v572 = vadd.f32 %v85, %v571
  %v573 = vpop.f32.mrb[0].mxu0
  %574 = vmatprep.mubr.f32.mxu0 0.0
  %575 = vmatmul.mubr.f32.gmra.mrb[0].mxu0 %v227
  %v576 = vpop.f32.mrb[0].mxu0
  %v577 = vadd.f32 %v85, %v576
  %v578 = vpop.f32.mrb[0].mxu0
  %579 = vmatprep.mubr.f32.mxu0 0.0
  %580 = vmatmul.mubr.f32.gmra.mrb[0].mxu0 %v230
  %v581 = vpop.f32.mrb[0].mxu0
  %v582 = vadd.f32 %v85, %v581
  %v583 = vpop.f32.mrb[0].mxu0
  %584 = vmatprep.mubr.f32.mxu0 0.0
  %585 = vmatmul.mubr.f32.gmra.mrb[0].mxu0 %v233
  %v586 = vpop.f32.mrb[0].mxu0
  %v587 = vadd.f32 %v85, %v586
  %v588 = vpop.f32.mrb[0].mxu0
  %589 = vmatprep.mubr.f32.mxu0 0.0
  %590 = vmatmul.mubr.f32.gmra.mrb[0].mxu0 %v236
  %v591 = vpop.f32.mrb[0].mxu0
  %v592 = vadd.f32 %v85, %v591
  %v593 = vpop.f32.mrb[0].mxu0
  %594 = vmatprep.mubr.f32.mxu0 0.0
  %595 = vmatmul.mubr.f32.gmra.mrb[0].mxu0 %v239
  %v596 = vpop.f32.mrb[0].mxu0
  %v597 = vadd.f32 %v85, %v596
  %v598 = vpop.f32.mrb[0].mxu0
  %599 = vmatprep.mubr.f32.mxu0 0.0
  %600 = vmatmul.mubr.f32.gmra.mrb[0].mxu0 %v242
  %v601 = vpop.f32.mrb[0].mxu0
  %v602 = vadd.f32 %v85, %v601
  %v603 = vpop.f32.mrb[0].mxu0
  %604 = vmatprep.mubr.f32.mxu0 0.0
  %605 = vmatmul.mubr.f32.gmra.mrb[0].mxu0 %v245
  %v606 = vpop.f32.mrb[0].mxu0
  %v607 = vadd.f32 %v85, %v606
  %v608 = vpop.f32.mrb[0].mxu0
  %609 = vmatprep.mubr.f32.mxu0 0.0
  %610 = vmatmul.mubr.f32.gmra.mrb[0].mxu0 %v248
  %v611 = vpop.f32.mrb[0].mxu0
  %v612 = vadd.f32 %v85, %v611
  %v613 = vpop.f32.mrb[0].mxu0
  %614 = vmatprep.mubr.f32.mxu0 0.0
  %615 = vmatmul.mubr.f32.gmra.mrb[0].mxu0 %v251
  %v616 = vpop.f32.mrb[0].mxu0
  %v617 = vadd.f32 %v85, %v616
  %v618 = vpop.f32.mrb[0].mxu0
  %619 = vmatprep.mubr.f32.mxu0 0.0
  %620 = vmatmul.mubr.f32.gmra.mrb[0].mxu0 %v254
  %v621 = vpop.f32.mrb[0].mxu0
  %v622 = vadd.f32 %v85, %v621
  %v623 = vpop.f32.mrb[0].mxu0
  %624 = vmatprep.mubr.f32.mxu0 0.0
  %625 = vmatmul.mubr.f32.gmra.mrb[0].mxu0 %v257
  %v626 = vpop.f32.mrb[0].mxu0
  %v627 = vadd.f32 %v85, %v626
  %v628 = vpop.f32.mrb[0].mxu0
  %629 = vmatprep.mubr.f32.mxu0 0.0
  %630 = vmatmul.mubr.f32.gmra.mrb[0].mxu0 %v260
  %v631 = vpop.f32.mrb[0].mxu0
  %v632 = vadd.f32 %v85, %v631
  %v633 = vpop.f32.mrb[0].mxu0
  %634 = vmatprep.mubr.f32.mxu0 0.0
  %635 = vmatmul.mubr.f32.gmra.mrb[0].mxu0 %v263
  %v636 = vpop.f32.mrb[0].mxu0
  %v637 = vadd.f32 %v85, %v636
  %v638 = vpop.f32.mrb[0].mxu0
  %639 = vmatprep.mubr.f32.mxu0 0.0
  %640 = vmatmul.mubr.f32.gmra.mrb[0].mxu0 %v266
  %v641 = vpop.f32.mrb[0].mxu0
  %v642 = vadd.f32 %v85, %v641
  %v643 = vpop.f32.mrb[0].mxu0
  %644 = vmatprep.mubr.f32.mxu0 0.0
  %645 = vmatmul.mubr.f32.gmra.mrb[0].mxu0 %v269
  %v646 = vpop.f32.mrb[0].mxu0
  %v647 = vadd.f32 %v85, %v646
  %v648 = vpop.f32.mrb[0].mxu0
  %649 = vmatprep.mubr.f32.mxu0 0.0
  %650 = vmatmul.mubr.f32.gmra.mrb[0].mxu0 %v272
  %v651 = vpop.f32.mrb[0].mxu0
  %v652 = vadd.f32 %v85, %v651
  %v653 = vpop.f32.mrb[0].mxu0
  %654 = vmatprep.mubr.f32.mxu0 0.0
  %655 = vmatmul.mubr.f32.gmra.mrb[0].mxu0 %v275
  %v656 = vpop.f32.mrb[0].mxu0
  %v657 = vadd.f32 %v85, %v656
  %v658 = vpop.f32.mrb[0].mxu0
  %659 = vmatprep.mubr.f32.mxu0 0.0
  %660 = vmatmul.mubr.f32.gmra.mrb[0].mxu0 %v278
  %v661 = vpop.f32.mrb[0].mxu0
  %v662 = vadd.f32 %v85, %v661
  %v663 = vpop.f32.mrb[0].mxu0
  %664 = vdwg.mxu0
  %v665 = vlaneseq
  %v666 = vand.u32 %v665, 127
  %vm667 = vcmp.lt.s32.totalorder %v666, 8
  %v668 = vmax.f32 %v347, 0.0
  %v669 = vmax.f32 %v352, 0.0
  %v670 = vmax.f32 %v357, 0.0
  %v671 = vmax.f32 %v362, 0.0
  %v672 = vmax.f32 %v367, 0.0
  %v673 = vmax.f32 %v372, 0.0
  %v674 = vmax.f32 %v377, 0.0
  %v675 = vmax.f32 %v382, 0.0
  %v676 = vmax.f32 %v387, 0.0
  %v677 = vmax.f32 %v392, 0.0
  %v678 = vmax.f32 %v397, 0.0
  %v679 = vmax.f32 %v402, 0.0
  %v680 = vmax.f32 %v407, 0.0
  %v681 = vmax.f32 %v412, 0.0
  %v682 = vmax.f32 %v417, 0.0
  %v683 = vmax.f32 %v422, 0.0
  %v684 = vmax.f32 %v427, 0.0
  %v685 = vmax.f32 %v432, 0.0
  %v686 = vmax.f32 %v437, 0.0
  %v687 = vmax.f32 %v442, 0.0
  %v688 = vmax.f32 %v447, 0.0
  %v689 = vmax.f32 %v452, 0.0
  %v690 = vmax.f32 %v457, 0.0
  %v691 = vmax.f32 %v462, 0.0
  %v692 = vmax.f32 %v467, 0.0
  %v693 = vmax.f32 %v472, 0.0
  %v694 = vmax.f32 %v477, 0.0
  %v695 = vmax.f32 %v482, 0.0
  %v696 = vmax.f32 %v487, 0.0
  %v697 = vmax.f32 %v492, 0.0
  %v698 = vmax.f32 %v497, 0.0
  %v699 = vmax.f32 %v502, 0.0
  %v700 = vmax.f32 %v507, 0.0
  %v701 = vmax.f32 %v512, 0.0
  %v702 = vmax.f32 %v517, 0.0
  %v703 = vmax.f32 %v522, 0.0
  %v704 = vmax.f32 %v527, 0.0
  %v705 = vmax.f32 %v532, 0.0
  %v706 = vmax.f32 %v537, 0.0
  %v707 = vmax.f32 %v542, 0.0
  %v708 = vmax.f32 %v547, 0.0
  %v709 = vmax.f32 %v552, 0.0
  %v710 = vmax.f32 %v557, 0.0
  %v711 = vmax.f32 %v562, 0.0
  %v712 = vmax.f32 %v567, 0.0
  %v713 = vmax.f32 %v572, 0.0
  %v714 = vmax.f32 %v577, 0.0
  %v715 = vmax.f32 %v582, 0.0
  %v716 = vmax.f32 %v587, 0.0
  %v717 = vmax.f32 %v592, 0.0
  %v718 = vmax.f32 %v597, 0.0
  %v719 = vmax.f32 %v602, 0.0
  %v720 = vmax.f32 %v607, 0.0
  %v721 = vmax.f32 %v612, 0.0
  %v722 = vmax.f32 %v617, 0.0
  %v723 = vmax.f32 %v622, 0.0
  %v724 = vmax.f32 %v627, 0.0
  %v725 = vmax.f32 %v632, 0.0
  %v726 = vmax.f32 %v637, 0.0
  %v727 = vmax.f32 %v642, 0.0
  %v728 = vmax.f32 %v647, 0.0
  %v729 = vmax.f32 %v652, 0.0
  %v730 = vmax.f32 %v657, 0.0
  %v731 = vmax.f32 %v662, 0.0
  %v732 = vsel %vm667, %v668, %v347
  %v733 = vsel %vm667, %v669, %v352
  %v734 = vsel %vm667, %v670, %v357
  %v735 = vsel %vm667, %v671, %v362
  %v736 = vsel %vm667, %v672, %v367
  %v737 = vsel %vm667, %v673, %v372
  %v738 = vsel %vm667, %v674, %v377
  %v739 = vsel %vm667, %v675, %v382
  %v740 = vsel %vm667, %v676, %v387
  %v741 = vsel %vm667, %v677, %v392
  %v742 = vsel %vm667, %v678, %v397
  %v743 = vsel %vm667, %v679, %v402
  %v744 = vsel %vm667, %v680, %v407
  %v745 = vsel %vm667, %v681, %v412
  %v746 = vsel %vm667, %v682, %v417
  %v747 = vsel %vm667, %v683, %v422
  %v748 = vsel %vm667, %v684, %v427
  %v749 = vsel %vm667, %v685, %v432
  %v750 = vsel %vm667, %v686, %v437
  %v751 = vsel %vm667, %v687, %v442
  %v752 = vsel %vm667, %v688, %v447
  %v753 = vsel %vm667, %v689, %v452
  %v754 = vsel %vm667, %v690, %v457
  %v755 = vsel %vm667, %v691, %v462
  %v756 = vsel %vm667, %v692, %v467
  %v757 = vsel %vm667, %v693, %v472
  %v758 = vsel %vm667, %v694, %v477
  %v759 = vsel %vm667, %v695, %v482
  %v760 = vsel %vm667, %v696, %v487
  %v761 = vsel %vm667, %v697, %v492
  %v762 = vsel %vm667, %v698, %v497
  %v763 = vsel %vm667, %v699, %v502
  %v764 = vsel %vm667, %v700, %v507
  %v765 = vsel %vm667, %v701, %v512
  %v766 = vsel %vm667, %v702, %v517
  %v767 = vsel %vm667, %v703, %v522
  %v768 = vsel %vm667, %v704, %v527
  %v769 = vsel %vm667, %v705, %v532
  %v770 = vsel %vm667, %v706, %v537
  %v771 = vsel %vm667, %v707, %v542
  %v772 = vsel %vm667, %v708, %v547
  %v773 = vsel %vm667, %v709, %v552
  %v774 = vsel %vm667, %v710, %v557
  %v775 = vsel %vm667, %v711, %v562
  %v776 = vsel %vm667, %v712, %v567
  %v777 = vsel %vm667, %v713, %v572
  %v778 = vsel %vm667, %v714, %v577
  %v779 = vsel %vm667, %v715, %v582
  %v780 = vsel %vm667, %v716, %v587
  %v781 = vsel %vm667, %v717, %v592
  %v782 = vsel %vm667, %v718, %v597
  %v783 = vsel %vm667, %v719, %v602
  %v784 = vsel %vm667, %v720, %v607
  %v785 = vsel %vm667, %v721, %v612
  %v786 = vsel %vm667, %v722, %v617
  %v787 = vsel %vm667, %v723, %v622
  %v788 = vsel %vm667, %v724, %v627
  %v789 = vsel %vm667, %v725, %v632
  %v790 = vsel %vm667, %v726, %v637
  %v791 = vsel %vm667, %v727, %v642
  %v792 = vsel %vm667, %v728, %v647
  %v793 = vsel %vm667, %v729, %v652
  %v794 = vsel %vm667, %v730, %v657
  %v795 = vsel %vm667, %v731, %v662
  %v796 = vsel %vm87, %v732, 0.0
  %v797 = vsel %vm87, %v733, 0.0
  %v798 = vadd.f32 %v796, %v797
  %v799 = vsel %vm87, %v734, 0.0
  %v800 = vadd.f32 %v798, %v799
  %v801 = vsel %vm87, %v735, 0.0
  %v802 = vadd.f32 %v800, %v801
  %v803 = vsel %vm87, %v736, 0.0
  %v804 = vadd.f32 %v802, %v803
  %v805 = vsel %vm87, %v737, 0.0
  %v806 = vadd.f32 %v804, %v805
  %v807 = vsel %vm87, %v738, 0.0
  %v808 = vadd.f32 %v806, %v807
  %v809 = vsel %vm87, %v739, 0.0
  %v810 = vadd.f32 %v808, %v809
  %v811 = vsel %vm87, %v740, 0.0
  %v812 = vadd.f32 %v810, %v811
  %v813 = vsel %vm87, %v741, 0.0
  %v814 = vadd.f32 %v812, %v813
  %v815 = vsel %vm87, %v742, 0.0
  %v816 = vadd.f32 %v814, %v815
  %v817 = vsel %vm87, %v743, 0.0
  %v818 = vadd.f32 %v816, %v817
  %v819 = vsel %vm87, %v744, 0.0
  %v820 = vadd.f32 %v818, %v819
  %v821 = vsel %vm87, %v745, 0.0
  %v822 = vadd.f32 %v820, %v821
  %v823 = vsel %vm87, %v746, 0.0
  %v824 = vadd.f32 %v822, %v823
  %v825 = vsel %vm87, %v747, 0.0
  %v826 = vadd.f32 %v824, %v825
  %v827 = vsel %vm87, %v748, 0.0
  %v828 = vadd.f32 %v826, %v827
  %v829 = vsel %vm87, %v749, 0.0
  %v830 = vadd.f32 %v828, %v829
  %v831 = vsel %vm87, %v750, 0.0
  %v832 = vadd.f32 %v830, %v831
  %v833 = vsel %vm87, %v751, 0.0
  %v834 = vadd.f32 %v832, %v833
  %v835 = vsel %vm87, %v752, 0.0
  %v836 = vadd.f32 %v834, %v835
  %v837 = vsel %vm87, %v753, 0.0
  %v838 = vadd.f32 %v836, %v837
  %v839 = vsel %vm87, %v754, 0.0
  %v840 = vadd.f32 %v838, %v839
  %v841 = vsel %vm87, %v755, 0.0
  %v842 = vadd.f32 %v840, %v841
  %v843 = vsel %vm87, %v756, 0.0
  %v844 = vadd.f32 %v842, %v843
  %v845 = vsel %vm87, %v757, 0.0
  %v846 = vadd.f32 %v844, %v845
  %v847 = vsel %vm87, %v758, 0.0
  %v848 = vadd.f32 %v846, %v847
  %v849 = vsel %vm87, %v759, 0.0
  %v850 = vadd.f32 %v848, %v849
  %v851 = vsel %vm87, %v760, 0.0
  %v852 = vadd.f32 %v850, %v851
  %v853 = vsel %vm87, %v761, 0.0
  %v854 = vadd.f32 %v852, %v853
  %v855 = vsel %vm87, %v762, 0.0
  %v856 = vadd.f32 %v854, %v855
  %v857 = vsel %vm87, %v763, 0.0
  %v858 = vadd.f32 %v856, %v857
  %v859 = vsel %vm87, %v764, 0.0
  %v860 = vadd.f32 %v858, %v859
  %v861 = vsel %vm87, %v765, 0.0
  %v862 = vadd.f32 %v860, %v861
  %v863 = vsel %vm87, %v766, 0.0
  %v864 = vadd.f32 %v862, %v863
  %v865 = vsel %vm87, %v767, 0.0
  %v866 = vadd.f32 %v864, %v865
  %v867 = vsel %vm87, %v768, 0.0
  %v868 = vadd.f32 %v866, %v867
  %v869 = vsel %vm87, %v769, 0.0
  %v870 = vadd.f32 %v868, %v869
  %v871 = vsel %vm87, %v770, 0.0
  %v872 = vadd.f32 %v870, %v871
  %v873 = vsel %vm87, %v771, 0.0
  %v874 = vadd.f32 %v872, %v873
  %v875 = vsel %vm87, %v772, 0.0
  %v876 = vadd.f32 %v874, %v875
  %v877 = vsel %vm87, %v773, 0.0
  %v878 = vadd.f32 %v876, %v877
  %v879 = vsel %vm87, %v774, 0.0
  %v880 = vadd.f32 %v878, %v879
  %v881 = vsel %vm87, %v775, 0.0
  %v882 = vadd.f32 %v880, %v881
  %v883 = vsel %vm87, %v776, 0.0
  %v884 = vadd.f32 %v882, %v883
  %v885 = vsel %vm87, %v777, 0.0
  %v886 = vadd.f32 %v884, %v885
  %v887 = vsel %vm87, %v778, 0.0
  %v888 = vadd.f32 %v886, %v887
  %v889 = vsel %vm87, %v779, 0.0
  %v890 = vadd.f32 %v888, %v889
  %v891 = vsel %vm87, %v780, 0.0
  %v892 = vadd.f32 %v890, %v891
  %v893 = vsel %vm87, %v781, 0.0
  %v894 = vadd.f32 %v892, %v893
  %v895 = vsel %vm87, %v782, 0.0
  %v896 = vadd.f32 %v894, %v895
  %v897 = vsel %vm87, %v783, 0.0
  %v898 = vadd.f32 %v896, %v897
  %v899 = vsel %vm87, %v784, 0.0
  %v900 = vadd.f32 %v898, %v899
  %v901 = vsel %vm87, %v785, 0.0
  %v902 = vadd.f32 %v900, %v901
  %v903 = vsel %vm87, %v786, 0.0
  %v904 = vadd.f32 %v902, %v903
  %v905 = vsel %vm87, %v787, 0.0
  %v906 = vadd.f32 %v904, %v905
  %v907 = vsel %vm87, %v788, 0.0
  %v908 = vadd.f32 %v906, %v907
  %v909 = vsel %vm87, %v789, 0.0
  %v910 = vadd.f32 %v908, %v909
  %v911 = vsel %vm87, %v790, 0.0
  %v912 = vadd.f32 %v910, %v911
  %v913 = vsel %vm87, %v791, 0.0
  %v914 = vadd.f32 %v912, %v913
  %v915 = vsel %vm87, %v792, 0.0
  %v916 = vadd.f32 %v914, %v915
  %v917 = vsel %vm87, %v793, 0.0
  %v918 = vadd.f32 %v916, %v917
  %v919 = vsel %vm87, %v794, 0.0
  %v920 = vadd.f32 %v918, %v919
  %v921 = vsel %vm87, %v795, 0.0
  %v922 = vadd.f32 %v920, %v921
  %v923 = vrot.slane %v922, 4
  %v924 = vadd.f32 %v922, %v923
  %v925 = vrot.slane %v924, 2
  %v926 = vadd.f32 %v924, %v925
  %v927 = vrot.slane %v926, 1
  %v928 = vadd.f32 %v926, %v927
  %v929 = vrcp.pop 512.0
  %v930 = vmul.f32 %v928, %v929
  %v931 = vsub.f32 %v732, %v930
  %v932 = vsub.f32 %v733, %v930
  %v933 = vsub.f32 %v734, %v930
  %v934 = vsub.f32 %v735, %v930
  %v935 = vsub.f32 %v736, %v930
  %v936 = vsub.f32 %v737, %v930
  %v937 = vsub.f32 %v738, %v930
  %v938 = vsub.f32 %v739, %v930
  %v939 = vsub.f32 %v740, %v930
  %v940 = vsub.f32 %v741, %v930
  %v941 = vsub.f32 %v742, %v930
  %v942 = vsub.f32 %v743, %v930
  %v943 = vsub.f32 %v744, %v930
  %v944 = vsub.f32 %v745, %v930
  %v945 = vsub.f32 %v746, %v930
  %v946 = vsub.f32 %v747, %v930
  %v947 = vsub.f32 %v748, %v930
  %v948 = vsub.f32 %v749, %v930
  %v949 = vsub.f32 %v750, %v930
  %v950 = vsub.f32 %v751, %v930
  %v951 = vsub.f32 %v752, %v930
  %v952 = vsub.f32 %v753, %v930
  %v953 = vsub.f32 %v754, %v930
  %v954 = vsub.f32 %v755, %v930
  %v955 = vsub.f32 %v756, %v930
  %v956 = vsub.f32 %v757, %v930
  %v957 = vsub.f32 %v758, %v930
  %v958 = vsub.f32 %v759, %v930
  %v959 = vsub.f32 %v760, %v930
  %v960 = vsub.f32 %v761, %v930
  %v961 = vsub.f32 %v762, %v930
  %v962 = vsub.f32 %v763, %v930
  %v963 = vsub.f32 %v764, %v930
  %v964 = vsub.f32 %v765, %v930
  %v965 = vsub.f32 %v766, %v930
  %v966 = vsub.f32 %v767, %v930
  %v967 = vsub.f32 %v768, %v930
  %v968 = vsub.f32 %v769, %v930
  %v969 = vsub.f32 %v770, %v930
  %v970 = vsub.f32 %v771, %v930
  %v971 = vsub.f32 %v772, %v930
  %v972 = vsub.f32 %v773, %v930
  %v973 = vsub.f32 %v774, %v930
  %v974 = vsub.f32 %v775, %v930
  %v975 = vsub.f32 %v776, %v930
  %v976 = vsub.f32 %v777, %v930
  %v977 = vsub.f32 %v778, %v930
  %v978 = vsub.f32 %v779, %v930
  %v979 = vsub.f32 %v780, %v930
  %v980 = vsub.f32 %v781, %v930
  %v981 = vsub.f32 %v782, %v930
  %v982 = vsub.f32 %v783, %v930
  %v983 = vsub.f32 %v784, %v930
  %v984 = vsub.f32 %v785, %v930
  %v985 = vsub.f32 %v786, %v930
  %v986 = vsub.f32 %v787, %v930
  %v987 = vsub.f32 %v788, %v930
  %v988 = vsub.f32 %v789, %v930
  %v989 = vsub.f32 %v790, %v930
  %v990 = vsub.f32 %v791, %v930
  %v991 = vsub.f32 %v792, %v930
  %v992 = vsub.f32 %v793, %v930
  %v993 = vsub.f32 %v794, %v930
  %v994 = vsub.f32 %v795, %v930
  %v995 = vmul.f32 %v931, %v931
  %v996 = vmul.f32 %v932, %v932
  %v997 = vmul.f32 %v933, %v933
  %v998 = vmul.f32 %v934, %v934
  %v999 = vmul.f32 %v935, %v935
  %v1000 = vmul.f32 %v936, %v936
  %v1001 = vmul.f32 %v937, %v937
  %v1002 = vmul.f32 %v938, %v938
  %v1003 = vmul.f32 %v939, %v939
  %v1004 = vmul.f32 %v940, %v940
  %v1005 = vmul.f32 %v941, %v941
  %v1006 = vmul.f32 %v942, %v942
  %v1007 = vmul.f32 %v943, %v943
  %v1008 = vmul.f32 %v944, %v944
  %v1009 = vmul.f32 %v945, %v945
  %v1010 = vmul.f32 %v946, %v946
  %v1011 = vmul.f32 %v947, %v947
  %v1012 = vmul.f32 %v948, %v948
  %v1013 = vmul.f32 %v949, %v949
  %v1014 = vmul.f32 %v950, %v950
  %v1015 = vmul.f32 %v951, %v951
  %v1016 = vmul.f32 %v952, %v952
  %v1017 = vmul.f32 %v953, %v953
  %v1018 = vmul.f32 %v954, %v954
  %v1019 = vmul.f32 %v955, %v955
  %v1020 = vmul.f32 %v956, %v956
  %v1021 = vmul.f32 %v957, %v957
  %v1022 = vmul.f32 %v958, %v958
  %v1023 = vmul.f32 %v959, %v959
  %v1024 = vmul.f32 %v960, %v960
  %v1025 = vmul.f32 %v961, %v961
  %v1026 = vmul.f32 %v962, %v962
  %v1027 = vmul.f32 %v963, %v963
  %v1028 = vmul.f32 %v964, %v964
  %v1029 = vmul.f32 %v965, %v965
  %v1030 = vmul.f32 %v966, %v966
  %v1031 = vmul.f32 %v967, %v967
  %v1032 = vmul.f32 %v968, %v968
  %v1033 = vmul.f32 %v969, %v969
  %v1034 = vmul.f32 %v970, %v970
  %v1035 = vmul.f32 %v971, %v971
  %v1036 = vmul.f32 %v972, %v972
  %v1037 = vmul.f32 %v973, %v973
  %v1038 = vmul.f32 %v974, %v974
  %v1039 = vmul.f32 %v975, %v975
  %v1040 = vmul.f32 %v976, %v976
  %v1041 = vmul.f32 %v977, %v977
  %v1042 = vmul.f32 %v978, %v978
  %v1043 = vmul.f32 %v979, %v979
  %v1044 = vmul.f32 %v980, %v980
  %v1045 = vmul.f32 %v981, %v981
  %v1046 = vmul.f32 %v982, %v982
  %v1047 = vmul.f32 %v983, %v983
  %v1048 = vmul.f32 %v984, %v984
  %v1049 = vmul.f32 %v985, %v985
  %v1050 = vmul.f32 %v986, %v986
  %v1051 = vmul.f32 %v987, %v987
  %v1052 = vmul.f32 %v988, %v988
  %v1053 = vmul.f32 %v989, %v989
  %v1054 = vmul.f32 %v990, %v990
  %v1055 = vmul.f32 %v991, %v991
  %v1056 = vmul.f32 %v992, %v992
  %v1057 = vmul.f32 %v993, %v993
  %v1058 = vmul.f32 %v994, %v994
  %v1059 = vsel %vm87, %v995, 0.0
  %v1060 = vsel %vm87, %v996, 0.0
  %v1061 = vadd.f32 %v1059, %v1060
  %v1062 = vsel %vm87, %v997, 0.0
  %v1063 = vadd.f32 %v1061, %v1062
  %v1064 = vsel %vm87, %v998, 0.0
  %v1065 = vadd.f32 %v1063, %v1064
  %v1066 = vsel %vm87, %v999, 0.0
  %v1067 = vadd.f32 %v1065, %v1066
  %v1068 = vsel %vm87, %v1000, 0.0
  %v1069 = vadd.f32 %v1067, %v1068
  %v1070 = vsel %vm87, %v1001, 0.0
  %v1071 = vadd.f32 %v1069, %v1070
  %v1072 = vsel %vm87, %v1002, 0.0
  %v1073 = vadd.f32 %v1071, %v1072
  %v1074 = vsel %vm87, %v1003, 0.0
  %v1075 = vadd.f32 %v1073, %v1074
  %v1076 = vsel %vm87, %v1004, 0.0
  %v1077 = vadd.f32 %v1075, %v1076
  %v1078 = vsel %vm87, %v1005, 0.0
  %v1079 = vadd.f32 %v1077, %v1078
  %v1080 = vsel %vm87, %v1006, 0.0
  %v1081 = vadd.f32 %v1079, %v1080
  %v1082 = vsel %vm87, %v1007, 0.0
  %v1083 = vadd.f32 %v1081, %v1082
  %v1084 = vsel %vm87, %v1008, 0.0
  %v1085 = vadd.f32 %v1083, %v1084
  %v1086 = vsel %vm87, %v1009, 0.0
  %v1087 = vadd.f32 %v1085, %v1086
  %v1088 = vsel %vm87, %v1010, 0.0
  %v1089 = vadd.f32 %v1087, %v1088
  %v1090 = vsel %vm87, %v1011, 0.0
  %v1091 = vadd.f32 %v1089, %v1090
  %v1092 = vsel %vm87, %v1012, 0.0
  %v1093 = vadd.f32 %v1091, %v1092
  %v1094 = vsel %vm87, %v1013, 0.0
  %v1095 = vadd.f32 %v1093, %v1094
  %v1096 = vsel %vm87, %v1014, 0.0
  %v1097 = vadd.f32 %v1095, %v1096
  %v1098 = vsel %vm87, %v1015, 0.0
  %v1099 = vadd.f32 %v1097, %v1098
  %v1100 = vsel %vm87, %v1016, 0.0
  %v1101 = vadd.f32 %v1099, %v1100
  %v1102 = vsel %vm87, %v1017, 0.0
  %v1103 = vadd.f32 %v1101, %v1102
  %v1104 = vsel %vm87, %v1018, 0.0
  %v1105 = vadd.f32 %v1103, %v1104
  %v1106 = vsel %vm87, %v1019, 0.0
  %v1107 = vadd.f32 %v1105, %v1106
  %v1108 = vsel %vm87, %v1020, 0.0
  %v1109 = vadd.f32 %v1107, %v1108
  %v1110 = vsel %vm87, %v1021, 0.0
  %v1111 = vadd.f32 %v1109, %v1110
  %v1112 = vsel %vm87, %v1022, 0.0
  %v1113 = vadd.f32 %v1111, %v1112
  %v1114 = vsel %vm87, %v1023, 0.0
  %v1115 = vadd.f32 %v1113, %v1114
  %v1116 = vsel %vm87, %v1024, 0.0
  %v1117 = vadd.f32 %v1115, %v1116
  %v1118 = vsel %vm87, %v1025, 0.0
  %v1119 = vadd.f32 %v1117, %v1118
  %v1120 = vsel %vm87, %v1026, 0.0
  %v1121 = vadd.f32 %v1119, %v1120
  %v1122 = vsel %vm87, %v1027, 0.0
  %v1123 = vadd.f32 %v1121, %v1122
  %v1124 = vsel %vm87, %v1028, 0.0
  %v1125 = vadd.f32 %v1123, %v1124
  %v1126 = vsel %vm87, %v1029, 0.0
  %v1127 = vadd.f32 %v1125, %v1126
  %v1128 = vsel %vm87, %v1030, 0.0
  %v1129 = vadd.f32 %v1127, %v1128
  %v1130 = vsel %vm87, %v1031, 0.0
  %v1131 = vadd.f32 %v1129, %v1130
  %v1132 = vsel %vm87, %v1032, 0.0
  %v1133 = vadd.f32 %v1131, %v1132
  %v1134 = vsel %vm87, %v1033, 0.0
  %v1135 = vadd.f32 %v1133, %v1134
  %v1136 = vsel %vm87, %v1034, 0.0
  %v1137 = vadd.f32 %v1135, %v1136
  %v1138 = vsel %vm87, %v1035, 0.0
  %v1139 = vadd.f32 %v1137, %v1138
  %v1140 = vsel %vm87, %v1036, 0.0
  %v1141 = vadd.f32 %v1139, %v1140
  %v1142 = vsel %vm87, %v1037, 0.0
  %v1143 = vadd.f32 %v1141, %v1142
  %v1144 = vsel %vm87, %v1038, 0.0
  %v1145 = vadd.f32 %v1143, %v1144
  %v1146 = vsel %vm87, %v1039, 0.0
  %v1147 = vadd.f32 %v1145, %v1146
  %v1148 = vsel %vm87, %v1040, 0.0
  %v1149 = vadd.f32 %v1147, %v1148
  %v1150 = vsel %vm87, %v1041, 0.0
  %v1151 = vadd.f32 %v1149, %v1150
  %v1152 = vsel %vm87, %v1042, 0.0
  %v1153 = vadd.f32 %v1151, %v1152
  %v1154 = vsel %vm87, %v1043, 0.0
  %v1155 = vadd.f32 %v1153, %v1154
  %v1156 = vsel %vm87, %v1044, 0.0
  %v1157 = vadd.f32 %v1155, %v1156
  %v1158 = vsel %vm87, %v1045, 0.0
  %v1159 = vadd.f32 %v1157, %v1158
  %v1160 = vsel %vm87, %v1046, 0.0
  %v1161 = vadd.f32 %v1159, %v1160
  %v1162 = vsel %vm87, %v1047, 0.0
  %v1163 = vadd.f32 %v1161, %v1162
  %v1164 = vsel %vm87, %v1048, 0.0
  %v1165 = vadd.f32 %v1163, %v1164
  %v1166 = vsel %vm87, %v1049, 0.0
  %v1167 = vadd.f32 %v1165, %v1166
  %v1168 = vsel %vm87, %v1050, 0.0
  %v1169 = vadd.f32 %v1167, %v1168
  %v1170 = vsel %vm87, %v1051, 0.0
  %v1171 = vadd.f32 %v1169, %v1170
  %v1172 = vsel %vm87, %v1052, 0.0
  %v1173 = vadd.f32 %v1171, %v1172
  %v1174 = vsel %vm87, %v1053, 0.0
  %v1175 = vadd.f32 %v1173, %v1174
  %v1176 = vsel %vm87, %v1054, 0.0
  %v1177 = vadd.f32 %v1175, %v1176
  %v1178 = vsel %vm87, %v1055, 0.0
  %v1179 = vadd.f32 %v1177, %v1178
  %v1180 = vsel %vm87, %v1056, 0.0
  %v1181 = vadd.f32 %v1179, %v1180
  %v1182 = vsel %vm87, %v1057, 0.0
  %v1183 = vadd.f32 %v1181, %v1182
  %v1184 = vsel %vm87, %v1058, 0.0
  %v1185 = vadd.f32 %v1183, %v1184
  %v1186 = vrot.slane %v1185, 4
  %v1187 = vadd.f32 %v1185, %v1186
  %v1188 = vrot.slane %v1187, 2
  %v1189 = vadd.f32 %v1187, %v1188
  %v1190 = vrot.slane %v1189, 1
  %v1191 = vadd.f32 %v1189, %v1190
  %v1192 = vmul.f32 %v1191, %v929
  %v1193 = vadd.f32 %v1192, 1e-05
  %v1194 = vrsqrt.pop %v1193
  %v1195 = vmul.f32 %v931, %v1194
  %v1196 = vmul.f32 %v932, %v1194
  %v1197 = vmul.f32 %v933, %v1194
  %v1198 = vmul.f32 %v934, %v1194
  %v1199 = vmul.f32 %v935, %v1194
  %v1200 = vmul.f32 %v936, %v1194
  %v1201 = vmul.f32 %v937, %v1194
  %v1202 = vmul.f32 %v938, %v1194
  %v1203 = vmul.f32 %v939, %v1194
  %v1204 = vmul.f32 %v940, %v1194
  %v1205 = vmul.f32 %v941, %v1194
  %v1206 = vmul.f32 %v942, %v1194
  %v1207 = vmul.f32 %v943, %v1194
  %v1208 = vmul.f32 %v944, %v1194
  %v1209 = vmul.f32 %v945, %v1194
  %v1210 = vmul.f32 %v946, %v1194
  %v1211 = vmul.f32 %v947, %v1194
  %v1212 = vmul.f32 %v948, %v1194
  %v1213 = vmul.f32 %v949, %v1194
  %v1214 = vmul.f32 %v950, %v1194
  %v1215 = vmul.f32 %v951, %v1194
  %v1216 = vmul.f32 %v952, %v1194
  %v1217 = vmul.f32 %v953, %v1194
  %v1218 = vmul.f32 %v954, %v1194
  %v1219 = vmul.f32 %v955, %v1194
  %v1220 = vmul.f32 %v956, %v1194
  %v1221 = vmul.f32 %v957, %v1194
  %v1222 = vmul.f32 %v958, %v1194
  %v1223 = vmul.f32 %v959, %v1194
  %v1224 = vmul.f32 %v960, %v1194
  %v1225 = vmul.f32 %v961, %v1194
  %v1226 = vmul.f32 %v962, %v1194
  %v1227 = vmul.f32 %v963, %v1194
  %v1228 = vmul.f32 %v964, %v1194
  %v1229 = vmul.f32 %v965, %v1194
  %v1230 = vmul.f32 %v966, %v1194
  %v1231 = vmul.f32 %v967, %v1194
  %v1232 = vmul.f32 %v968, %v1194
  %v1233 = vmul.f32 %v969, %v1194
  %v1234 = vmul.f32 %v970, %v1194
  %v1235 = vmul.f32 %v971, %v1194
  %v1236 = vmul.f32 %v972, %v1194
  %v1237 = vmul.f32 %v973, %v1194
  %v1238 = vmul.f32 %v974, %v1194
  %v1239 = vmul.f32 %v975, %v1194
  %v1240 = vmul.f32 %v976, %v1194
  %v1241 = vmul.f32 %v977, %v1194
  %v1242 = vmul.f32 %v978, %v1194
  %v1243 = vmul.f32 %v979, %v1194
  %v1244 = vmul.f32 %v980, %v1194
  %v1245 = vmul.f32 %v981, %v1194
  %v1246 = vmul.f32 %v982, %v1194
  %v1247 = vmul.f32 %v983, %v1194
  %v1248 = vmul.f32 %v984, %v1194
  %v1249 = vmul.f32 %v985, %v1194
  %v1250 = vmul.f32 %v986, %v1194
  %v1251 = vmul.f32 %v987, %v1194
  %v1252 = vmul.f32 %v988, %v1194
  %v1253 = vmul.f32 %v989, %v1194
  %v1254 = vmul.f32 %v990, %v1194
  %v1255 = vmul.f32 %v991, %v1194
  %v1256 = vmul.f32 %v992, %v1194
  %v1257 = vmul.f32 %v993, %v1194
  %v1258 = vmul.f32 %v994, %v1194
  %1259 = vst.msk [vmem:[%s3] sm:$0xff] %vm87, %v1195
  %1260 = vst.msk [vmem:[%s3 + $0x8] sm:$0xff] %vm87, %v1196
  %1261 = vst.msk [vmem:[%s3 + $0x10] sm:$0xff] %vm87, %v1197
  %1262 = vst.msk [vmem:[%s3 + $0x18] sm:$0xff] %vm87, %v1198
  %1263 = vst.msk [vmem:[%s3 + $0x20] sm:$0xff] %vm87, %v1199
  %1264 = vst.msk [vmem:[%s3 + $0x28] sm:$0xff] %vm87, %v1200
  %1265 = vst.msk [vmem:[%s3 + $0x30] sm:$0xff] %vm87, %v1201
  %1266 = vst.msk [vmem:[%s3 + $0x38] sm:$0xff] %vm87, %v1202
  %1267 = vst.msk [vmem:[%s3 + $0x40] sm:$0xff] %vm87, %v1203
  %1268 = vst.msk [vmem:[%s3 + $0x48] sm:$0xff] %vm87, %v1204
  %1269 = vst.msk [vmem:[%s3 + $0x50] sm:$0xff] %vm87, %v1205
  %1270 = vst.msk [vmem:[%s3 + $0x58] sm:$0xff] %vm87, %v1206
  %1271 = vst.msk [vmem:[%s3 + $0x60] sm:$0xff] %vm87, %v1207
  %1272 = vst.msk [vmem:[%s3 + $0x68] sm:$0xff] %vm87, %v1208
  %1273 = vst.msk [vmem:[%s3 + $0x70] sm:$0xff] %vm87, %v1209
  %1274 = vst.msk [vmem:[%s3 + $0x78] sm:$0xff] %vm87, %v1210
  %1275 = vst.msk [vmem:[%s3 + $0x80] sm:$0xff] %vm87, %v1211
  %1276 = vst.msk [vmem:[%s3 + $0x88] sm:$0xff] %vm87, %v1212
  %1277 = vst.msk [vmem:[%s3 + $0x90] sm:$0xff] %vm87, %v1213
  %1278 = vst.msk [vmem:[%s3 + $0x98] sm:$0xff] %vm87, %v1214
  %1279 = vst.msk [vmem:[%s3 + $0xa0] sm:$0xff] %vm87, %v1215
  %1280 = vst.msk [vmem:[%s3 + $0xa8] sm:$0xff] %vm87, %v1216
  %1281 = vst.msk [vmem:[%s3 + $0xb0] sm:$0xff] %vm87, %v1217
  %1282 = vst.msk [vmem:[%s3 + $0xb8] sm:$0xff] %vm87, %v1218
  %1283 = vst.msk [vmem:[%s3 + $0xc0] sm:$0xff] %vm87, %v1219
  %1284 = vst.msk [vmem:[%s3 + $0xc8] sm:$0xff] %vm87, %v1220
  %1285 = vst.msk [vmem:[%s3 + $0xd0] sm:$0xff] %vm87, %v1221
  %1286 = vst.msk [vmem:[%s3 + $0xd8] sm:$0xff] %vm87, %v1222
  %1287 = vst.msk [vmem:[%s3 + $0xe0] sm:$0xff] %vm87, %v1223
  %1288 = vst.msk [vmem:[%s3 + $0xe8] sm:$0xff] %vm87, %v1224
  %1289 = vst.msk [vmem:[%s3 + $0xf0] sm:$0xff] %vm87, %v1225
  %1290 = vst.msk [vmem:[%s3 + $0xf8] sm:$0xff] %vm87, %v1226
  %1291 = vst.msk [vmem:[%s3 + $0x100] sm:$0xff] %vm87, %v1227
  %1292 = vst.msk [vmem:[%s3 + $0x108] sm:$0xff] %vm87, %v1228
  %1293 = vst.msk [vmem:[%s3 + $0x110] sm:$0xff] %vm87, %v1229
  %1294 = vst.msk [vmem:[%s3 + $0x118] sm:$0xff] %vm87, %v1230
  %1295 = vst.msk [vmem:[%s3 + $0x120] sm:$0xff] %vm87, %v1231
  %1296 = vst.msk [vmem:[%s3 + $0x128] sm:$0xff] %vm87, %v1232
  %1297 = vst.msk [vmem:[%s3 + $0x130] sm:$0xff] %vm87, %v1233
  %1298 = vst.msk [vmem:[%s3 + $0x138] sm:$0xff] %vm87, %v1234
  %1299 = vst.msk [vmem:[%s3 + $0x140] sm:$0xff] %vm87, %v1235
  %1300 = vst.msk [vmem:[%s3 + $0x148] sm:$0xff] %vm87, %v1236
  %1301 = vst.msk [vmem:[%s3 + $0x150] sm:$0xff] %vm87, %v1237
  %1302 = vst.msk [vmem:[%s3 + $0x158] sm:$0xff] %vm87, %v1238
  %1303 = vst.msk [vmem:[%s3 + $0x160] sm:$0xff] %vm87, %v1239
  %1304 = vst.msk [vmem:[%s3 + $0x168] sm:$0xff] %vm87, %v1240
  %1305 = vst.msk [vmem:[%s3 + $0x170] sm:$0xff] %vm87, %v1241
  %1306 = vst.msk [vmem:[%s3 + $0x178] sm:$0xff] %vm87, %v1242
  %1307 = vst.msk [vmem:[%s3 + $0x180] sm:$0xff] %vm87, %v1243
  %1308 = vst.msk [vmem:[%s3 + $0x188] sm:$0xff] %vm87, %v1244
  %1309 = vst.msk [vmem:[%s3 + $0x190] sm:$0xff] %vm87, %v1245
  %1310 = vst.msk [vmem:[%s3 + $0x198] sm:$0xff] %vm87, %v1246
  %1311 = vst.msk [vmem:[%s3 + $0x1a0] sm:$0xff] %vm87, %v1247
  %1312 = vst.msk [vmem:[%s3 + $0x1a8] sm:$0xff] %vm87, %v1248
  %1313 = vst.msk [vmem:[%s3 + $0x1b0] sm:$0xff] %vm87, %v1249
  %1314 = vst.msk [vmem:[%s3 + $0x1b8] sm:$0xff] %vm87, %v1250
  %1315 = vst.msk [vmem:[%s3 + $0x1c0] sm:$0xff] %vm87, %v1251
  %1316 = vst.msk [vmem:[%s3 + $0x1c8] sm:$0xff] %vm87, %v1252
  %1317 = vst.msk [vmem:[%s3 + $0x1d0] sm:$0xff] %vm87, %v1253
  %1318 = vst.msk [vmem:[%s3 + $0x1d8] sm:$0xff] %vm87, %v1254
  %1319 = vst.msk [vmem:[%s3 + $0x1e0] sm:$0xff] %vm87, %v1255
  %1320 = vst.msk [vmem:[%s3 + $0x1e8] sm:$0xff] %vm87, %v1256
  %1321 = vst.msk [vmem:[%s3 + $0x1f0] sm:$0xff] %vm87, %v1257
  %1322 = vst.msk [vmem:[%s3 + $0x1f8] sm:$0xff] %vm87, %v1258
  // Predicated region
  $region14: #{wnet_forward.34} parent=0 // pred_check
    _
  $region15: #{wnet_forward.34} parent=0 // pred_check_branch
    %1324 = sbr.rel (0) target = $region17
  $region16: #{wnet_forward.34} parent=0 // pred_region
    _
  $region17: #{wnet_forward.34} parent=0 // pred_fallthru
    _
  // Predicated region
  $region18: #{wnet_forward.34} parent=0 // pred_check
    _
  $region19: #{wnet_forward.34} parent=0 // pred_check_branch
    %1326 = sbr.rel (0) target = $region21
  $region20: #{wnet_forward.34} parent=0 // pred_region
    _
  $region21: #{wnet_forward.34} parent=0 // pred_fallthru
    _

// kernel: wnet_forward.35
$region0: #{wnet_forward.35}
  #allocation0 [shape = 'u32[]', space=smem, size = 0x4, offset = 0x4, fixed_abs, tag = 'smem constant byte address 0x4 - core index']
  #allocation1 [shape = 'u32[144,128]{1,0:T(1,128)}', space=vmem, size = 0x12000, scoped, tag = 'internal scratch']
  %s0 = inlined_call_operand.vmem [shape: f32[512,72], index: 0, kind: input, shape index: {}]
  %s1 = inlined_call_operand.vmem [shape: f32[72,8], index: 1, kind: input, shape index: {}]
  %s2 = inlined_call_operand.vmem [shape: f32[1,8], index: 2, kind: input, shape index: {}]
  %s3 = inlined_call_operand.vmem [shape: f32[512,8], index: 3, kind: input, shape index: {}]
  %s4 = inlined_call_operand.vmem [shape: f32[512,8], index: 4, kind: output, shape index: {}]
  %s5 = sld [smem:[#allocation0]]
  $region26: #{wnet_forward.35} parent=0
    _
  %s7 = ssub.s32 1, %s5
  %s8 = scalar_select 0, %s7, %s5
  // Predicated region
  $region2: #{wnet_forward.35} parent=0 // pred_check
    _
  $region3: #{wnet_forward.35} parent=0 // pred_check_branch
    %10 = sbr.rel (0) target = $region5
  $region4: #{wnet_forward.35} parent=0 // pred_region
    _
  $region5: #{wnet_forward.35} parent=0 // pred_fallthru
    _
  // Predicated region
  $region6: #{wnet_forward.35} parent=0 // pred_check
    _
  $region7: #{wnet_forward.35} parent=0 // pred_check_branch
    %12 = sbr.rel (0) target = $region9
  $region8: #{wnet_forward.35} parent=0 // pred_region
    _
  $region9: #{wnet_forward.35} parent=0 // pred_fallthru
    _
  // Predicated region
  $region10: #{wnet_forward.35} parent=0 // pred_check
    _
  $region11: #{wnet_forward.35} parent=0 // pred_check_branch
    %14 = sbr.rel (0) target = $region13
  $region12: #{wnet_forward.35} parent=0 // pred_region
    _
  $region13: #{wnet_forward.35} parent=0 // pred_fallthru
    _
  // Predicated region
  $region14: #{wnet_forward.35} parent=0 // pred_check
    _
  $region15: #{wnet_forward.35} parent=0 // pred_check_branch
    %16 = sbr.rel (0) target = $region17
  $region16: #{wnet_forward.35} parent=0 // pred_region
    _
  $region17: #{wnet_forward.35} parent=0 // pred_fallthru
    _
  %v17 = vld [vmem:[%s0] sm:$0xff]
  %v18 = vld [vmem:[%s0 + $0x8] sm:$0xff]
  %v19 = vld [vmem:[%s0 + $0x10] sm:$0xff]
  %v20 = vld [vmem:[%s0 + $0x18] sm:$0xff]
  %v21 = vld [vmem:[%s0 + $0x20] sm:$0xff]
  %v22 = vld [vmem:[%s0 + $0x28] sm:$0xff]
  %v23 = vld [vmem:[%s0 + $0x30] sm:$0xff]
  %v24 = vld [vmem:[%s0 + $0x38] sm:$0xff]
  %v25 = vld [vmem:[%s0 + $0x40] sm:$0xff]
  %v26 = vld [vmem:[%s0 + $0x48] sm:$0xff]
  %v27 = vld [vmem:[%s0 + $0x50] sm:$0xff]
  %v28 = vld [vmem:[%s0 + $0x58] sm:$0xff]
  %v29 = vld [vmem:[%s0 + $0x60] sm:$0xff]
  %v30 = vld [vmem:[%s0 + $0x68] sm:$0xff]
  %v31 = vld [vmem:[%s0 + $0x70] sm:$0xff]
  %v32 = vld [vmem:[%s0 + $0x78] sm:$0xff]
  %v33 = vld [vmem:[%s0 + $0x80] sm:$0xff]
  %v34 = vld [vmem:[%s0 + $0x88] sm:$0xff]
  %v35 = vld [vmem:[%s0 + $0x90] sm:$0xff]
  %v36 = vld [vmem:[%s0 + $0x98] sm:$0xff]
  %v37 = vld [vmem:[%s0 + $0xa0] sm:$0xff]
  %v38 = vld [vmem:[%s0 + $0xa8] sm:$0xff]
  %v39 = vld [vmem:[%s0 + $0xb0] sm:$0xff]
  %v40 = vld [vmem:[%s0 + $0xb8] sm:$0xff]
  %v41 = vld [vmem:[%s0 + $0xc0] sm:$0xff]
  %v42 = vld [vmem:[%s0 + $0xc8] sm:$0xff]
  %v43 = vld [vmem:[%s0 + $0xd0] sm:$0xff]
  %v44 = vld [vmem:[%s0 + $0xd8] sm:$0xff]
  %v45 = vld [vmem:[%s0 + $0xe0] sm:$0xff]
  %v46 = vld [vmem:[%s0 + $0xe8] sm:$0xff]
  %v47 = vld [vmem:[%s0 + $0xf0] sm:$0xff]
  %v48 = vld [vmem:[%s0 + $0xf8] sm:$0xff]
  %v49 = vld [vmem:[%s0 + $0x100] sm:$0xff]
  %v50 = vld [vmem:[%s0 + $0x108] sm:$0xff]
  %v51 = vld [vmem:[%s0 + $0x110] sm:$0xff]
  %v52 = vld [vmem:[%s0 + $0x118] sm:$0xff]
  %v53 = vld [vmem:[%s0 + $0x120] sm:$0xff]
  %v54 = vld [vmem:[%s0 + $0x128] sm:$0xff]
  %v55 = vld [vmem:[%s0 + $0x130] sm:$0xff]
  %v56 = vld [vmem:[%s0 + $0x138] sm:$0xff]
  %v57 = vld [vmem:[%s0 + $0x140] sm:$0xff]
  %v58 = vld [vmem:[%s0 + $0x148] sm:$0xff]
  %v59 = vld [vmem:[%s0 + $0x150] sm:$0xff]
  %v60 = vld [vmem:[%s0 + $0x158] sm:$0xff]
  %v61 = vld [vmem:[%s0 + $0x160] sm:$0xff]
  %v62 = vld [vmem:[%s0 + $0x168] sm:$0xff]
  %v63 = vld [vmem:[%s0 + $0x170] sm:$0xff]
  %v64 = vld [vmem:[%s0 + $0x178] sm:$0xff]
  %v65 = vld [vmem:[%s0 + $0x180] sm:$0xff]
  %v66 = vld [vmem:[%s0 + $0x188] sm:$0xff]
  %v67 = vld [vmem:[%s0 + $0x190] sm:$0xff]
  %v68 = vld [vmem:[%s0 + $0x198] sm:$0xff]
  %v69 = vld [vmem:[%s0 + $0x1a0] sm:$0xff]
  %v70 = vld [vmem:[%s0 + $0x1a8] sm:$0xff]
  %v71 = vld [vmem:[%s0 + $0x1b0] sm:$0xff]
  %v72 = vld [vmem:[%s0 + $0x1b8] sm:$0xff]
  %v73 = vld [vmem:[%s0 + $0x1c0] sm:$0xff]
  %v74 = vld [vmem:[%s0 + $0x1c8] sm:$0xff]
  %v75 = vld [vmem:[%s0 + $0x1d0] sm:$0xff]
  %v76 = vld [vmem:[%s0 + $0x1d8] sm:$0xff]
  %v77 = vld [vmem:[%s0 + $0x1e0] sm:$0xff]
  %v78 = vld [vmem:[%s0 + $0x1e8] sm:$0xff]
  %v79 = vld [vmem:[%s0 + $0x1f0] sm:$0xff]
  %v80 = vld [vmem:[%s0 + $0x1f8] sm:$0xff]
  %v81 = vld [vmem:[%s1] sm:$0xff]
  %v82 = vld [vmem:[%s1 + $0x8] sm:$0xff]
  %v83 = vld [vmem:[%s1 + $0x10] sm:$0xff]
  %v84 = vld [vmem:[%s1 + $0x18] sm:$0xff]
  %v85 = vld [vmem:[%s1 + $0x20] sm:$0xff]
  %v86 = vld [vmem:[%s1 + $0x28] sm:$0xff]
  %v87 = vld [vmem:[%s1 + $0x30] sm:$0xff]
  %v88 = vld [vmem:[%s1 + $0x38] sm:$0xff]
  %v89 = vld [vmem:[%s1 + $0x40] sm:$0xff]
  %v90 = vld [vmem:[%s2] sm:$0x1]
  %v92 = vlaneseq
  %v93 = vshrl.u32 %v92, 7
  %v94 = vsub.s32 0, %v93
  %v95 = vrot.slane %v90, %v94
  %vm97 = vcmask 588800
  %v99 = vsel %vm97, %v17, 0
  %v102 = vsel %vm97, %v18, 0
  %v105 = vsel %vm97, %v19, 0
  %v108 = vsel %vm97, %v20, 0
  %v111 = vsel %vm97, %v21, 0
  %v114 = vsel %vm97, %v22, 0
  %v117 = vsel %vm97, %v23, 0
  %v120 = vsel %vm97, %v24, 0
  %v123 = vsel %vm97, %v25, 0
  %v126 = vsel %vm97, %v26, 0
  %v129 = vsel %vm97, %v27, 0
  %v132 = vsel %vm97, %v28, 0
  %v135 = vsel %vm97, %v29, 0
  %v138 = vsel %vm97, %v30, 0
  %v141 = vsel %vm97, %v31, 0
  %v144 = vsel %vm97, %v32, 0
  %v147 = vsel %vm97, %v33, 0
  %v150 = vsel %vm97, %v34, 0
  %v153 = vsel %vm97, %v35, 0
  %v156 = vsel %vm97, %v36, 0
  %v159 = vsel %vm97, %v37, 0
  %v162 = vsel %vm97, %v38, 0
  %v165 = vsel %vm97, %v39, 0
  %v168 = vsel %vm97, %v40, 0
  %v171 = vsel %vm97, %v41, 0
  %v174 = vsel %vm97, %v42, 0
  %v177 = vsel %vm97, %v43, 0
  %v180 = vsel %vm97, %v44, 0
  %v183 = vsel %vm97, %v45, 0
  %v186 = vsel %vm97, %v46, 0
  %v189 = vsel %vm97, %v47, 0
  %v192 = vsel %vm97, %v48, 0
  %v195 = vsel %vm97, %v49, 0
  %v198 = vsel %vm97, %v50, 0
  %v201 = vsel %vm97, %v51, 0
  %v204 = vsel %vm97, %v52, 0
  %v207 = vsel %vm97, %v53, 0
  %v210 = vsel %vm97, %v54, 0
  %v213 = vsel %vm97, %v55, 0
  %v216 = vsel %vm97, %v56, 0
  %v219 = vsel %vm97, %v57, 0
  %v222 = vsel %vm97, %v58, 0
  %v225 = vsel %vm97, %v59, 0
  %v228 = vsel %vm97, %v60, 0
  %v231 = vsel %vm97, %v61, 0
  %v234 = vsel %vm97, %v62, 0
  %v237 = vsel %vm97, %v63, 0
  %v240 = vsel %vm97, %v64, 0
  %v243 = vsel %vm97, %v65, 0
  %v246 = vsel %vm97, %v66, 0
  %v249 = vsel %vm97, %v67, 0
  %v252 = vsel %vm97, %v68, 0
  %v255 = vsel %vm97, %v69, 0
  %v258 = vsel %vm97, %v70, 0
  %v261 = vsel %vm97, %v71, 0
  %v264 = vsel %vm97, %v72, 0
  %v267 = vsel %vm97, %v73, 0
  %v270 = vsel %vm97, %v74, 0
  %v273 = vsel %vm97, %v75, 0
  %v276 = vsel %vm97, %v76, 0
  %v279 = vsel %vm97, %v77, 0
  %v282 = vsel %vm97, %v78, 0
  %v285 = vsel %vm97, %v79, 0
  %v288 = vsel %vm97, %v80, 0
  %290 = vmatprep.subr.mxu0 0.0
  %291 = vmatpush1.msra.mxu0 %v81
  %292 = vmatprep.subr.mxu0 0.0
  %293 = vmatpush1.msra.mxu0 %v82
  %294 = vmatprep.subr.mxu0 0.0
  %295 = vmatpush1.msra.mxu0 %v83
  %296 = vmatprep.subr.mxu0 0.0
  %297 = vmatpush1.msra.mxu0 %v84
  %298 = vmatprep.subr.mxu0 0.0
  %299 = vmatpush1.msra.mxu0 %v85
  %300 = vmatprep.subr.mxu0 0.0
  %301 = vmatpush1.msra.mxu0 %v86
  %302 = vmatprep.subr.mxu0 0.0
  %303 = vmatpush1.msra.mxu0 %v87
  %304 = vmatprep.subr.mxu0 0.0
  %305 = vmatpush1.msra.mxu0 %v88
  %306 = vmatprep.subr.mxu0 0.0
  %307 = vmatpush1.msra.mxu0 %v89
  %308 = vmatprep.subr.mxu0 0.0
  %309 = vmatpush1.msra.mxu0 0.0
  %310 = vmatprep.subr.mxu0 0.0
  %311 = vmatpush1.msra.mxu0 0.0
  %312 = vmatprep.subr.mxu0 0.0
  %313 = vmatpush1.msra.mxu0 0.0
  %314 = vmatprep.subr.mxu0 0.0
  %315 = vmatpush1.msra.mxu0 0.0
  %316 = vmatprep.subr.mxu0 0.0
  %317 = vmatpush1.msra.mxu0 0.0
  %318 = vmatprep.subr.mxu0 0.0
  %319 = vmatpush1.msra.mxu0 0.0
  %320 = vmatprep.subr.mxu0 0.0
  %321 = vmatpush1.msra.mxu0 0.0
  %322 = vmatprep.subr.mxu0 0.0
  %323 = vmatpush1.msra.mxu0 0.0
  %324 = vmatprep.subr.mxu0 0.0
  %325 = vmatpush1.msra.mxu0 0.0
  %326 = vmatprep.subr.mxu0 0.0
  %327 = vmatpush1.msra.mxu0 0.0
  %328 = vmatprep.subr.mxu0 0.0
  %329 = vmatpush1.msra.mxu0 0.0
  %330 = vmatprep.subr.mxu0 0.0
  %331 = vmatpush1.msra.mxu0 0.0
  %332 = vmatprep.subr.mxu0 0.0
  %333 = vmatpush1.msra.mxu0 0.0
  %334 = vmatprep.subr.mxu0 0.0
  %335 = vmatpush1.msra.mxu0 0.0
  %336 = vmatprep.subr.mxu0 0.0
  %337 = vmatpush1.msra.mxu0 0.0
  %338 = vmatprep.subr.mxu0 0.0
  %339 = vmatpush1.msra.mxu0 0.0
  %340 = vmatprep.subr.mxu0 0.0
  %341 = vmatpush1.msra.mxu0 0.0
  %342 = vmatprep.subr.mxu0 0.0
  %343 = vmatpush1.msra.mxu0 0.0
  %344 = vmatprep.subr.mxu0 0.0
  %345 = vmatpush1.msra.mxu0 0.0
  %346 = vmatprep.subr.mxu0 0.0
  %347 = vmatpush1.msra.mxu0 0.0
  %348 = vmatprep.subr.mxu0 0.0
  %349 = vmatpush1.msra.mxu0 0.0
  %350 = vmatprep.subr.mxu0 0.0
  %351 = vmatpush1.msra.mxu0 0.0
  %352 = vmatprep.subr.mxu0 0.0
  %353 = vmatpush1.msra.mxu0 0.0
  %354 = vmatprep.mubr.f32.mxu0 0.0
  %355 = vmatmul.mubr.f32.gmra.mrb[0].mxu0 %v99
  %v356 = vpop.f32.mrb[0].mxu0
  %v357 = vadd.f32 %v95, %v356
  %v358 = vpop.f32.mrb[0].mxu0
  %359 = vmatprep.mubr.f32.mxu0 0.0
  %360 = vmatmul.mubr.f32.gmra.mrb[0].mxu0 %v102
  %v361 = vpop.f32.mrb[0].mxu0
  %v362 = vadd.f32 %v95, %v361
  %v363 = vpop.f32.mrb[0].mxu0
  %364 = vmatprep.mubr.f32.mxu0 0.0
  %365 = vmatmul.mubr.f32.gmra.mrb[0].mxu0 %v105
  %v366 = vpop.f32.mrb[0].mxu0
  %v367 = vadd.f32 %v95, %v366
  %v368 = vpop.f32.mrb[0].mxu0
  %369 = vmatprep.mubr.f32.mxu0 0.0
  %370 = vmatmul.mubr.f32.gmra.mrb[0].mxu0 %v108
  %v371 = vpop.f32.mrb[0].mxu0
  %v372 = vadd.f32 %v95, %v371
  %v373 = vpop.f32.mrb[0].mxu0
  %374 = vmatprep.mubr.f32.mxu0 0.0
  %375 = vmatmul.mubr.f32.gmra.mrb[0].mxu0 %v111
  %v376 = vpop.f32.mrb[0].mxu0
  %v377 = vadd.f32 %v95, %v376
  %v378 = vpop.f32.mrb[0].mxu0
  %379 = vmatprep.mubr.f32.mxu0 0.0
  %380 = vmatmul.mubr.f32.gmra.mrb[0].mxu0 %v114
  %v381 = vpop.f32.mrb[0].mxu0
  %v382 = vadd.f32 %v95, %v381
  %v383 = vpop.f32.mrb[0].mxu0
  %384 = vmatprep.mubr.f32.mxu0 0.0
  %385 = vmatmul.mubr.f32.gmra.mrb[0].mxu0 %v117
  %v386 = vpop.f32.mrb[0].mxu0
  %v387 = vadd.f32 %v95, %v386
  %v388 = vpop.f32.mrb[0].mxu0
  %389 = vmatprep.mubr.f32.mxu0 0.0
  %390 = vmatmul.mubr.f32.gmra.mrb[0].mxu0 %v120
  %v391 = vpop.f32.mrb[0].mxu0
  %v392 = vadd.f32 %v95, %v391
  %v393 = vpop.f32.mrb[0].mxu0
  %394 = vmatprep.mubr.f32.mxu0 0.0
  %395 = vmatmul.mubr.f32.gmra.mrb[0].mxu0 %v123
  %v396 = vpop.f32.mrb[0].mxu0
  %v397 = vadd.f32 %v95, %v396
  %v398 = vpop.f32.mrb[0].mxu0
  %399 = vmatprep.mubr.f32.mxu0 0.0
  %400 = vmatmul.mubr.f32.gmra.mrb[0].mxu0 %v126
  %v401 = vpop.f32.mrb[0].mxu0
  %v402 = vadd.f32 %v95, %v401
  %v403 = vpop.f32.mrb[0].mxu0
  %404 = vmatprep.mubr.f32.mxu0 0.0
  %405 = vmatmul.mubr.f32.gmra.mrb[0].mxu0 %v129
  %v406 = vpop.f32.mrb[0].mxu0
  %v407 = vadd.f32 %v95, %v406
  %v408 = vpop.f32.mrb[0].mxu0
  %409 = vmatprep.mubr.f32.mxu0 0.0
  %410 = vmatmul.mubr.f32.gmra.mrb[0].mxu0 %v132
  %v411 = vpop.f32.mrb[0].mxu0
  %v412 = vadd.f32 %v95, %v411
  %v413 = vpop.f32.mrb[0].mxu0
  %414 = vmatprep.mubr.f32.mxu0 0.0
  %415 = vmatmul.mubr.f32.gmra.mrb[0].mxu0 %v135
  %v416 = vpop.f32.mrb[0].mxu0
  %v417 = vadd.f32 %v95, %v416
  %v418 = vpop.f32.mrb[0].mxu0
  %419 = vmatprep.mubr.f32.mxu0 0.0
  %420 = vmatmul.mubr.f32.gmra.mrb[0].mxu0 %v138
  %v421 = vpop.f32.mrb[0].mxu0
  %v422 = vadd.f32 %v95, %v421
  %v423 = vpop.f32.mrb[0].mxu0
  %424 = vmatprep.mubr.f32.mxu0 0.0
  %425 = vmatmul.mubr.f32.gmra.mrb[0].mxu0 %v141
  %v426 = vpop.f32.mrb[0].mxu0
  %v427 = vadd.f32 %v95, %v426
  %v428 = vpop.f32.mrb[0].mxu0
  %429 = vmatprep.mubr.f32.mxu0 0.0
  %430 = vmatmul.mubr.f32.gmra.mrb[0].mxu0 %v144
  %v431 = vpop.f32.mrb[0].mxu0
  %v432 = vadd.f32 %v95, %v431
  %v433 = vpop.f32.mrb[0].mxu0
  %434 = vmatprep.mubr.f32.mxu0 0.0
  %435 = vmatmul.mubr.f32.gmra.mrb[0].mxu0 %v147
  %v436 = vpop.f32.mrb[0].mxu0
  %v437 = vadd.f32 %v95, %v436
  %v438 = vpop.f32.mrb[0].mxu0
  %439 = vmatprep.mubr.f32.mxu0 0.0
  %440 = vmatmul.mubr.f32.gmra.mrb[0].mxu0 %v150
  %v441 = vpop.f32.mrb[0].mxu0
  %v442 = vadd.f32 %v95, %v441
  %v443 = vpop.f32.mrb[0].mxu0
  %444 = vmatprep.mubr.f32.mxu0 0.0
  %445 = vmatmul.mubr.f32.gmra.mrb[0].mxu0 %v153
  %v446 = vpop.f32.mrb[0].mxu0
  %v447 = vadd.f32 %v95, %v446
  %v448 = vpop.f32.mrb[0].mxu0
  %449 = vmatprep.mubr.f32.mxu0 0.0
  %450 = vmatmul.mubr.f32.gmra.mrb[0].mxu0 %v156
  %v451 = vpop.f32.mrb[0].mxu0
  %v452 = vadd.f32 %v95, %v451
  %v453 = vpop.f32.mrb[0].mxu0
  %454 = vmatprep.mubr.f32.mxu0 0.0
  %455 = vmatmul.mubr.f32.gmra.mrb[0].mxu0 %v159
  %v456 = vpop.f32.mrb[0].mxu0
  %v457 = vadd.f32 %v95, %v456
  %v458 = vpop.f32.mrb[0].mxu0
  %459 = vmatprep.mubr.f32.mxu0 0.0
  %460 = vmatmul.mubr.f32.gmra.mrb[0].mxu0 %v162
  %v461 = vpop.f32.mrb[0].mxu0
  %v462 = vadd.f32 %v95, %v461
  %v463 = vpop.f32.mrb[0].mxu0
  %464 = vmatprep.mubr.f32.mxu0 0.0
  %465 = vmatmul.mubr.f32.gmra.mrb[0].mxu0 %v165
  %v466 = vpop.f32.mrb[0].mxu0
  %v467 = vadd.f32 %v95, %v466
  %v468 = vpop.f32.mrb[0].mxu0
  %469 = vmatprep.mubr.f32.mxu0 0.0
  %470 = vmatmul.mubr.f32.gmra.mrb[0].mxu0 %v168
  %v471 = vpop.f32.mrb[0].mxu0
  %v472 = vadd.f32 %v95, %v471
  %v473 = vpop.f32.mrb[0].mxu0
  %474 = vmatprep.mubr.f32.mxu0 0.0
  %475 = vmatmul.mubr.f32.gmra.mrb[0].mxu0 %v171
  %v476 = vpop.f32.mrb[0].mxu0
  %v477 = vadd.f32 %v95, %v476
  %v478 = vpop.f32.mrb[0].mxu0
  %479 = vmatprep.mubr.f32.mxu0 0.0
  %480 = vmatmul.mubr.f32.gmra.mrb[0].mxu0 %v174
  %v481 = vpop.f32.mrb[0].mxu0
  %v482 = vadd.f32 %v95, %v481
  %v483 = vpop.f32.mrb[0].mxu0
  %484 = vmatprep.mubr.f32.mxu0 0.0
  %485 = vmatmul.mubr.f32.gmra.mrb[0].mxu0 %v177
  %v486 = vpop.f32.mrb[0].mxu0
  %v487 = vadd.f32 %v95, %v486
  %v488 = vpop.f32.mrb[0].mxu0
  %489 = vmatprep.mubr.f32.mxu0 0.0
  %490 = vmatmul.mubr.f32.gmra.mrb[0].mxu0 %v180
  %v491 = vpop.f32.mrb[0].mxu0
  %v492 = vadd.f32 %v95, %v491
  %v493 = vpop.f32.mrb[0].mxu0
  %494 = vmatprep.mubr.f32.mxu0 0.0
  %495 = vmatmul.mubr.f32.gmra.mrb[0].mxu0 %v183
  %v496 = vpop.f32.mrb[0].mxu0
  %v497 = vadd.f32 %v95, %v496
  %v498 = vpop.f32.mrb[0].mxu0
  %499 = vmatprep.mubr.f32.mxu0 0.0
  %500 = vmatmul.mubr.f32.gmra.mrb[0].mxu0 %v186
  %v501 = vpop.f32.mrb[0].mxu0
  %v502 = vadd.f32 %v95, %v501
  %v503 = vpop.f32.mrb[0].mxu0
  %504 = vmatprep.mubr.f32.mxu0 0.0
  %505 = vmatmul.mubr.f32.gmra.mrb[0].mxu0 %v189
  %v506 = vpop.f32.mrb[0].mxu0
  %v507 = vadd.f32 %v95, %v506
  %v508 = vpop.f32.mrb[0].mxu0
  %509 = vmatprep.mubr.f32.mxu0 0.0
  %510 = vmatmul.mubr.f32.gmra.mrb[0].mxu0 %v192
  %v511 = vpop.f32.mrb[0].mxu0
  %v512 = vadd.f32 %v95, %v511
  %v513 = vpop.f32.mrb[0].mxu0
  %514 = vmatprep.mubr.f32.mxu0 0.0
  %515 = vmatmul.mubr.f32.gmra.mrb[0].mxu0 %v195
  %v516 = vpop.f32.mrb[0].mxu0
  %v517 = vadd.f32 %v95, %v516
  %v518 = vpop.f32.mrb[0].mxu0
  %519 = vmatprep.mubr.f32.mxu0 0.0
  %520 = vmatmul.mubr.f32.gmra.mrb[0].mxu0 %v198
  %v521 = vpop.f32.mrb[0].mxu0
  %v522 = vadd.f32 %v95, %v521
  %v523 = vpop.f32.mrb[0].mxu0
  %524 = vmatprep.mubr.f32.mxu0 0.0
  %525 = vmatmul.mubr.f32.gmra.mrb[0].mxu0 %v201
  %v526 = vpop.f32.mrb[0].mxu0
  %v527 = vadd.f32 %v95, %v526
  %v528 = vpop.f32.mrb[0].mxu0
  %529 = vmatprep.mubr.f32.mxu0 0.0
  %530 = vmatmul.mubr.f32.gmra.mrb[0].mxu0 %v204
  %v531 = vpop.f32.mrb[0].mxu0
  %v532 = vadd.f32 %v95, %v531
  %v533 = vpop.f32.mrb[0].mxu0
  %534 = vmatprep.mubr.f32.mxu0 0.0
  %535 = vmatmul.mubr.f32.gmra.mrb[0].mxu0 %v207
  %v536 = vpop.f32.mrb[0].mxu0
  %v537 = vadd.f32 %v95, %v536
  %v538 = vpop.f32.mrb[0].mxu0
  %539 = vmatprep.mubr.f32.mxu0 0.0
  %540 = vmatmul.mubr.f32.gmra.mrb[0].mxu0 %v210
  %v541 = vpop.f32.mrb[0].mxu0
  %v542 = vadd.f32 %v95, %v541
  %v543 = vpop.f32.mrb[0].mxu0
  %544 = vmatprep.mubr.f32.mxu0 0.0
  %545 = vmatmul.mubr.f32.gmra.mrb[0].mxu0 %v213
  %v546 = vpop.f32.mrb[0].mxu0
  %v547 = vadd.f32 %v95, %v546
  %v548 = vpop.f32.mrb[0].mxu0
  %549 = vmatprep.mubr.f32.mxu0 0.0
  %550 = vmatmul.mubr.f32.gmra.mrb[0].mxu0 %v216
  %v551 = vpop.f32.mrb[0].mxu0
  %v552 = vadd.f32 %v95, %v551
  %v553 = vpop.f32.mrb[0].mxu0
  %554 = vmatprep.mubr.f32.mxu0 0.0
  %555 = vmatmul.mubr.f32.gmra.mrb[0].mxu0 %v219
  %v556 = vpop.f32.mrb[0].mxu0
  %v557 = vadd.f32 %v95, %v556
  %v558 = vpop.f32.mrb[0].mxu0
  %559 = vmatprep.mubr.f32.mxu0 0.0
  %560 = vmatmul.mubr.f32.gmra.mrb[0].mxu0 %v222
  %v561 = vpop.f32.mrb[0].mxu0
  %v562 = vadd.f32 %v95, %v561
  %v563 = vpop.f32.mrb[0].mxu0
  %564 = vmatprep.mubr.f32.mxu0 0.0
  %565 = vmatmul.mubr.f32.gmra.mrb[0].mxu0 %v225
  %v566 = vpop.f32.mrb[0].mxu0
  %v567 = vadd.f32 %v95, %v566
  %v568 = vpop.f32.mrb[0].mxu0
  %569 = vmatprep.mubr.f32.mxu0 0.0
  %570 = vmatmul.mubr.f32.gmra.mrb[0].mxu0 %v228
  %v571 = vpop.f32.mrb[0].mxu0
  %v572 = vadd.f32 %v95, %v571
  %v573 = vpop.f32.mrb[0].mxu0
  %574 = vmatprep.mubr.f32.mxu0 0.0
  %575 = vmatmul.mubr.f32.gmra.mrb[0].mxu0 %v231
  %v576 = vpop.f32.mrb[0].mxu0
  %v577 = vadd.f32 %v95, %v576
  %v578 = vpop.f32.mrb[0].mxu0
  %579 = vmatprep.mubr.f32.mxu0 0.0
  %580 = vmatmul.mubr.f32.gmra.mrb[0].mxu0 %v234
  %v581 = vpop.f32.mrb[0].mxu0
  %v582 = vadd.f32 %v95, %v581
  %v583 = vpop.f32.mrb[0].mxu0
  %584 = vmatprep.mubr.f32.mxu0 0.0
  %585 = vmatmul.mubr.f32.gmra.mrb[0].mxu0 %v237
  %v586 = vpop.f32.mrb[0].mxu0
  %v587 = vadd.f32 %v95, %v586
  %v588 = vpop.f32.mrb[0].mxu0
  %589 = vmatprep.mubr.f32.mxu0 0.0
  %590 = vmatmul.mubr.f32.gmra.mrb[0].mxu0 %v240
  %v591 = vpop.f32.mrb[0].mxu0
  %v592 = vadd.f32 %v95, %v591
  %v593 = vpop.f32.mrb[0].mxu0
  %594 = vmatprep.mubr.f32.mxu0 0.0
  %595 = vmatmul.mubr.f32.gmra.mrb[0].mxu0 %v243
  %v596 = vpop.f32.mrb[0].mxu0
  %v597 = vadd.f32 %v95, %v596
  %v598 = vpop.f32.mrb[0].mxu0
  %599 = vmatprep.mubr.f32.mxu0 0.0
  %600 = vmatmul.mubr.f32.gmra.mrb[0].mxu0 %v246
  %v601 = vpop.f32.mrb[0].mxu0
  %v602 = vadd.f32 %v95, %v601
  %v603 = vpop.f32.mrb[0].mxu0
  %604 = vmatprep.mubr.f32.mxu0 0.0
  %605 = vmatmul.mubr.f32.gmra.mrb[0].mxu0 %v249
  %v606 = vpop.f32.mrb[0].mxu0
  %v607 = vadd.f32 %v95, %v606
  %v608 = vpop.f32.mrb[0].mxu0
  %609 = vmatprep.mubr.f32.mxu0 0.0
  %610 = vmatmul.mubr.f32.gmra.mrb[0].mxu0 %v252
  %v611 = vpop.f32.mrb[0].mxu0
  %v612 = vadd.f32 %v95, %v611
  %v613 = vpop.f32.mrb[0].mxu0
  %614 = vmatprep.mubr.f32.mxu0 0.0
  %615 = vmatmul.mubr.f32.gmra.mrb[0].mxu0 %v255
  %v616 = vpop.f32.mrb[0].mxu0
  %v617 = vadd.f32 %v95, %v616
  %v618 = vpop.f32.mrb[0].mxu0
  %619 = vmatprep.mubr.f32.mxu0 0.0
  %620 = vmatmul.mubr.f32.gmra.mrb[0].mxu0 %v258
  %v621 = vpop.f32.mrb[0].mxu0
  %v622 = vadd.f32 %v95, %v621
  %v623 = vpop.f32.mrb[0].mxu0
  %624 = vmatprep.mubr.f32.mxu0 0.0
  %625 = vmatmul.mubr.f32.gmra.mrb[0].mxu0 %v261
  %v626 = vpop.f32.mrb[0].mxu0
  %v627 = vadd.f32 %v95, %v626
  %v628 = vpop.f32.mrb[0].mxu0
  %629 = vmatprep.mubr.f32.mxu0 0.0
  %630 = vmatmul.mubr.f32.gmra.mrb[0].mxu0 %v264
  %v631 = vpop.f32.mrb[0].mxu0
  %v632 = vadd.f32 %v95, %v631
  %v633 = vpop.f32.mrb[0].mxu0
  %634 = vmatprep.mubr.f32.mxu0 0.0
  %635 = vmatmul.mubr.f32.gmra.mrb[0].mxu0 %v267
  %v636 = vpop.f32.mrb[0].mxu0
  %v637 = vadd.f32 %v95, %v636
  %v638 = vpop.f32.mrb[0].mxu0
  %639 = vmatprep.mubr.f32.mxu0 0.0
  %640 = vmatmul.mubr.f32.gmra.mrb[0].mxu0 %v270
  %v641 = vpop.f32.mrb[0].mxu0
  %v642 = vadd.f32 %v95, %v641
  %v643 = vpop.f32.mrb[0].mxu0
  %644 = vmatprep.mubr.f32.mxu0 0.0
  %645 = vmatmul.mubr.f32.gmra.mrb[0].mxu0 %v273
  %v646 = vpop.f32.mrb[0].mxu0
  %v647 = vadd.f32 %v95, %v646
  %v648 = vpop.f32.mrb[0].mxu0
  %649 = vmatprep.mubr.f32.mxu0 0.0
  %650 = vmatmul.mubr.f32.gmra.mrb[0].mxu0 %v276
  %v651 = vpop.f32.mrb[0].mxu0
  %v652 = vadd.f32 %v95, %v651
  %v653 = vpop.f32.mrb[0].mxu0
  %654 = vmatprep.mubr.f32.mxu0 0.0
  %655 = vmatmul.mubr.f32.gmra.mrb[0].mxu0 %v279
  %v656 = vpop.f32.mrb[0].mxu0
  %v657 = vadd.f32 %v95, %v656
  %v658 = vpop.f32.mrb[0].mxu0
  %659 = vmatprep.mubr.f32.mxu0 0.0
  %660 = vmatmul.mubr.f32.gmra.mrb[0].mxu0 %v282
  %v661 = vpop.f32.mrb[0].mxu0
  %v662 = vadd.f32 %v95, %v661
  %v663 = vpop.f32.mrb[0].mxu0
  %664 = vmatprep.mubr.f32.mxu0 0.0
  %665 = vmatmul.mubr.f32.gmra.mrb[0].mxu0 %v285
  %v666 = vpop.f32.mrb[0].mxu0
  %v667 = vadd.f32 %v95, %v666
  %v668 = vpop.f32.mrb[0].mxu0
  %669 = vmatprep.mubr.f32.mxu0 0.0
  %670 = vmatmul.mubr.f32.gmra.mrb[0].mxu0 %v288
  %v671 = vpop.f32.mrb[0].mxu0
  %v672 = vadd.f32 %v95, %v671
  %v673 = vpop.f32.mrb[0].mxu0
  %674 = vdwg.mxu0
  %v675 = vmax.f32 %v357, 0.0
  %v676 = vmax.f32 %v362, 0.0
  %v677 = vmax.f32 %v367, 0.0
  %v678 = vmax.f32 %v372, 0.0
  %v679 = vmax.f32 %v377, 0.0
  %v680 = vmax.f32 %v382, 0.0
  %v681 = vmax.f32 %v387, 0.0
  %v682 = vmax.f32 %v392, 0.0
  %v683 = vmax.f32 %v397, 0.0
  %v684 = vmax.f32 %v402, 0.0
  %v685 = vmax.f32 %v407, 0.0
  %v686 = vmax.f32 %v412, 0.0
  %v687 = vmax.f32 %v417, 0.0
  %v688 = vmax.f32 %v422, 0.0
  %v689 = vmax.f32 %v427, 0.0
  %v690 = vmax.f32 %v432, 0.0
  %v691 = vmax.f32 %v437, 0.0
  %v692 = vmax.f32 %v442, 0.0
  %v693 = vmax.f32 %v447, 0.0
  %v694 = vmax.f32 %v452, 0.0
  %v695 = vmax.f32 %v457, 0.0
  %v696 = vmax.f32 %v462, 0.0
  %v697 = vmax.f32 %v467, 0.0
  %v698 = vmax.f32 %v472, 0.0
  %v699 = vmax.f32 %v477, 0.0
  %v700 = vmax.f32 %v482, 0.0
  %v701 = vmax.f32 %v487, 0.0
  %v702 = vmax.f32 %v492, 0.0
  %v703 = vmax.f32 %v497, 0.0
  %v704 = vmax.f32 %v502, 0.0
  %v705 = vmax.f32 %v507, 0.0
  %v706 = vmax.f32 %v512, 0.0
  %v707 = vmax.f32 %v517, 0.0
  %v708 = vmax.f32 %v522, 0.0
  %v709 = vmax.f32 %v527, 0.0
  %v710 = vmax.f32 %v532, 0.0
  %v711 = vmax.f32 %v537, 0.0
  %v712 = vmax.f32 %v542, 0.0
  %v713 = vmax.f32 %v547, 0.0
  %v714 = vmax.f32 %v552, 0.0
  %v715 = vmax.f32 %v557, 0.0
  %v716 = vmax.f32 %v562, 0.0
  %v717 = vmax.f32 %v567, 0.0
  %v718 = vmax.f32 %v572, 0.0
  %v719 = vmax.f32 %v577, 0.0
  %v720 = vmax.f32 %v582, 0.0
  %v721 = vmax.f32 %v587, 0.0
  %v722 = vmax.f32 %v592, 0.0
  %v723 = vmax.f32 %v597, 0.0
  %v724 = vmax.f32 %v602, 0.0
  %v725 = vmax.f32 %v607, 0.0
  %v726 = vmax.f32 %v612, 0.0
  %v727 = vmax.f32 %v617, 0.0
  %v728 = vmax.f32 %v622, 0.0
  %v729 = vmax.f32 %v627, 0.0
  %v730 = vmax.f32 %v632, 0.0
  %v731 = vmax.f32 %v637, 0.0
  %v732 = vmax.f32 %v642, 0.0
  %v733 = vmax.f32 %v647, 0.0
  %v734 = vmax.f32 %v652, 0.0
  %v735 = vmax.f32 %v657, 0.0
  %v736 = vmax.f32 %v662, 0.0
  %v737 = vmax.f32 %v667, 0.0
  %v738 = vmax.f32 %v672, 0.0
  %vm739 = vcmask 64512
  %v740 = vsel %vm739, %v675, 0.0
  %v741 = vsel %vm739, %v676, 0.0
  %v742 = vadd.f32 %v740, %v741
  %v743 = vsel %vm739, %v677, 0.0
  %v744 = vadd.f32 %v742, %v743
  %v745 = vsel %vm739, %v678, 0.0
  %v746 = vadd.f32 %v744, %v745
  %v747 = vsel %vm739, %v679, 0.0
  %v748 = vadd.f32 %v746, %v747
  %v749 = vsel %vm739, %v680, 0.0
  %v750 = vadd.f32 %v748, %v749
  %v751 = vsel %vm739, %v681, 0.0
  %v752 = vadd.f32 %v750, %v751
  %v753 = vsel %vm739, %v682, 0.0
  %v754 = vadd.f32 %v752, %v753
  %v755 = vsel %vm739, %v683, 0.0
  %v756 = vadd.f32 %v754, %v755
  %v757 = vsel %vm739, %v684, 0.0
  %v758 = vadd.f32 %v756, %v757
  %v759 = vsel %vm739, %v685, 0.0
  %v760 = vadd.f32 %v758, %v759
  %v761 = vsel %vm739, %v686, 0.0
  %v762 = vadd.f32 %v760, %v761
  %v763 = vsel %vm739, %v687, 0.0
  %v764 = vadd.f32 %v762, %v763
  %v765 = vsel %vm739, %v688, 0.0
  %v766 = vadd.f32 %v764, %v765
  %v767 = vsel %vm739, %v689, 0.0
  %v768 = vadd.f32 %v766, %v767
  %v769 = vsel %vm739, %v690, 0.0
  %v770 = vadd.f32 %v768, %v769
  %v771 = vsel %vm739, %v691, 0.0
  %v772 = vadd.f32 %v770, %v771
  %v773 = vsel %vm739, %v692, 0.0
  %v774 = vadd.f32 %v772, %v773
  %v775 = vsel %vm739, %v693, 0.0
  %v776 = vadd.f32 %v774, %v775
  %v777 = vsel %vm739, %v694, 0.0
  %v778 = vadd.f32 %v776, %v777
  %v779 = vsel %vm739, %v695, 0.0
  %v780 = vadd.f32 %v778, %v779
  %v781 = vsel %vm739, %v696, 0.0
  %v782 = vadd.f32 %v780, %v781
  %v783 = vsel %vm739, %v697, 0.0
  %v784 = vadd.f32 %v782, %v783
  %v785 = vsel %vm739, %v698, 0.0
  %v786 = vadd.f32 %v784, %v785
  %v787 = vsel %vm739, %v699, 0.0
  %v788 = vadd.f32 %v786, %v787
  %v789 = vsel %vm739, %v700, 0.0
  %v790 = vadd.f32 %v788, %v789
  %v791 = vsel %vm739, %v701, 0.0
  %v792 = vadd.f32 %v790, %v791
  %v793 = vsel %vm739, %v702, 0.0
  %v794 = vadd.f32 %v792, %v793
  %v795 = vsel %vm739, %v703, 0.0
  %v796 = vadd.f32 %v794, %v795
  %v797 = vsel %vm739, %v704, 0.0
  %v798 = vadd.f32 %v796, %v797
  %v799 = vsel %vm739, %v705, 0.0
  %v800 = vadd.f32 %v798, %v799
  %v801 = vsel %vm739, %v706, 0.0
  %v802 = vadd.f32 %v800, %v801
  %v803 = vsel %vm739, %v707, 0.0
  %v804 = vadd.f32 %v802, %v803
  %v805 = vsel %vm739, %v708, 0.0
  %v806 = vadd.f32 %v804, %v805
  %v807 = vsel %vm739, %v709, 0.0
  %v808 = vadd.f32 %v806, %v807
  %v809 = vsel %vm739, %v710, 0.0
  %v810 = vadd.f32 %v808, %v809
  %v811 = vsel %vm739, %v711, 0.0
  %v812 = vadd.f32 %v810, %v811
  %v813 = vsel %vm739, %v712, 0.0
  %v814 = vadd.f32 %v812, %v813
  %v815 = vsel %vm739, %v713, 0.0
  %v816 = vadd.f32 %v814, %v815
  %v817 = vsel %vm739, %v714, 0.0
  %v818 = vadd.f32 %v816, %v817
  %v819 = vsel %vm739, %v715, 0.0
  %v820 = vadd.f32 %v818, %v819
  %v821 = vsel %vm739, %v716, 0.0
  %v822 = vadd.f32 %v820, %v821
  %v823 = vsel %vm739, %v717, 0.0
  %v824 = vadd.f32 %v822, %v823
  %v825 = vsel %vm739, %v718, 0.0
  %v826 = vadd.f32 %v824, %v825
  %v827 = vsel %vm739, %v719, 0.0
  %v828 = vadd.f32 %v826, %v827
  %v829 = vsel %vm739, %v720, 0.0
  %v830 = vadd.f32 %v828, %v829
  %v831 = vsel %vm739, %v721, 0.0
  %v832 = vadd.f32 %v830, %v831
  %v833 = vsel %vm739, %v722, 0.0
  %v834 = vadd.f32 %v832, %v833
  %v835 = vsel %vm739, %v723, 0.0
  %v836 = vadd.f32 %v834, %v835
  %v837 = vsel %vm739, %v724, 0.0
  %v838 = vadd.f32 %v836, %v837
  %v839 = vsel %vm739, %v725, 0.0
  %v840 = vadd.f32 %v838, %v839
  %v841 = vsel %vm739, %v726, 0.0
  %v842 = vadd.f32 %v840, %v841
  %v843 = vsel %vm739, %v727, 0.0
  %v844 = vadd.f32 %v842, %v843
  %v845 = vsel %vm739, %v728, 0.0
  %v846 = vadd.f32 %v844, %v845
  %v847 = vsel %vm739, %v729, 0.0
  %v848 = vadd.f32 %v846, %v847
  %v849 = vsel %vm739, %v730, 0.0
  %v850 = vadd.f32 %v848, %v849
  %v851 = vsel %vm739, %v731, 0.0
  %v852 = vadd.f32 %v850, %v851
  %v853 = vsel %vm739, %v732, 0.0
  %v854 = vadd.f32 %v852, %v853
  %v855 = vsel %vm739, %v733, 0.0
  %v856 = vadd.f32 %v854, %v855
  %v857 = vsel %vm739, %v734, 0.0
  %v858 = vadd.f32 %v856, %v857
  %v859 = vsel %vm739, %v735, 0.0
  %v860 = vadd.f32 %v858, %v859
  %v861 = vsel %vm739, %v736, 0.0
  %v862 = vadd.f32 %v860, %v861
  %v863 = vsel %vm739, %v737, 0.0
  %v864 = vadd.f32 %v862, %v863
  %v865 = vsel %vm739, %v738, 0.0
  %v866 = vadd.f32 %v864, %v865
  %v867 = vrot.slane %v866, 4
  %v868 = vadd.f32 %v866, %v867
  %v869 = vrot.slane %v868, 2
  %v870 = vadd.f32 %v868, %v869
  %v871 = vrot.slane %v870, 1
  %v872 = vadd.f32 %v870, %v871
  %v873 = vrcp.pop 512.0
  %v874 = vmul.f32 %v872, %v873
  %v875 = vsub.f32 %v675, %v874
  %v876 = vsub.f32 %v676, %v874
  %v877 = vsub.f32 %v677, %v874
  %v878 = vsub.f32 %v678, %v874
  %v879 = vsub.f32 %v679, %v874
  %v880 = vsub.f32 %v680, %v874
  %v881 = vsub.f32 %v681, %v874
  %v882 = vsub.f32 %v682, %v874
  %v883 = vsub.f32 %v683, %v874
  %v884 = vsub.f32 %v684, %v874
  %v885 = vsub.f32 %v685, %v874
  %v886 = vsub.f32 %v686, %v874
  %v887 = vsub.f32 %v687, %v874
  %v888 = vsub.f32 %v688, %v874
  %v889 = vsub.f32 %v689, %v874
  %v890 = vsub.f32 %v690, %v874
  %v891 = vsub.f32 %v691, %v874
  %v892 = vsub.f32 %v692, %v874
  %v893 = vsub.f32 %v693, %v874
  %v894 = vsub.f32 %v694, %v874
  %v895 = vsub.f32 %v695, %v874
  %v896 = vsub.f32 %v696, %v874
  %v897 = vsub.f32 %v697, %v874
  %v898 = vsub.f32 %v698, %v874
  %v899 = vsub.f32 %v699, %v874
  %v900 = vsub.f32 %v700, %v874
  %v901 = vsub.f32 %v701, %v874
  %v902 = vsub.f32 %v702, %v874
  %v903 = vsub.f32 %v703, %v874
  %v904 = vsub.f32 %v704, %v874
  %v905 = vsub.f32 %v705, %v874
  %v906 = vsub.f32 %v706, %v874
  %v907 = vsub.f32 %v707, %v874
  %v908 = vsub.f32 %v708, %v874
  %v909 = vsub.f32 %v709, %v874
  %v910 = vsub.f32 %v710, %v874
  %v911 = vsub.f32 %v711, %v874
  %v912 = vsub.f32 %v712, %v874
  %v913 = vsub.f32 %v713, %v874
  %v914 = vsub.f32 %v714, %v874
  %v915 = vsub.f32 %v715, %v874
  %v916 = vsub.f32 %v716, %v874
  %v917 = vsub.f32 %v717, %v874
  %v918 = vsub.f32 %v718, %v874
  %v919 = vsub.f32 %v719, %v874
  %v920 = vsub.f32 %v720, %v874
  %v921 = vsub.f32 %v721, %v874
  %v922 = vsub.f32 %v722, %v874
  %v923 = vsub.f32 %v723, %v874
  %v924 = vsub.f32 %v724, %v874
  %v925 = vsub.f32 %v725, %v874
  %v926 = vsub.f32 %v726, %v874
  %v927 = vsub.f32 %v727, %v874
  %v928 = vsub.f32 %v728, %v874
  %v929 = vsub.f32 %v729, %v874
  %v930 = vsub.f32 %v730, %v874
  %v931 = vsub.f32 %v731, %v874
  %v932 = vsub.f32 %v732, %v874
  %v933 = vsub.f32 %v733, %v874
  %v934 = vsub.f32 %v734, %v874
  %v935 = vsub.f32 %v735, %v874
  %v936 = vsub.f32 %v736, %v874
  %v937 = vsub.f32 %v737, %v874
  %v938 = vsub.f32 %v738, %v874
  %v939 = vmul.f32 %v875, %v875
  %v940 = vmul.f32 %v876, %v876
  %v941 = vmul.f32 %v877, %v877
  %v942 = vmul.f32 %v878, %v878
  %v943 = vmul.f32 %v879, %v879
  %v944 = vmul.f32 %v880, %v880
  %v945 = vmul.f32 %v881, %v881
  %v946 = vmul.f32 %v882, %v882
  %v947 = vmul.f32 %v883, %v883
  %v948 = vmul.f32 %v884, %v884
  %v949 = vmul.f32 %v885, %v885
  %v950 = vmul.f32 %v886, %v886
  %v951 = vmul.f32 %v887, %v887
  %v952 = vmul.f32 %v888, %v888
  %v953 = vmul.f32 %v889, %v889
  %v954 = vmul.f32 %v890, %v890
  %v955 = vmul.f32 %v891, %v891
  %v956 = vmul.f32 %v892, %v892
  %v957 = vmul.f32 %v893, %v893
  %v958 = vmul.f32 %v894, %v894
  %v959 = vmul.f32 %v895, %v895
  %v960 = vmul.f32 %v896, %v896
  %v961 = vmul.f32 %v897, %v897
  %v962 = vmul.f32 %v898, %v898
  %v963 = vmul.f32 %v899, %v899
  %v964 = vmul.f32 %v900, %v900
  %v965 = vmul.f32 %v901, %v901
  %v966 = vmul.f32 %v902, %v902
  %v967 = vmul.f32 %v903, %v903
  %v968 = vmul.f32 %v904, %v904
  %v969 = vmul.f32 %v905, %v905
  %v970 = vmul.f32 %v906, %v906
  %v971 = vmul.f32 %v907, %v907
  %v972 = vmul.f32 %v908, %v908
  %v973 = vmul.f32 %v909, %v909
  %v974 = vmul.f32 %v910, %v910
  %v975 = vmul.f32 %v911, %v911
  %v976 = vmul.f32 %v912, %v912
  %v977 = vmul.f32 %v913, %v913
  %v978 = vmul.f32 %v914, %v914
  %v979 = vmul.f32 %v915, %v915
  %v980 = vmul.f32 %v916, %v916
  %v981 = vmul.f32 %v917, %v917
  %v982 = vmul.f32 %v918, %v918
  %v983 = vmul.f32 %v919, %v919
  %v984 = vmul.f32 %v920, %v920
  %v985 = vmul.f32 %v921, %v921
  %v986 = vmul.f32 %v922, %v922
  %v987 = vmul.f32 %v923, %v923
  %v988 = vmul.f32 %v924, %v924
  %v989 = vmul.f32 %v925, %v925
  %v990 = vmul.f32 %v926, %v926
  %v991 = vmul.f32 %v927, %v927
  %v992 = vmul.f32 %v928, %v928
  %v993 = vmul.f32 %v929, %v929
  %v994 = vmul.f32 %v930, %v930
  %v995 = vmul.f32 %v931, %v931
  %v996 = vmul.f32 %v932, %v932
  %v997 = vmul.f32 %v933, %v933
  %v998 = vmul.f32 %v934, %v934
  %v999 = vmul.f32 %v935, %v935
  %v1000 = vmul.f32 %v936, %v936
  %v1001 = vmul.f32 %v937, %v937
  %v1002 = vmul.f32 %v938, %v938
  %v1003 = vsel %vm739, %v939, 0.0
  %v1004 = vsel %vm739, %v940, 0.0
  %v1005 = vadd.f32 %v1003, %v1004
  %v1006 = vsel %vm739, %v941, 0.0
  %v1007 = vadd.f32 %v1005, %v1006
  %v1008 = vsel %vm739, %v942, 0.0
  %v1009 = vadd.f32 %v1007, %v1008
  %v1010 = vsel %vm739, %v943, 0.0
  %v1011 = vadd.f32 %v1009, %v1010
  %v1012 = vsel %vm739, %v944, 0.0
  %v1013 = vadd.f32 %v1011, %v1012
  %v1014 = vsel %vm739, %v945, 0.0
  %v1015 = vadd.f32 %v1013, %v1014
  %v1016 = vsel %vm739, %v946, 0.0
  %v1017 = vadd.f32 %v1015, %v1016
  %v1018 = vsel %vm739, %v947, 0.0
  %v1019 = vadd.f32 %v1017, %v1018
  %v1020 = vsel %vm739, %v948, 0.0
  %v1021 = vadd.f32 %v1019, %v1020
  %v1022 = vsel %vm739, %v949, 0.0
  %v1023 = vadd.f32 %v1021, %v1022
  %v1024 = vsel %vm739, %v950, 0.0
  %v1025 = vadd.f32 %v1023, %v1024
  %v1026 = vsel %vm739, %v951, 0.0
  %v1027 = vadd.f32 %v1025, %v1026
  %v1028 = vsel %vm739, %v952, 0.0
  %v1029 = vadd.f32 %v1027, %v1028
  %v1030 = vsel %vm739, %v953, 0.0
  %v1031 = vadd.f32 %v1029, %v1030
  %v1032 = vsel %vm739, %v954, 0.0
  %v1033 = vadd.f32 %v1031, %v1032
  %v1034 = vsel %vm739, %v955, 0.0
  %v1035 = vadd.f32 %v1033, %v1034
  %v1036 = vsel %vm739, %v956, 0.0
  %v1037 = vadd.f32 %v1035, %v1036
  %v1038 = vsel %vm739, %v957, 0.0
  %v1039 = vadd.f32 %v1037, %v1038
  %v1040 = vsel %vm739, %v958, 0.0
  %v1041 = vadd.f32 %v1039, %v1040
  %v1042 = vsel %vm739, %v959, 0.0
  %v1043 = vadd.f32 %v1041, %v1042
  %v1044 = vsel %vm739, %v960, 0.0
  %v1045 = vadd.f32 %v1043, %v1044
  %v1046 = vsel %vm739, %v961, 0.0
  %v1047 = vadd.f32 %v1045, %v1046
  %v1048 = vsel %vm739, %v962, 0.0
  %v1049 = vadd.f32 %v1047, %v1048
  %v1050 = vsel %vm739, %v963, 0.0
  %v1051 = vadd.f32 %v1049, %v1050
  %v1052 = vsel %vm739, %v964, 0.0
  %v1053 = vadd.f32 %v1051, %v1052
  %v1054 = vsel %vm739, %v965, 0.0
  %v1055 = vadd.f32 %v1053, %v1054
  %v1056 = vsel %vm739, %v966, 0.0
  %v1057 = vadd.f32 %v1055, %v1056
  %v1058 = vsel %vm739, %v967, 0.0
  %v1059 = vadd.f32 %v1057, %v1058
  %v1060 = vsel %vm739, %v968, 0.0
  %v1061 = vadd.f32 %v1059, %v1060
  %v1062 = vsel %vm739, %v969, 0.0
  %v1063 = vadd.f32 %v1061, %v1062
  %v1064 = vsel %vm739, %v970, 0.0
  %v1065 = vadd.f32 %v1063, %v1064
  %v1066 = vsel %vm739, %v971, 0.0
  %v1067 = vadd.f32 %v1065, %v1066
  %v1068 = vsel %vm739, %v972, 0.0
  %v1069 = vadd.f32 %v1067, %v1068
  %v1070 = vsel %vm739, %v973, 0.0
  %v1071 = vadd.f32 %v1069, %v1070
  %v1072 = vsel %vm739, %v974, 0.0
  %v1073 = vadd.f32 %v1071, %v1072
  %v1074 = vsel %vm739, %v975, 0.0
  %v1075 = vadd.f32 %v1073, %v1074
  %v1076 = vsel %vm739, %v976, 0.0
  %v1077 = vadd.f32 %v1075, %v1076
  %v1078 = vsel %vm739, %v977, 0.0
  %v1079 = vadd.f32 %v1077, %v1078
  %v1080 = vsel %vm739, %v978, 0.0
  %v1081 = vadd.f32 %v1079, %v1080
  %v1082 = vsel %vm739, %v979, 0.0
  %v1083 = vadd.f32 %v1081, %v1082
  %v1084 = vsel %vm739, %v980, 0.0
  %v1085 = vadd.f32 %v1083, %v1084
  %v1086 = vsel %vm739, %v981, 0.0
  %v1087 = vadd.f32 %v1085, %v1086
  %v1088 = vsel %vm739, %v982, 0.0
  %v1089 = vadd.f32 %v1087, %v1088
  %v1090 = vsel %vm739, %v983, 0.0
  %v1091 = vadd.f32 %v1089, %v1090
  %v1092 = vsel %vm739, %v984, 0.0
  %v1093 = vadd.f32 %v1091, %v1092
  %v1094 = vsel %vm739, %v985, 0.0
  %v1095 = vadd.f32 %v1093, %v1094
  %v1096 = vsel %vm739, %v986, 0.0
  %v1097 = vadd.f32 %v1095, %v1096
  %v1098 = vsel %vm739, %v987, 0.0
  %v1099 = vadd.f32 %v1097, %v1098
  %v1100 = vsel %vm739, %v988, 0.0
  %v1101 = vadd.f32 %v1099, %v1100
  %v1102 = vsel %vm739, %v989, 0.0
  %v1103 = vadd.f32 %v1101, %v1102
  %v1104 = vsel %vm739, %v990, 0.0
  %v1105 = vadd.f32 %v1103, %v1104
  %v1106 = vsel %vm739, %v991, 0.0
  %v1107 = vadd.f32 %v1105, %v1106
  %v1108 = vsel %vm739, %v992, 0.0
  %v1109 = vadd.f32 %v1107, %v1108
  %v1110 = vsel %vm739, %v993, 0.0
  %v1111 = vadd.f32 %v1109, %v1110
  %v1112 = vsel %vm739, %v994, 0.0
  %v1113 = vadd.f32 %v1111, %v1112
  %v1114 = vsel %vm739, %v995, 0.0
  %v1115 = vadd.f32 %v1113, %v1114
  %v1116 = vsel %vm739, %v996, 0.0
  %v1117 = vadd.f32 %v1115, %v1116
  %v1118 = vsel %vm739, %v997, 0.0
  %v1119 = vadd.f32 %v1117, %v1118
  %v1120 = vsel %vm739, %v998, 0.0
  %v1121 = vadd.f32 %v1119, %v1120
  %v1122 = vsel %vm739, %v999, 0.0
  %v1123 = vadd.f32 %v1121, %v1122
  %v1124 = vsel %vm739, %v1000, 0.0
  %v1125 = vadd.f32 %v1123, %v1124
  %v1126 = vsel %vm739, %v1001, 0.0
  %v1127 = vadd.f32 %v1125, %v1126
  %v1128 = vsel %vm739, %v1002, 0.0
  %v1129 = vadd.f32 %v1127, %v1128
  %v1130 = vrot.slane %v1129, 4
  %v1131 = vadd.f32 %v1129, %v1130
  %v1132 = vrot.slane %v1131, 2
  %v1133 = vadd.f32 %v1131, %v1132
  %v1134 = vrot.slane %v1133, 1
  %v1135 = vadd.f32 %v1133, %v1134
  %v1136 = vmul.f32 %v1135, %v873
  %v1137 = vadd.f32 %v1136, 1e-05
  %v1138 = vrsqrt.pop %v1137
  %v1139 = vmul.f32 %v875, %v1138
  %v1140 = vmul.f32 %v876, %v1138
  %v1141 = vmul.f32 %v877, %v1138
  %v1142 = vmul.f32 %v878, %v1138
  %v1143 = vmul.f32 %v879, %v1138
  %v1144 = vmul.f32 %v880, %v1138
  %v1145 = vmul.f32 %v881, %v1138
  %v1146 = vmul.f32 %v882, %v1138
  %v1147 = vmul.f32 %v883, %v1138
  %v1148 = vmul.f32 %v884, %v1138
  %v1149 = vmul.f32 %v885, %v1138
  %v1150 = vmul.f32 %v886, %v1138
  %v1151 = vmul.f32 %v887, %v1138
  %v1152 = vmul.f32 %v888, %v1138
  %v1153 = vmul.f32 %v889, %v1138
  %v1154 = vmul.f32 %v890, %v1138
  %v1155 = vmul.f32 %v891, %v1138
  %v1156 = vmul.f32 %v892, %v1138
  %v1157 = vmul.f32 %v893, %v1138
  %v1158 = vmul.f32 %v894, %v1138
  %v1159 = vmul.f32 %v895, %v1138
  %v1160 = vmul.f32 %v896, %v1138
  %v1161 = vmul.f32 %v897, %v1138
  %v1162 = vmul.f32 %v898, %v1138
  %v1163 = vmul.f32 %v899, %v1138
  %v1164 = vmul.f32 %v900, %v1138
  %v1165 = vmul.f32 %v901, %v1138
  %v1166 = vmul.f32 %v902, %v1138
  %v1167 = vmul.f32 %v903, %v1138
  %v1168 = vmul.f32 %v904, %v1138
  %v1169 = vmul.f32 %v905, %v1138
  %v1170 = vmul.f32 %v906, %v1138
  %v1171 = vmul.f32 %v907, %v1138
  %v1172 = vmul.f32 %v908, %v1138
  %v1173 = vmul.f32 %v909, %v1138
  %v1174 = vmul.f32 %v910, %v1138
  %v1175 = vmul.f32 %v911, %v1138
  %v1176 = vmul.f32 %v912, %v1138
  %v1177 = vmul.f32 %v913, %v1138
  %v1178 = vmul.f32 %v914, %v1138
  %v1179 = vmul.f32 %v915, %v1138
  %v1180 = vmul.f32 %v916, %v1138
  %v1181 = vmul.f32 %v917, %v1138
  %v1182 = vmul.f32 %v918, %v1138
  %v1183 = vmul.f32 %v919, %v1138
  %v1184 = vmul.f32 %v920, %v1138
  %v1185 = vmul.f32 %v921, %v1138
  %v1186 = vmul.f32 %v922, %v1138
  %v1187 = vmul.f32 %v923, %v1138
  %v1188 = vmul.f32 %v924, %v1138
  %v1189 = vmul.f32 %v925, %v1138
  %v1190 = vmul.f32 %v926, %v1138
  %v1191 = vmul.f32 %v927, %v1138
  %v1192 = vmul.f32 %v928, %v1138
  %v1193 = vmul.f32 %v929, %v1138
  %v1194 = vmul.f32 %v930, %v1138
  %v1195 = vmul.f32 %v931, %v1138
  %v1196 = vmul.f32 %v932, %v1138
  %v1197 = vmul.f32 %v933, %v1138
  %v1198 = vmul.f32 %v934, %v1138
  %v1199 = vmul.f32 %v935, %v1138
  %v1200 = vmul.f32 %v936, %v1138
  %v1201 = vmul.f32 %v937, %v1138
  %v1202 = vmul.f32 %v938, %v1138
  %v1203 = vld [vmem:[%s3] sm:$0xff]
  %v1204 = vld [vmem:[%s3 + $0x8] sm:$0xff]
  %v1205 = vld [vmem:[%s3 + $0x10] sm:$0xff]
  %v1206 = vld [vmem:[%s3 + $0x18] sm:$0xff]
  %v1207 = vld [vmem:[%s3 + $0x20] sm:$0xff]
  %v1208 = vld [vmem:[%s3 + $0x28] sm:$0xff]
  %v1209 = vld [vmem:[%s3 + $0x30] sm:$0xff]
  %v1210 = vld [vmem:[%s3 + $0x38] sm:$0xff]
  %v1211 = vld [vmem:[%s3 + $0x40] sm:$0xff]
  %v1212 = vld [vmem:[%s3 + $0x48] sm:$0xff]
  %v1213 = vld [vmem:[%s3 + $0x50] sm:$0xff]
  %v1214 = vld [vmem:[%s3 + $0x58] sm:$0xff]
  %v1215 = vld [vmem:[%s3 + $0x60] sm:$0xff]
  %v1216 = vld [vmem:[%s3 + $0x68] sm:$0xff]
  %v1217 = vld [vmem:[%s3 + $0x70] sm:$0xff]
  %v1218 = vld [vmem:[%s3 + $0x78] sm:$0xff]
  %v1219 = vld [vmem:[%s3 + $0x80] sm:$0xff]
  %v1220 = vld [vmem:[%s3 + $0x88] sm:$0xff]
  %v1221 = vld [vmem:[%s3 + $0x90] sm:$0xff]
  %v1222 = vld [vmem:[%s3 + $0x98] sm:$0xff]
  %v1223 = vld [vmem:[%s3 + $0xa0] sm:$0xff]
  %v1224 = vld [vmem:[%s3 + $0xa8] sm:$0xff]
  %v1225 = vld [vmem:[%s3 + $0xb0] sm:$0xff]
  %v1226 = vld [vmem:[%s3 + $0xb8] sm:$0xff]
  %v1227 = vld [vmem:[%s3 + $0xc0] sm:$0xff]
  %v1228 = vld [vmem:[%s3 + $0xc8] sm:$0xff]
  %v1229 = vld [vmem:[%s3 + $0xd0] sm:$0xff]
  %v1230 = vld [vmem:[%s3 + $0xd8] sm:$0xff]
  %v1231 = vld [vmem:[%s3 + $0xe0] sm:$0xff]
  %v1232 = vld [vmem:[%s3 + $0xe8] sm:$0xff]
  %v1233 = vld [vmem:[%s3 + $0xf0] sm:$0xff]
  %v1234 = vld [vmem:[%s3 + $0xf8] sm:$0xff]
  %v1235 = vld [vmem:[%s3 + $0x100] sm:$0xff]
  %v1236 = vld [vmem:[%s3 + $0x108] sm:$0xff]
  %v1237 = vld [vmem:[%s3 + $0x110] sm:$0xff]
  %v1238 = vld [vmem:[%s3 + $0x118] sm:$0xff]
  %v1239 = vld [vmem:[%s3 + $0x120] sm:$0xff]
  %v1240 = vld [vmem:[%s3 + $0x128] sm:$0xff]
  %v1241 = vld [vmem:[%s3 + $0x130] sm:$0xff]
  %v1242 = vld [vmem:[%s3 + $0x138] sm:$0xff]
  %v1243 = vld [vmem:[%s3 + $0x140] sm:$0xff]
  %v1244 = vld [vmem:[%s3 + $0x148] sm:$0xff]
  %v1245 = vld [vmem:[%s3 + $0x150] sm:$0xff]
  %v1246 = vld [vmem:[%s3 + $0x158] sm:$0xff]
  %v1247 = vld [vmem:[%s3 + $0x160] sm:$0xff]
  %v1248 = vld [vmem:[%s3 + $0x168] sm:$0xff]
  %v1249 = vld [vmem:[%s3 + $0x170] sm:$0xff]
  %v1250 = vld [vmem:[%s3 + $0x178] sm:$0xff]
  %v1251 = vld [vmem:[%s3 + $0x180] sm:$0xff]
  %v1252 = vld [vmem:[%s3 + $0x188] sm:$0xff]
  %v1253 = vld [vmem:[%s3 + $0x190] sm:$0xff]
  %v1254 = vld [vmem:[%s3 + $0x198] sm:$0xff]
  %v1255 = vld [vmem:[%s3 + $0x1a0] sm:$0xff]
  %v1256 = vld [vmem:[%s3 + $0x1a8] sm:$0xff]
  %v1257 = vld [vmem:[%s3 + $0x1b0] sm:$0xff]
  %v1258 = vld [vmem:[%s3 + $0x1b8] sm:$0xff]
  %v1259 = vld [vmem:[%s3 + $0x1c0] sm:$0xff]
  %v1260 = vld [vmem:[%s3 + $0x1c8] sm:$0xff]
  %v1261 = vld [vmem:[%s3 + $0x1d0] sm:$0xff]
  %v1262 = vld [vmem:[%s3 + $0x1d8] sm:$0xff]
  %v1263 = vld [vmem:[%s3 + $0x1e0] sm:$0xff]
  %v1264 = vld [vmem:[%s3 + $0x1e8] sm:$0xff]
  %v1265 = vld [vmem:[%s3 + $0x1f0] sm:$0xff]
  %v1266 = vld [vmem:[%s3 + $0x1f8] sm:$0xff]
  %v1267 = vadd.f32 %v1139, %v1203
  %v1268 = vadd.f32 %v1140, %v1204
  %v1269 = vadd.f32 %v1141, %v1205
  %v1270 = vadd.f32 %v1142, %v1206
  %v1271 = vadd.f32 %v1143, %v1207
  %v1272 = vadd.f32 %v1144, %v1208
  %v1273 = vadd.f32 %v1145, %v1209
  %v1274 = vadd.f32 %v1146, %v1210
  %v1275 = vadd.f32 %v1147, %v1211
  %v1276 = vadd.f32 %v1148, %v1212
  %v1277 = vadd.f32 %v1149, %v1213
  %v1278 = vadd.f32 %v1150, %v1214
  %v1279 = vadd.f32 %v1151, %v1215
  %v1280 = vadd.f32 %v1152, %v1216
  %v1281 = vadd.f32 %v1153, %v1217
  %v1282 = vadd.f32 %v1154, %v1218
  %v1283 = vadd.f32 %v1155, %v1219
  %v1284 = vadd.f32 %v1156, %v1220
  %v1285 = vadd.f32 %v1157, %v1221
  %v1286 = vadd.f32 %v1158, %v1222
  %v1287 = vadd.f32 %v1159, %v1223
  %v1288 = vadd.f32 %v1160, %v1224
  %v1289 = vadd.f32 %v1161, %v1225
  %v1290 = vadd.f32 %v1162, %v1226
  %v1291 = vadd.f32 %v1163, %v1227
  %v1292 = vadd.f32 %v1164, %v1228
  %v1293 = vadd.f32 %v1165, %v1229
  %v1294 = vadd.f32 %v1166, %v1230
  %v1295 = vadd.f32 %v1167, %v1231
  %v1296 = vadd.f32 %v1168, %v1232
  %v1297 = vadd.f32 %v1169, %v1233
  %v1298 = vadd.f32 %v1170, %v1234
  %v1299 = vadd.f32 %v1171, %v1235
  %v1300 = vadd.f32 %v1172, %v1236
  %v1301 = vadd.f32 %v1173, %v1237
  %v1302 = vadd.f32 %v1174, %v1238
  %v1303 = vadd.f32 %v1175, %v1239
  %v1304 = vadd.f32 %v1176, %v1240
  %v1305 = vadd.f32 %v1177, %v1241
  %v1306 = vadd.f32 %v1178, %v1242
  %v1307 = vadd.f32 %v1179, %v1243
  %v1308 = vadd.f32 %v1180, %v1244
  %v1309 = vadd.f32 %v1181, %v1245
  %v1310 = vadd.f32 %v1182, %v1246
  %v1311 = vadd.f32 %v1183, %v1247
  %v1312 = vadd.f32 %v1184, %v1248
  %v1313 = vadd.f32 %v1185, %v1249
  %v1314 = vadd.f32 %v1186, %v1250
  %v1315 = vadd.f32 %v1187, %v1251
  %v1316 = vadd.f32 %v1188, %v1252
  %v1317 = vadd.f32 %v1189, %v1253
  %v1318 = vadd.f32 %v1190, %v1254
  %v1319 = vadd.f32 %v1191, %v1255
  %v1320 = vadd.f32 %v1192, %v1256
  %v1321 = vadd.f32 %v1193, %v1257
  %v1322 = vadd.f32 %v1194, %v1258
  %v1323 = vadd.f32 %v1195, %v1259
  %v1324 = vadd.f32 %v1196, %v1260
  %v1325 = vadd.f32 %v1197, %v1261
  %v1326 = vadd.f32 %v1198, %v1262
  %v1327 = vadd.f32 %v1199, %v1263
  %v1328 = vadd.f32 %v1200, %v1264
  %v1329 = vadd.f32 %v1201, %v1265
  %v1330 = vadd.f32 %v1202, %v1266
  %1331 = vst.msk [vmem:[%s4] sm:$0xff] %vm739, %v1267
  %1332 = vst.msk [vmem:[%s4 + $0x8] sm:$0xff] %vm739, %v1268
  %1333 = vst.msk [vmem:[%s4 + $0x10] sm:$0xff] %vm739, %v1269
  %1334 = vst.msk [vmem:[%s4 + $0x18] sm:$0xff] %vm739, %v1270
  %1335 = vst.msk [vmem:[%s4 + $0x20] sm:$0xff] %vm739, %v1271
  %1336 = vst.msk [vmem:[%s4 + $0x28] sm:$0xff] %vm739, %v1272
  %1337 = vst.msk [vmem:[%s4 + $0x30] sm:$0xff] %vm739, %v1273
  %1338 = vst.msk [vmem:[%s4 + $0x38] sm:$0xff] %vm739, %v1274
  %1339 = vst.msk [vmem:[%s4 + $0x40] sm:$0xff] %vm739, %v1275
  %1340 = vst.msk [vmem:[%s4 + $0x48] sm:$0xff] %vm739, %v1276
  %1341 = vst.msk [vmem:[%s4 + $0x50] sm:$0xff] %vm739, %v1277
  %1342 = vst.msk [vmem:[%s4 + $0x58] sm:$0xff] %vm739, %v1278
  %1343 = vst.msk [vmem:[%s4 + $0x60] sm:$0xff] %vm739, %v1279
  %1344 = vst.msk [vmem:[%s4 + $0x68] sm:$0xff] %vm739, %v1280
  %1345 = vst.msk [vmem:[%s4 + $0x70] sm:$0xff] %vm739, %v1281
  %1346 = vst.msk [vmem:[%s4 + $0x78] sm:$0xff] %vm739, %v1282
  %1347 = vst.msk [vmem:[%s4 + $0x80] sm:$0xff] %vm739, %v1283
  %1348 = vst.msk [vmem:[%s4 + $0x88] sm:$0xff] %vm739, %v1284
  %1349 = vst.msk [vmem:[%s4 + $0x90] sm:$0xff] %vm739, %v1285
  %1350 = vst.msk [vmem:[%s4 + $0x98] sm:$0xff] %vm739, %v1286
  %1351 = vst.msk [vmem:[%s4 + $0xa0] sm:$0xff] %vm739, %v1287
  %1352 = vst.msk [vmem:[%s4 + $0xa8] sm:$0xff] %vm739, %v1288
  %1353 = vst.msk [vmem:[%s4 + $0xb0] sm:$0xff] %vm739, %v1289
  %1354 = vst.msk [vmem:[%s4 + $0xb8] sm:$0xff] %vm739, %v1290
  %1355 = vst.msk [vmem:[%s4 + $0xc0] sm:$0xff] %vm739, %v1291
  %1356 = vst.msk [vmem:[%s4 + $0xc8] sm:$0xff] %vm739, %v1292
  %1357 = vst.msk [vmem:[%s4 + $0xd0] sm:$0xff] %vm739, %v1293
  %1358 = vst.msk [vmem:[%s4 + $0xd8] sm:$0xff] %vm739, %v1294
  %1359 = vst.msk [vmem:[%s4 + $0xe0] sm:$0xff] %vm739, %v1295
  %1360 = vst.msk [vmem:[%s4 + $0xe8] sm:$0xff] %vm739, %v1296
  %1361 = vst.msk [vmem:[%s4 + $0xf0] sm:$0xff] %vm739, %v1297
  %1362 = vst.msk [vmem:[%s4 + $0xf8] sm:$0xff] %vm739, %v1298
  %1363 = vst.msk [vmem:[%s4 + $0x100] sm:$0xff] %vm739, %v1299
  %1364 = vst.msk [vmem:[%s4 + $0x108] sm:$0xff] %vm739, %v1300
  %1365 = vst.msk [vmem:[%s4 + $0x110] sm:$0xff] %vm739, %v1301
  %1366 = vst.msk [vmem:[%s4 + $0x118] sm:$0xff] %vm739, %v1302
  %1367 = vst.msk [vmem:[%s4 + $0x120] sm:$0xff] %vm739, %v1303
  %1368 = vst.msk [vmem:[%s4 + $0x128] sm:$0xff] %vm739, %v1304
  %1369 = vst.msk [vmem:[%s4 + $0x130] sm:$0xff] %vm739, %v1305
  %1370 = vst.msk [vmem:[%s4 + $0x138] sm:$0xff] %vm739, %v1306
  %1371 = vst.msk [vmem:[%s4 + $0x140] sm:$0xff] %vm739, %v1307
  %1372 = vst.msk [vmem:[%s4 + $0x148] sm:$0xff] %vm739, %v1308
  %1373 = vst.msk [vmem:[%s4 + $0x150] sm:$0xff] %vm739, %v1309
  %1374 = vst.msk [vmem:[%s4 + $0x158] sm:$0xff] %vm739, %v1310
  %1375 = vst.msk [vmem:[%s4 + $0x160] sm:$0xff] %vm739, %v1311
  %1376 = vst.msk [vmem:[%s4 + $0x168] sm:$0xff] %vm739, %v1312
  %1377 = vst.msk [vmem:[%s4 + $0x170] sm:$0xff] %vm739, %v1313
  %1378 = vst.msk [vmem:[%s4 + $0x178] sm:$0xff] %vm739, %v1314
  %1379 = vst.msk [vmem:[%s4 + $0x180] sm:$0xff] %vm739, %v1315
  %1380 = vst.msk [vmem:[%s4 + $0x188] sm:$0xff] %vm739, %v1316
  %1381 = vst.msk [vmem:[%s4 + $0x190] sm:$0xff] %vm739, %v1317
  %1382 = vst.msk [vmem:[%s4 + $0x198] sm:$0xff] %vm739, %v1318
  %1383 = vst.msk [vmem:[%s4 + $0x1a0] sm:$0xff] %vm739, %v1319
  %1384 = vst.msk [vmem:[%s4 + $0x1a8] sm:$0xff] %vm739, %v1320
  %1385 = vst.msk [vmem:[%s4 + $0x1b0] sm:$0xff] %vm739, %v1321
  %1386 = vst.msk [vmem:[%s4 + $0x1b8] sm:$0xff] %vm739, %v1322
  %1387 = vst.msk [vmem:[%s4 + $0x1c0] sm:$0xff] %vm739, %v1323
  %1388 = vst.msk [vmem:[%s4 + $0x1c8] sm:$0xff] %vm739, %v1324
  %1389 = vst.msk [vmem:[%s4 + $0x1d0] sm:$0xff] %vm739, %v1325
  %1390 = vst.msk [vmem:[%s4 + $0x1d8] sm:$0xff] %vm739, %v1326
  %1391 = vst.msk [vmem:[%s4 + $0x1e0] sm:$0xff] %vm739, %v1327
  %1392 = vst.msk [vmem:[%s4 + $0x1e8] sm:$0xff] %vm739, %v1328
  %1393 = vst.msk [vmem:[%s4 + $0x1f0] sm:$0xff] %vm739, %v1329
  %1394 = vst.msk [vmem:[%s4 + $0x1f8] sm:$0xff] %vm739, %v1330
  // Predicated region
  $region18: #{wnet_forward.35} parent=0 // pred_check
    _
  $region19: #{wnet_forward.35} parent=0 // pred_check_branch
    %1396 = sbr.rel (0) target = $region21
  $region20: #{wnet_forward.35} parent=0 // pred_region
    _
  $region21: #{wnet_forward.35} parent=0 // pred_fallthru
    _
  // Predicated region
  $region22: #{wnet_forward.35} parent=0 // pred_check
    _
  $region23: #{wnet_forward.35} parent=0 // pred_check_branch
    %1398 = sbr.rel (0) target = $region25
  $region24: #{wnet_forward.35} parent=0 // pred_region
    _
  $region25: #{wnet_forward.35} parent=0 // pred_fallthru
    _

// kernel: wnet_forward.36
$region0: #{wnet_forward.36}
  #allocation0 [shape = 'u32[]', space=smem, size = 0x4, offset = 0x4, fixed_abs, tag = 'smem constant byte address 0x4 - core index']
  #allocation1 [shape = 'u32[144,128]{1,0:T(1,128)}', space=vmem, size = 0x12000, scoped, tag = 'internal scratch']
  %s0 = inlined_call_operand.vmem [shape: f32[8,128], index: 0, kind: input, shape index: {}]
  %s1 = inlined_call_operand.vmem [shape: f32[8,128], index: 1, kind: input, shape index: {}]
  %s2 = inlined_call_operand.vmem [shape: f32[8,128], index: 2, kind: input, shape index: {}]
  %s3 = inlined_call_operand.vmem [shape: f32[8,128], index: 3, kind: input, shape index: {}]
  %s4 = inlined_call_operand.vmem [shape: f32[8,128], index: 4, kind: output, shape index: {}]
  %s5 = sld [smem:[#allocation0]]
  $region26: #{wnet_forward.36} parent=0
    _
  %s7 = ssub.s32 1, %s5
  %s8 = scalar_select 0, %s7, %s5
  // Predicated region
  $region2: #{wnet_forward.36} parent=0 // pred_check
    _
  $region3: #{wnet_forward.36} parent=0 // pred_check_branch
    %10 = sbr.rel (0) target = $region5
  $region4: #{wnet_forward.36} parent=0 // pred_region
    _
  $region5: #{wnet_forward.36} parent=0 // pred_fallthru
    _
  // Predicated region
  $region6: #{wnet_forward.36} parent=0 // pred_check
    _
  $region7: #{wnet_forward.36} parent=0 // pred_check_branch
    %12 = sbr.rel (0) target = $region9
  $region8: #{wnet_forward.36} parent=0 // pred_region
    _
  $region9: #{wnet_forward.36} parent=0 // pred_fallthru
    _
  // Predicated region
  $region10: #{wnet_forward.36} parent=0 // pred_check
    _
  $region11: #{wnet_forward.36} parent=0 // pred_check_branch
    %14 = sbr.rel (0) target = $region13
  $region12: #{wnet_forward.36} parent=0 // pred_region
    _
  $region13: #{wnet_forward.36} parent=0 // pred_fallthru
    _
  // Predicated region
  $region14: #{wnet_forward.36} parent=0 // pred_check
    _
  $region15: #{wnet_forward.36} parent=0 // pred_check_branch
    %16 = sbr.rel (0) target = $region17
  $region16: #{wnet_forward.36} parent=0 // pred_region
    _
  $region17: #{wnet_forward.36} parent=0 // pred_fallthru
    _
  %v17 = vld [vmem:[%s0] sm:$0xff]
  %v18 = vld [vmem:[%s1] sm:$0xff]
  %v19 = vmax.f32 %v17, %v18
  %v20 = vld [vmem:[%s2] sm:$0xff]
  %v21 = vld [vmem:[%s3] sm:$0xff]
  %v22 = vmax.f32 %v20, %v21
  %v23 = vmax.f32 %v19, %v22
  %24 = vst [vmem:[%s4] sm:$0xff] %v23
  // Predicated region
  $region18: #{wnet_forward.36} parent=0 // pred_check
    _
  $region19: #{wnet_forward.36} parent=0 // pred_check_branch
    %26 = sbr.rel (0) target = $region21
  $region20: #{wnet_forward.36} parent=0 // pred_region
    _
  $region21: #{wnet_forward.36} parent=0 // pred_fallthru
    _
  // Predicated region
  $region22: #{wnet_forward.36} parent=0 // pred_check
    _
  $region23: #{wnet_forward.36} parent=0 // pred_check_branch
    %28 = sbr.rel (0) target = $region25
  $region24: #{wnet_forward.36} parent=0 // pred_region
    _
  $region25: #{wnet_forward.36} parent=0 // pred_fallthru
    _

// kernel: wnet_forward.37
$region0: #{wnet_forward.37}
  #allocation0 [shape = 'u32[]', space=smem, size = 0x4, offset = 0x4, fixed_abs, tag = 'smem constant byte address 0x4 - core index']
  #allocation1 [shape = 'u32[144,128]{1,0:T(1,128)}', space=vmem, size = 0x12000, scoped, tag = 'internal scratch']
  %s0 = inlined_call_operand.vmem [shape: f32[128,72], index: 0, kind: input, shape index: {}]
  %s1 = inlined_call_operand.vmem [shape: f32[72,32], index: 1, kind: input, shape index: {}]
  %s2 = inlined_call_operand.vmem [shape: f32[1,32], index: 2, kind: input, shape index: {}]
  %s3 = inlined_call_operand.vmem [shape: f32[128,32], index: 3, kind: output, shape index: {}]
  %s4 = sld [smem:[#allocation0]]
  $region22: #{wnet_forward.37} parent=0
    _
  %s6 = ssub.s32 1, %s4
  %s7 = scalar_select 0, %s6, %s4
  // Predicated region
  $region2: #{wnet_forward.37} parent=0 // pred_check
    _
  $region3: #{wnet_forward.37} parent=0 // pred_check_branch
    %9 = sbr.rel (0) target = $region5
  $region4: #{wnet_forward.37} parent=0 // pred_region
    _
  $region5: #{wnet_forward.37} parent=0 // pred_fallthru
    _
  // Predicated region
  $region6: #{wnet_forward.37} parent=0 // pred_check
    _
  $region7: #{wnet_forward.37} parent=0 // pred_check_branch
    %11 = sbr.rel (0) target = $region9
  $region8: #{wnet_forward.37} parent=0 // pred_region
    _
  $region9: #{wnet_forward.37} parent=0 // pred_fallthru
    _
  // Predicated region
  $region10: #{wnet_forward.37} parent=0 // pred_check
    _
  $region11: #{wnet_forward.37} parent=0 // pred_check_branch
    %13 = sbr.rel (0) target = $region13
  $region12: #{wnet_forward.37} parent=0 // pred_region
    _
  $region13: #{wnet_forward.37} parent=0 // pred_fallthru
    _
  %v14 = vld [vmem:[%s0] sm:$0xff]
  %v15 = vld [vmem:[%s0 + $0x8] sm:$0xff]
  %v16 = vld [vmem:[%s0 + $0x10] sm:$0xff]
  %v17 = vld [vmem:[%s0 + $0x18] sm:$0xff]
  %v18 = vld [vmem:[%s0 + $0x20] sm:$0xff]
  %v19 = vld [vmem:[%s0 + $0x28] sm:$0xff]
  %v20 = vld [vmem:[%s0 + $0x30] sm:$0xff]
  %v21 = vld [vmem:[%s0 + $0x38] sm:$0xff]
  %v22 = vld [vmem:[%s0 + $0x40] sm:$0xff]
  %v23 = vld [vmem:[%s0 + $0x48] sm:$0xff]
  %v24 = vld [vmem:[%s0 + $0x50] sm:$0xff]
  %v25 = vld [vmem:[%s0 + $0x58] sm:$0xff]
  %v26 = vld [vmem:[%s0 + $0x60] sm:$0xff]
  %v27 = vld [vmem:[%s0 + $0x68] sm:$0xff]
  %v28 = vld [vmem:[%s0 + $0x70] sm:$0xff]
  %v29 = vld [vmem:[%s0 + $0x78] sm:$0xff]
  %v30 = vld [vmem:[%s1] sm:$0xff]
  %v31 = vld [vmem:[%s1 + $0x8] sm:$0xff]
  %v32 = vld [vmem:[%s1 + $0x10] sm:$0xff]
  %v33 = vld [vmem:[%s1 + $0x18] sm:$0xff]
  %v34 = vld [vmem:[%s1 + $0x20] sm:$0xff]
  %v35 = vld [vmem:[%s1 + $0x28] sm:$0xff]
  %v36 = vld [vmem:[%s1 + $0x30] sm:$0xff]
  %v37 = vld [vmem:[%s1 + $0x38] sm:$0xff]
  %v38 = vld [vmem:[%s1 + $0x40] sm:$0xff]
  %v39 = vld [vmem:[%s2] sm:$0x1]
  %v41 = vlaneseq
  %v42 = vshrl.u32 %v41, 7
  %v43 = vsub.s32 0, %v42
  %v44 = vrot.slane %v39, %v43
  %vm46 = vcmask 588800
  %v48 = vsel %vm46, %v14, 0
  %v51 = vsel %vm46, %v15, 0
  %v54 = vsel %vm46, %v16, 0
  %v57 = vsel %vm46, %v17, 0
  %v60 = vsel %vm46, %v18, 0
  %v63 = vsel %vm46, %v19, 0
  %v66 = vsel %vm46, %v20, 0
  %v69 = vsel %vm46, %v21, 0
  %v72 = vsel %vm46, %v22, 0
  %v75 = vsel %vm46, %v23, 0
  %v78 = vsel %vm46, %v24, 0
  %v81 = vsel %vm46, %v25, 0
  %v84 = vsel %vm46, %v26, 0
  %v87 = vsel %vm46, %v27, 0
  %v90 = vsel %vm46, %v28, 0
  %v93 = vsel %vm46, %v29, 0
  %95 = vmatprep.subr.mxu0 0.0
  %96 = vmatpush1.msra.mxu0 %v30
  %97 = vmatprep.subr.mxu0 0.0
  %98 = vmatpush1.msra.mxu0 %v31
  %99 = vmatprep.subr.mxu0 0.0
  %100 = vmatpush1.msra.mxu0 %v32
  %101 = vmatprep.subr.mxu0 0.0
  %102 = vmatpush1.msra.mxu0 %v33
  %103 = vmatprep.subr.mxu0 0.0
  %104 = vmatpush1.msra.mxu0 %v34
  %105 = vmatprep.subr.mxu0 0.0
  %106 = vmatpush1.msra.mxu0 %v35
  %107 = vmatprep.subr.mxu0 0.0
  %108 = vmatpush1.msra.mxu0 %v36
  %109 = vmatprep.subr.mxu0 0.0
  %110 = vmatpush1.msra.mxu0 %v37
  %111 = vmatprep.subr.mxu0 0.0
  %112 = vmatpush1.msra.mxu0 %v38
  %113 = vmatprep.subr.mxu0 0.0
  %114 = vmatpush1.msra.mxu0 0.0
  %115 = vmatprep.subr.mxu0 0.0
  %116 = vmatpush1.msra.mxu0 0.0
  %117 = vmatprep.subr.mxu0 0.0
  %118 = vmatpush1.msra.mxu0 0.0
  %119 = vmatprep.subr.mxu0 0.0
  %120 = vmatpush1.msra.mxu0 0.0
  %121 = vmatprep.subr.mxu0 0.0
  %122 = vmatpush1.msra.mxu0 0.0
  %123 = vmatprep.subr.mxu0 0.0
  %124 = vmatpush1.msra.mxu0 0.0
  %125 = vmatprep.subr.mxu0 0.0
  %126 = vmatpush1.msra.mxu0 0.0
  %127 = vmatprep.subr.mxu0 0.0
  %128 = vmatpush1.msra.mxu0 0.0
  %129 = vmatprep.subr.mxu0 0.0
  %130 = vmatpush1.msra.mxu0 0.0
  %131 = vmatprep.subr.mxu0 0.0
  %132 = vmatpush1.msra.mxu0 0.0
  %133 = vmatprep.subr.mxu0 0.0
  %134 = vmatpush1.msra.mxu0 0.0
  %135 = vmatprep.subr.mxu0 0.0
  %136 = vmatpush1.msra.mxu0 0.0
  %137 = vmatprep.subr.mxu0 0.0
  %138 = vmatpush1.msra.mxu0 0.0
  %139 = vmatprep.subr.mxu0 0.0
  %140 = vmatpush1.msra.mxu0 0.0
  %141 = vmatprep.subr.mxu0 0.0
  %142 = vmatpush1.msra.mxu0 0.0
  %143 = vmatprep.subr.mxu0 0.0
  %144 = vmatpush1.msra.mxu0 0.0
  %145 = vmatprep.subr.mxu0 0.0
  %146 = vmatpush1.msra.mxu0 0.0
  %147 = vmatprep.subr.mxu0 0.0
  %148 = vmatpush1.msra.mxu0 0.0
  %149 = vmatprep.subr.mxu0 0.0
  %150 = vmatpush1.msra.mxu0 0.0
  %151 = vmatprep.subr.mxu0 0.0
  %152 = vmatpush1.msra.mxu0 0.0
  %153 = vmatprep.subr.mxu0 0.0
  %154 = vmatpush1.msra.mxu0 0.0
  %155 = vmatprep.subr.mxu0 0.0
  %156 = vmatpush1.msra.mxu0 0.0
  %157 = vmatprep.subr.mxu0 0.0
  %158 = vmatpush1.msra.mxu0 0.0
  %159 = vmatprep.mubr.f32.mxu0 0.0
  %160 = vmatmul.mubr.f32.gmra.mrb[0].mxu0 %v48
  %v161 = vpop.f32.mrb[0].mxu0
  %v162 = vadd.f32 %v44, %v161
  %v163 = vpop.f32.mrb[0].mxu0
  %164 = vmatprep.mubr.f32.mxu0 0.0
  %165 = vmatmul.mubr.f32.gmra.mrb[0].mxu0 %v51
  %v166 = vpop.f32.mrb[0].mxu0
  %v167 = vadd.f32 %v44, %v166
  %v168 = vpop.f32.mrb[0].mxu0
  %169 = vmatprep.mubr.f32.mxu0 0.0
  %170 = vmatmul.mubr.f32.gmra.mrb[0].mxu0 %v54
  %v171 = vpop.f32.mrb[0].mxu0
  %v172 = vadd.f32 %v44, %v171
  %v173 = vpop.f32.mrb[0].mxu0
  %174 = vmatprep.mubr.f32.mxu0 0.0
  %175 = vmatmul.mubr.f32.gmra.mrb[0].mxu0 %v57
  %v176 = vpop.f32.mrb[0].mxu0
  %v177 = vadd.f32 %v44, %v176
  %v178 = vpop.f32.mrb[0].mxu0
  %179 = vmatprep.mubr.f32.mxu0 0.0
  %180 = vmatmul.mubr.f32.gmra.mrb[0].mxu0 %v60
  %v181 = vpop.f32.mrb[0].mxu0
  %v182 = vadd.f32 %v44, %v181
  %v183 = vpop.f32.mrb[0].mxu0
  %184 = vmatprep.mubr.f32.mxu0 0.0
  %185 = vmatmul.mubr.f32.gmra.mrb[0].mxu0 %v63
  %v186 = vpop.f32.mrb[0].mxu0
  %v187 = vadd.f32 %v44, %v186
  %v188 = vpop.f32.mrb[0].mxu0
  %189 = vmatprep.mubr.f32.mxu0 0.0
  %190 = vmatmul.mubr.f32.gmra.mrb[0].mxu0 %v66
  %v191 = vpop.f32.mrb[0].mxu0
  %v192 = vadd.f32 %v44, %v191
  %v193 = vpop.f32.mrb[0].mxu0
  %194 = vmatprep.mubr.f32.mxu0 0.0
  %195 = vmatmul.mubr.f32.gmra.mrb[0].mxu0 %v69
  %v196 = vpop.f32.mrb[0].mxu0
  %v197 = vadd.f32 %v44, %v196
  %v198 = vpop.f32.mrb[0].mxu0
  %199 = vmatprep.mubr.f32.mxu0 0.0
  %200 = vmatmul.mubr.f32.gmra.mrb[0].mxu0 %v72
  %v201 = vpop.f32.mrb[0].mxu0
  %v202 = vadd.f32 %v44, %v201
  %v203 = vpop.f32.mrb[0].mxu0
  %204 = vmatprep.mubr.f32.mxu0 0.0
  %205 = vmatmul.mubr.f32.gmra.mrb[0].mxu0 %v75
  %v206 = vpop.f32.mrb[0].mxu0
  %v207 = vadd.f32 %v44, %v206
  %v208 = vpop.f32.mrb[0].mxu0
  %209 = vmatprep.mubr.f32.mxu0 0.0
  %210 = vmatmul.mubr.f32.gmra.mrb[0].mxu0 %v78
  %v211 = vpop.f32.mrb[0].mxu0
  %v212 = vadd.f32 %v44, %v211
  %v213 = vpop.f32.mrb[0].mxu0
  %214 = vmatprep.mubr.f32.mxu0 0.0
  %215 = vmatmul.mubr.f32.gmra.mrb[0].mxu0 %v81
  %v216 = vpop.f32.mrb[0].mxu0
  %v217 = vadd.f32 %v44, %v216
  %v218 = vpop.f32.mrb[0].mxu0
  %219 = vmatprep.mubr.f32.mxu0 0.0
  %220 = vmatmul.mubr.f32.gmra.mrb[0].mxu0 %v84
  %v221 = vpop.f32.mrb[0].mxu0
  %v222 = vadd.f32 %v44, %v221
  %v223 = vpop.f32.mrb[0].mxu0
  %224 = vmatprep.mubr.f32.mxu0 0.0
  %225 = vmatmul.mubr.f32.gmra.mrb[0].mxu0 %v87
  %v226 = vpop.f32.mrb[0].mxu0
  %v227 = vadd.f32 %v44, %v226
  %v228 = vpop.f32.mrb[0].mxu0
  %229 = vmatprep.mubr.f32.mxu0 0.0
  %230 = vmatmul.mubr.f32.gmra.mrb[0].mxu0 %v90
  %v231 = vpop.f32.mrb[0].mxu0
  %v232 = vadd.f32 %v44, %v231
  %v233 = vpop.f32.mrb[0].mxu0
  %234 = vmatprep.mubr.f32.mxu0 0.0
  %235 = vmatmul.mubr.f32.gmra.mrb[0].mxu0 %v93
  %v236 = vpop.f32.mrb[0].mxu0
  %v237 = vadd.f32 %v44, %v236
  %v238 = vpop.f32.mrb[0].mxu0
  %239 = vdwg.mxu0
  %v240 = vlaneseq
  %v241 = vand.u32 %v240, 127
  %vm242 = vcmp.lt.s32.totalorder %v241, 16
  %v243 = vmax.f32 %v162, 0.0
  %v244 = vmax.f32 %v167, 0.0
  %v245 = vmax.f32 %v172, 0.0
  %v246 = vmax.f32 %v177, 0.0
  %v247 = vmax.f32 %v182, 0.0
  %v248 = vmax.f32 %v187, 0.0
  %v249 = vmax.f32 %v192, 0.0
  %v250 = vmax.f32 %v197, 0.0
  %v251 = vmax.f32 %v202, 0.0
  %v252 = vmax.f32 %v207, 0.0
  %v253 = vmax.f32 %v212, 0.0
  %v254 = vmax.f32 %v217, 0.0
  %v255 = vmax.f32 %v222, 0.0
  %v256 = vmax.f32 %v227, 0.0
  %v257 = vmax.f32 %v232, 0.0
  %v258 = vmax.f32 %v237, 0.0
  %v259 = vsel %vm242, %v243, %v162
  %v260 = vsel %vm242, %v244, %v167
  %v261 = vsel %vm242, %v245, %v172
  %v262 = vsel %vm242, %v246, %v177
  %v263 = vsel %vm242, %v247, %v182
  %v264 = vsel %vm242, %v248, %v187
  %v265 = vsel %vm242, %v249, %v192
  %v266 = vsel %vm242, %v250, %v197
  %v267 = vsel %vm242, %v251, %v202
  %v268 = vsel %vm242, %v252, %v207
  %v269 = vsel %vm242, %v253, %v212
  %v270 = vsel %vm242, %v254, %v217
  %v271 = vsel %vm242, %v255, %v222
  %v272 = vsel %vm242, %v256, %v227
  %v273 = vsel %vm242, %v257, %v232
  %v274 = vsel %vm242, %v258, %v237
  %vm275 = vcmask 261120
  %v276 = vsel %vm275, %v259, 0.0
  %v277 = vsel %vm275, %v260, 0.0
  %v278 = vadd.f32 %v276, %v277
  %v279 = vsel %vm275, %v261, 0.0
  %v280 = vadd.f32 %v278, %v279
  %v281 = vsel %vm275, %v262, 0.0
  %v282 = vadd.f32 %v280, %v281
  %v283 = vsel %vm275, %v263, 0.0
  %v284 = vadd.f32 %v282, %v283
  %v285 = vsel %vm275, %v264, 0.0
  %v286 = vadd.f32 %v284, %v285
  %v287 = vsel %vm275, %v265, 0.0
  %v288 = vadd.f32 %v286, %v287
  %v289 = vsel %vm275, %v266, 0.0
  %v290 = vadd.f32 %v288, %v289
  %v291 = vsel %vm275, %v267, 0.0
  %v292 = vadd.f32 %v290, %v291
  %v293 = vsel %vm275, %v268, 0.0
  %v294 = vadd.f32 %v292, %v293
  %v295 = vsel %vm275, %v269, 0.0
  %v296 = vadd.f32 %v294, %v295
  %v297 = vsel %vm275, %v270, 0.0
  %v298 = vadd.f32 %v296, %v297
  %v299 = vsel %vm275, %v271, 0.0
  %v300 = vadd.f32 %v298, %v299
  %v301 = vsel %vm275, %v272, 0.0
  %v302 = vadd.f32 %v300, %v301
  %v303 = vsel %vm275, %v273, 0.0
  %v304 = vadd.f32 %v302, %v303
  %v305 = vsel %vm275, %v274, 0.0
  %v306 = vadd.f32 %v304, %v305
  %v307 = vrot.slane %v306, 4
  %v308 = vadd.f32 %v306, %v307
  %v309 = vrot.slane %v308, 2
  %v310 = vadd.f32 %v308, %v309
  %v311 = vrot.slane %v310, 1
  %v312 = vadd.f32 %v310, %v311
  %v313 = vrcp.pop 128.0
  %v314 = vmul.f32 %v312, %v313
  %v315 = vsub.f32 %v259, %v314
  %v316 = vsub.f32 %v260, %v314
  %v317 = vsub.f32 %v261, %v314
  %v318 = vsub.f32 %v262, %v314
  %v319 = vsub.f32 %v263, %v314
  %v320 = vsub.f32 %v264, %v314
  %v321 = vsub.f32 %v265, %v314
  %v322 = vsub.f32 %v266, %v314
  %v323 = vsub.f32 %v267, %v314
  %v324 = vsub.f32 %v268, %v314
  %v325 = vsub.f32 %v269, %v314
  %v326 = vsub.f32 %v270, %v314
  %v327 = vsub.f32 %v271, %v314
  %v328 = vsub.f32 %v272, %v314
  %v329 = vsub.f32 %v273, %v314
  %v330 = vsub.f32 %v274, %v314
  %v331 = vmul.f32 %v315, %v315
  %v332 = vmul.f32 %v316, %v316
  %v333 = vmul.f32 %v317, %v317
  %v334 = vmul.f32 %v318, %v318
  %v335 = vmul.f32 %v319, %v319
  %v336 = vmul.f32 %v320, %v320
  %v337 = vmul.f32 %v321, %v321
  %v338 = vmul.f32 %v322, %v322
  %v339 = vmul.f32 %v323, %v323
  %v340 = vmul.f32 %v324, %v324
  %v341 = vmul.f32 %v325, %v325
  %v342 = vmul.f32 %v326, %v326
  %v343 = vmul.f32 %v327, %v327
  %v344 = vmul.f32 %v328, %v328
  %v345 = vmul.f32 %v329, %v329
  %v346 = vmul.f32 %v330, %v330
  %v347 = vsel %vm275, %v331, 0.0
  %v348 = vsel %vm275, %v332, 0.0
  %v349 = vadd.f32 %v347, %v348
  %v350 = vsel %vm275, %v333, 0.0
  %v351 = vadd.f32 %v349, %v350
  %v352 = vsel %vm275, %v334, 0.0
  %v353 = vadd.f32 %v351, %v352
  %v354 = vsel %vm275, %v335, 0.0
  %v355 = vadd.f32 %v353, %v354
  %v356 = vsel %vm275, %v336, 0.0
  %v357 = vadd.f32 %v355, %v356
  %v358 = vsel %vm275, %v337, 0.0
  %v359 = vadd.f32 %v357, %v358
  %v360 = vsel %vm275, %v338, 0.0
  %v361 = vadd.f32 %v359, %v360
  %v362 = vsel %vm275, %v339, 0.0
  %v363 = vadd.f32 %v361, %v362
  %v364 = vsel %vm275, %v340, 0.0
  %v365 = vadd.f32 %v363, %v364
  %v366 = vsel %vm275, %v341, 0.0
  %v367 = vadd.f32 %v365, %v366
  %v368 = vsel %vm275, %v342, 0.0
  %v369 = vadd.f32 %v367, %v368
  %v370 = vsel %vm275, %v343, 0.0
  %v371 = vadd.f32 %v369, %v370
  %v372 = vsel %vm275, %v344, 0.0
  %v373 = vadd.f32 %v371, %v372
  %v374 = vsel %vm275, %v345, 0.0
  %v375 = vadd.f32 %v373, %v374
  %v376 = vsel %vm275, %v346, 0.0
  %v377 = vadd.f32 %v375, %v376
  %v378 = vrot.slane %v377, 4
  %v379 = vadd.f32 %v377, %v378
  %v380 = vrot.slane %v379, 2
  %v381 = vadd.f32 %v379, %v380
  %v382 = vrot.slane %v381, 1
  %v383 = vadd.f32 %v381, %v382
  %v384 = vmul.f32 %v383, %v313
  %v385 = vadd.f32 %v384, 1e-05
  %v386 = vrsqrt.pop %v385
  %v387 = vmul.f32 %v315, %v386
  %v388 = vmul.f32 %v316, %v386
  %v389 = vmul.f32 %v317, %v386
  %v390 = vmul.f32 %v318, %v386
  %v391 = vmul.f32 %v319, %v386
  %v392 = vmul.f32 %v320, %v386
  %v393 = vmul.f32 %v321, %v386
  %v394 = vmul.f32 %v322, %v386
  %v395 = vmul.f32 %v323, %v386
  %v396 = vmul.f32 %v324, %v386
  %v397 = vmul.f32 %v325, %v386
  %v398 = vmul.f32 %v326, %v386
  %v399 = vmul.f32 %v327, %v386
  %v400 = vmul.f32 %v328, %v386
  %v401 = vmul.f32 %v329, %v386
  %v402 = vmul.f32 %v330, %v386
  %403 = vst.msk [vmem:[%s3] sm:$0xff] %vm275, %v387
  %404 = vst.msk [vmem:[%s3 + $0x8] sm:$0xff] %vm275, %v388
  %405 = vst.msk [vmem:[%s3 + $0x10] sm:$0xff] %vm275, %v389
  %406 = vst.msk [vmem:[%s3 + $0x18] sm:$0xff] %vm275, %v390
  %407 = vst.msk [vmem:[%s3 + $0x20] sm:$0xff] %vm275, %v391
  %408 = vst.msk [vmem:[%s3 + $0x28] sm:$0xff] %vm275, %v392
  %409 = vst.msk [vmem:[%s3 + $0x30] sm:$0xff] %vm275, %v393
  %410 = vst.msk [vmem:[%s3 + $0x38] sm:$0xff] %vm275, %v394
  %411 = vst.msk [vmem:[%s3 + $0x40] sm:$0xff] %vm275, %v395
  %412 = vst.msk [vmem:[%s3 + $0x48] sm:$0xff] %vm275, %v396
  %413 = vst.msk [vmem:[%s3 + $0x50] sm:$0xff] %vm275, %v397
  %414 = vst.msk [vmem:[%s3 + $0x58] sm:$0xff] %vm275, %v398
  %415 = vst.msk [vmem:[%s3 + $0x60] sm:$0xff] %vm275, %v399
  %416 = vst.msk [vmem:[%s3 + $0x68] sm:$0xff] %vm275, %v400
  %417 = vst.msk [vmem:[%s3 + $0x70] sm:$0xff] %vm275, %v401
  %418 = vst.msk [vmem:[%s3 + $0x78] sm:$0xff] %vm275, %v402
  // Predicated region
  $region14: #{wnet_forward.37} parent=0 // pred_check
    _
  $region15: #{wnet_forward.37} parent=0 // pred_check_branch
    %420 = sbr.rel (0) target = $region17
  $region16: #{wnet_forward.37} parent=0 // pred_region
    _
  $region17: #{wnet_forward.37} parent=0 // pred_fallthru
    _
  // Predicated region
  $region18: #{wnet_forward.37} parent=0 // pred_check
    _
  $region19: #{wnet_forward.37} parent=0 // pred_check_branch
    %422 = sbr.rel (0) target = $region21
  $region20: #{wnet_forward.37} parent=0 // pred_region
    _
  $region21: #{wnet_forward.37} parent=0 // pred_fallthru
    _

// kernel: wnet_forward.38
$region0: #{wnet_forward.38}
  #allocation0 [shape = 'u32[]', space=smem, size = 0x4, offset = 0x4, fixed_abs, tag = 'smem constant byte address 0x4 - core index']
  #allocation1 [shape = 'u32[144,128]{1,0:T(1,128)}', space=vmem, size = 0x12000, scoped, tag = 'internal scratch']
  %s0 = inlined_call_operand.vmem [shape: f32[128,144], index: 0, kind: input, shape index: {}]
  %s1 = inlined_call_operand.vmem [shape: f32[144,16], index: 1, kind: input, shape index: {}]
  %s2 = inlined_call_operand.vmem [shape: f32[1,16], index: 2, kind: input, shape index: {}]
  %s3 = inlined_call_operand.vmem [shape: f32[128,16], index: 3, kind: input, shape index: {}]
  %s4 = inlined_call_operand.vmem [shape: f32[128,16], index: 4, kind: output, shape index: {}]
  %s5 = sld [smem:[#allocation0]]
  $region26: #{wnet_forward.38} parent=0
    _
  %s7 = ssub.s32 1, %s5
  %s8 = scalar_select 0, %s7, %s5
  // Predicated region
  $region2: #{wnet_forward.38} parent=0 // pred_check
    _
  $region3: #{wnet_forward.38} parent=0 // pred_check_branch
    %10 = sbr.rel (0) target = $region5
  $region4: #{wnet_forward.38} parent=0 // pred_region
    _
  $region5: #{wnet_forward.38} parent=0 // pred_fallthru
    _
  // Predicated region
  $region6: #{wnet_forward.38} parent=0 // pred_check
    _
  $region7: #{wnet_forward.38} parent=0 // pred_check_branch
    %12 = sbr.rel (0) target = $region9
  $region8: #{wnet_forward.38} parent=0 // pred_region
    _
  $region9: #{wnet_forward.38} parent=0 // pred_fallthru
    _
  // Predicated region
  $region10: #{wnet_forward.38} parent=0 // pred_check
    _
  $region11: #{wnet_forward.38} parent=0 // pred_check_branch
    %14 = sbr.rel (0) target = $region13
  $region12: #{wnet_forward.38} parent=0 // pred_region
    _
  $region13: #{wnet_forward.38} parent=0 // pred_fallthru
    _
  // Predicated region
  $region14: #{wnet_forward.38} parent=0 // pred_check
    _
  $region15: #{wnet_forward.38} parent=0 // pred_check_branch
    %16 = sbr.rel (0) target = $region17
  $region16: #{wnet_forward.38} parent=0 // pred_region
    _
  $region17: #{wnet_forward.38} parent=0 // pred_fallthru
    _
  %v17 = vld [vmem:[%s0] sm:$0xff]
  %v18 = vld [vmem:[%s0 + $0x8] sm:$0xff]
  %v19 = vld [vmem:[%s0 + $0x10] sm:$0xff]
  %v20 = vld [vmem:[%s0 + $0x18] sm:$0xff]
  %v21 = vld [vmem:[%s0 + $0x20] sm:$0xff]
  %v22 = vld [vmem:[%s0 + $0x28] sm:$0xff]
  %v23 = vld [vmem:[%s0 + $0x30] sm:$0xff]
  %v24 = vld [vmem:[%s0 + $0x38] sm:$0xff]
  %v25 = vld [vmem:[%s0 + $0x40] sm:$0xff]
  %v26 = vld [vmem:[%s0 + $0x48] sm:$0xff]
  %v27 = vld [vmem:[%s0 + $0x50] sm:$0xff]
  %v28 = vld [vmem:[%s0 + $0x58] sm:$0xff]
  %v29 = vld [vmem:[%s0 + $0x60] sm:$0xff]
  %v30 = vld [vmem:[%s0 + $0x68] sm:$0xff]
  %v31 = vld [vmem:[%s0 + $0x70] sm:$0xff]
  %v32 = vld [vmem:[%s0 + $0x78] sm:$0xff]
  %v33 = vld [vmem:[%s0 + $0x80] sm:$0xff]
  %v34 = vld [vmem:[%s0 + $0x88] sm:$0xff]
  %v35 = vld [vmem:[%s0 + $0x90] sm:$0xff]
  %v36 = vld [vmem:[%s0 + $0x98] sm:$0xff]
  %v37 = vld [vmem:[%s0 + $0xa0] sm:$0xff]
  %v38 = vld [vmem:[%s0 + $0xa8] sm:$0xff]
  %v39 = vld [vmem:[%s0 + $0xb0] sm:$0xff]
  %v40 = vld [vmem:[%s0 + $0xb8] sm:$0xff]
  %v41 = vld [vmem:[%s0 + $0xc0] sm:$0xff]
  %v42 = vld [vmem:[%s0 + $0xc8] sm:$0xff]
  %v43 = vld [vmem:[%s0 + $0xd0] sm:$0xff]
  %v44 = vld [vmem:[%s0 + $0xd8] sm:$0xff]
  %v45 = vld [vmem:[%s0 + $0xe0] sm:$0xff]
  %v46 = vld [vmem:[%s0 + $0xe8] sm:$0xff]
  %v47 = vld [vmem:[%s0 + $0xf0] sm:$0xff]
  %v48 = vld [vmem:[%s0 + $0xf8] sm:$0xff]
  %v49 = vld [vmem:[%s1] sm:$0xff]
  %v50 = vld [vmem:[%s1 + $0x8] sm:$0xff]
  %v51 = vld [vmem:[%s1 + $0x10] sm:$0xff]
  %v52 = vld [vmem:[%s1 + $0x18] sm:$0xff]
  %v53 = vld [vmem:[%s1 + $0x20] sm:$0xff]
  %v54 = vld [vmem:[%s1 + $0x28] sm:$0xff]
  %v55 = vld [vmem:[%s1 + $0x30] sm:$0xff]
  %v56 = vld [vmem:[%s1 + $0x38] sm:$0xff]
  %v57 = vld [vmem:[%s1 + $0x40] sm:$0xff]
  %v58 = vld [vmem:[%s1 + $0x48] sm:$0xff]
  %v59 = vld [vmem:[%s1 + $0x50] sm:$0xff]
  %v60 = vld [vmem:[%s1 + $0x58] sm:$0xff]
  %v61 = vld [vmem:[%s1 + $0x60] sm:$0xff]
  %v62 = vld [vmem:[%s1 + $0x68] sm:$0xff]
  %v63 = vld [vmem:[%s1 + $0x70] sm:$0xff]
  %v64 = vld [vmem:[%s1 + $0x78] sm:$0xff]
  %v65 = vld [vmem:[%s1 + $0x80] sm:$0xff]
  %v66 = vld [vmem:[%s1 + $0x88] sm:$0xff]
  %v67 = vld [vmem:[%s2] sm:$0x1]
  %v69 = vlaneseq
  %v70 = vshrl.u32 %v69, 7
  %v71 = vsub.s32 0, %v70
  %v72 = vrot.slane %v67, %v71
  %vm74 = vcmask 130048
  %v76 = vsel %vm74, %v18, 0
  %v79 = vsel %vm74, %v20, 0
  %v82 = vsel %vm74, %v22, 0
  %v85 = vsel %vm74, %v24, 0
  %v88 = vsel %vm74, %v26, 0
  %v91 = vsel %vm74, %v28, 0
  %v94 = vsel %vm74, %v30, 0
  %v97 = vsel %vm74, %v32, 0
  %v100 = vsel %vm74, %v34, 0
  %v103 = vsel %vm74, %v36, 0
  %v106 = vsel %vm74, %v38, 0
  %v109 = vsel %vm74, %v40, 0
  %v112 = vsel %vm74, %v42, 0
  %v115 = vsel %vm74, %v44, 0
  %v118 = vsel %vm74, %v46, 0
  %v121 = vsel %vm74, %v48, 0
  %123 = vmatprep.subr.mxu0 0.0
  %124 = vmatpush1.msra.mxu0 %v49
  %125 = vmatprep.subr.mxu0 0.0
  %126 = vmatpush1.msra.mxu0 %v50
  %127 = vmatprep.subr.mxu0 0.0
  %128 = vmatpush1.msra.mxu0 %v51
  %129 = vmatprep.subr.mxu0 0.0
  %130 = vmatpush1.msra.mxu0 %v52
  %131 = vmatprep.subr.mxu0 0.0
  %132 = vmatpush1.msra.mxu0 %v53
  %133 = vmatprep.subr.mxu0 0.0
  %134 = vmatpush1.msra.mxu0 %v54
  %135 = vmatprep.subr.mxu0 0.0
  %136 = vmatpush1.msra.mxu0 %v55
  %137 = vmatprep.subr.mxu0 0.0
  %138 = vmatpush1.msra.mxu0 %v56
  %139 = vmatprep.subr.mxu0 0.0
  %140 = vmatpush1.msra.mxu0 %v57
  %141 = vmatprep.subr.mxu0 0.0
  %142 = vmatpush1.msra.mxu0 %v58
  %143 = vmatprep.subr.mxu0 0.0
  %144 = vmatpush1.msra.mxu0 %v59
  %145 = vmatprep.subr.mxu0 0.0
  %146 = vmatpush1.msra.mxu0 %v60
  %147 = vmatprep.subr.mxu0 0.0
  %148 = vmatpush1.msra.mxu0 %v61
  %149 = vmatprep.subr.mxu0 0.0
  %150 = vmatpush1.msra.mxu0 %v62
  %151 = vmatprep.subr.mxu0 0.0
  %152 = vmatpush1.msra.mxu0 %v63
  %153 = vmatprep.subr.mxu0 0.0
  %154 = vmatpush1.msra.mxu0 %v64
  %155 = vmatprep.subr.mxu0 0.0
  %156 = vmatpush1.msra.mxu0 %v65
  %157 = vmatprep.subr.mxu0 0.0
  %158 = vmatpush1.msra.mxu0 %v66
  %159 = vmatprep.subr.mxu0 0.0
  %160 = vmatpush1.msra.mxu0 0.0
  %161 = vmatprep.subr.mxu0 0.0
  %162 = vmatpush1.msra.mxu0 0.0
  %163 = vmatprep.subr.mxu0 0.0
  %164 = vmatpush1.msra.mxu0 0.0
  %165 = vmatprep.subr.mxu0 0.0
  %166 = vmatpush1.msra.mxu0 0.0
  %167 = vmatprep.subr.mxu0 0.0
  %168 = vmatpush1.msra.mxu0 0.0
  %169 = vmatprep.subr.mxu0 0.0
  %170 = vmatpush1.msra.mxu0 0.0
  %171 = vmatprep.subr.mxu0 0.0
  %172 = vmatpush1.msra.mxu0 0.0
  %173 = vmatprep.subr.mxu0 0.0
  %174 = vmatpush1.msra.mxu0 0.0
  %175 = vmatprep.subr.mxu0 0.0
  %176 = vmatpush1.msra.mxu0 0.0
  %177 = vmatprep.subr.mxu0 0.0
  %178 = vmatpush1.msra.mxu0 0.0
  %179 = vmatprep.subr.mxu0 0.0
  %180 = vmatpush1.msra.mxu0 0.0
  %181 = vmatprep.subr.mxu0 0.0
  %182 = vmatpush1.msra.mxu0 0.0
  %183 = vmatprep.subr.mxu0 0.0
  %184 = vmatpush1.msra.mxu0 0.0
  %185 = vmatprep.subr.mxu0 0.0
  %186 = vmatpush1.msra.mxu0 0.0
  %187 = vmatprep.mubr.f32.mxu0 %v76
  %188 = vmatmul.mubr.f32.gmra.mrb[0].mxu0 %v17
  %v189 = vpop.f32.mrb[0].mxu0
  %v190 = vadd.f32 %v72, %v189
  %v191 = vpop.f32.mrb[0].mxu0
  %192 = vmatprep.mubr.f32.mxu0 %v79
  %193 = vmatmul.mubr.f32.gmra.mrb[0].mxu0 %v19
  %v194 = vpop.f32.mrb[0].mxu0
  %v195 = vadd.f32 %v72, %v194
  %v196 = vpop.f32.mrb[0].mxu0
  %197 = vmatprep.mubr.f32.mxu0 %v82
  %198 = vmatmul.mubr.f32.gmra.mrb[0].mxu0 %v21
  %v199 = vpop.f32.mrb[0].mxu0
  %v200 = vadd.f32 %v72, %v199
  %v201 = vpop.f32.mrb[0].mxu0
  %202 = vmatprep.mubr.f32.mxu0 %v85
  %203 = vmatmul.mubr.f32.gmra.mrb[0].mxu0 %v23
  %v204 = vpop.f32.mrb[0].mxu0
  %v205 = vadd.f32 %v72, %v204
  %v206 = vpop.f32.mrb[0].mxu0
  %207 = vmatprep.mubr.f32.mxu0 %v88
  %208 = vmatmul.mubr.f32.gmra.mrb[0].mxu0 %v25
  %v209 = vpop.f32.mrb[0].mxu0
  %v210 = vadd.f32 %v72, %v209
  %v211 = vpop.f32.mrb[0].mxu0
  %212 = vmatprep.mubr.f32.mxu0 %v91
  %213 = vmatmul.mubr.f32.gmra.mrb[0].mxu0 %v27
  %v214 = vpop.f32.mrb[0].mxu0
  %v215 = vadd.f32 %v72, %v214
  %v216 = vpop.f32.mrb[0].mxu0
  %217 = vmatprep.mubr.f32.mxu0 %v94
  %218 = vmatmul.mubr.f32.gmra.mrb[0].mxu0 %v29
  %v219 = vpop.f32.mrb[0].mxu0
  %v220 = vadd.f32 %v72, %v219
  %v221 = vpop.f32.mrb[0].mxu0
  %222 = vmatprep.mubr.f32.mxu0 %v97
  %223 = vmatmul.mubr.f32.gmra.mrb[0].mxu0 %v31
  %v224 = vpop.f32.mrb[0].mxu0
  %v225 = vadd.f32 %v72, %v224
  %v226 = vpop.f32.mrb[0].mxu0
  %227 = vmatprep.mubr.f32.mxu0 %v100
  %228 = vmatmul.mubr.f32.gmra.mrb[0].mxu0 %v33
  %v229 = vpop.f32.mrb[0].mxu0
  %v230 = vadd.f32 %v72, %v229
  %v231 = vpop.f32.mrb[0].mxu0
  %232 = vmatprep.mubr.f32.mxu0 %v103
  %233 = vmatmul.mubr.f32.gmra.mrb[0].mxu0 %v35
  %v234 = vpop.f32.mrb[0].mxu0
  %v235 = vadd.f32 %v72, %v234
  %v236 = vpop.f32.mrb[0].mxu0
  %237 = vmatprep.mubr.f32.mxu0 %v106
  %238 = vmatmul.mubr.f32.gmra.mrb[0].mxu0 %v37
  %v239 = vpop.f32.mrb[0].mxu0
  %v240 = vadd.f32 %v72, %v239
  %v241 = vpop.f32.mrb[0].mxu0
  %242 = vmatprep.mubr.f32.mxu0 %v109
  %243 = vmatmul.mubr.f32.gmra.mrb[0].mxu0 %v39
  %v244 = vpop.f32.mrb[0].mxu0
  %v245 = vadd.f32 %v72, %v244
  %v246 = vpop.f32.mrb[0].mxu0
  %247 = vmatprep.mubr.f32.mxu0 %v112
  %248 = vmatmul.mubr.f32.gmra.mrb[0].mxu0 %v41
  %v249 = vpop.f32.mrb[0].mxu0
  %v250 = vadd.f32 %v72, %v249
  %v251 = vpop.f32.mrb[0].mxu0
  %252 = vmatprep.mubr.f32.mxu0 %v115
  %253 = vmatmul.mubr.f32.gmra.mrb[0].mxu0 %v43
  %v254 = vpop.f32.mrb[0].mxu0
  %v255 = vadd.f32 %v72, %v254
  %v256 = vpop.f32.mrb[0].mxu0
  %257 = vmatprep.mubr.f32.mxu0 %v118
  %258 = vmatmul.mubr.f32.gmra.mrb[0].mxu0 %v45
  %v259 = vpop.f32.mrb[0].mxu0
  %v260 = vadd.f32 %v72, %v259
  %v261 = vpop.f32.mrb[0].mxu0
  %262 = vmatprep.mubr.f32.mxu0 %v121
  %263 = vmatmul.mubr.f32.gmra.mrb[0].mxu0 %v47
  %v264 = vpop.f32.mrb[0].mxu0
  %v265 = vadd.f32 %v72, %v264
  %v266 = vpop.f32.mrb[0].mxu0
  %267 = vdwg.mxu0
  %v268 = vmax.f32 %v190, 0.0
  %v269 = vmax.f32 %v195, 0.0
  %v270 = vmax.f32 %v200, 0.0
  %v271 = vmax.f32 %v205, 0.0
  %v272 = vmax.f32 %v210, 0.0
  %v273 = vmax.f32 %v215, 0.0
  %v274 = vmax.f32 %v220, 0.0
  %v275 = vmax.f32 %v225, 0.0
  %v276 = vmax.f32 %v230, 0.0
  %v277 = vmax.f32 %v235, 0.0
  %v278 = vmax.f32 %v240, 0.0
  %v279 = vmax.f32 %v245, 0.0
  %v280 = vmax.f32 %v250, 0.0
  %v281 = vmax.f32 %v255, 0.0
  %v282 = vmax.f32 %v260, 0.0
  %v283 = vmax.f32 %v265, 0.0
  %v284 = vsel %vm74, %v268, 0.0
  %v285 = vsel %vm74, %v269, 0.0
  %v286 = vadd.f32 %v284, %v285
  %v287 = vsel %vm74, %v270, 0.0
  %v288 = vadd.f32 %v286, %v287
  %v289 = vsel %vm74, %v271, 0.0
  %v290 = vadd.f32 %v288, %v289
  %v291 = vsel %vm74, %v272, 0.0
  %v292 = vadd.f32 %v290, %v291
  %v293 = vsel %vm74, %v273, 0.0
  %v294 = vadd.f32 %v292, %v293
  %v295 = vsel %vm74, %v274, 0.0
  %v296 = vadd.f32 %v294, %v295
  %v297 = vsel %vm74, %v275, 0.0
  %v298 = vadd.f32 %v296, %v297
  %v299 = vsel %vm74, %v276, 0.0
  %v300 = vadd.f32 %v298, %v299
  %v301 = vsel %vm74, %v277, 0.0
  %v302 = vadd.f32 %v300, %v301
  %v303 = vsel %vm74, %v278, 0.0
  %v304 = vadd.f32 %v302, %v303
  %v305 = vsel %vm74, %v279, 0.0
  %v306 = vadd.f32 %v304, %v305
  %v307 = vsel %vm74, %v280, 0.0
  %v308 = vadd.f32 %v306, %v307
  %v309 = vsel %vm74, %v281, 0.0
  %v310 = vadd.f32 %v308, %v309
  %v311 = vsel %vm74, %v282, 0.0
  %v312 = vadd.f32 %v310, %v311
  %v313 = vsel %vm74, %v283, 0.0
  %v314 = vadd.f32 %v312, %v313
  %v315 = vrot.slane %v314, 4
  %v316 = vadd.f32 %v314, %v315
  %v317 = vrot.slane %v316, 2
  %v318 = vadd.f32 %v316, %v317
  %v319 = vrot.slane %v318, 1
  %v320 = vadd.f32 %v318, %v319
  %v321 = vrcp.pop 128.0
  %v322 = vmul.f32 %v320, %v321
  %v323 = vsub.f32 %v268, %v322
  %v324 = vsub.f32 %v269, %v322
  %v325 = vsub.f32 %v270, %v322
  %v326 = vsub.f32 %v271, %v322
  %v327 = vsub.f32 %v272, %v322
  %v328 = vsub.f32 %v273, %v322
  %v329 = vsub.f32 %v274, %v322
  %v330 = vsub.f32 %v275, %v322
  %v331 = vsub.f32 %v276, %v322
  %v332 = vsub.f32 %v277, %v322
  %v333 = vsub.f32 %v278, %v322
  %v334 = vsub.f32 %v279, %v322
  %v335 = vsub.f32 %v280, %v322
  %v336 = vsub.f32 %v281, %v322
  %v337 = vsub.f32 %v282, %v322
  %v338 = vsub.f32 %v283, %v322
  %v339 = vmul.f32 %v323, %v323
  %v340 = vmul.f32 %v324, %v324
  %v341 = vmul.f32 %v325, %v325
  %v342 = vmul.f32 %v326, %v326
  %v343 = vmul.f32 %v327, %v327
  %v344 = vmul.f32 %v328, %v328
  %v345 = vmul.f32 %v329, %v329
  %v346 = vmul.f32 %v330, %v330
  %v347 = vmul.f32 %v331, %v331
  %v348 = vmul.f32 %v332, %v332
  %v349 = vmul.f32 %v333, %v333
  %v350 = vmul.f32 %v334, %v334
  %v351 = vmul.f32 %v335, %v335
  %v352 = vmul.f32 %v336, %v336
  %v353 = vmul.f32 %v337, %v337
  %v354 = vmul.f32 %v338, %v338
  %v355 = vsel %vm74, %v339, 0.0
  %v356 = vsel %vm74, %v340, 0.0
  %v357 = vadd.f32 %v355, %v356
  %v358 = vsel %vm74, %v341, 0.0
  %v359 = vadd.f32 %v357, %v358
  %v360 = vsel %vm74, %v342, 0.0
  %v361 = vadd.f32 %v359, %v360
  %v362 = vsel %vm74, %v343, 0.0
  %v363 = vadd.f32 %v361, %v362
  %v364 = vsel %vm74, %v344, 0.0
  %v365 = vadd.f32 %v363, %v364
  %v366 = vsel %vm74, %v345, 0.0
  %v367 = vadd.f32 %v365, %v366
  %v368 = vsel %vm74, %v346, 0.0
  %v369 = vadd.f32 %v367, %v368
  %v370 = vsel %vm74, %v347, 0.0
  %v371 = vadd.f32 %v369, %v370
  %v372 = vsel %vm74, %v348, 0.0
  %v373 = vadd.f32 %v371, %v372
  %v374 = vsel %vm74, %v349, 0.0
  %v375 = vadd.f32 %v373, %v374
  %v376 = vsel %vm74, %v350, 0.0
  %v377 = vadd.f32 %v375, %v376
  %v378 = vsel %vm74, %v351, 0.0
  %v379 = vadd.f32 %v377, %v378
  %v380 = vsel %vm74, %v352, 0.0
  %v381 = vadd.f32 %v379, %v380
  %v382 = vsel %vm74, %v353, 0.0
  %v383 = vadd.f32 %v381, %v382
  %v384 = vsel %vm74, %v354, 0.0
  %v385 = vadd.f32 %v383, %v384
  %v386 = vrot.slane %v385, 4
  %v387 = vadd.f32 %v385, %v386
  %v388 = vrot.slane %v387, 2
  %v389 = vadd.f32 %v387, %v388
  %v390 = vrot.slane %v389, 1
  %v391 = vadd.f32 %v389, %v390
  %v392 = vmul.f32 %v391, %v321
  %v393 = vadd.f32 %v392, 1e-05
  %v394 = vrsqrt.pop %v393
  %v395 = vmul.f32 %v323, %v394
  %v396 = vmul.f32 %v324, %v394
  %v397 = vmul.f32 %v325, %v394
  %v398 = vmul.f32 %v326, %v394
  %v399 = vmul.f32 %v327, %v394
  %v400 = vmul.f32 %v328, %v394
  %v401 = vmul.f32 %v329, %v394
  %v402 = vmul.f32 %v330, %v394
  %v403 = vmul.f32 %v331, %v394
  %v404 = vmul.f32 %v332, %v394
  %v405 = vmul.f32 %v333, %v394
  %v406 = vmul.f32 %v334, %v394
  %v407 = vmul.f32 %v335, %v394
  %v408 = vmul.f32 %v336, %v394
  %v409 = vmul.f32 %v337, %v394
  %v410 = vmul.f32 %v338, %v394
  %v411 = vld [vmem:[%s3] sm:$0xff]
  %v412 = vld [vmem:[%s3 + $0x8] sm:$0xff]
  %v413 = vld [vmem:[%s3 + $0x10] sm:$0xff]
  %v414 = vld [vmem:[%s3 + $0x18] sm:$0xff]
  %v415 = vld [vmem:[%s3 + $0x20] sm:$0xff]
  %v416 = vld [vmem:[%s3 + $0x28] sm:$0xff]
  %v417 = vld [vmem:[%s3 + $0x30] sm:$0xff]
  %v418 = vld [vmem:[%s3 + $0x38] sm:$0xff]
  %v419 = vld [vmem:[%s3 + $0x40] sm:$0xff]
  %v420 = vld [vmem:[%s3 + $0x48] sm:$0xff]
  %v421 = vld [vmem:[%s3 + $0x50] sm:$0xff]
  %v422 = vld [vmem:[%s3 + $0x58] sm:$0xff]
  %v423 = vld [vmem:[%s3 + $0x60] sm:$0xff]
  %v424 = vld [vmem:[%s3 + $0x68] sm:$0xff]
  %v425 = vld [vmem:[%s3 + $0x70] sm:$0xff]
  %v426 = vld [vmem:[%s3 + $0x78] sm:$0xff]
  %v427 = vadd.f32 %v395, %v411
  %v428 = vadd.f32 %v396, %v412
  %v429 = vadd.f32 %v397, %v413
  %v430 = vadd.f32 %v398, %v414
  %v431 = vadd.f32 %v399, %v415
  %v432 = vadd.f32 %v400, %v416
  %v433 = vadd.f32 %v401, %v417
  %v434 = vadd.f32 %v402, %v418
  %v435 = vadd.f32 %v403, %v419
  %v436 = vadd.f32 %v404, %v420
  %v437 = vadd.f32 %v405, %v421
  %v438 = vadd.f32 %v406, %v422
  %v439 = vadd.f32 %v407, %v423
  %v440 = vadd.f32 %v408, %v424
  %v441 = vadd.f32 %v409, %v425
  %v442 = vadd.f32 %v410, %v426
  %443 = vst.msk [vmem:[%s4] sm:$0xff] %vm74, %v427
  %444 = vst.msk [vmem:[%s4 + $0x8] sm:$0xff] %vm74, %v428
  %445 = vst.msk [vmem:[%s4 + $0x10] sm:$0xff] %vm74, %v429
  %446 = vst.msk [vmem:[%s4 + $0x18] sm:$0xff] %vm74, %v430
  %447 = vst.msk [vmem:[%s4 + $0x20] sm:$0xff] %vm74, %v431
  %448 = vst.msk [vmem:[%s4 + $0x28] sm:$0xff] %vm74, %v432
  %449 = vst.msk [vmem:[%s4 + $0x30] sm:$0xff] %vm74, %v433
  %450 = vst.msk [vmem:[%s4 + $0x38] sm:$0xff] %vm74, %v434
  %451 = vst.msk [vmem:[%s4 + $0x40] sm:$0xff] %vm74, %v435
  %452 = vst.msk [vmem:[%s4 + $0x48] sm:$0xff] %vm74, %v436
  %453 = vst.msk [vmem:[%s4 + $0x50] sm:$0xff] %vm74, %v437
  %454 = vst.msk [vmem:[%s4 + $0x58] sm:$0xff] %vm74, %v438
  %455 = vst.msk [vmem:[%s4 + $0x60] sm:$0xff] %vm74, %v439
  %456 = vst.msk [vmem:[%s4 + $0x68] sm:$0xff] %vm74, %v440
  %457 = vst.msk [vmem:[%s4 + $0x70] sm:$0xff] %vm74, %v441
  %458 = vst.msk [vmem:[%s4 + $0x78] sm:$0xff] %vm74, %v442
  // Predicated region
  $region18: #{wnet_forward.38} parent=0 // pred_check
    _
  $region19: #{wnet_forward.38} parent=0 // pred_check_branch
    %460 = sbr.rel (0) target = $region21
  $region20: #{wnet_forward.38} parent=0 // pred_region
    _
  $region21: #{wnet_forward.38} parent=0 // pred_fallthru
    _
  // Predicated region
  $region22: #{wnet_forward.38} parent=0 // pred_check
    _
  $region23: #{wnet_forward.38} parent=0 // pred_check_branch
    %462 = sbr.rel (0) target = $region25
  $region24: #{wnet_forward.38} parent=0 // pred_region
    _
  $region25: #{wnet_forward.38} parent=0 // pred_fallthru
    _

// kernel: wnet_forward.39
$region0: #{wnet_forward.39}
  #allocation0 [shape = 'u32[]', space=smem, size = 0x4, offset = 0x4, fixed_abs, tag = 'smem constant byte address 0x4 - core index']
  #allocation1 [shape = 'u32[144,128]{1,0:T(1,128)}', space=vmem, size = 0x12000, scoped, tag = 'internal scratch']
  %s0 = inlined_call_operand.vmem [shape: f32[4,128], index: 0, kind: input, shape index: {}]
  %s1 = inlined_call_operand.vmem [shape: f32[4,128], index: 1, kind: input, shape index: {}]
  %s2 = inlined_call_operand.vmem [shape: f32[4,128], index: 2, kind: input, shape index: {}]
  %s3 = inlined_call_operand.vmem [shape: f32[4,128], index: 3, kind: input, shape index: {}]
  %s4 = inlined_call_operand.vmem [shape: f32[4,128], index: 4, kind: output, shape index: {}]
  %s5 = sld [smem:[#allocation0]]
  $region26: #{wnet_forward.39} parent=0
    _
  %s7 = ssub.s32 1, %s5
  %s8 = scalar_select 0, %s7, %s5
  // Predicated region
  $region2: #{wnet_forward.39} parent=0 // pred_check
    _
  $region3: #{wnet_forward.39} parent=0 // pred_check_branch
    %10 = sbr.rel (0) target = $region5
  $region4: #{wnet_forward.39} parent=0 // pred_region
    _
  $region5: #{wnet_forward.39} parent=0 // pred_fallthru
    _
  // Predicated region
  $region6: #{wnet_forward.39} parent=0 // pred_check
    _
  $region7: #{wnet_forward.39} parent=0 // pred_check_branch
    %12 = sbr.rel (0) target = $region9
  $region8: #{wnet_forward.39} parent=0 // pred_region
    _
  $region9: #{wnet_forward.39} parent=0 // pred_fallthru
    _
  // Predicated region
  $region10: #{wnet_forward.39} parent=0 // pred_check
    _
  $region11: #{wnet_forward.39} parent=0 // pred_check_branch
    %14 = sbr.rel (0) target = $region13
  $region12: #{wnet_forward.39} parent=0 // pred_region
    _
  $region13: #{wnet_forward.39} parent=0 // pred_fallthru
    _
  // Predicated region
  $region14: #{wnet_forward.39} parent=0 // pred_check
    _
  $region15: #{wnet_forward.39} parent=0 // pred_check_branch
    %16 = sbr.rel (0) target = $region17
  $region16: #{wnet_forward.39} parent=0 // pred_region
    _
  $region17: #{wnet_forward.39} parent=0 // pred_fallthru
    _
  %v17 = vld [vmem:[%s0] sm:$0xf]
  %v18 = vld [vmem:[%s1] sm:$0xf]
  %v19 = vmax.f32 %v17, %v18
  %v20 = vld [vmem:[%s2] sm:$0xf]
  %v21 = vld [vmem:[%s3] sm:$0xf]
  %v22 = vmax.f32 %v20, %v21
  %v23 = vmax.f32 %v19, %v22
  %24 = vst [vmem:[%s4] sm:$0xf] %v23
  // Predicated region
  $region18: #{wnet_forward.39} parent=0 // pred_check
    _
  $region19: #{wnet_forward.39} parent=0 // pred_check_branch
    %26 = sbr.rel (0) target = $region21
  $region20: #{wnet_forward.39} parent=0 // pred_region
    _
  $region21: #{wnet_forward.39} parent=0 // pred_fallthru
    _
  // Predicated region
  $region22: #{wnet_forward.39} parent=0 // pred_check
    _
  $region23: #{wnet_forward.39} parent=0 // pred_check_branch
    %28 = sbr.rel (0) target = $region25
  $region24: #{wnet_forward.39} parent=0 // pred_region
    _
  $region25: #{wnet_forward.39} parent=0 // pred_fallthru
    _

// kernel: tile.23
$region0: #{tile.23}
  #allocation0 [shape = 's32[1]{0}', space=sflag, size = 0x4, scoped, tag = 'scoped memory for tile.23']
  %s0 = inlined_call_operand.vmem [shape: f32[16], index: 0, kind: input, shape index: {}]
  %s1 = inlined_call_operand.vmem [shape: f32[4,16], index: 1, kind: output, shape index: {}]
  // Predicated region
  $region2: #{tile.23} parent=0 // pred_check
    _
  $region3: #{tile.23} parent=0 // pred_check_branch
    %3 = sbr.rel (0) target = $region5
  $region4: #{tile.23} parent=0 // pred_region
    _
  $region5: #{tile.23} parent=0 // pred_fallthru
    _
  %v4 = vld [vmem:[%s0] ss:$0 sm:$0xff]
  %5 = vst [vmem:[%s1] sm:$0xf] %v4

// kernel: tile.24
$region0: #{tile.24}
  %s0 = inlined_call_operand.vmem [shape: f32[4,16], index: 0, kind: input, shape index: {}]
  %s1 = inlined_call_operand.vmem [shape: f32[1,64], index: 1, kind: output, shape index: {}]
  $region1: #{tile.24} parent=0
    #allocation0 [shape = 'u8[4096]{0}', space=vmem, size = 0x1000, scoped, tag = 'scoped mem for output reshape']
    #allocation1 [shape = 'u8[4096]{0}', space=vmem, size = 0x1000, scoped, tag = 'scoped mem for input reshape']
    %s3 = sshllo.u32 0, 4
    %v4 = vld [vmem:[%s0] sm:%s3]
    %5 = vst [vmem:[#allocation1] sm:%s3] %v4
    %v6 = vld [vmem:[#allocation1] sm:$0x1]
    %vm7 = vcmask 130048
    %8 = vst.msk [vmem:[#allocation0] sm:$0x1] %vm7, %v6
    %s9 = scalar_lea.vmem [#allocation1], 3
    %v10 = vld [vmem:[%s9] sm:$0x1]
    %11 = vrot.lane.b32.xlu0 %v10, 48
    %v12 = vpop.permute.xlu0 %11
    %vm13 = vcmask 523648
    %14 = vst.msk [vmem:[#allocation0] sm:$0x1] %vm13, %v12
    %s15 = scalar_lea.vmem [#allocation1], 2
    %v16 = vld [vmem:[%s15] sm:$0x1]
    %17 = vrot.lane.b32.xlu0 %v16, 32
    %v18 = vpop.permute.xlu0 %17
    %vm19 = vcmask 392448
    %20 = vst.msk [vmem:[#allocation0] sm:$0x1] %vm19, %v18
    %s21 = scalar_lea.vmem [#allocation1], 1
    %v22 = vld [vmem:[%s21] sm:$0x1]
    %23 = vrot.lane.b32.xlu0 %v22, 16
    %v24 = vpop.permute.xlu0 %23
    %vm25 = vcmask 261248
    %26 = vst.msk [vmem:[#allocation0] sm:$0x1] %vm25, %v24
    %s28 = sshllo.u32 0, 1
    %v30 = vld [vmem:[#allocation0] sm:%s28]
    %s31 = sshllo.u32 0, 1
    %32 = vst [vmem:[%s1] sm:%s31] %v30

// kernel: wnet_forward.40
$region0: #{wnet_forward.40}
  #allocation0 [shape = 'u32[]', space=smem, size = 0x4, offset = 0x4, fixed_abs, tag = 'smem constant byte address 0x4 - core index']
  #allocation1 [shape = 'u32[144,128]{1,0:T(1,128)}', space=vmem, size = 0x12000, scoped, tag = 'internal scratch']
  %s0 = inlined_call_operand.vmem [shape: f32[32,144], index: 0, kind: input, shape index: {}]
  %s1 = inlined_call_operand.vmem [shape: f32[144,64], index: 1, kind: input, shape index: {}]
  %s2 = inlined_call_operand.vmem [shape: f32[1,64], index: 2, kind: input, shape index: {}]
  %s3 = inlined_call_operand.vmem [shape: f32[32,64], index: 3, kind: output, shape index: {}]
  %s4 = sld [smem:[#allocation0]]
  $region22: #{wnet_forward.40} parent=0
    _
  %s6 = ssub.s32 1, %s4
  %s7 = scalar_select 0, %s6, %s4
  // Predicated region
  $region2: #{wnet_forward.40} parent=0 // pred_check
    _
  $region3: #{wnet_forward.40} parent=0 // pred_check_branch
    %9 = sbr.rel (0) target = $region5
  $region4: #{wnet_forward.40} parent=0 // pred_region
    _
  $region5: #{wnet_forward.40} parent=0 // pred_fallthru
    _
  // Predicated region
  $region6: #{wnet_forward.40} parent=0 // pred_check
    _
  $region7: #{wnet_forward.40} parent=0 // pred_check_branch
    %11 = sbr.rel (0) target = $region9
  $region8: #{wnet_forward.40} parent=0 // pred_region
    _
  $region9: #{wnet_forward.40} parent=0 // pred_fallthru
    _
  // Predicated region
  $region10: #{wnet_forward.40} parent=0 // pred_check
    _
  $region11: #{wnet_forward.40} parent=0 // pred_check_branch
    %13 = sbr.rel (0) target = $region13
  $region12: #{wnet_forward.40} parent=0 // pred_region
    _
  $region13: #{wnet_forward.40} parent=0 // pred_fallthru
    _
  %v14 = vld [vmem:[%s0] sm:$0xff]
  %v15 = vld [vmem:[%s0 + $0x8] sm:$0xff]
  %v16 = vld [vmem:[%s0 + $0x10] sm:$0xff]
  %v17 = vld [vmem:[%s0 + $0x18] sm:$0xff]
  %v18 = vld [vmem:[%s0 + $0x20] sm:$0xff]
  %v19 = vld [vmem:[%s0 + $0x28] sm:$0xff]
  %v20 = vld [vmem:[%s0 + $0x30] sm:$0xff]
  %v21 = vld [vmem:[%s0 + $0x38] sm:$0xff]
  %v22 = vld [vmem:[%s1] sm:$0xff]
  %v23 = vld [vmem:[%s1 + $0x8] sm:$0xff]
  %v24 = vld [vmem:[%s1 + $0x10] sm:$0xff]
  %v25 = vld [vmem:[%s1 + $0x18] sm:$0xff]
  %v26 = vld [vmem:[%s1 + $0x20] sm:$0xff]
  %v27 = vld [vmem:[%s1 + $0x28] sm:$0xff]
  %v28 = vld [vmem:[%s1 + $0x30] sm:$0xff]
  %v29 = vld [vmem:[%s1 + $0x38] sm:$0xff]
  %v30 = vld [vmem:[%s1 + $0x40] sm:$0xff]
  %v31 = vld [vmem:[%s1 + $0x48] sm:$0xff]
  %v32 = vld [vmem:[%s1 + $0x50] sm:$0xff]
  %v33 = vld [vmem:[%s1 + $0x58] sm:$0xff]
  %v34 = vld [vmem:[%s1 + $0x60] sm:$0xff]
  %v35 = vld [vmem:[%s1 + $0x68] sm:$0xff]
  %v36 = vld [vmem:[%s1 + $0x70] sm:$0xff]
  %v37 = vld [vmem:[%s1 + $0x78] sm:$0xff]
  %v38 = vld [vmem:[%s1 + $0x80] sm:$0xff]
  %v39 = vld [vmem:[%s1 + $0x88] sm:$0xff]
  %v40 = vld [vmem:[%s2] sm:$0x1]
  %v42 = vlaneseq
  %v43 = vshrl.u32 %v42, 7
  %v44 = vsub.s32 0, %v43
  %v45 = vrot.slane %v40, %v44
  %vm47 = vcmask 130048
  %v49 = vsel %vm47, %v15, 0
  %v52 = vsel %vm47, %v17, 0
  %v55 = vsel %vm47, %v19, 0
  %v58 = vsel %vm47, %v21, 0
  %60 = vmatprep.subr.mxu0 0.0
  %61 = vmatpush1.msra.mxu0 %v22
  %62 = vmatprep.subr.mxu0 0.0
  %63 = vmatpush1.msra.mxu0 %v23
  %64 = vmatprep.subr.mxu0 0.0
  %65 = vmatpush1.msra.mxu0 %v24
  %66 = vmatprep.subr.mxu0 0.0
  %67 = vmatpush1.msra.mxu0 %v25
  %68 = vmatprep.subr.mxu0 0.0
  %69 = vmatpush1.msra.mxu0 %v26
  %70 = vmatprep.subr.mxu0 0.0
  %71 = vmatpush1.msra.mxu0 %v27
  %72 = vmatprep.subr.mxu0 0.0
  %73 = vmatpush1.msra.mxu0 %v28
  %74 = vmatprep.subr.mxu0 0.0
  %75 = vmatpush1.msra.mxu0 %v29
  %76 = vmatprep.subr.mxu0 0.0
  %77 = vmatpush1.msra.mxu0 %v30
  %78 = vmatprep.subr.mxu0 0.0
  %79 = vmatpush1.msra.mxu0 %v31
  %80 = vmatprep.subr.mxu0 0.0
  %81 = vmatpush1.msra.mxu0 %v32
  %82 = vmatprep.subr.mxu0 0.0
  %83 = vmatpush1.msra.mxu0 %v33
  %84 = vmatprep.subr.mxu0 0.0
  %85 = vmatpush1.msra.mxu0 %v34
  %86 = vmatprep.subr.mxu0 0.0
  %87 = vmatpush1.msra.mxu0 %v35
  %88 = vmatprep.subr.mxu0 0.0
  %89 = vmatpush1.msra.mxu0 %v36
  %90 = vmatprep.subr.mxu0 0.0
  %91 = vmatpush1.msra.mxu0 %v37
  %92 = vmatprep.subr.mxu0 0.0
  %93 = vmatpush1.msra.mxu0 %v38
  %94 = vmatprep.subr.mxu0 0.0
  %95 = vmatpush1.msra.mxu0 %v39
  %96 = vmatprep.subr.mxu0 0.0
  %97 = vmatpush1.msra.mxu0 0.0
  %98 = vmatprep.subr.mxu0 0.0
  %99 = vmatpush1.msra.mxu0 0.0
  %100 = vmatprep.subr.mxu0 0.0
  %101 = vmatpush1.msra.mxu0 0.0
  %102 = vmatprep.subr.mxu0 0.0
  %103 = vmatpush1.msra.mxu0 0.0
  %104 = vmatprep.subr.mxu0 0.0
  %105 = vmatpush1.msra.mxu0 0.0
  %106 = vmatprep.subr.mxu0 0.0
  %107 = vmatpush1.msra.mxu0 0.0
  %108 = vmatprep.subr.mxu0 0.0
  %109 = vmatpush1.msra.mxu0 0.0
  %110 = vmatprep.subr.mxu0 0.0
  %111 = vmatpush1.msra.mxu0 0.0
  %112 = vmatprep.subr.mxu0 0.0
  %113 = vmatpush1.msra.mxu0 0.0
  %114 = vmatprep.subr.mxu0 0.0
  %115 = vmatpush1.msra.mxu0 0.0
  %116 = vmatprep.subr.mxu0 0.0
  %117 = vmatpush1.msra.mxu0 0.0
  %118 = vmatprep.subr.mxu0 0.0
  %119 = vmatpush1.msra.mxu0 0.0
  %120 = vmatprep.subr.mxu0 0.0
  %121 = vmatpush1.msra.mxu0 0.0
  %122 = vmatprep.subr.mxu0 0.0
  %123 = vmatpush1.msra.mxu0 0.0
  %124 = vmatprep.mubr.f32.mxu0 %v49
  %125 = vmatmul.mubr.f32.gmra.mrb[0].mxu0 %v14
  %v126 = vpop.f32.mrb[0].mxu0
  %v127 = vadd.f32 %v45, %v126
  %v128 = vpop.f32.mrb[0].mxu0
  %129 = vmatprep.mubr.f32.mxu0 %v52
  %130 = vmatmul.mubr.f32.gmra.mrb[0].mxu0 %v16
  %v131 = vpop.f32.mrb[0].mxu0
  %v132 = vadd.f32 %v45, %v131
  %v133 = vpop.f32.mrb[0].mxu0
  %134 = vmatprep.mubr.f32.mxu0 %v55
  %135 = vmatmul.mubr.f32.gmra.mrb[0].mxu0 %v18
  %v136 = vpop.f32.mrb[0].mxu0
  %v137 = vadd.f32 %v45, %v136
  %v138 = vpop.f32.mrb[0].mxu0
  %139 = vmatprep.mubr.f32.mxu0 %v58
  %140 = vmatmul.mubr.f32.gmra.mrb[0].mxu0 %v20
  %v141 = vpop.f32.mrb[0].mxu0
  %v142 = vadd.f32 %v45, %v141
  %v143 = vpop.f32.mrb[0].mxu0
  %144 = vdwg.mxu0
  %v145 = vlaneseq
  %v146 = vand.u32 %v145, 127
  %vm147 = vcmp.lt.s32.totalorder %v146, 32
  %v148 = vmax.f32 %v127, 0.0
  %v149 = vmax.f32 %v132, 0.0
  %v150 = vmax.f32 %v137, 0.0
  %v151 = vmax.f32 %v142, 0.0
  %v152 = vsel %vm147, %v148, %v127
  %v153 = vsel %vm147, %v149, %v132
  %v154 = vsel %vm147, %v150, %v137
  %v155 = vsel %vm147, %v151, %v142
  %vm156 = vcmask 523264
  %v157 = vsel %vm156, %v152, 0.0
  %v158 = vsel %vm156, %v153, 0.0
  %v159 = vadd.f32 %v157, %v158
  %v160 = vsel %vm156, %v154, 0.0
  %v161 = vadd.f32 %v159, %v160
  %v162 = vsel %vm156, %v155, 0.0
  %v163 = vadd.f32 %v161, %v162
  %v164 = vrot.slane %v163, 4
  %v165 = vadd.f32 %v163, %v164
  %v166 = vrot.slane %v165, 2
  %v167 = vadd.f32 %v165, %v166
  %v168 = vrot.slane %v167, 1
  %v169 = vadd.f32 %v167, %v168
  %v170 = vrcp.pop 32.0
  %v171 = vmul.f32 %v169, %v170
  %v172 = vsub.f32 %v152, %v171
  %v173 = vsub.f32 %v153, %v171
  %v174 = vsub.f32 %v154, %v171
  %v175 = vsub.f32 %v155, %v171
  %v176 = vmul.f32 %v172, %v172
  %v177 = vmul.f32 %v173, %v173
  %v178 = vmul.f32 %v174, %v174
  %v179 = vmul.f32 %v175, %v175
  %v180 = vsel %vm156, %v176, 0.0
  %v181 = vsel %vm156, %v177, 0.0
  %v182 = vadd.f32 %v180, %v181
  %v183 = vsel %vm156, %v178, 0.0
  %v184 = vadd.f32 %v182, %v183
  %v185 = vsel %vm156, %v179, 0.0
  %v186 = vadd.f32 %v184, %v185
  %v187 = vrot.slane %v186, 4
  %v188 = vadd.f32 %v186, %v187
  %v189 = vrot.slane %v188, 2
  %v190 = vadd.f32 %v188, %v189
  %v191 = vrot.slane %v190, 1
  %v192 = vadd.f32 %v190, %v191
  %v193 = vmul.f32 %v192, %v170
  %v194 = vadd.f32 %v193, 1e-05
  %v195 = vrsqrt.pop %v194
  %v196 = vmul.f32 %v172, %v195
  %v197 = vmul.f32 %v173, %v195
  %v198 = vmul.f32 %v174, %v195
  %v199 = vmul.f32 %v175, %v195
  %200 = vst.msk [vmem:[%s3] sm:$0xff] %vm156, %v196
  %201 = vst.msk [vmem:[%s3 + $0x8] sm:$0xff] %vm156, %v197
  %202 = vst.msk [vmem:[%s3 + $0x10] sm:$0xff] %vm156, %v198
  %203 = vst.msk [vmem:[%s3 + $0x18] sm:$0xff] %vm156, %v199
  // Predicated region
  $region14: #{wnet_forward.40} parent=0 // pred_check
    _
  $region15: #{wnet_forward.40} parent=0 // pred_check_branch
    %205 = sbr.rel (0) target = $region17
  $region16: #{wnet_forward.40} parent=0 // pred_region
    _
  $region17: #{wnet_forward.40} parent=0 // pred_fallthru
    _
  // Predicated region
  $region18: #{wnet_forward.40} parent=0 // pred_check
    _
  $region19: #{wnet_forward.40} parent=0 // pred_check_branch
    %207 = sbr.rel (0) target = $region21
  $region20: #{wnet_forward.40} parent=0 // pred_region
    _
  $region21: #{wnet_forward.40} parent=0 // pred_fallthru
    _

// kernel: wnet_forward.41
$region0: #{wnet_forward.41}
  #allocation0 [shape = 'u32[]', space=smem, size = 0x4, offset = 0x4, fixed_abs, tag = 'smem constant byte address 0x4 - core index']
  #allocation1 [shape = 'u32[144,128]{1,0:T(1,128)}', space=vmem, size = 0x12000, scoped, tag = 'internal scratch']
  %s0 = inlined_call_operand.vmem [shape: f32[32,288], index: 0, kind: input, shape index: {}]
  %s1 = inlined_call_operand.vmem [shape: f32[288,32], index: 1, kind: input, shape index: {}]
  %s2 = inlined_call_operand.vmem [shape: f32[1,32], index: 2, kind: input, shape index: {}]
  %s3 = inlined_call_operand.vmem [shape: f32[32,32], index: 3, kind: input, shape index: {}]
  %s4 = inlined_call_operand.vmem [shape: f32[32,32], index: 4, kind: output, shape index: {}]
  %s5 = sld [smem:[#allocation0]]
  $region26: #{wnet_forward.41} parent=0
    _
  %s7 = ssub.s32 1, %s5
  %s8 = scalar_select 0, %s7, %s5
  // Predicated region
  $region2: #{wnet_forward.41} parent=0 // pred_check
    _
  $region3: #{wnet_forward.41} parent=0 // pred_check_branch
    %10 = sbr.rel (0) target = $region5
  $region4: #{wnet_forward.41} parent=0 // pred_region
    _
  $region5: #{wnet_forward.41} parent=0 // pred_fallthru
    _
  // Predicated region
  $region6: #{wnet_forward.41} parent=0 // pred_check
    _
  $region7: #{wnet_forward.41} parent=0 // pred_check_branch
    %12 = sbr.rel (0) target = $region9
  $region8: #{wnet_forward.41} parent=0 // pred_region
    _
  $region9: #{wnet_forward.41} parent=0 // pred_fallthru
    _
  // Predicated region
  $region10: #{wnet_forward.41} parent=0 // pred_check
    _
  $region11: #{wnet_forward.41} parent=0 // pred_check_branch
    %14 = sbr.rel (0) target = $region13
  $region12: #{wnet_forward.41} parent=0 // pred_region
    _
  $region13: #{wnet_forward.41} parent=0 // pred_fallthru
    _
  // Predicated region
  $region14: #{wnet_forward.41} parent=0 // pred_check
    _
  $region15: #{wnet_forward.41} parent=0 // pred_check_branch
    %16 = sbr.rel (0) target = $region17
  $region16: #{wnet_forward.41} parent=0 // pred_region
    _
  $region17: #{wnet_forward.41} parent=0 // pred_fallthru
    _
  %v17 = vld [vmem:[%s0] sm:$0xff]
  %v18 = vld [vmem:[%s0 + $0x8] sm:$0xff]
  %v19 = vld [vmem:[%s0 + $0x10] sm:$0xff]
  %v20 = vld [vmem:[%s0 + $0x18] sm:$0xff]
  %v21 = vld [vmem:[%s0 + $0x20] sm:$0xff]
  %v22 = vld [vmem:[%s0 + $0x28] sm:$0xff]
  %v23 = vld [vmem:[%s0 + $0x30] sm:$0xff]
  %v24 = vld [vmem:[%s0 + $0x38] sm:$0xff]
  %v25 = vld [vmem:[%s0 + $0x40] sm:$0xff]
  %v26 = vld [vmem:[%s0 + $0x48] sm:$0xff]
  %v27 = vld [vmem:[%s0 + $0x50] sm:$0xff]
  %v28 = vld [vmem:[%s0 + $0x58] sm:$0xff]
  %v29 = vld [vmem:[%s1] sm:$0xff]
  %v30 = vld [vmem:[%s1 + $0x8] sm:$0xff]
  %v31 = vld [vmem:[%s1 + $0x10] sm:$0xff]
  %v32 = vld [vmem:[%s1 + $0x18] sm:$0xff]
  %v33 = vld [vmem:[%s1 + $0x20] sm:$0xff]
  %v34 = vld [vmem:[%s1 + $0x28] sm:$0xff]
  %v35 = vld [vmem:[%s1 + $0x30] sm:$0xff]
  %v36 = vld [vmem:[%s1 + $0x38] sm:$0xff]
  %v37 = vld [vmem:[%s1 + $0x40] sm:$0xff]
  %v38 = vld [vmem:[%s1 + $0x48] sm:$0xff]
  %v39 = vld [vmem:[%s1 + $0x50] sm:$0xff]
  %v40 = vld [vmem:[%s1 + $0x58] sm:$0xff]
  %v41 = vld [vmem:[%s1 + $0x60] sm:$0xff]
  %v42 = vld [vmem:[%s1 + $0x68] sm:$0xff]
  %v43 = vld [vmem:[%s1 + $0x70] sm:$0xff]
  %v44 = vld [vmem:[%s1 + $0x78] sm:$0xff]
  %v45 = vld [vmem:[%s1 + $0x80] sm:$0xff]
  %v46 = vld [vmem:[%s1 + $0x88] sm:$0xff]
  %v47 = vld [vmem:[%s1 + $0x90] sm:$0xff]
  %v48 = vld [vmem:[%s1 + $0x98] sm:$0xff]
  %v49 = vld [vmem:[%s1 + $0xa0] sm:$0xff]
  %v50 = vld [vmem:[%s1 + $0xa8] sm:$0xff]
  %v51 = vld [vmem:[%s1 + $0xb0] sm:$0xff]
  %v52 = vld [vmem:[%s1 + $0xb8] sm:$0xff]
  %v53 = vld [vmem:[%s1 + $0xc0] sm:$0xff]
  %v54 = vld [vmem:[%s1 + $0xc8] sm:$0xff]
  %v55 = vld [vmem:[%s1 + $0xd0] sm:$0xff]
  %v56 = vld [vmem:[%s1 + $0xd8] sm:$0xff]
  %v57 = vld [vmem:[%s1 + $0xe0] sm:$0xff]
  %v58 = vld [vmem:[%s1 + $0xe8] sm:$0xff]
  %v59 = vld [vmem:[%s1 + $0xf0] sm:$0xff]
  %v60 = vld [vmem:[%s1 + $0xf8] sm:$0xff]
  %v61 = vld [vmem:[%s1 + $0x100] sm:$0xff]
  %v62 = vld [vmem:[%s1 + $0x108] sm:$0xff]
  %v63 = vld [vmem:[%s1 + $0x110] sm:$0xff]
  %v64 = vld [vmem:[%s1 + $0x118] sm:$0xff]
  %v65 = vld [vmem:[%s2] sm:$0x1]
  %v67 = vlaneseq
  %v68 = vshrl.u32 %v67, 7
  %v69 = vsub.s32 0, %v68
  %v70 = vrot.slane %v65, %v69
  %vm72 = vcmask 261120
  %v74 = vsel %vm72, %v19, 0
  %v77 = vsel %vm72, %v22, 0
  %v80 = vsel %vm72, %v25, 0
  %v83 = vsel %vm72, %v28, 0
  %85 = vmatprep.subr.mxu0 0.0
  %86 = vmatpush1.msra.mxu0 %v29
  %87 = vmatprep.subr.mxu0 0.0
  %88 = vmatpush1.msra.mxu0 %v30
  %89 = vmatprep.subr.mxu0 0.0
  %90 = vmatpush1.msra.mxu0 %v31
  %91 = vmatprep.subr.mxu0 0.0
  %92 = vmatpush1.msra.mxu0 %v32
  %93 = vmatprep.subr.mxu0 0.0
  %94 = vmatpush1.msra.mxu0 %v33
  %95 = vmatprep.subr.mxu0 0.0
  %96 = vmatpush1.msra.mxu0 %v34
  %97 = vmatprep.subr.mxu0 0.0
  %98 = vmatpush1.msra.mxu0 %v35
  %99 = vmatprep.subr.mxu0 0.0
  %100 = vmatpush1.msra.mxu0 %v36
  %101 = vmatprep.subr.mxu0 0.0
  %102 = vmatpush1.msra.mxu0 %v37
  %103 = vmatprep.subr.mxu0 0.0
  %104 = vmatpush1.msra.mxu0 %v38
  %105 = vmatprep.subr.mxu0 0.0
  %106 = vmatpush1.msra.mxu0 %v39
  %107 = vmatprep.subr.mxu0 0.0
  %108 = vmatpush1.msra.mxu0 %v40
  %109 = vmatprep.subr.mxu0 0.0
  %110 = vmatpush1.msra.mxu0 %v41
  %111 = vmatprep.subr.mxu0 0.0
  %112 = vmatpush1.msra.mxu0 %v42
  %113 = vmatprep.subr.mxu0 0.0
  %114 = vmatpush1.msra.mxu0 %v43
  %115 = vmatprep.subr.mxu0 0.0
  %116 = vmatpush1.msra.mxu0 %v44
  %117 = vmatprep.subr.mxu0 0.0
  %118 = vmatpush1.msra.mxu0 %v45
  %119 = vmatprep.subr.mxu0 0.0
  %120 = vmatpush1.msra.mxu0 %v46
  %121 = vmatprep.subr.mxu0 0.0
  %122 = vmatpush1.msra.mxu0 %v47
  %123 = vmatprep.subr.mxu0 0.0
  %124 = vmatpush1.msra.mxu0 %v48
  %125 = vmatprep.subr.mxu0 0.0
  %126 = vmatpush1.msra.mxu0 %v49
  %127 = vmatprep.subr.mxu0 0.0
  %128 = vmatpush1.msra.mxu0 %v50
  %129 = vmatprep.subr.mxu0 0.0
  %130 = vmatpush1.msra.mxu0 %v51
  %131 = vmatprep.subr.mxu0 0.0
  %132 = vmatpush1.msra.mxu0 %v52
  %133 = vmatprep.subr.mxu0 0.0
  %134 = vmatpush1.msra.mxu0 %v53
  %135 = vmatprep.subr.mxu0 0.0
  %136 = vmatpush1.msra.mxu0 %v54
  %137 = vmatprep.subr.mxu0 0.0
  %138 = vmatpush1.msra.mxu0 %v55
  %139 = vmatprep.subr.mxu0 0.0
  %140 = vmatpush1.msra.mxu0 %v56
  %141 = vmatprep.subr.mxu0 0.0
  %142 = vmatpush1.msra.mxu0 %v57
  %143 = vmatprep.subr.mxu0 0.0
  %144 = vmatpush1.msra.mxu0 %v58
  %145 = vmatprep.subr.mxu0 0.0
  %146 = vmatpush1.msra.mxu0 %v59
  %147 = vmatprep.subr.mxu0 0.0
  %148 = vmatpush1.msra.mxu0 %v60
  %149 = vmatprep.mubr.f32.mxu0 %v18
  %150 = vmatmul.mubr.f32.gmra.mrb[0].mxu0 %v17
  %v151 = vpop.f32.mrb[0].mxu0
  %v152 = vadd.f32 %v70, %v151
  %v153 = vpop.f32.mrb[0].mxu0
  %154 = vmatprep.mubr.f32.mxu0 %v21
  %155 = vmatmul.mubr.f32.gmra.mrb[0].mxu0 %v20
  %v156 = vpop.f32.mrb[0].mxu0
  %v157 = vadd.f32 %v70, %v156
  %v158 = vpop.f32.mrb[0].mxu0
  %159 = vmatprep.mubr.f32.mxu0 %v24
  %160 = vmatmul.mubr.f32.gmra.mrb[0].mxu0 %v23
  %v161 = vpop.f32.mrb[0].mxu0
  %v162 = vadd.f32 %v70, %v161
  %v163 = vpop.f32.mrb[0].mxu0
  %164 = vmatprep.mubr.f32.mxu0 %v27
  %165 = vmatmul.mubr.f32.gmra.mrb[0].mxu0 %v26
  %v166 = vpop.f32.mrb[0].mxu0
  %v167 = vadd.f32 %v70, %v166
  %v168 = vpop.f32.mrb[0].mxu0
  %169 = vdwg.mxu0
  %170 = vmatprep.subr.mxu0 0.0
  %171 = vmatpush1.msra.mxu0 %v61
  %172 = vmatprep.subr.mxu0 0.0
  %173 = vmatpush1.msra.mxu0 %v62
  %174 = vmatprep.subr.mxu0 0.0
  %175 = vmatpush1.msra.mxu0 %v63
  %176 = vmatprep.subr.mxu0 0.0
  %177 = vmatpush1.msra.mxu0 %v64
  %178 = vmatprep.subr.mxu0 0.0
  %179 = vmatpush1.msra.mxu0 0.0
  %180 = vmatprep.subr.mxu0 0.0
  %181 = vmatpush1.msra.mxu0 0.0
  %182 = vmatprep.subr.mxu0 0.0
  %183 = vmatpush1.msra.mxu0 0.0
  %184 = vmatprep.subr.mxu0 0.0
  %185 = vmatpush1.msra.mxu0 0.0
  %186 = vmatprep.subr.mxu0 0.0
  %187 = vmatpush1.msra.mxu0 0.0
  %188 = vmatprep.subr.mxu0 0.0
  %189 = vmatpush1.msra.mxu0 0.0
  %190 = vmatprep.subr.mxu0 0.0
  %191 = vmatpush1.msra.mxu0 0.0
  %192 = vmatprep.subr.mxu0 0.0
  %193 = vmatpush1.msra.mxu0 0.0
  %194 = vmatprep.subr.mxu0 0.0
  %195 = vmatpush1.msra.mxu0 0.0
  %196 = vmatprep.subr.mxu0 0.0
  %197 = vmatpush1.msra.mxu0 0.0
  %198 = vmatprep.subr.mxu0 0.0
  %199 = vmatpush1.msra.mxu0 0.0
  %200 = vmatprep.subr.mxu0 0.0
  %201 = vmatpush1.msra.mxu0 0.0
  %202 = vmatprep.subr.mxu0 0.0
  %203 = vmatpush1.msra.mxu0 0.0
  %204 = vmatprep.subr.mxu0 0.0
  %205 = vmatpush1.msra.mxu0 0.0
  %206 = vmatprep.subr.mxu0 0.0
  %207 = vmatpush1.msra.mxu0 0.0
  %208 = vmatprep.subr.mxu0 0.0
  %209 = vmatpush1.msra.mxu0 0.0
  %210 = vmatprep.subr.mxu0 0.0
  %211 = vmatpush1.msra.mxu0 0.0
  %212 = vmatprep.subr.mxu0 0.0
  %213 = vmatpush1.msra.mxu0 0.0
  %214 = vmatprep.subr.mxu0 0.0
  %215 = vmatpush1.msra.mxu0 0.0
  %216 = vmatprep.subr.mxu0 0.0
  %217 = vmatpush1.msra.mxu0 0.0
  %218 = vmatprep.subr.mxu0 0.0
  %219 = vmatpush1.msra.mxu0 0.0
  %220 = vmatprep.subr.mxu0 0.0
  %221 = vmatpush1.msra.mxu0 0.0
  %222 = vmatprep.subr.mxu0 0.0
  %223 = vmatpush1.msra.mxu0 0.0
  %224 = vmatprep.subr.mxu0 0.0
  %225 = vmatpush1.msra.mxu0 0.0
  %226 = vmatprep.subr.mxu0 0.0
  %227 = vmatpush1.msra.mxu0 0.0
  %228 = vmatprep.subr.mxu0 0.0
  %229 = vmatpush1.msra.mxu0 0.0
  %230 = vmatprep.subr.mxu0 0.0
  %231 = vmatpush1.msra.mxu0 0.0
  %232 = vmatprep.subr.mxu0 0.0
  %233 = vmatpush1.msra.mxu0 0.0
  %234 = vmatprep.mubr.f32.mxu0 0.0
  %235 = vmatmul.mubr.f32.gmra.mrb[0].mxu0 %v74
  %v236 = vpop.f32.mrb[0].mxu0
  %v237 = vadd.f32 %v152, %v236
  %v238 = vpop.f32.mrb[0].mxu0
  %239 = vmatprep.mubr.f32.mxu0 0.0
  %240 = vmatmul.mubr.f32.gmra.mrb[0].mxu0 %v77
  %v241 = vpop.f32.mrb[0].mxu0
  %v242 = vadd.f32 %v157, %v241
  %v243 = vpop.f32.mrb[0].mxu0
  %244 = vmatprep.mubr.f32.mxu0 0.0
  %245 = vmatmul.mubr.f32.gmra.mrb[0].mxu0 %v80
  %v246 = vpop.f32.mrb[0].mxu0
  %v247 = vadd.f32 %v162, %v246
  %v248 = vpop.f32.mrb[0].mxu0
  %249 = vmatprep.mubr.f32.mxu0 0.0
  %250 = vmatmul.mubr.f32.gmra.mrb[0].mxu0 %v83
  %v251 = vpop.f32.mrb[0].mxu0
  %v252 = vadd.f32 %v167, %v251
  %v253 = vpop.f32.mrb[0].mxu0
  %254 = vdwg.mxu0
  %v255 = vmax.f32 %v237, 0.0
  %v256 = vmax.f32 %v242, 0.0
  %v257 = vmax.f32 %v247, 0.0
  %v258 = vmax.f32 %v252, 0.0
  %v259 = vsel %vm72, %v255, 0.0
  %v260 = vsel %vm72, %v256, 0.0
  %v261 = vadd.f32 %v259, %v260
  %v262 = vsel %vm72, %v257, 0.0
  %v263 = vadd.f32 %v261, %v262
  %v264 = vsel %vm72, %v258, 0.0
  %v265 = vadd.f32 %v263, %v264
  %v266 = vrot.slane %v265, 4
  %v267 = vadd.f32 %v265, %v266
  %v268 = vrot.slane %v267, 2
  %v269 = vadd.f32 %v267, %v268
  %v270 = vrot.slane %v269, 1
  %v271 = vadd.f32 %v269, %v270
  %v272 = vrcp.pop 32.0
  %v273 = vmul.f32 %v271, %v272
  %v274 = vsub.f32 %v255, %v273
  %v275 = vsub.f32 %v256, %v273
  %v276 = vsub.f32 %v257, %v273
  %v277 = vsub.f32 %v258, %v273
  %v278 = vmul.f32 %v274, %v274
  %v279 = vmul.f32 %v275, %v275
  %v280 = vmul.f32 %v276, %v276
  %v281 = vmul.f32 %v277, %v277
  %v282 = vsel %vm72, %v278, 0.0
  %v283 = vsel %vm72, %v279, 0.0
  %v284 = vadd.f32 %v282, %v283
  %v285 = vsel %vm72, %v280, 0.0
  %v286 = vadd.f32 %v284, %v285
  %v287 = vsel %vm72, %v281, 0.0
  %v288 = vadd.f32 %v286, %v287
  %v289 = vrot.slane %v288, 4
  %v290 = vadd.f32 %v288, %v289
  %v291 = vrot.slane %v290, 2
  %v292 = vadd.f32 %v290, %v291
  %v293 = vrot.slane %v292, 1
  %v294 = vadd.f32 %v292, %v293
  %v295 = vmul.f32 %v294, %v272
  %v296 = vadd.f32 %v295, 1e-05
  %v297 = vrsqrt.pop %v296
  %v298 = vmul.f32 %v274, %v297
  %v299 = vmul.f32 %v275, %v297
  %v300 = vmul.f32 %v276, %v297
  %v301 = vmul.f32 %v277, %v297
  %v302 = vld [vmem:[%s3] sm:$0xff]
  %v303 = vld [vmem:[%s3 + $0x8] sm:$0xff]
  %v304 = vld [vmem:[%s3 + $0x10] sm:$0xff]
  %v305 = vld [vmem:[%s3 + $0x18] sm:$0xff]
  %v306 = vadd.f32 %v298, %v302
  %v307 = vadd.f32 %v299, %v303
  %v308 = vadd.f32 %v300, %v304
  %v309 = vadd.f32 %v301, %v305
  %310 = vst.msk [vmem:[%s4] sm:$0xff] %vm72, %v306
  %311 = vst.msk [vmem:[%s4 + $0x8] sm:$0xff] %vm72, %v307
  %312 = vst.msk [vmem:[%s4 + $0x10] sm:$0xff] %vm72, %v308
  %313 = vst.msk [vmem:[%s4 + $0x18] sm:$0xff] %vm72, %v309
  // Predicated region
  $region18: #{wnet_forward.41} parent=0 // pred_check
    _
  $region19: #{wnet_forward.41} parent=0 // pred_check_branch
    %315 = sbr.rel (0) target = $region21
  $region20: #{wnet_forward.41} parent=0 // pred_region
    _
  $region21: #{wnet_forward.41} parent=0 // pred_fallthru
    _
  // Predicated region
  $region22: #{wnet_forward.41} parent=0 // pred_check
    _
  $region23: #{wnet_forward.41} parent=0 // pred_check_branch
    %317 = sbr.rel (0) target = $region25
  $region24: #{wnet_forward.41} parent=0 // pred_region
    _
  $region25: #{wnet_forward.41} parent=0 // pred_fallthru
    _

// kernel: wnet_forward.42
$region0: #{wnet_forward.42}
  #allocation0 [shape = 'u32[]', space=smem, size = 0x4, offset = 0x4, fixed_abs, tag = 'smem constant byte address 0x4 - core index']
  #allocation1 [shape = 'u32[144,128]{1,0:T(1,128)}', space=vmem, size = 0x12000, scoped, tag = 'internal scratch']
  %s0 = inlined_call_operand.vmem [shape: f32[32,32], index: 0, kind: input, shape index: {}]
  %s1 = inlined_call_operand.vmem [shape: f32[32,64], index: 1, kind: input, shape index: {}]
  %s2 = inlined_call_operand.vmem [shape: f32[1,64], index: 2, kind: input, shape index: {}]
  %s3 = inlined_call_operand.vmem [shape: f32[32,64], index: 3, kind: output, shape index: {}]
  %s4 = sld [smem:[#allocation0]]
  $region22: #{wnet_forward.42} parent=0
    _
  %s6 = ssub.s32 1, %s4
  %s7 = scalar_select 0, %s6, %s4
  // Predicated region
  $region2: #{wnet_forward.42} parent=0 // pred_check
    _
  $region3: #{wnet_forward.42} parent=0 // pred_check_branch
    %9 = sbr.rel (0) target = $region5
  $region4: #{wnet_forward.42} parent=0 // pred_region
    _
  $region5: #{wnet_forward.42} parent=0 // pred_fallthru
    _
  // Predicated region
  $region6: #{wnet_forward.42} parent=0 // pred_check
    _
  $region7: #{wnet_forward.42} parent=0 // pred_check_branch
    %11 = sbr.rel (0) target = $region9
  $region8: #{wnet_forward.42} parent=0 // pred_region
    _
  $region9: #{wnet_forward.42} parent=0 // pred_fallthru
    _
  // Predicated region
  $region10: #{wnet_forward.42} parent=0 // pred_check
    _
  $region11: #{wnet_forward.42} parent=0 // pred_check_branch
    %13 = sbr.rel (0) target = $region13
  $region12: #{wnet_forward.42} parent=0 // pred_region
    _
  $region13: #{wnet_forward.42} parent=0 // pred_fallthru
    _
  %v14 = vld [vmem:[%s0] sm:$0xff]
  %v15 = vld [vmem:[%s0 + $0x8] sm:$0xff]
  %v16 = vld [vmem:[%s0 + $0x10] sm:$0xff]
  %v17 = vld [vmem:[%s0 + $0x18] sm:$0xff]
  %v18 = vld [vmem:[%s1] sm:$0xff]
  %v19 = vld [vmem:[%s1 + $0x8] sm:$0xff]
  %v20 = vld [vmem:[%s1 + $0x10] sm:$0xff]
  %v21 = vld [vmem:[%s1 + $0x18] sm:$0xff]
  %v22 = vld [vmem:[%s2] sm:$0x1]
  %v24 = vlaneseq
  %v25 = vshrl.u32 %v24, 7
  %v26 = vsub.s32 0, %v25
  %v27 = vrot.slane %v22, %v26
  %vm29 = vcmask 261120
  %v31 = vsel %vm29, %v14, 0
  %v34 = vsel %vm29, %v15, 0
  %v37 = vsel %vm29, %v16, 0
  %v40 = vsel %vm29, %v17, 0
  %42 = vmatprep.subr.mxu0 0.0
  %43 = vmatpush1.msra.mxu0 %v18
  %44 = vmatprep.subr.mxu0 0.0
  %45 = vmatpush1.msra.mxu0 %v19
  %46 = vmatprep.subr.mxu0 0.0
  %47 = vmatpush1.msra.mxu0 %v20
  %48 = vmatprep.subr.mxu0 0.0
  %49 = vmatpush1.msra.mxu0 %v21
  %50 = vmatprep.subr.mxu0 0.0
  %51 = vmatpush1.msra.mxu0 0.0
  %52 = vmatprep.subr.mxu0 0.0
  %53 = vmatpush1.msra.mxu0 0.0
  %54 = vmatprep.subr.mxu0 0.0
  %55 = vmatpush1.msra.mxu0 0.0
  %56 = vmatprep.subr.mxu0 0.0
  %57 = vmatpush1.msra.mxu0 0.0
  %58 = vmatprep.subr.mxu0 0.0
  %59 = vmatpush1.msra.mxu0 0.0
  %60 = vmatprep.subr.mxu0 0.0
  %61 = vmatpush1.msra.mxu0 0.0
  %62 = vmatprep.subr.mxu0 0.0
  %63 = vmatpush1.msra.mxu0 0.0
  %64 = vmatprep.subr.mxu0 0.0
  %65 = vmatpush1.msra.mxu0 0.0
  %66 = vmatprep.subr.mxu0 0.0
  %67 = vmatpush1.msra.mxu0 0.0
  %68 = vmatprep.subr.mxu0 0.0
  %69 = vmatpush1.msra.mxu0 0.0
  %70 = vmatprep.subr.mxu0 0.0
  %71 = vmatpush1.msra.mxu0 0.0
  %72 = vmatprep.subr.mxu0 0.0
  %73 = vmatpush1.msra.mxu0 0.0
  %74 = vmatprep.subr.mxu0 0.0
  %75 = vmatpush1.msra.mxu0 0.0
  %76 = vmatprep.subr.mxu0 0.0
  %77 = vmatpush1.msra.mxu0 0.0
  %78 = vmatprep.subr.mxu0 0.0
  %79 = vmatpush1.msra.mxu0 0.0
  %80 = vmatprep.subr.mxu0 0.0
  %81 = vmatpush1.msra.mxu0 0.0
  %82 = vmatprep.subr.mxu0 0.0
  %83 = vmatpush1.msra.mxu0 0.0
  %84 = vmatprep.subr.mxu0 0.0
  %85 = vmatpush1.msra.mxu0 0.0
  %86 = vmatprep.subr.mxu0 0.0
  %87 = vmatpush1.msra.mxu0 0.0
  %88 = vmatprep.subr.mxu0 0.0
  %89 = vmatpush1.msra.mxu0 0.0
  %90 = vmatprep.subr.mxu0 0.0
  %91 = vmatpush1.msra.mxu0 0.0
  %92 = vmatprep.subr.mxu0 0.0
  %93 = vmatpush1.msra.mxu0 0.0
  %94 = vmatprep.subr.mxu0 0.0
  %95 = vmatpush1.msra.mxu0 0.0
  %96 = vmatprep.subr.mxu0 0.0
  %97 = vmatpush1.msra.mxu0 0.0
  %98 = vmatprep.subr.mxu0 0.0
  %99 = vmatpush1.msra.mxu0 0.0
  %100 = vmatprep.subr.mxu0 0.0
  %101 = vmatpush1.msra.mxu0 0.0
  %102 = vmatprep.subr.mxu0 0.0
  %103 = vmatpush1.msra.mxu0 0.0
  %104 = vmatprep.subr.mxu0 0.0
  %105 = vmatpush1.msra.mxu0 0.0
  %106 = vmatprep.mubr.f32.mxu0 0.0
  %107 = vmatmul.mubr.f32.gmra.mrb[0].mxu0 %v31
  %v108 = vpop.f32.mrb[0].mxu0
  %v109 = vadd.f32 %v27, %v108
  %v110 = vpop.f32.mrb[0].mxu0
  %111 = vmatprep.mubr.f32.mxu0 0.0
  %112 = vmatmul.mubr.f32.gmra.mrb[0].mxu0 %v34
  %v113 = vpop.f32.mrb[0].mxu0
  %v114 = vadd.f32 %v27, %v113
  %v115 = vpop.f32.mrb[0].mxu0
  %116 = vmatprep.mubr.f32.mxu0 0.0
  %117 = vmatmul.mubr.f32.gmra.mrb[0].mxu0 %v37
  %v118 = vpop.f32.mrb[0].mxu0
  %v119 = vadd.f32 %v27, %v118
  %v120 = vpop.f32.mrb[0].mxu0
  %121 = vmatprep.mubr.f32.mxu0 0.0
  %122 = vmatmul.mubr.f32.gmra.mrb[0].mxu0 %v40
  %v123 = vpop.f32.mrb[0].mxu0
  %v124 = vadd.f32 %v27, %v123
  %v125 = vpop.f32.mrb[0].mxu0
  %126 = vdwg.mxu0
  %vm127 = vcmask 523264
  %128 = vst.msk [vmem:[%s3] sm:$0xff] %vm127, %v109
  %129 = vst.msk [vmem:[%s3 + $0x8] sm:$0xff] %vm127, %v114
  %130 = vst.msk [vmem:[%s3 + $0x10] sm:$0xff] %vm127, %v119
  %131 = vst.msk [vmem:[%s3 + $0x18] sm:$0xff] %vm127, %v124
  // Predicated region
  $region14: #{wnet_forward.42} parent=0 // pred_check
    _
  $region15: #{wnet_forward.42} parent=0 // pred_check_branch
    %133 = sbr.rel (0) target = $region17
  $region16: #{wnet_forward.42} parent=0 // pred_region
    _
  $region17: #{wnet_forward.42} parent=0 // pred_fallthru
    _
  // Predicated region
  $region18: #{wnet_forward.42} parent=0 // pred_check
    _
  $region19: #{wnet_forward.42} parent=0 // pred_check_branch
    %135 = sbr.rel (0) target = $region21
  $region20: #{wnet_forward.42} parent=0 // pred_region
    _
  $region21: #{wnet_forward.42} parent=0 // pred_fallthru
    _

// kernel: wnet_forward.43
$region0: #{wnet_forward.43}
  #allocation0 [shape = 'u32[]', space=smem, size = 0x4, offset = 0x4, fixed_abs, tag = 'smem constant byte address 0x4 - core index']
  #allocation1 [shape = 'u32[144,128]{1,0:T(1,128)}', space=vmem, size = 0x12000, scoped, tag = 'internal scratch']
  %s0 = inlined_call_operand.vmem [shape: f32[128,144], index: 0, kind: input, shape index: {}]
  %s1 = inlined_call_operand.vmem [shape: f32[144,16], index: 1, kind: input, shape index: {}]
  %s2 = inlined_call_operand.vmem [shape: f32[1,16], index: 2, kind: input, shape index: {}]
  %s3 = inlined_call_operand.vmem [shape: f32[128,16], index: 3, kind: output, shape index: {}]
  %s4 = sld [smem:[#allocation0]]
  $region22: #{wnet_forward.43} parent=0
    _
  %s6 = ssub.s32 1, %s4
  %s7 = scalar_select 0, %s6, %s4
  // Predicated region
  $region2: #{wnet_forward.43} parent=0 // pred_check
    _
  $region3: #{wnet_forward.43} parent=0 // pred_check_branch
    %9 = sbr.rel (0) target = $region5
  $region4: #{wnet_forward.43} parent=0 // pred_region
    _
  $region5: #{wnet_forward.43} parent=0 // pred_fallthru
    _
  // Predicated region
  $region6: #{wnet_forward.43} parent=0 // pred_check
    _
  $region7: #{wnet_forward.43} parent=0 // pred_check_branch
    %11 = sbr.rel (0) target = $region9
  $region8: #{wnet_forward.43} parent=0 // pred_region
    _
  $region9: #{wnet_forward.43} parent=0 // pred_fallthru
    _
  // Predicated region
  $region10: #{wnet_forward.43} parent=0 // pred_check
    _
  $region11: #{wnet_forward.43} parent=0 // pred_check_branch
    %13 = sbr.rel (0) target = $region13
  $region12: #{wnet_forward.43} parent=0 // pred_region
    _
  $region13: #{wnet_forward.43} parent=0 // pred_fallthru
    _
  %v14 = vld [vmem:[%s0] sm:$0xff]
  %v15 = vld [vmem:[%s0 + $0x8] sm:$0xff]
  %v16 = vld [vmem:[%s0 + $0x10] sm:$0xff]
  %v17 = vld [vmem:[%s0 + $0x18] sm:$0xff]
  %v18 = vld [vmem:[%s0 + $0x20] sm:$0xff]
  %v19 = vld [vmem:[%s0 + $0x28] sm:$0xff]
  %v20 = vld [vmem:[%s0 + $0x30] sm:$0xff]
  %v21 = vld [vmem:[%s0 + $0x38] sm:$0xff]
  %v22 = vld [vmem:[%s0 + $0x40] sm:$0xff]
  %v23 = vld [vmem:[%s0 + $0x48] sm:$0xff]
  %v24 = vld [vmem:[%s0 + $0x50] sm:$0xff]
  %v25 = vld [vmem:[%s0 + $0x58] sm:$0xff]
  %v26 = vld [vmem:[%s0 + $0x60] sm:$0xff]
  %v27 = vld [vmem:[%s0 + $0x68] sm:$0xff]
  %v28 = vld [vmem:[%s0 + $0x70] sm:$0xff]
  %v29 = vld [vmem:[%s0 + $0x78] sm:$0xff]
  %v30 = vld [vmem:[%s0 + $0x80] sm:$0xff]
  %v31 = vld [vmem:[%s0 + $0x88] sm:$0xff]
  %v32 = vld [vmem:[%s0 + $0x90] sm:$0xff]
  %v33 = vld [vmem:[%s0 + $0x98] sm:$0xff]
  %v34 = vld [vmem:[%s0 + $0xa0] sm:$0xff]
  %v35 = vld [vmem:[%s0 + $0xa8] sm:$0xff]
  %v36 = vld [vmem:[%s0 + $0xb0] sm:$0xff]
  %v37 = vld [vmem:[%s0 + $0xb8] sm:$0xff]
  %v38 = vld [vmem:[%s0 + $0xc0] sm:$0xff]
  %v39 = vld [vmem:[%s0 + $0xc8] sm:$0xff]
  %v40 = vld [vmem:[%s0 + $0xd0] sm:$0xff]
  %v41 = vld [vmem:[%s0 + $0xd8] sm:$0xff]
  %v42 = vld [vmem:[%s0 + $0xe0] sm:$0xff]
  %v43 = vld [vmem:[%s0 + $0xe8] sm:$0xff]
  %v44 = vld [vmem:[%s0 + $0xf0] sm:$0xff]
  %v45 = vld [vmem:[%s0 + $0xf8] sm:$0xff]
  %v46 = vld [vmem:[%s1] sm:$0xff]
  %v47 = vld [vmem:[%s1 + $0x8] sm:$0xff]
  %v48 = vld [vmem:[%s1 + $0x10] sm:$0xff]
  %v49 = vld [vmem:[%s1 + $0x18] sm:$0xff]
  %v50 = vld [vmem:[%s1 + $0x20] sm:$0xff]
  %v51 = vld [vmem:[%s1 + $0x28] sm:$0xff]
  %v52 = vld [vmem:[%s1 + $0x30] sm:$0xff]
  %v53 = vld [vmem:[%s1 + $0x38] sm:$0xff]
  %v54 = vld [vmem:[%s1 + $0x40] sm:$0xff]
  %v55 = vld [vmem:[%s1 + $0x48] sm:$0xff]
  %v56 = vld [vmem:[%s1 + $0x50] sm:$0xff]
  %v57 = vld [vmem:[%s1 + $0x58] sm:$0xff]
  %v58 = vld [vmem:[%s1 + $0x60] sm:$0xff]
  %v59 = vld [vmem:[%s1 + $0x68] sm:$0xff]
  %v60 = vld [vmem:[%s1 + $0x70] sm:$0xff]
  %v61 = vld [vmem:[%s1 + $0x78] sm:$0xff]
  %v62 = vld [vmem:[%s1 + $0x80] sm:$0xff]
  %v63 = vld [vmem:[%s1 + $0x88] sm:$0xff]
  %v64 = vld [vmem:[%s2] sm:$0x1]
  %v66 = vlaneseq
  %v67 = vshrl.u32 %v66, 7
  %v68 = vsub.s32 0, %v67
  %v69 = vrot.slane %v64, %v68
  %vm71 = vcmask 130048
  %v73 = vsel %vm71, %v15, 0
  %v76 = vsel %vm71, %v17, 0
  %v79 = vsel %vm71, %v19, 0
  %v82 = vsel %vm71, %v21, 0
  %v85 = vsel %vm71, %v23, 0
  %v88 = vsel %vm71, %v25, 0
  %v91 = vsel %vm71, %v27, 0
  %v94 = vsel %vm71, %v29, 0
  %v97 = vsel %vm71, %v31, 0
  %v100 = vsel %vm71, %v33, 0
  %v103 = vsel %vm71, %v35, 0
  %v106 = vsel %vm71, %v37, 0
  %v109 = vsel %vm71, %v39, 0
  %v112 = vsel %vm71, %v41, 0
  %v115 = vsel %vm71, %v43, 0
  %v118 = vsel %vm71, %v45, 0
  %120 = vmatprep.subr.mxu0 0.0
  %121 = vmatpush1.msra.mxu0 %v46
  %122 = vmatprep.subr.mxu0 0.0
  %123 = vmatpush1.msra.mxu0 %v47
  %124 = vmatprep.subr.mxu0 0.0
  %125 = vmatpush1.msra.mxu0 %v48
  %126 = vmatprep.subr.mxu0 0.0
  %127 = vmatpush1.msra.mxu0 %v49
  %128 = vmatprep.subr.mxu0 0.0
  %129 = vmatpush1.msra.mxu0 %v50
  %130 = vmatprep.subr.mxu0 0.0
  %131 = vmatpush1.msra.mxu0 %v51
  %132 = vmatprep.subr.mxu0 0.0
  %133 = vmatpush1.msra.mxu0 %v52
  %134 = vmatprep.subr.mxu0 0.0
  %135 = vmatpush1.msra.mxu0 %v53
  %136 = vmatprep.subr.mxu0 0.0
  %137 = vmatpush1.msra.mxu0 %v54
  %138 = vmatprep.subr.mxu0 0.0
  %139 = vmatpush1.msra.mxu0 %v55
  %140 = vmatprep.subr.mxu0 0.0
  %141 = vmatpush1.msra.mxu0 %v56
  %142 = vmatprep.subr.mxu0 0.0
  %143 = vmatpush1.msra.mxu0 %v57
  %144 = vmatprep.subr.mxu0 0.0
  %145 = vmatpush1.msra.mxu0 %v58
  %146 = vmatprep.subr.mxu0 0.0
  %147 = vmatpush1.msra.mxu0 %v59
  %148 = vmatprep.subr.mxu0 0.0
  %149 = vmatpush1.msra.mxu0 %v60
  %150 = vmatprep.subr.mxu0 0.0
  %151 = vmatpush1.msra.mxu0 %v61
  %152 = vmatprep.subr.mxu0 0.0
  %153 = vmatpush1.msra.mxu0 %v62
  %154 = vmatprep.subr.mxu0 0.0
  %155 = vmatpush1.msra.mxu0 %v63
  %156 = vmatprep.subr.mxu0 0.0
  %157 = vmatpush1.msra.mxu0 0.0
  %158 = vmatprep.subr.mxu0 0.0
  %159 = vmatpush1.msra.mxu0 0.0
  %160 = vmatprep.subr.mxu0 0.0
  %161 = vmatpush1.msra.mxu0 0.0
  %162 = vmatprep.subr.mxu0 0.0
  %163 = vmatpush1.msra.mxu0 0.0
  %164 = vmatprep.subr.mxu0 0.0
  %165 = vmatpush1.msra.mxu0 0.0
  %166 = vmatprep.subr.mxu0 0.0
  %167 = vmatpush1.msra.mxu0 0.0
  %168 = vmatprep.subr.mxu0 0.0
  %169 = vmatpush1.msra.mxu0 0.0
  %170 = vmatprep.subr.mxu0 0.0
  %171 = vmatpush1.msra.mxu0 0.0
  %172 = vmatprep.subr.mxu0 0.0
  %173 = vmatpush1.msra.mxu0 0.0
  %174 = vmatprep.subr.mxu0 0.0
  %175 = vmatpush1.msra.mxu0 0.0
  %176 = vmatprep.subr.mxu0 0.0
  %177 = vmatpush1.msra.mxu0 0.0
  %178 = vmatprep.subr.mxu0 0.0
  %179 = vmatpush1.msra.mxu0 0.0
  %180 = vmatprep.subr.mxu0 0.0
  %181 = vmatpush1.msra.mxu0 0.0
  %182 = vmatprep.subr.mxu0 0.0
  %183 = vmatpush1.msra.mxu0 0.0
  %184 = vmatprep.mubr.f32.mxu0 %v73
  %185 = vmatmul.mubr.f32.gmra.mrb[0].mxu0 %v14
  %v186 = vpop.f32.mrb[0].mxu0
  %v187 = vadd.f32 %v69, %v186
  %v188 = vpop.f32.mrb[0].mxu0
  %189 = vmatprep.mubr.f32.mxu0 %v76
  %190 = vmatmul.mubr.f32.gmra.mrb[0].mxu0 %v16
  %v191 = vpop.f32.mrb[0].mxu0
  %v192 = vadd.f32 %v69, %v191
  %v193 = vpop.f32.mrb[0].mxu0
  %194 = vmatprep.mubr.f32.mxu0 %v79
  %195 = vmatmul.mubr.f32.gmra.mrb[0].mxu0 %v18
  %v196 = vpop.f32.mrb[0].mxu0
  %v197 = vadd.f32 %v69, %v196
  %v198 = vpop.f32.mrb[0].mxu0
  %199 = vmatprep.mubr.f32.mxu0 %v82
  %200 = vmatmul.mubr.f32.gmra.mrb[0].mxu0 %v20
  %v201 = vpop.f32.mrb[0].mxu0
  %v202 = vadd.f32 %v69, %v201
  %v203 = vpop.f32.mrb[0].mxu0
  %204 = vmatprep.mubr.f32.mxu0 %v85
  %205 = vmatmul.mubr.f32.gmra.mrb[0].mxu0 %v22
  %v206 = vpop.f32.mrb[0].mxu0
  %v207 = vadd.f32 %v69, %v206
  %v208 = vpop.f32.mrb[0].mxu0
  %209 = vmatprep.mubr.f32.mxu0 %v88
  %210 = vmatmul.mubr.f32.gmra.mrb[0].mxu0 %v24
  %v211 = vpop.f32.mrb[0].mxu0
  %v212 = vadd.f32 %v69, %v211
  %v213 = vpop.f32.mrb[0].mxu0
  %214 = vmatprep.mubr.f32.mxu0 %v91
  %215 = vmatmul.mubr.f32.gmra.mrb[0].mxu0 %v26
  %v216 = vpop.f32.mrb[0].mxu0
  %v217 = vadd.f32 %v69, %v216
  %v218 = vpop.f32.mrb[0].mxu0
  %219 = vmatprep.mubr.f32.mxu0 %v94
  %220 = vmatmul.mubr.f32.gmra.mrb[0].mxu0 %v28
  %v221 = vpop.f32.mrb[0].mxu0
  %v222 = vadd.f32 %v69, %v221
  %v223 = vpop.f32.mrb[0].mxu0
  %224 = vmatprep.mubr.f32.mxu0 %v97
  %225 = vmatmul.mubr.f32.gmra.mrb[0].mxu0 %v30
  %v226 = vpop.f32.mrb[0].mxu0
  %v227 = vadd.f32 %v69, %v226
  %v228 = vpop.f32.mrb[0].mxu0
  %229 = vmatprep.mubr.f32.mxu0 %v100
  %230 = vmatmul.mubr.f32.gmra.mrb[0].mxu0 %v32
  %v231 = vpop.f32.mrb[0].mxu0
  %v232 = vadd.f32 %v69, %v231
  %v233 = vpop.f32.mrb[0].mxu0
  %234 = vmatprep.mubr.f32.mxu0 %v103
  %235 = vmatmul.mubr.f32.gmra.mrb[0].mxu0 %v34
  %v236 = vpop.f32.mrb[0].mxu0
  %v237 = vadd.f32 %v69, %v236
  %v238 = vpop.f32.mrb[0].mxu0
  %239 = vmatprep.mubr.f32.mxu0 %v106
  %240 = vmatmul.mubr.f32.gmra.mrb[0].mxu0 %v36
  %v241 = vpop.f32.mrb[0].mxu0
  %v242 = vadd.f32 %v69, %v241
  %v243 = vpop.f32.mrb[0].mxu0
  %244 = vmatprep.mubr.f32.mxu0 %v109
  %245 = vmatmul.mubr.f32.gmra.mrb[0].mxu0 %v38
  %v246 = vpop.f32.mrb[0].mxu0
  %v247 = vadd.f32 %v69, %v246
  %v248 = vpop.f32.mrb[0].mxu0
  %249 = vmatprep.mubr.f32.mxu0 %v112
  %250 = vmatmul.mubr.f32.gmra.mrb[0].mxu0 %v40
  %v251 = vpop.f32.mrb[0].mxu0
  %v252 = vadd.f32 %v69, %v251
  %v253 = vpop.f32.mrb[0].mxu0
  %254 = vmatprep.mubr.f32.mxu0 %v115
  %255 = vmatmul.mubr.f32.gmra.mrb[0].mxu0 %v42
  %v256 = vpop.f32.mrb[0].mxu0
  %v257 = vadd.f32 %v69, %v256
  %v258 = vpop.f32.mrb[0].mxu0
  %259 = vmatprep.mubr.f32.mxu0 %v118
  %260 = vmatmul.mubr.f32.gmra.mrb[0].mxu0 %v44
  %v261 = vpop.f32.mrb[0].mxu0
  %v262 = vadd.f32 %v69, %v261
  %v263 = vpop.f32.mrb[0].mxu0
  %264 = vdwg.mxu0
  %v265 = vmax.f32 %v187, 0.0
  %v266 = vmax.f32 %v192, 0.0
  %v267 = vmax.f32 %v197, 0.0
  %v268 = vmax.f32 %v202, 0.0
  %v269 = vmax.f32 %v207, 0.0
  %v270 = vmax.f32 %v212, 0.0
  %v271 = vmax.f32 %v217, 0.0
  %v272 = vmax.f32 %v222, 0.0
  %v273 = vmax.f32 %v227, 0.0
  %v274 = vmax.f32 %v232, 0.0
  %v275 = vmax.f32 %v237, 0.0
  %v276 = vmax.f32 %v242, 0.0
  %v277 = vmax.f32 %v247, 0.0
  %v278 = vmax.f32 %v252, 0.0
  %v279 = vmax.f32 %v257, 0.0
  %v280 = vmax.f32 %v262, 0.0
  %v281 = vsel %vm71, %v265, 0.0
  %v282 = vsel %vm71, %v266, 0.0
  %v283 = vadd.f32 %v281, %v282
  %v284 = vsel %vm71, %v267, 0.0
  %v285 = vadd.f32 %v283, %v284
  %v286 = vsel %vm71, %v268, 0.0
  %v287 = vadd.f32 %v285, %v286
  %v288 = vsel %vm71, %v269, 0.0
  %v289 = vadd.f32 %v287, %v288
  %v290 = vsel %vm71, %v270, 0.0
  %v291 = vadd.f32 %v289, %v290
  %v292 = vsel %vm71, %v271, 0.0
  %v293 = vadd.f32 %v291, %v292
  %v294 = vsel %vm71, %v272, 0.0
  %v295 = vadd.f32 %v293, %v294
  %v296 = vsel %vm71, %v273, 0.0
  %v297 = vadd.f32 %v295, %v296
  %v298 = vsel %vm71, %v274, 0.0
  %v299 = vadd.f32 %v297, %v298
  %v300 = vsel %vm71, %v275, 0.0
  %v301 = vadd.f32 %v299, %v300
  %v302 = vsel %vm71, %v276, 0.0
  %v303 = vadd.f32 %v301, %v302
  %v304 = vsel %vm71, %v277, 0.0
  %v305 = vadd.f32 %v303, %v304
  %v306 = vsel %vm71, %v278, 0.0
  %v307 = vadd.f32 %v305, %v306
  %v308 = vsel %vm71, %v279, 0.0
  %v309 = vadd.f32 %v307, %v308
  %v310 = vsel %vm71, %v280, 0.0
  %v311 = vadd.f32 %v309, %v310
  %v312 = vrot.slane %v311, 4
  %v313 = vadd.f32 %v311, %v312
  %v314 = vrot.slane %v313, 2
  %v315 = vadd.f32 %v313, %v314
  %v316 = vrot.slane %v315, 1
  %v317 = vadd.f32 %v315, %v316
  %v318 = vrcp.pop 128.0
  %v319 = vmul.f32 %v317, %v318
  %v320 = vsub.f32 %v265, %v319
  %v321 = vsub.f32 %v266, %v319
  %v322 = vsub.f32 %v267, %v319
  %v323 = vsub.f32 %v268, %v319
  %v324 = vsub.f32 %v269, %v319
  %v325 = vsub.f32 %v270, %v319
  %v326 = vsub.f32 %v271, %v319
  %v327 = vsub.f32 %v272, %v319
  %v328 = vsub.f32 %v273, %v319
  %v329 = vsub.f32 %v274, %v319
  %v330 = vsub.f32 %v275, %v319
  %v331 = vsub.f32 %v276, %v319
  %v332 = vsub.f32 %v277, %v319
  %v333 = vsub.f32 %v278, %v319
  %v334 = vsub.f32 %v279, %v319
  %v335 = vsub.f32 %v280, %v319
  %v336 = vmul.f32 %v320, %v320
  %v337 = vmul.f32 %v321, %v321
  %v338 = vmul.f32 %v322, %v322
  %v339 = vmul.f32 %v323, %v323
  %v340 = vmul.f32 %v324, %v324
  %v341 = vmul.f32 %v325, %v325
  %v342 = vmul.f32 %v326, %v326
  %v343 = vmul.f32 %v327, %v327
  %v344 = vmul.f32 %v328, %v328
  %v345 = vmul.f32 %v329, %v329
  %v346 = vmul.f32 %v330, %v330
  %v347 = vmul.f32 %v331, %v331
  %v348 = vmul.f32 %v332, %v332
  %v349 = vmul.f32 %v333, %v333
  %v350 = vmul.f32 %v334, %v334
  %v351 = vmul.f32 %v335, %v335
  %v352 = vsel %vm71, %v336, 0.0
  %v353 = vsel %vm71, %v337, 0.0
  %v354 = vadd.f32 %v352, %v353
  %v355 = vsel %vm71, %v338, 0.0
  %v356 = vadd.f32 %v354, %v355
  %v357 = vsel %vm71, %v339, 0.0
  %v358 = vadd.f32 %v356, %v357
  %v359 = vsel %vm71, %v340, 0.0
  %v360 = vadd.f32 %v358, %v359
  %v361 = vsel %vm71, %v341, 0.0
  %v362 = vadd.f32 %v360, %v361
  %v363 = vsel %vm71, %v342, 0.0
  %v364 = vadd.f32 %v362, %v363
  %v365 = vsel %vm71, %v343, 0.0
  %v366 = vadd.f32 %v364, %v365
  %v367 = vsel %vm71, %v344, 0.0
  %v368 = vadd.f32 %v366, %v367
  %v369 = vsel %vm71, %v345, 0.0
  %v370 = vadd.f32 %v368, %v369
  %v371 = vsel %vm71, %v346, 0.0
  %v372 = vadd.f32 %v370, %v371
  %v373 = vsel %vm71, %v347, 0.0
  %v374 = vadd.f32 %v372, %v373
  %v375 = vsel %vm71, %v348, 0.0
  %v376 = vadd.f32 %v374, %v375
  %v377 = vsel %vm71, %v349, 0.0
  %v378 = vadd.f32 %v376, %v377
  %v379 = vsel %vm71, %v350, 0.0
  %v380 = vadd.f32 %v378, %v379
  %v381 = vsel %vm71, %v351, 0.0
  %v382 = vadd.f32 %v380, %v381
  %v383 = vrot.slane %v382, 4
  %v384 = vadd.f32 %v382, %v383
  %v385 = vrot.slane %v384, 2
  %v386 = vadd.f32 %v384, %v385
  %v387 = vrot.slane %v386, 1
  %v388 = vadd.f32 %v386, %v387
  %v389 = vmul.f32 %v388, %v318
  %v390 = vadd.f32 %v389, 1e-05
  %v391 = vrsqrt.pop %v390
  %v392 = vmul.f32 %v320, %v391
  %v393 = vmul.f32 %v321, %v391
  %v394 = vmul.f32 %v322, %v391
  %v395 = vmul.f32 %v323, %v391
  %v396 = vmul.f32 %v324, %v391
  %v397 = vmul.f32 %v325, %v391
  %v398 = vmul.f32 %v326, %v391
  %v399 = vmul.f32 %v327, %v391
  %v400 = vmul.f32 %v328, %v391
  %v401 = vmul.f32 %v329, %v391
  %v402 = vmul.f32 %v330, %v391
  %v403 = vmul.f32 %v331, %v391
  %v404 = vmul.f32 %v332, %v391
  %v405 = vmul.f32 %v333, %v391
  %v406 = vmul.f32 %v334, %v391
  %v407 = vmul.f32 %v335, %v391
  %408 = vst.msk [vmem:[%s3] sm:$0xff] %vm71, %v392
  %409 = vst.msk [vmem:[%s3 + $0x8] sm:$0xff] %vm71, %v393
  %410 = vst.msk [vmem:[%s3 + $0x10] sm:$0xff] %vm71, %v394
  %411 = vst.msk [vmem:[%s3 + $0x18] sm:$0xff] %vm71, %v395
  %412 = vst.msk [vmem:[%s3 + $0x20] sm:$0xff] %vm71, %v396
  %413 = vst.msk [vmem:[%s3 + $0x28] sm:$0xff] %vm71, %v397
  %414 = vst.msk [vmem:[%s3 + $0x30] sm:$0xff] %vm71, %v398
  %415 = vst.msk [vmem:[%s3 + $0x38] sm:$0xff] %vm71, %v399
  %416 = vst.msk [vmem:[%s3 + $0x40] sm:$0xff] %vm71, %v400
  %417 = vst.msk [vmem:[%s3 + $0x48] sm:$0xff] %vm71, %v401
  %418 = vst.msk [vmem:[%s3 + $0x50] sm:$0xff] %vm71, %v402
  %419 = vst.msk [vmem:[%s3 + $0x58] sm:$0xff] %vm71, %v403
  %420 = vst.msk [vmem:[%s3 + $0x60] sm:$0xff] %vm71, %v404
  %421 = vst.msk [vmem:[%s3 + $0x68] sm:$0xff] %vm71, %v405
  %422 = vst.msk [vmem:[%s3 + $0x70] sm:$0xff] %vm71, %v406
  %423 = vst.msk [vmem:[%s3 + $0x78] sm:$0xff] %vm71, %v407
  // Predicated region
  $region14: #{wnet_forward.43} parent=0 // pred_check
    _
  $region15: #{wnet_forward.43} parent=0 // pred_check_branch
    %425 = sbr.rel (0) target = $region17
  $region16: #{wnet_forward.43} parent=0 // pred_region
    _
  $region17: #{wnet_forward.43} parent=0 // pred_fallthru
    _
  // Predicated region
  $region18: #{wnet_forward.43} parent=0 // pred_check
    _
  $region19: #{wnet_forward.43} parent=0 // pred_check_branch
    %427 = sbr.rel (0) target = $region21
  $region20: #{wnet_forward.43} parent=0 // pred_region
    _
  $region21: #{wnet_forward.43} parent=0 // pred_fallthru
    _

// kernel: tile.28
$region0: #{tile.28}
  #allocation0 [shape = 's32[1]{0}', space=sflag, size = 0x4, scoped, tag = 'scoped memory for tile.28']
  %s0 = inlined_call_operand.vmem [shape: f32[8], index: 0, kind: input, shape index: {}]
  %s1 = inlined_call_operand.vmem [shape: f32[4,8], index: 1, kind: output, shape index: {}]
  // Predicated region
  $region2: #{tile.28} parent=0 // pred_check
    _
  $region3: #{tile.28} parent=0 // pred_check_branch
    %3 = sbr.rel (0) target = $region5
  $region4: #{tile.28} parent=0 // pred_region
    _
  $region5: #{tile.28} parent=0 // pred_fallthru
    _
  %v4 = vld [vmem:[%s0] ss:$0 sm:$0xff]
  %5 = vst [vmem:[%s1] sm:$0xf] %v4

// kernel: tile.29
$region0: #{tile.29}
  %s0 = inlined_call_operand.vmem [shape: f32[4,8], index: 0, kind: input, shape index: {}]
  %s1 = inlined_call_operand.vmem [shape: f32[1,32], index: 1, kind: output, shape index: {}]
  $region1: #{tile.29} parent=0
    #allocation0 [shape = 'u8[4096]{0}', space=vmem, size = 0x1000, scoped, tag = 'scoped mem for output reshape']
    #allocation1 [shape = 'u8[4096]{0}', space=vmem, size = 0x1000, scoped, tag = 'scoped mem for input reshape']
    %s3 = sshllo.u32 0, 4
    %v4 = vld [vmem:[%s0] sm:%s3]
    %5 = vst [vmem:[#allocation1] sm:%s3] %v4
    %v6 = vld [vmem:[#allocation1] sm:$0x1]
    %vm7 = vcmask 64512
    %8 = vst.msk [vmem:[#allocation0] sm:$0x1] %vm7, %v6
    %s9 = scalar_lea.vmem [#allocation1], 3
    %v10 = vld [vmem:[%s9] sm:$0x1]
    %11 = vrot.lane.b32.xlu0 %v10, 24
    %v12 = vpop.permute.xlu0 %11
    %vm13 = vcmask 261312
    %14 = vst.msk [vmem:[#allocation0] sm:$0x1] %vm13, %v12
    %s15 = scalar_lea.vmem [#allocation1], 2
    %v16 = vld [vmem:[%s15] sm:$0x1]
    %17 = vrot.lane.b32.xlu0 %v16, 16
    %v18 = vpop.permute.xlu0 %17
    %vm19 = vcmask 195712
    %20 = vst.msk [vmem:[#allocation0] sm:$0x1] %vm19, %v18
    %s21 = scalar_lea.vmem [#allocation1], 1
    %v22 = vld [vmem:[%s21] sm:$0x1]
    %23 = vrot.lane.b32.xlu0 %v22, 8
    %v24 = vpop.permute.xlu0 %23
    %vm25 = vcmask 130112
    %26 = vst.msk [vmem:[#allocation0] sm:$0x1] %vm25, %v24
    %s28 = sshllo.u32 0, 1
    %v30 = vld [vmem:[#allocation0] sm:%s28]
    %s31 = sshllo.u32 0, 1
    %32 = vst [vmem:[%s1] sm:%s31] %v30

// kernel: wnet_forward.46
$region0: #{wnet_forward.46}
  #allocation0 [shape = 'u32[]', space=smem, size = 0x4, offset = 0x4, fixed_abs, tag = 'smem constant byte address 0x4 - core index']
  #allocation1 [shape = 'u32[144,128]{1,0:T(1,128)}', space=vmem, size = 0x12000, scoped, tag = 'internal scratch']
  %s0 = inlined_call_operand.vmem [shape: f32[128,16], index: 0, kind: input, shape index: {}]
  %s1 = inlined_call_operand.vmem [shape: f32[16,32], index: 1, kind: input, shape index: {}]
  %s2 = inlined_call_operand.vmem [shape: f32[1,32], index: 2, kind: input, shape index: {}]
  %s3 = inlined_call_operand.vmem [shape: f32[128,32], index: 3, kind: output, shape index: {}]
  %s4 = sld [smem:[#allocation0]]
  $region22: #{wnet_forward.46} parent=0
    _
  %s6 = ssub.s32 1, %s4
  %s7 = scalar_select 0, %s6, %s4
  // Predicated region
  $region2: #{wnet_forward.46} parent=0 // pred_check
    _
  $region3: #{wnet_forward.46} parent=0 // pred_check_branch
    %9 = sbr.rel (0) target = $region5
  $region4: #{wnet_forward.46} parent=0 // pred_region
    _
  $region5: #{wnet_forward.46} parent=0 // pred_fallthru
    _
  // Predicated region
  $region6: #{wnet_forward.46} parent=0 // pred_check
    _
  $region7: #{wnet_forward.46} parent=0 // pred_check_branch
    %11 = sbr.rel (0) target = $region9
  $region8: #{wnet_forward.46} parent=0 // pred_region
    _
  $region9: #{wnet_forward.46} parent=0 // pred_fallthru
    _
  // Predicated region
  $region10: #{wnet_forward.46} parent=0 // pred_check
    _
  $region11: #{wnet_forward.46} parent=0 // pred_check_branch
    %13 = sbr.rel (0) target = $region13
  $region12: #{wnet_forward.46} parent=0 // pred_region
    _
  $region13: #{wnet_forward.46} parent=0 // pred_fallthru
    _
  %v14 = vld [vmem:[%s0] sm:$0xff]
  %v15 = vld [vmem:[%s0 + $0x8] sm:$0xff]
  %v16 = vld [vmem:[%s0 + $0x10] sm:$0xff]
  %v17 = vld [vmem:[%s0 + $0x18] sm:$0xff]
  %v18 = vld [vmem:[%s0 + $0x20] sm:$0xff]
  %v19 = vld [vmem:[%s0 + $0x28] sm:$0xff]
  %v20 = vld [vmem:[%s0 + $0x30] sm:$0xff]
  %v21 = vld [vmem:[%s0 + $0x38] sm:$0xff]
  %v22 = vld [vmem:[%s0 + $0x40] sm:$0xff]
  %v23 = vld [vmem:[%s0 + $0x48] sm:$0xff]
  %v24 = vld [vmem:[%s0 + $0x50] sm:$0xff]
  %v25 = vld [vmem:[%s0 + $0x58] sm:$0xff]
  %v26 = vld [vmem:[%s0 + $0x60] sm:$0xff]
  %v27 = vld [vmem:[%s0 + $0x68] sm:$0xff]
  %v28 = vld [vmem:[%s0 + $0x70] sm:$0xff]
  %v29 = vld [vmem:[%s0 + $0x78] sm:$0xff]
  %v30 = vld [vmem:[%s1] sm:$0xff]
  %v31 = vld [vmem:[%s1 + $0x8] sm:$0xff]
  %v32 = vld [vmem:[%s2] sm:$0x1]
  %v34 = vlaneseq
  %v35 = vshrl.u32 %v34, 7
  %v36 = vsub.s32 0, %v35
  %v37 = vrot.slane %v32, %v36
  %vm39 = vcmask 130048
  %v41 = vsel %vm39, %v14, 0
  %v44 = vsel %vm39, %v15, 0
  %v47 = vsel %vm39, %v16, 0
  %v50 = vsel %vm39, %v17, 0
  %v53 = vsel %vm39, %v18, 0
  %v56 = vsel %vm39, %v19, 0
  %v59 = vsel %vm39, %v20, 0
  %v62 = vsel %vm39, %v21, 0
  %v65 = vsel %vm39, %v22, 0
  %v68 = vsel %vm39, %v23, 0
  %v71 = vsel %vm39, %v24, 0
  %v74 = vsel %vm39, %v25, 0
  %v77 = vsel %vm39, %v26, 0
  %v80 = vsel %vm39, %v27, 0
  %v83 = vsel %vm39, %v28, 0
  %v86 = vsel %vm39, %v29, 0
  %88 = vmatprep.subr.mxu0 0.0
  %89 = vmatpush1.msra.mxu0 %v30
  %90 = vmatprep.subr.mxu0 0.0
  %91 = vmatpush1.msra.mxu0 %v31
  %92 = vmatprep.subr.mxu0 0.0
  %93 = vmatpush1.msra.mxu0 0.0
  %94 = vmatprep.subr.mxu0 0.0
  %95 = vmatpush1.msra.mxu0 0.0
  %96 = vmatprep.subr.mxu0 0.0
  %97 = vmatpush1.msra.mxu0 0.0
  %98 = vmatprep.subr.mxu0 0.0
  %99 = vmatpush1.msra.mxu0 0.0
  %100 = vmatprep.subr.mxu0 0.0
  %101 = vmatpush1.msra.mxu0 0.0
  %102 = vmatprep.subr.mxu0 0.0
  %103 = vmatpush1.msra.mxu0 0.0
  %104 = vmatprep.subr.mxu0 0.0
  %105 = vmatpush1.msra.mxu0 0.0
  %106 = vmatprep.subr.mxu0 0.0
  %107 = vmatpush1.msra.mxu0 0.0
  %108 = vmatprep.subr.mxu0 0.0
  %109 = vmatpush1.msra.mxu0 0.0
  %110 = vmatprep.subr.mxu0 0.0
  %111 = vmatpush1.msra.mxu0 0.0
  %112 = vmatprep.subr.mxu0 0.0
  %113 = vmatpush1.msra.mxu0 0.0
  %114 = vmatprep.subr.mxu0 0.0
  %115 = vmatpush1.msra.mxu0 0.0
  %116 = vmatprep.subr.mxu0 0.0
  %117 = vmatpush1.msra.mxu0 0.0
  %118 = vmatprep.subr.mxu0 0.0
  %119 = vmatpush1.msra.mxu0 0.0
  %120 = vmatprep.subr.mxu0 0.0
  %121 = vmatpush1.msra.mxu0 0.0
  %122 = vmatprep.subr.mxu0 0.0
  %123 = vmatpush1.msra.mxu0 0.0
  %124 = vmatprep.subr.mxu0 0.0
  %125 = vmatpush1.msra.mxu0 0.0
  %126 = vmatprep.subr.mxu0 0.0
  %127 = vmatpush1.msra.mxu0 0.0
  %128 = vmatprep.subr.mxu0 0.0
  %129 = vmatpush1.msra.mxu0 0.0
  %130 = vmatprep.subr.mxu0 0.0
  %131 = vmatpush1.msra.mxu0 0.0
  %132 = vmatprep.subr.mxu0 0.0
  %133 = vmatpush1.msra.mxu0 0.0
  %134 = vmatprep.subr.mxu0 0.0
  %135 = vmatpush1.msra.mxu0 0.0
  %136 = vmatprep.subr.mxu0 0.0
  %137 = vmatpush1.msra.mxu0 0.0
  %138 = vmatprep.subr.mxu0 0.0
  %139 = vmatpush1.msra.mxu0 0.0
  %140 = vmatprep.subr.mxu0 0.0
  %141 = vmatpush1.msra.mxu0 0.0
  %142 = vmatprep.subr.mxu0 0.0
  %143 = vmatpush1.msra.mxu0 0.0
  %144 = vmatprep.subr.mxu0 0.0
  %145 = vmatpush1.msra.mxu0 0.0
  %146 = vmatprep.subr.mxu0 0.0
  %147 = vmatpush1.msra.mxu0 0.0
  %148 = vmatprep.subr.mxu0 0.0
  %149 = vmatpush1.msra.mxu0 0.0
  %150 = vmatprep.subr.mxu0 0.0
  %151 = vmatpush1.msra.mxu0 0.0
  %152 = vmatprep.mubr.f32.mxu0 0.0
  %153 = vmatmul.mubr.f32.gmra.mrb[0].mxu0 %v41
  %v154 = vpop.f32.mrb[0].mxu0
  %v155 = vadd.f32 %v37, %v154
  %v156 = vpop.f32.mrb[0].mxu0
  %157 = vmatprep.mubr.f32.mxu0 0.0
  %158 = vmatmul.mubr.f32.gmra.mrb[0].mxu0 %v44
  %v159 = vpop.f32.mrb[0].mxu0
  %v160 = vadd.f32 %v37, %v159
  %v161 = vpop.f32.mrb[0].mxu0
  %162 = vmatprep.mubr.f32.mxu0 0.0
  %163 = vmatmul.mubr.f32.gmra.mrb[0].mxu0 %v47
  %v164 = vpop.f32.mrb[0].mxu0
  %v165 = vadd.f32 %v37, %v164
  %v166 = vpop.f32.mrb[0].mxu0
  %167 = vmatprep.mubr.f32.mxu0 0.0
  %168 = vmatmul.mubr.f32.gmra.mrb[0].mxu0 %v50
  %v169 = vpop.f32.mrb[0].mxu0
  %v170 = vadd.f32 %v37, %v169
  %v171 = vpop.f32.mrb[0].mxu0
  %172 = vmatprep.mubr.f32.mxu0 0.0
  %173 = vmatmul.mubr.f32.gmra.mrb[0].mxu0 %v53
  %v174 = vpop.f32.mrb[0].mxu0
  %v175 = vadd.f32 %v37, %v174
  %v176 = vpop.f32.mrb[0].mxu0
  %177 = vmatprep.mubr.f32.mxu0 0.0
  %178 = vmatmul.mubr.f32.gmra.mrb[0].mxu0 %v56
  %v179 = vpop.f32.mrb[0].mxu0
  %v180 = vadd.f32 %v37, %v179
  %v181 = vpop.f32.mrb[0].mxu0
  %182 = vmatprep.mubr.f32.mxu0 0.0
  %183 = vmatmul.mubr.f32.gmra.mrb[0].mxu0 %v59
  %v184 = vpop.f32.mrb[0].mxu0
  %v185 = vadd.f32 %v37, %v184
  %v186 = vpop.f32.mrb[0].mxu0
  %187 = vmatprep.mubr.f32.mxu0 0.0
  %188 = vmatmul.mubr.f32.gmra.mrb[0].mxu0 %v62
  %v189 = vpop.f32.mrb[0].mxu0
  %v190 = vadd.f32 %v37, %v189
  %v191 = vpop.f32.mrb[0].mxu0
  %192 = vmatprep.mubr.f32.mxu0 0.0
  %193 = vmatmul.mubr.f32.gmra.mrb[0].mxu0 %v65
  %v194 = vpop.f32.mrb[0].mxu0
  %v195 = vadd.f32 %v37, %v194
  %v196 = vpop.f32.mrb[0].mxu0
  %197 = vmatprep.mubr.f32.mxu0 0.0
  %198 = vmatmul.mubr.f32.gmra.mrb[0].mxu0 %v68
  %v199 = vpop.f32.mrb[0].mxu0
  %v200 = vadd.f32 %v37, %v199
  %v201 = vpop.f32.mrb[0].mxu0
  %202 = vmatprep.mubr.f32.mxu0 0.0
  %203 = vmatmul.mubr.f32.gmra.mrb[0].mxu0 %v71
  %v204 = vpop.f32.mrb[0].mxu0
  %v205 = vadd.f32 %v37, %v204
  %v206 = vpop.f32.mrb[0].mxu0
  %207 = vmatprep.mubr.f32.mxu0 0.0
  %208 = vmatmul.mubr.f32.gmra.mrb[0].mxu0 %v74
  %v209 = vpop.f32.mrb[0].mxu0
  %v210 = vadd.f32 %v37, %v209
  %v211 = vpop.f32.mrb[0].mxu0
  %212 = vmatprep.mubr.f32.mxu0 0.0
  %213 = vmatmul.mubr.f32.gmra.mrb[0].mxu0 %v77
  %v214 = vpop.f32.mrb[0].mxu0
  %v215 = vadd.f32 %v37, %v214
  %v216 = vpop.f32.mrb[0].mxu0
  %217 = vmatprep.mubr.f32.mxu0 0.0
  %218 = vmatmul.mubr.f32.gmra.mrb[0].mxu0 %v80
  %v219 = vpop.f32.mrb[0].mxu0
  %v220 = vadd.f32 %v37, %v219
  %v221 = vpop.f32.mrb[0].mxu0
  %222 = vmatprep.mubr.f32.mxu0 0.0
  %223 = vmatmul.mubr.f32.gmra.mrb[0].mxu0 %v83
  %v224 = vpop.f32.mrb[0].mxu0
  %v225 = vadd.f32 %v37, %v224
  %v226 = vpop.f32.mrb[0].mxu0
  %227 = vmatprep.mubr.f32.mxu0 0.0
  %228 = vmatmul.mubr.f32.gmra.mrb[0].mxu0 %v86
  %v229 = vpop.f32.mrb[0].mxu0
  %v230 = vadd.f32 %v37, %v229
  %v231 = vpop.f32.mrb[0].mxu0
  %232 = vdwg.mxu0
  %vm233 = vcmask 261120
  %234 = vst.msk [vmem:[%s3] sm:$0xff] %vm233, %v155
  %235 = vst.msk [vmem:[%s3 + $0x8] sm:$0xff] %vm233, %v160
  %236 = vst.msk [vmem:[%s3 + $0x10] sm:$0xff] %vm233, %v165
  %237 = vst.msk [vmem:[%s3 + $0x18] sm:$0xff] %vm233, %v170
  %238 = vst.msk [vmem:[%s3 + $0x20] sm:$0xff] %vm233, %v175
  %239 = vst.msk [vmem:[%s3 + $0x28] sm:$0xff] %vm233, %v180
  %240 = vst.msk [vmem:[%s3 + $0x30] sm:$0xff] %vm233, %v185
  %241 = vst.msk [vmem:[%s3 + $0x38] sm:$0xff] %vm233, %v190
  %242 = vst.msk [vmem:[%s3 + $0x40] sm:$0xff] %vm233, %v195
  %243 = vst.msk [vmem:[%s3 + $0x48] sm:$0xff] %vm233, %v200
  %244 = vst.msk [vmem:[%s3 + $0x50] sm:$0xff] %vm233, %v205
  %245 = vst.msk [vmem:[%s3 + $0x58] sm:$0xff] %vm233, %v210
  %246 = vst.msk [vmem:[%s3 + $0x60] sm:$0xff] %vm233, %v215
  %247 = vst.msk [vmem:[%s3 + $0x68] sm:$0xff] %vm233, %v220
  %248 = vst.msk [vmem:[%s3 + $0x70] sm:$0xff] %vm233, %v225
  %249 = vst.msk [vmem:[%s3 + $0x78] sm:$0xff] %vm233, %v230
  // Predicated region
  $region14: #{wnet_forward.46} parent=0 // pred_check
    _
  $region15: #{wnet_forward.46} parent=0 // pred_check_branch
    %251 = sbr.rel (0) target = $region17
  $region16: #{wnet_forward.46} parent=0 // pred_region
    _
  $region17: #{wnet_forward.46} parent=0 // pred_fallthru
    _
  // Predicated region
  $region18: #{wnet_forward.46} parent=0 // pred_check
    _
  $region19: #{wnet_forward.46} parent=0 // pred_check_branch
    %253 = sbr.rel (0) target = $region21
  $region20: #{wnet_forward.46} parent=0 // pred_region
    _
  $region21: #{wnet_forward.46} parent=0 // pred_fallthru
    _

// kernel: wnet_forward.44
$region0: #{wnet_forward.44}
  #allocation0 [shape = 'u32[]', space=smem, size = 0x4, offset = 0x4, fixed_abs, tag = 'smem constant byte address 0x4 - core index']
  #allocation1 [shape = 'u32[144,128]{1,0:T(1,128)}', space=vmem, size = 0x12000, scoped, tag = 'internal scratch']
  %s0 = inlined_call_operand.vmem [shape: f32[128,288], index: 0, kind: input, shape index: {}]
  %s1 = inlined_call_operand.vmem [shape: f32[288,32], index: 1, kind: input, shape index: {}]
  %s2 = inlined_call_operand.vmem [shape: f32[1,32], index: 2, kind: input, shape index: {}]
  %s3 = inlined_call_operand.vmem [shape: f32[128,32], index: 3, kind: output, shape index: {}]
  %s4 = sld [smem:[#allocation0]]
  $region22: #{wnet_forward.44} parent=0
    _
  %s6 = ssub.s32 1, %s4
  %s7 = scalar_select 0, %s6, %s4
  // Predicated region
  $region2: #{wnet_forward.44} parent=0 // pred_check
    _
  $region3: #{wnet_forward.44} parent=0 // pred_check_branch
    %9 = sbr.rel (0) target = $region5
  $region4: #{wnet_forward.44} parent=0 // pred_region
    _
  $region5: #{wnet_forward.44} parent=0 // pred_fallthru
    _
  // Predicated region
  $region6: #{wnet_forward.44} parent=0 // pred_check
    _
  $region7: #{wnet_forward.44} parent=0 // pred_check_branch
    %11 = sbr.rel (0) target = $region9
  $region8: #{wnet_forward.44} parent=0 // pred_region
    _
  $region9: #{wnet_forward.44} parent=0 // pred_fallthru
    _
  // Predicated region
  $region10: #{wnet_forward.44} parent=0 // pred_check
    _
  $region11: #{wnet_forward.44} parent=0 // pred_check_branch
    %13 = sbr.rel (0) target = $region13
  $region12: #{wnet_forward.44} parent=0 // pred_region
    _
  $region13: #{wnet_forward.44} parent=0 // pred_fallthru
    _
  %v14 = vld [vmem:[%s0] sm:$0xff]
  %v15 = vld [vmem:[%s0 + $0x8] sm:$0xff]
  %v16 = vld [vmem:[%s0 + $0x10] sm:$0xff]
  %v17 = vld [vmem:[%s0 + $0x18] sm:$0xff]
  %v18 = vld [vmem:[%s0 + $0x20] sm:$0xff]
  %v19 = vld [vmem:[%s0 + $0x28] sm:$0xff]
  %v20 = vld [vmem:[%s0 + $0x30] sm:$0xff]
  %v21 = vld [vmem:[%s0 + $0x38] sm:$0xff]
  %v22 = vld [vmem:[%s0 + $0x40] sm:$0xff]
  %v23 = vld [vmem:[%s0 + $0x48] sm:$0xff]
  %v24 = vld [vmem:[%s0 + $0x50] sm:$0xff]
  %v25 = vld [vmem:[%s0 + $0x58] sm:$0xff]
  %v26 = vld [vmem:[%s0 + $0x60] sm:$0xff]
  %v27 = vld [vmem:[%s0 + $0x68] sm:$0xff]
  %v28 = vld [vmem:[%s0 + $0x70] sm:$0xff]
  %v29 = vld [vmem:[%s0 + $0x78] sm:$0xff]
  %v30 = vld [vmem:[%s0 + $0x80] sm:$0xff]
  %v31 = vld [vmem:[%s0 + $0x88] sm:$0xff]
  %v32 = vld [vmem:[%s0 + $0x90] sm:$0xff]
  %v33 = vld [vmem:[%s0 + $0x98] sm:$0xff]
  %v34 = vld [vmem:[%s0 + $0xa0] sm:$0xff]
  %v35 = vld [vmem:[%s0 + $0xa8] sm:$0xff]
  %v36 = vld [vmem:[%s0 + $0xb0] sm:$0xff]
  %v37 = vld [vmem:[%s0 + $0xb8] sm:$0xff]
  %v38 = vld [vmem:[%s0 + $0xc0] sm:$0xff]
  %v39 = vld [vmem:[%s0 + $0xc8] sm:$0xff]
  %v40 = vld [vmem:[%s0 + $0xd0] sm:$0xff]
  %v41 = vld [vmem:[%s0 + $0xd8] sm:$0xff]
  %v42 = vld [vmem:[%s0 + $0xe0] sm:$0xff]
  %v43 = vld [vmem:[%s0 + $0xe8] sm:$0xff]
  %v44 = vld [vmem:[%s0 + $0xf0] sm:$0xff]
  %v45 = vld [vmem:[%s0 + $0xf8] sm:$0xff]
  %v46 = vld [vmem:[%s0 + $0x100] sm:$0xff]
  %v47 = vld [vmem:[%s0 + $0x108] sm:$0xff]
  %v48 = vld [vmem:[%s0 + $0x110] sm:$0xff]
  %v49 = vld [vmem:[%s0 + $0x118] sm:$0xff]
  %v50 = vld [vmem:[%s0 + $0x120] sm:$0xff]
  %v51 = vld [vmem:[%s0 + $0x128] sm:$0xff]
  %v52 = vld [vmem:[%s0 + $0x130] sm:$0xff]
  %v53 = vld [vmem:[%s0 + $0x138] sm:$0xff]
  %v54 = vld [vmem:[%s0 + $0x140] sm:$0xff]
  %v55 = vld [vmem:[%s0 + $0x148] sm:$0xff]
  %v56 = vld [vmem:[%s0 + $0x150] sm:$0xff]
  %v57 = vld [vmem:[%s0 + $0x158] sm:$0xff]
  %v58 = vld [vmem:[%s0 + $0x160] sm:$0xff]
  %v59 = vld [vmem:[%s0 + $0x168] sm:$0xff]
  %v60 = vld [vmem:[%s0 + $0x170] sm:$0xff]
  %v61 = vld [vmem:[%s0 + $0x178] sm:$0xff]
  %v62 = vld [vmem:[%s1] sm:$0xff]
  %v63 = vld [vmem:[%s1 + $0x8] sm:$0xff]
  %v64 = vld [vmem:[%s1 + $0x10] sm:$0xff]
  %v65 = vld [vmem:[%s1 + $0x18] sm:$0xff]
  %v66 = vld [vmem:[%s1 + $0x20] sm:$0xff]
  %v67 = vld [vmem:[%s1 + $0x28] sm:$0xff]
  %v68 = vld [vmem:[%s1 + $0x30] sm:$0xff]
  %v69 = vld [vmem:[%s1 + $0x38] sm:$0xff]
  %v70 = vld [vmem:[%s1 + $0x40] sm:$0xff]
  %v71 = vld [vmem:[%s1 + $0x48] sm:$0xff]
  %v72 = vld [vmem:[%s1 + $0x50] sm:$0xff]
  %v73 = vld [vmem:[%s1 + $0x58] sm:$0xff]
  %v74 = vld [vmem:[%s1 + $0x60] sm:$0xff]
  %v75 = vld [vmem:[%s1 + $0x68] sm:$0xff]
  %v76 = vld [vmem:[%s1 + $0x70] sm:$0xff]
  %v77 = vld [vmem:[%s1 + $0x78] sm:$0xff]
  %v78 = vld [vmem:[%s1 + $0x80] sm:$0xff]
  %v79 = vld [vmem:[%s1 + $0x88] sm:$0xff]
  %v80 = vld [vmem:[%s1 + $0x90] sm:$0xff]
  %v81 = vld [vmem:[%s1 + $0x98] sm:$0xff]
  %v82 = vld [vmem:[%s1 + $0xa0] sm:$0xff]
  %v83 = vld [vmem:[%s1 + $0xa8] sm:$0xff]
  %v84 = vld [vmem:[%s1 + $0xb0] sm:$0xff]
  %v85 = vld [vmem:[%s1 + $0xb8] sm:$0xff]
  %v86 = vld [vmem:[%s1 + $0xc0] sm:$0xff]
  %v87 = vld [vmem:[%s1 + $0xc8] sm:$0xff]
  %v88 = vld [vmem:[%s1 + $0xd0] sm:$0xff]
  %v89 = vld [vmem:[%s1 + $0xd8] sm:$0xff]
  %v90 = vld [vmem:[%s1 + $0xe0] sm:$0xff]
  %v91 = vld [vmem:[%s1 + $0xe8] sm:$0xff]
  %v92 = vld [vmem:[%s1 + $0xf0] sm:$0xff]
  %v93 = vld [vmem:[%s1 + $0xf8] sm:$0xff]
  %v94 = vld [vmem:[%s1 + $0x100] sm:$0xff]
  %v95 = vld [vmem:[%s1 + $0x108] sm:$0xff]
  %v96 = vld [vmem:[%s1 + $0x110] sm:$0xff]
  %v97 = vld [vmem:[%s1 + $0x118] sm:$0xff]
  %v98 = vld [vmem:[%s2] sm:$0x1]
  %v100 = vlaneseq
  %v101 = vshrl.u32 %v100, 7
  %v102 = vsub.s32 0, %v101
  %v103 = vrot.slane %v98, %v102
  %vm105 = vcmask 261120
  %v107 = vsel %vm105, %v16, 0
  %v110 = vsel %vm105, %v19, 0
  %v113 = vsel %vm105, %v22, 0
  %v116 = vsel %vm105, %v25, 0
  %v119 = vsel %vm105, %v28, 0
  %v122 = vsel %vm105, %v31, 0
  %v125 = vsel %vm105, %v34, 0
  %v128 = vsel %vm105, %v37, 0
  %v131 = vsel %vm105, %v40, 0
  %v134 = vsel %vm105, %v43, 0
  %v137 = vsel %vm105, %v46, 0
  %v140 = vsel %vm105, %v49, 0
  %v143 = vsel %vm105, %v52, 0
  %v146 = vsel %vm105, %v55, 0
  %v149 = vsel %vm105, %v58, 0
  %v152 = vsel %vm105, %v61, 0
  %154 = vmatprep.subr.mxu0 0.0
  %155 = vmatpush1.msra.mxu0 %v62
  %156 = vmatprep.subr.mxu0 0.0
  %157 = vmatpush1.msra.mxu0 %v63
  %158 = vmatprep.subr.mxu0 0.0
  %159 = vmatpush1.msra.mxu0 %v64
  %160 = vmatprep.subr.mxu0 0.0
  %161 = vmatpush1.msra.mxu0 %v65
  %162 = vmatprep.subr.mxu0 0.0
  %163 = vmatpush1.msra.mxu0 %v66
  %164 = vmatprep.subr.mxu0 0.0
  %165 = vmatpush1.msra.mxu0 %v67
  %166 = vmatprep.subr.mxu0 0.0
  %167 = vmatpush1.msra.mxu0 %v68
  %168 = vmatprep.subr.mxu0 0.0
  %169 = vmatpush1.msra.mxu0 %v69
  %170 = vmatprep.subr.mxu0 0.0
  %171 = vmatpush1.msra.mxu0 %v70
  %172 = vmatprep.subr.mxu0 0.0
  %173 = vmatpush1.msra.mxu0 %v71
  %174 = vmatprep.subr.mxu0 0.0
  %175 = vmatpush1.msra.mxu0 %v72
  %176 = vmatprep.subr.mxu0 0.0
  %177 = vmatpush1.msra.mxu0 %v73
  %178 = vmatprep.subr.mxu0 0.0
  %179 = vmatpush1.msra.mxu0 %v74
  %180 = vmatprep.subr.mxu0 0.0
  %181 = vmatpush1.msra.mxu0 %v75
  %182 = vmatprep.subr.mxu0 0.0
  %183 = vmatpush1.msra.mxu0 %v76
  %184 = vmatprep.subr.mxu0 0.0
  %185 = vmatpush1.msra.mxu0 %v77
  %186 = vmatprep.subr.mxu0 0.0
  %187 = vmatpush1.msra.mxu0 %v78
  %188 = vmatprep.subr.mxu0 0.0
  %189 = vmatpush1.msra.mxu0 %v79
  %190 = vmatprep.subr.mxu0 0.0
  %191 = vmatpush1.msra.mxu0 %v80
  %192 = vmatprep.subr.mxu0 0.0
  %193 = vmatpush1.msra.mxu0 %v81
  %194 = vmatprep.subr.mxu0 0.0
  %195 = vmatpush1.msra.mxu0 %v82
  %196 = vmatprep.subr.mxu0 0.0
  %197 = vmatpush1.msra.mxu0 %v83
  %198 = vmatprep.subr.mxu0 0.0
  %199 = vmatpush1.msra.mxu0 %v84
  %200 = vmatprep.subr.mxu0 0.0
  %201 = vmatpush1.msra.mxu0 %v85
  %202 = vmatprep.subr.mxu0 0.0
  %203 = vmatpush1.msra.mxu0 %v86
  %204 = vmatprep.subr.mxu0 0.0
  %205 = vmatpush1.msra.mxu0 %v87
  %206 = vmatprep.subr.mxu0 0.0
  %207 = vmatpush1.msra.mxu0 %v88
  %208 = vmatprep.subr.mxu0 0.0
  %209 = vmatpush1.msra.mxu0 %v89
  %210 = vmatprep.subr.mxu0 0.0
  %211 = vmatpush1.msra.mxu0 %v90
  %212 = vmatprep.subr.mxu0 0.0
  %213 = vmatpush1.msra.mxu0 %v91
  %214 = vmatprep.subr.mxu0 0.0
  %215 = vmatpush1.msra.mxu0 %v92
  %216 = vmatprep.subr.mxu0 0.0
  %217 = vmatpush1.msra.mxu0 %v93
  %218 = vmatprep.mubr.f32.mxu0 %v15
  %219 = vmatmul.mubr.f32.gmra.mrb[0].mxu0 %v14
  %v220 = vpop.f32.mrb[0].mxu0
  %v221 = vadd.f32 %v103, %v220
  %v222 = vpop.f32.mrb[0].mxu0
  %223 = vmatprep.mubr.f32.mxu0 %v18
  %224 = vmatmul.mubr.f32.gmra.mrb[0].mxu0 %v17
  %v225 = vpop.f32.mrb[0].mxu0
  %v226 = vadd.f32 %v103, %v225
  %v227 = vpop.f32.mrb[0].mxu0
  %228 = vmatprep.mubr.f32.mxu0 %v21
  %229 = vmatmul.mubr.f32.gmra.mrb[0].mxu0 %v20
  %v230 = vpop.f32.mrb[0].mxu0
  %v231 = vadd.f32 %v103, %v230
  %v232 = vpop.f32.mrb[0].mxu0
  %233 = vmatprep.mubr.f32.mxu0 %v24
  %234 = vmatmul.mubr.f32.gmra.mrb[0].mxu0 %v23
  %v235 = vpop.f32.mrb[0].mxu0
  %v236 = vadd.f32 %v103, %v235
  %v237 = vpop.f32.mrb[0].mxu0
  %238 = vmatprep.mubr.f32.mxu0 %v27
  %239 = vmatmul.mubr.f32.gmra.mrb[0].mxu0 %v26
  %v240 = vpop.f32.mrb[0].mxu0
  %v241 = vadd.f32 %v103, %v240
  %v242 = vpop.f32.mrb[0].mxu0
  %243 = vmatprep.mubr.f32.mxu0 %v30
  %244 = vmatmul.mubr.f32.gmra.mrb[0].mxu0 %v29
  %v245 = vpop.f32.mrb[0].mxu0
  %v246 = vadd.f32 %v103, %v245
  %v247 = vpop.f32.mrb[0].mxu0
  %248 = vmatprep.mubr.f32.mxu0 %v33
  %249 = vmatmul.mubr.f32.gmra.mrb[0].mxu0 %v32
  %v250 = vpop.f32.mrb[0].mxu0
  %v251 = vadd.f32 %v103, %v250
  %v252 = vpop.f32.mrb[0].mxu0
  %253 = vmatprep.mubr.f32.mxu0 %v36
  %254 = vmatmul.mubr.f32.gmra.mrb[0].mxu0 %v35
  %v255 = vpop.f32.mrb[0].mxu0
  %v256 = vadd.f32 %v103, %v255
  %v257 = vpop.f32.mrb[0].mxu0
  %258 = vmatprep.mubr.f32.mxu0 %v39
  %259 = vmatmul.mubr.f32.gmra.mrb[0].mxu0 %v38
  %v260 = vpop.f32.mrb[0].mxu0
  %v261 = vadd.f32 %v103, %v260
  %v262 = vpop.f32.mrb[0].mxu0
  %263 = vmatprep.mubr.f32.mxu0 %v42
  %264 = vmatmul.mubr.f32.gmra.mrb[0].mxu0 %v41
  %v265 = vpop.f32.mrb[0].mxu0
  %v266 = vadd.f32 %v103, %v265
  %v267 = vpop.f32.mrb[0].mxu0
  %268 = vmatprep.mubr.f32.mxu0 %v45
  %269 = vmatmul.mubr.f32.gmra.mrb[0].mxu0 %v44
  %v270 = vpop.f32.mrb[0].mxu0
  %v271 = vadd.f32 %v103, %v270
  %v272 = vpop.f32.mrb[0].mxu0
  %273 = vmatprep.mubr.f32.mxu0 %v48
  %274 = vmatmul.mubr.f32.gmra.mrb[0].mxu0 %v47
  %v275 = vpop.f32.mrb[0].mxu0
  %v276 = vadd.f32 %v103, %v275
  %v277 = vpop.f32.mrb[0].mxu0
  %278 = vmatprep.mubr.f32.mxu0 %v51
  %279 = vmatmul.mubr.f32.gmra.mrb[0].mxu0 %v50
  %v280 = vpop.f32.mrb[0].mxu0
  %v281 = vadd.f32 %v103, %v280
  %v282 = vpop.f32.mrb[0].mxu0
  %283 = vmatprep.mubr.f32.mxu0 %v54
  %284 = vmatmul.mubr.f32.gmra.mrb[0].mxu0 %v53
  %v285 = vpop.f32.mrb[0].mxu0
  %v286 = vadd.f32 %v103, %v285
  %v287 = vpop.f32.mrb[0].mxu0
  %288 = vmatprep.mubr.f32.mxu0 %v57
  %289 = vmatmul.mubr.f32.gmra.mrb[0].mxu0 %v56
  %v290 = vpop.f32.mrb[0].mxu0
  %v291 = vadd.f32 %v103, %v290
  %v292 = vpop.f32.mrb[0].mxu0
  %293 = vmatprep.mubr.f32.mxu0 %v60
  %294 = vmatmul.mubr.f32.gmra.mrb[0].mxu0 %v59
  %v295 = vpop.f32.mrb[0].mxu0
  %v296 = vadd.f32 %v103, %v295
  %v297 = vpop.f32.mrb[0].mxu0
  %298 = vdwg.mxu0
  %299 = vmatprep.subr.mxu0 0.0
  %300 = vmatpush1.msra.mxu0 %v94
  %301 = vmatprep.subr.mxu0 0.0
  %302 = vmatpush1.msra.mxu0 %v95
  %303 = vmatprep.subr.mxu0 0.0
  %304 = vmatpush1.msra.mxu0 %v96
  %305 = vmatprep.subr.mxu0 0.0
  %306 = vmatpush1.msra.mxu0 %v97
  %307 = vmatprep.subr.mxu0 0.0
  %308 = vmatpush1.msra.mxu0 0.0
  %309 = vmatprep.subr.mxu0 0.0
  %310 = vmatpush1.msra.mxu0 0.0
  %311 = vmatprep.subr.mxu0 0.0
  %312 = vmatpush1.msra.mxu0 0.0
  %313 = vmatprep.subr.mxu0 0.0
  %314 = vmatpush1.msra.mxu0 0.0
  %315 = vmatprep.subr.mxu0 0.0
  %316 = vmatpush1.msra.mxu0 0.0
  %317 = vmatprep.subr.mxu0 0.0
  %318 = vmatpush1.msra.mxu0 0.0
  %319 = vmatprep.subr.mxu0 0.0
  %320 = vmatpush1.msra.mxu0 0.0
  %321 = vmatprep.subr.mxu0 0.0
  %322 = vmatpush1.msra.mxu0 0.0
  %323 = vmatprep.subr.mxu0 0.0
  %324 = vmatpush1.msra.mxu0 0.0
  %325 = vmatprep.subr.mxu0 0.0
  %326 = vmatpush1.msra.mxu0 0.0
  %327 = vmatprep.subr.mxu0 0.0
  %328 = vmatpush1.msra.mxu0 0.0
  %329 = vmatprep.subr.mxu0 0.0
  %330 = vmatpush1.msra.mxu0 0.0
  %331 = vmatprep.subr.mxu0 0.0
  %332 = vmatpush1.msra.mxu0 0.0
  %333 = vmatprep.subr.mxu0 0.0
  %334 = vmatpush1.msra.mxu0 0.0
  %335 = vmatprep.subr.mxu0 0.0
  %336 = vmatpush1.msra.mxu0 0.0
  %337 = vmatprep.subr.mxu0 0.0
  %338 = vmatpush1.msra.mxu0 0.0
  %339 = vmatprep.subr.mxu0 0.0
  %340 = vmatpush1.msra.mxu0 0.0
  %341 = vmatprep.subr.mxu0 0.0
  %342 = vmatpush1.msra.mxu0 0.0
  %343 = vmatprep.subr.mxu0 0.0
  %344 = vmatpush1.msra.mxu0 0.0
  %345 = vmatprep.subr.mxu0 0.0
  %346 = vmatpush1.msra.mxu0 0.0
  %347 = vmatprep.subr.mxu0 0.0
  %348 = vmatpush1.msra.mxu0 0.0
  %349 = vmatprep.subr.mxu0 0.0
  %350 = vmatpush1.msra.mxu0 0.0
  %351 = vmatprep.subr.mxu0 0.0
  %352 = vmatpush1.msra.mxu0 0.0
  %353 = vmatprep.subr.mxu0 0.0
  %354 = vmatpush1.msra.mxu0 0.0
  %355 = vmatprep.subr.mxu0 0.0
  %356 = vmatpush1.msra.mxu0 0.0
  %357 = vmatprep.subr.mxu0 0.0
  %358 = vmatpush1.msra.mxu0 0.0
  %359 = vmatprep.subr.mxu0 0.0
  %360 = vmatpush1.msra.mxu0 0.0
  %361 = vmatprep.subr.mxu0 0.0
  %362 = vmatpush1.msra.mxu0 0.0
  %363 = vmatprep.mubr.f32.mxu0 0.0
  %364 = vmatmul.mubr.f32.gmra.mrb[0].mxu0 %v107
  %v365 = vpop.f32.mrb[0].mxu0
  %v366 = vadd.f32 %v221, %v365
  %v367 = vpop.f32.mrb[0].mxu0
  %368 = vmatprep.mubr.f32.mxu0 0.0
  %369 = vmatmul.mubr.f32.gmra.mrb[0].mxu0 %v110
  %v370 = vpop.f32.mrb[0].mxu0
  %v371 = vadd.f32 %v226, %v370
  %v372 = vpop.f32.mrb[0].mxu0
  %373 = vmatprep.mubr.f32.mxu0 0.0
  %374 = vmatmul.mubr.f32.gmra.mrb[0].mxu0 %v113
  %v375 = vpop.f32.mrb[0].mxu0
  %v376 = vadd.f32 %v231, %v375
  %v377 = vpop.f32.mrb[0].mxu0
  %378 = vmatprep.mubr.f32.mxu0 0.0
  %379 = vmatmul.mubr.f32.gmra.mrb[0].mxu0 %v116
  %v380 = vpop.f32.mrb[0].mxu0
  %v381 = vadd.f32 %v236, %v380
  %v382 = vpop.f32.mrb[0].mxu0
  %383 = vmatprep.mubr.f32.mxu0 0.0
  %384 = vmatmul.mubr.f32.gmra.mrb[0].mxu0 %v119
  %v385 = vpop.f32.mrb[0].mxu0
  %v386 = vadd.f32 %v241, %v385
  %v387 = vpop.f32.mrb[0].mxu0
  %388 = vmatprep.mubr.f32.mxu0 0.0
  %389 = vmatmul.mubr.f32.gmra.mrb[0].mxu0 %v122
  %v390 = vpop.f32.mrb[0].mxu0
  %v391 = vadd.f32 %v246, %v390
  %v392 = vpop.f32.mrb[0].mxu0
  %393 = vmatprep.mubr.f32.mxu0 0.0
  %394 = vmatmul.mubr.f32.gmra.mrb[0].mxu0 %v125
  %v395 = vpop.f32.mrb[0].mxu0
  %v396 = vadd.f32 %v251, %v395
  %v397 = vpop.f32.mrb[0].mxu0
  %398 = vmatprep.mubr.f32.mxu0 0.0
  %399 = vmatmul.mubr.f32.gmra.mrb[0].mxu0 %v128
  %v400 = vpop.f32.mrb[0].mxu0
  %v401 = vadd.f32 %v256, %v400
  %v402 = vpop.f32.mrb[0].mxu0
  %403 = vmatprep.mubr.f32.mxu0 0.0
  %404 = vmatmul.mubr.f32.gmra.mrb[0].mxu0 %v131
  %v405 = vpop.f32.mrb[0].mxu0
  %v406 = vadd.f32 %v261, %v405
  %v407 = vpop.f32.mrb[0].mxu0
  %408 = vmatprep.mubr.f32.mxu0 0.0
  %409 = vmatmul.mubr.f32.gmra.mrb[0].mxu0 %v134
  %v410 = vpop.f32.mrb[0].mxu0
  %v411 = vadd.f32 %v266, %v410
  %v412 = vpop.f32.mrb[0].mxu0
  %413 = vmatprep.mubr.f32.mxu0 0.0
  %414 = vmatmul.mubr.f32.gmra.mrb[0].mxu0 %v137
  %v415 = vpop.f32.mrb[0].mxu0
  %v416 = vadd.f32 %v271, %v415
  %v417 = vpop.f32.mrb[0].mxu0
  %418 = vmatprep.mubr.f32.mxu0 0.0
  %419 = vmatmul.mubr.f32.gmra.mrb[0].mxu0 %v140
  %v420 = vpop.f32.mrb[0].mxu0
  %v421 = vadd.f32 %v276, %v420
  %v422 = vpop.f32.mrb[0].mxu0
  %423 = vmatprep.mubr.f32.mxu0 0.0
  %424 = vmatmul.mubr.f32.gmra.mrb[0].mxu0 %v143
  %v425 = vpop.f32.mrb[0].mxu0
  %v426 = vadd.f32 %v281, %v425
  %v427 = vpop.f32.mrb[0].mxu0
  %428 = vmatprep.mubr.f32.mxu0 0.0
  %429 = vmatmul.mubr.f32.gmra.mrb[0].mxu0 %v146
  %v430 = vpop.f32.mrb[0].mxu0
  %v431 = vadd.f32 %v286, %v430
  %v432 = vpop.f32.mrb[0].mxu0
  %433 = vmatprep.mubr.f32.mxu0 0.0
  %434 = vmatmul.mubr.f32.gmra.mrb[0].mxu0 %v149
  %v435 = vpop.f32.mrb[0].mxu0
  %v436 = vadd.f32 %v291, %v435
  %v437 = vpop.f32.mrb[0].mxu0
  %438 = vmatprep.mubr.f32.mxu0 0.0
  %439 = vmatmul.mubr.f32.gmra.mrb[0].mxu0 %v152
  %v440 = vpop.f32.mrb[0].mxu0
  %v441 = vadd.f32 %v296, %v440
  %v442 = vpop.f32.mrb[0].mxu0
  %443 = vdwg.mxu0
  %v444 = vlaneseq
  %v445 = vand.u32 %v444, 127
  %vm446 = vcmp.lt.s32.totalorder %v445, 16
  %v447 = vmax.f32 %v366, 0.0
  %v448 = vmax.f32 %v371, 0.0
  %v449 = vmax.f32 %v376, 0.0
  %v450 = vmax.f32 %v381, 0.0
  %v451 = vmax.f32 %v386, 0.0
  %v452 = vmax.f32 %v391, 0.0
  %v453 = vmax.f32 %v396, 0.0
  %v454 = vmax.f32 %v401, 0.0
  %v455 = vmax.f32 %v406, 0.0
  %v456 = vmax.f32 %v411, 0.0
  %v457 = vmax.f32 %v416, 0.0
  %v458 = vmax.f32 %v421, 0.0
  %v459 = vmax.f32 %v426, 0.0
  %v460 = vmax.f32 %v431, 0.0
  %v461 = vmax.f32 %v436, 0.0
  %v462 = vmax.f32 %v441, 0.0
  %v463 = vsel %vm446, %v447, %v366
  %v464 = vsel %vm446, %v448, %v371
  %v465 = vsel %vm446, %v449, %v376
  %v466 = vsel %vm446, %v450, %v381
  %v467 = vsel %vm446, %v451, %v386
  %v468 = vsel %vm446, %v452, %v391
  %v469 = vsel %vm446, %v453, %v396
  %v470 = vsel %vm446, %v454, %v401
  %v471 = vsel %vm446, %v455, %v406
  %v472 = vsel %vm446, %v456, %v411
  %v473 = vsel %vm446, %v457, %v416
  %v474 = vsel %vm446, %v458, %v421
  %v475 = vsel %vm446, %v459, %v426
  %v476 = vsel %vm446, %v460, %v431
  %v477 = vsel %vm446, %v461, %v436
  %v478 = vsel %vm446, %v462, %v441
  %v479 = vsel %vm105, %v463, 0.0
  %v480 = vsel %vm105, %v464, 0.0
  %v481 = vadd.f32 %v479, %v480
  %v482 = vsel %vm105, %v465, 0.0
  %v483 = vadd.f32 %v481, %v482
  %v484 = vsel %vm105, %v466, 0.0
  %v485 = vadd.f32 %v483, %v484
  %v486 = vsel %vm105, %v467, 0.0
  %v487 = vadd.f32 %v485, %v486
  %v488 = vsel %vm105, %v468, 0.0
  %v489 = vadd.f32 %v487, %v488
  %v490 = vsel %vm105, %v469, 0.0
  %v491 = vadd.f32 %v489, %v490
  %v492 = vsel %vm105, %v470, 0.0
  %v493 = vadd.f32 %v491, %v492
  %v494 = vsel %vm105, %v471, 0.0
  %v495 = vadd.f32 %v493, %v494
  %v496 = vsel %vm105, %v472, 0.0
  %v497 = vadd.f32 %v495, %v496
  %v498 = vsel %vm105, %v473, 0.0
  %v499 = vadd.f32 %v497, %v498
  %v500 = vsel %vm105, %v474, 0.0
  %v501 = vadd.f32 %v499, %v500
  %v502 = vsel %vm105, %v475, 0.0
  %v503 = vadd.f32 %v501, %v502
  %v504 = vsel %vm105, %v476, 0.0
  %v505 = vadd.f32 %v503, %v504
  %v506 = vsel %vm105, %v477, 0.0
  %v507 = vadd.f32 %v505, %v506
  %v508 = vsel %vm105, %v478, 0.0
  %v509 = vadd.f32 %v507, %v508
  %v510 = vrot.slane %v509, 4
  %v511 = vadd.f32 %v509, %v510
  %v512 = vrot.slane %v511, 2
  %v513 = vadd.f32 %v511, %v512
  %v514 = vrot.slane %v513, 1
  %v515 = vadd.f32 %v513, %v514
  %v516 = vrcp.pop 128.0
  %v517 = vmul.f32 %v515, %v516
  %v518 = vsub.f32 %v463, %v517
  %v519 = vsub.f32 %v464, %v517
  %v520 = vsub.f32 %v465, %v517
  %v521 = vsub.f32 %v466, %v517
  %v522 = vsub.f32 %v467, %v517
  %v523 = vsub.f32 %v468, %v517
  %v524 = vsub.f32 %v469, %v517
  %v525 = vsub.f32 %v470, %v517
  %v526 = vsub.f32 %v471, %v517
  %v527 = vsub.f32 %v472, %v517
  %v528 = vsub.f32 %v473, %v517
  %v529 = vsub.f32 %v474, %v517
  %v530 = vsub.f32 %v475, %v517
  %v531 = vsub.f32 %v476, %v517
  %v532 = vsub.f32 %v477, %v517
  %v533 = vsub.f32 %v478, %v517
  %v534 = vmul.f32 %v518, %v518
  %v535 = vmul.f32 %v519, %v519
  %v536 = vmul.f32 %v520, %v520
  %v537 = vmul.f32 %v521, %v521
  %v538 = vmul.f32 %v522, %v522
  %v539 = vmul.f32 %v523, %v523
  %v540 = vmul.f32 %v524, %v524
  %v541 = vmul.f32 %v525, %v525
  %v542 = vmul.f32 %v526, %v526
  %v543 = vmul.f32 %v527, %v527
  %v544 = vmul.f32 %v528, %v528
  %v545 = vmul.f32 %v529, %v529
  %v546 = vmul.f32 %v530, %v530
  %v547 = vmul.f32 %v531, %v531
  %v548 = vmul.f32 %v532, %v532
  %v549 = vmul.f32 %v533, %v533
  %v550 = vsel %vm105, %v534, 0.0
  %v551 = vsel %vm105, %v535, 0.0
  %v552 = vadd.f32 %v550, %v551
  %v553 = vsel %vm105, %v536, 0.0
  %v554 = vadd.f32 %v552, %v553
  %v555 = vsel %vm105, %v537, 0.0
  %v556 = vadd.f32 %v554, %v555
  %v557 = vsel %vm105, %v538, 0.0
  %v558 = vadd.f32 %v556, %v557
  %v559 = vsel %vm105, %v539, 0.0
  %v560 = vadd.f32 %v558, %v559
  %v561 = vsel %vm105, %v540, 0.0
  %v562 = vadd.f32 %v560, %v561
  %v563 = vsel %vm105, %v541, 0.0
  %v564 = vadd.f32 %v562, %v563
  %v565 = vsel %vm105, %v542, 0.0
  %v566 = vadd.f32 %v564, %v565
  %v567 = vsel %vm105, %v543, 0.0
  %v568 = vadd.f32 %v566, %v567
  %v569 = vsel %vm105, %v544, 0.0
  %v570 = vadd.f32 %v568, %v569
  %v571 = vsel %vm105, %v545, 0.0
  %v572 = vadd.f32 %v570, %v571
  %v573 = vsel %vm105, %v546, 0.0
  %v574 = vadd.f32 %v572, %v573
  %v575 = vsel %vm105, %v547, 0.0
  %v576 = vadd.f32 %v574, %v575
  %v577 = vsel %vm105, %v548, 0.0
  %v578 = vadd.f32 %v576, %v577
  %v579 = vsel %vm105, %v549, 0.0
  %v580 = vadd.f32 %v578, %v579
  %v581 = vrot.slane %v580, 4
  %v582 = vadd.f32 %v580, %v581
  %v583 = vrot.slane %v582, 2
  %v584 = vadd.f32 %v582, %v583
  %v585 = vrot.slane %v584, 1
  %v586 = vadd.f32 %v584, %v585
  %v587 = vmul.f32 %v586, %v516
  %v588 = vadd.f32 %v587, 1e-05
  %v589 = vrsqrt.pop %v588
  %v590 = vmul.f32 %v518, %v589
  %v591 = vmul.f32 %v519, %v589
  %v592 = vmul.f32 %v520, %v589
  %v593 = vmul.f32 %v521, %v589
  %v594 = vmul.f32 %v522, %v589
  %v595 = vmul.f32 %v523, %v589
  %v596 = vmul.f32 %v524, %v589
  %v597 = vmul.f32 %v525, %v589
  %v598 = vmul.f32 %v526, %v589
  %v599 = vmul.f32 %v527, %v589
  %v600 = vmul.f32 %v528, %v589
  %v601 = vmul.f32 %v529, %v589
  %v602 = vmul.f32 %v530, %v589
  %v603 = vmul.f32 %v531, %v589
  %v604 = vmul.f32 %v532, %v589
  %v605 = vmul.f32 %v533, %v589
  %606 = vst.msk [vmem:[%s3] sm:$0xff] %vm105, %v590
  %607 = vst.msk [vmem:[%s3 + $0x8] sm:$0xff] %vm105, %v591
  %608 = vst.msk [vmem:[%s3 + $0x10] sm:$0xff] %vm105, %v592
  %609 = vst.msk [vmem:[%s3 + $0x18] sm:$0xff] %vm105, %v593
  %610 = vst.msk [vmem:[%s3 + $0x20] sm:$0xff] %vm105, %v594
  %611 = vst.msk [vmem:[%s3 + $0x28] sm:$0xff] %vm105, %v595
  %612 = vst.msk [vmem:[%s3 + $0x30] sm:$0xff] %vm105, %v596
  %613 = vst.msk [vmem:[%s3 + $0x38] sm:$0xff] %vm105, %v597
  %614 = vst.msk [vmem:[%s3 + $0x40] sm:$0xff] %vm105, %v598
  %615 = vst.msk [vmem:[%s3 + $0x48] sm:$0xff] %vm105, %v599
  %616 = vst.msk [vmem:[%s3 + $0x50] sm:$0xff] %vm105, %v600
  %617 = vst.msk [vmem:[%s3 + $0x58] sm:$0xff] %vm105, %v601
  %618 = vst.msk [vmem:[%s3 + $0x60] sm:$0xff] %vm105, %v602
  %619 = vst.msk [vmem:[%s3 + $0x68] sm:$0xff] %vm105, %v603
  %620 = vst.msk [vmem:[%s3 + $0x70] sm:$0xff] %vm105, %v604
  %621 = vst.msk [vmem:[%s3 + $0x78] sm:$0xff] %vm105, %v605
  // Predicated region
  $region14: #{wnet_forward.44} parent=0 // pred_check
    _
  $region15: #{wnet_forward.44} parent=0 // pred_check_branch
    %623 = sbr.rel (0) target = $region17
  $region16: #{wnet_forward.44} parent=0 // pred_region
    _
  $region17: #{wnet_forward.44} parent=0 // pred_fallthru
    _
  // Predicated region
  $region18: #{wnet_forward.44} parent=0 // pred_check
    _
  $region19: #{wnet_forward.44} parent=0 // pred_check_branch
    %625 = sbr.rel (0) target = $region21
  $region20: #{wnet_forward.44} parent=0 // pred_region
    _
  $region21: #{wnet_forward.44} parent=0 // pred_fallthru
    _

// kernel: wnet_forward.47
$region0: #{wnet_forward.47}
  #allocation0 [shape = 'u32[]', space=smem, size = 0x4, offset = 0x4, fixed_abs, tag = 'smem constant byte address 0x4 - core index']
  #allocation1 [shape = 'u32[144,128]{1,0:T(1,128)}', space=vmem, size = 0x12000, scoped, tag = 'internal scratch']
  %s0 = inlined_call_operand.vmem [shape: f32[512,72], index: 0, kind: input, shape index: {}]
  %s1 = inlined_call_operand.vmem [shape: f32[72,8], index: 1, kind: input, shape index: {}]
  %s2 = inlined_call_operand.vmem [shape: f32[1,8], index: 2, kind: input, shape index: {}]
  %s3 = inlined_call_operand.vmem [shape: f32[512,8], index: 3, kind: output, shape index: {}]
  %s4 = sld [smem:[#allocation0]]
  $region22: #{wnet_forward.47} parent=0
    _
  %s6 = ssub.s32 1, %s4
  %s7 = scalar_select 0, %s6, %s4
  // Predicated region
  $region2: #{wnet_forward.47} parent=0 // pred_check
    _
  $region3: #{wnet_forward.47} parent=0 // pred_check_branch
    %9 = sbr.rel (0) target = $region5
  $region4: #{wnet_forward.47} parent=0 // pred_region
    _
  $region5: #{wnet_forward.47} parent=0 // pred_fallthru
    _
  // Predicated region
  $region6: #{wnet_forward.47} parent=0 // pred_check
    _
  $region7: #{wnet_forward.47} parent=0 // pred_check_branch
    %11 = sbr.rel (0) target = $region9
  $region8: #{wnet_forward.47} parent=0 // pred_region
    _
  $region9: #{wnet_forward.47} parent=0 // pred_fallthru
    _
  // Predicated region
  $region10: #{wnet_forward.47} parent=0 // pred_check
    _
  $region11: #{wnet_forward.47} parent=0 // pred_check_branch
    %13 = sbr.rel (0) target = $region13
  $region12: #{wnet_forward.47} parent=0 // pred_region
    _
  $region13: #{wnet_forward.47} parent=0 // pred_fallthru
    _
  %v14 = vld [vmem:[%s0] sm:$0xff]
  %v15 = vld [vmem:[%s0 + $0x8] sm:$0xff]
  %v16 = vld [vmem:[%s0 + $0x10] sm:$0xff]
  %v17 = vld [vmem:[%s0 + $0x18] sm:$0xff]
  %v18 = vld [vmem:[%s0 + $0x20] sm:$0xff]
  %v19 = vld [vmem:[%s0 + $0x28] sm:$0xff]
  %v20 = vld [vmem:[%s0 + $0x30] sm:$0xff]
  %v21 = vld [vmem:[%s0 + $0x38] sm:$0xff]
  %v22 = vld [vmem:[%s0 + $0x40] sm:$0xff]
  %v23 = vld [vmem:[%s0 + $0x48] sm:$0xff]
  %v24 = vld [vmem:[%s0 + $0x50] sm:$0xff]
  %v25 = vld [vmem:[%s0 + $0x58] sm:$0xff]
  %v26 = vld [vmem:[%s0 + $0x60] sm:$0xff]
  %v27 = vld [vmem:[%s0 + $0x68] sm:$0xff]
  %v28 = vld [vmem:[%s0 + $0x70] sm:$0xff]
  %v29 = vld [vmem:[%s0 + $0x78] sm:$0xff]
  %v30 = vld [vmem:[%s0 + $0x80] sm:$0xff]
  %v31 = vld [vmem:[%s0 + $0x88] sm:$0xff]
  %v32 = vld [vmem:[%s0 + $0x90] sm:$0xff]
  %v33 = vld [vmem:[%s0 + $0x98] sm:$0xff]
  %v34 = vld [vmem:[%s0 + $0xa0] sm:$0xff]
  %v35 = vld [vmem:[%s0 + $0xa8] sm:$0xff]
  %v36 = vld [vmem:[%s0 + $0xb0] sm:$0xff]
  %v37 = vld [vmem:[%s0 + $0xb8] sm:$0xff]
  %v38 = vld [vmem:[%s0 + $0xc0] sm:$0xff]
  %v39 = vld [vmem:[%s0 + $0xc8] sm:$0xff]
  %v40 = vld [vmem:[%s0 + $0xd0] sm:$0xff]
  %v41 = vld [vmem:[%s0 + $0xd8] sm:$0xff]
  %v42 = vld [vmem:[%s0 + $0xe0] sm:$0xff]
  %v43 = vld [vmem:[%s0 + $0xe8] sm:$0xff]
  %v44 = vld [vmem:[%s0 + $0xf0] sm:$0xff]
  %v45 = vld [vmem:[%s0 + $0xf8] sm:$0xff]
  %v46 = vld [vmem:[%s0 + $0x100] sm:$0xff]
  %v47 = vld [vmem:[%s0 + $0x108] sm:$0xff]
  %v48 = vld [vmem:[%s0 + $0x110] sm:$0xff]
  %v49 = vld [vmem:[%s0 + $0x118] sm:$0xff]
  %v50 = vld [vmem:[%s0 + $0x120] sm:$0xff]
  %v51 = vld [vmem:[%s0 + $0x128] sm:$0xff]
  %v52 = vld [vmem:[%s0 + $0x130] sm:$0xff]
  %v53 = vld [vmem:[%s0 + $0x138] sm:$0xff]
  %v54 = vld [vmem:[%s0 + $0x140] sm:$0xff]
  %v55 = vld [vmem:[%s0 + $0x148] sm:$0xff]
  %v56 = vld [vmem:[%s0 + $0x150] sm:$0xff]
  %v57 = vld [vmem:[%s0 + $0x158] sm:$0xff]
  %v58 = vld [vmem:[%s0 + $0x160] sm:$0xff]
  %v59 = vld [vmem:[%s0 + $0x168] sm:$0xff]
  %v60 = vld [vmem:[%s0 + $0x170] sm:$0xff]
  %v61 = vld [vmem:[%s0 + $0x178] sm:$0xff]
  %v62 = vld [vmem:[%s0 + $0x180] sm:$0xff]
  %v63 = vld [vmem:[%s0 + $0x188] sm:$0xff]
  %v64 = vld [vmem:[%s0 + $0x190] sm:$0xff]
  %v65 = vld [vmem:[%s0 + $0x198] sm:$0xff]
  %v66 = vld [vmem:[%s0 + $0x1a0] sm:$0xff]
  %v67 = vld [vmem:[%s0 + $0x1a8] sm:$0xff]
  %v68 = vld [vmem:[%s0 + $0x1b0] sm:$0xff]
  %v69 = vld [vmem:[%s0 + $0x1b8] sm:$0xff]
  %v70 = vld [vmem:[%s0 + $0x1c0] sm:$0xff]
  %v71 = vld [vmem:[%s0 + $0x1c8] sm:$0xff]
  %v72 = vld [vmem:[%s0 + $0x1d0] sm:$0xff]
  %v73 = vld [vmem:[%s0 + $0x1d8] sm:$0xff]
  %v74 = vld [vmem:[%s0 + $0x1e0] sm:$0xff]
  %v75 = vld [vmem:[%s0 + $0x1e8] sm:$0xff]
  %v76 = vld [vmem:[%s0 + $0x1f0] sm:$0xff]
  %v77 = vld [vmem:[%s0 + $0x1f8] sm:$0xff]
  %v78 = vld [vmem:[%s1] sm:$0xff]
  %v79 = vld [vmem:[%s1 + $0x8] sm:$0xff]
  %v80 = vld [vmem:[%s1 + $0x10] sm:$0xff]
  %v81 = vld [vmem:[%s1 + $0x18] sm:$0xff]
  %v82 = vld [vmem:[%s1 + $0x20] sm:$0xff]
  %v83 = vld [vmem:[%s1 + $0x28] sm:$0xff]
  %v84 = vld [vmem:[%s1 + $0x30] sm:$0xff]
  %v85 = vld [vmem:[%s1 + $0x38] sm:$0xff]
  %v86 = vld [vmem:[%s1 + $0x40] sm:$0xff]
  %v87 = vld [vmem:[%s2] sm:$0x1]
  %v89 = vlaneseq
  %v90 = vshrl.u32 %v89, 7
  %v91 = vsub.s32 0, %v90
  %v92 = vrot.slane %v87, %v91
  %vm94 = vcmask 588800
  %v96 = vsel %vm94, %v14, 0
  %v99 = vsel %vm94, %v15, 0
  %v102 = vsel %vm94, %v16, 0
  %v105 = vsel %vm94, %v17, 0
  %v108 = vsel %vm94, %v18, 0
  %v111 = vsel %vm94, %v19, 0
  %v114 = vsel %vm94, %v20, 0
  %v117 = vsel %vm94, %v21, 0
  %v120 = vsel %vm94, %v22, 0
  %v123 = vsel %vm94, %v23, 0
  %v126 = vsel %vm94, %v24, 0
  %v129 = vsel %vm94, %v25, 0
  %v132 = vsel %vm94, %v26, 0
  %v135 = vsel %vm94, %v27, 0
  %v138 = vsel %vm94, %v28, 0
  %v141 = vsel %vm94, %v29, 0
  %v144 = vsel %vm94, %v30, 0
  %v147 = vsel %vm94, %v31, 0
  %v150 = vsel %vm94, %v32, 0
  %v153 = vsel %vm94, %v33, 0
  %v156 = vsel %vm94, %v34, 0
  %v159 = vsel %vm94, %v35, 0
  %v162 = vsel %vm94, %v36, 0
  %v165 = vsel %vm94, %v37, 0
  %v168 = vsel %vm94, %v38, 0
  %v171 = vsel %vm94, %v39, 0
  %v174 = vsel %vm94, %v40, 0
  %v177 = vsel %vm94, %v41, 0
  %v180 = vsel %vm94, %v42, 0
  %v183 = vsel %vm94, %v43, 0
  %v186 = vsel %vm94, %v44, 0
  %v189 = vsel %vm94, %v45, 0
  %v192 = vsel %vm94, %v46, 0
  %v195 = vsel %vm94, %v47, 0
  %v198 = vsel %vm94, %v48, 0
  %v201 = vsel %vm94, %v49, 0
  %v204 = vsel %vm94, %v50, 0
  %v207 = vsel %vm94, %v51, 0
  %v210 = vsel %vm94, %v52, 0
  %v213 = vsel %vm94, %v53, 0
  %v216 = vsel %vm94, %v54, 0
  %v219 = vsel %vm94, %v55, 0
  %v222 = vsel %vm94, %v56, 0
  %v225 = vsel %vm94, %v57, 0
  %v228 = vsel %vm94, %v58, 0
  %v231 = vsel %vm94, %v59, 0
  %v234 = vsel %vm94, %v60, 0
  %v237 = vsel %vm94, %v61, 0
  %v240 = vsel %vm94, %v62, 0
  %v243 = vsel %vm94, %v63, 0
  %v246 = vsel %vm94, %v64, 0
  %v249 = vsel %vm94, %v65, 0
  %v252 = vsel %vm94, %v66, 0
  %v255 = vsel %vm94, %v67, 0
  %v258 = vsel %vm94, %v68, 0
  %v261 = vsel %vm94, %v69, 0
  %v264 = vsel %vm94, %v70, 0
  %v267 = vsel %vm94, %v71, 0
  %v270 = vsel %vm94, %v72, 0
  %v273 = vsel %vm94, %v73, 0
  %v276 = vsel %vm94, %v74, 0
  %v279 = vsel %vm94, %v75, 0
  %v282 = vsel %vm94, %v76, 0
  %v285 = vsel %vm94, %v77, 0
  %287 = vmatprep.subr.mxu0 0.0
  %288 = vmatpush1.msra.mxu0 %v78
  %289 = vmatprep.subr.mxu0 0.0
  %290 = vmatpush1.msra.mxu0 %v79
  %291 = vmatprep.subr.mxu0 0.0
  %292 = vmatpush1.msra.mxu0 %v80
  %293 = vmatprep.subr.mxu0 0.0
  %294 = vmatpush1.msra.mxu0 %v81
  %295 = vmatprep.subr.mxu0 0.0
  %296 = vmatpush1.msra.mxu0 %v82
  %297 = vmatprep.subr.mxu0 0.0
  %298 = vmatpush1.msra.mxu0 %v83
  %299 = vmatprep.subr.mxu0 0.0
  %300 = vmatpush1.msra.mxu0 %v84
  %301 = vmatprep.subr.mxu0 0.0
  %302 = vmatpush1.msra.mxu0 %v85
  %303 = vmatprep.subr.mxu0 0.0
  %304 = vmatpush1.msra.mxu0 %v86
  %305 = vmatprep.subr.mxu0 0.0
  %306 = vmatpush1.msra.mxu0 0.0
  %307 = vmatprep.subr.mxu0 0.0
  %308 = vmatpush1.msra.mxu0 0.0
  %309 = vmatprep.subr.mxu0 0.0
  %310 = vmatpush1.msra.mxu0 0.0
  %311 = vmatprep.subr.mxu0 0.0
  %312 = vmatpush1.msra.mxu0 0.0
  %313 = vmatprep.subr.mxu0 0.0
  %314 = vmatpush1.msra.mxu0 0.0
  %315 = vmatprep.subr.mxu0 0.0
  %316 = vmatpush1.msra.mxu0 0.0
  %317 = vmatprep.subr.mxu0 0.0
  %318 = vmatpush1.msra.mxu0 0.0
  %319 = vmatprep.subr.mxu0 0.0
  %320 = vmatpush1.msra.mxu0 0.0
  %321 = vmatprep.subr.mxu0 0.0
  %322 = vmatpush1.msra.mxu0 0.0
  %323 = vmatprep.subr.mxu0 0.0
  %324 = vmatpush1.msra.mxu0 0.0
  %325 = vmatprep.subr.mxu0 0.0
  %326 = vmatpush1.msra.mxu0 0.0
  %327 = vmatprep.subr.mxu0 0.0
  %328 = vmatpush1.msra.mxu0 0.0
  %329 = vmatprep.subr.mxu0 0.0
  %330 = vmatpush1.msra.mxu0 0.0
  %331 = vmatprep.subr.mxu0 0.0
  %332 = vmatpush1.msra.mxu0 0.0
  %333 = vmatprep.subr.mxu0 0.0
  %334 = vmatpush1.msra.mxu0 0.0
  %335 = vmatprep.subr.mxu0 0.0
  %336 = vmatpush1.msra.mxu0 0.0
  %337 = vmatprep.subr.mxu0 0.0
  %338 = vmatpush1.msra.mxu0 0.0
  %339 = vmatprep.subr.mxu0 0.0
  %340 = vmatpush1.msra.mxu0 0.0
  %341 = vmatprep.subr.mxu0 0.0
  %342 = vmatpush1.msra.mxu0 0.0
  %343 = vmatprep.subr.mxu0 0.0
  %344 = vmatpush1.msra.mxu0 0.0
  %345 = vmatprep.subr.mxu0 0.0
  %346 = vmatpush1.msra.mxu0 0.0
  %347 = vmatprep.subr.mxu0 0.0
  %348 = vmatpush1.msra.mxu0 0.0
  %349 = vmatprep.subr.mxu0 0.0
  %350 = vmatpush1.msra.mxu0 0.0
  %351 = vmatprep.mubr.f32.mxu0 0.0
  %352 = vmatmul.mubr.f32.gmra.mrb[0].mxu0 %v96
  %v353 = vpop.f32.mrb[0].mxu0
  %v354 = vadd.f32 %v92, %v353
  %v355 = vpop.f32.mrb[0].mxu0
  %356 = vmatprep.mubr.f32.mxu0 0.0
  %357 = vmatmul.mubr.f32.gmra.mrb[0].mxu0 %v99
  %v358 = vpop.f32.mrb[0].mxu0
  %v359 = vadd.f32 %v92, %v358
  %v360 = vpop.f32.mrb[0].mxu0
  %361 = vmatprep.mubr.f32.mxu0 0.0
  %362 = vmatmul.mubr.f32.gmra.mrb[0].mxu0 %v102
  %v363 = vpop.f32.mrb[0].mxu0
  %v364 = vadd.f32 %v92, %v363
  %v365 = vpop.f32.mrb[0].mxu0
  %366 = vmatprep.mubr.f32.mxu0 0.0
  %367 = vmatmul.mubr.f32.gmra.mrb[0].mxu0 %v105
  %v368 = vpop.f32.mrb[0].mxu0
  %v369 = vadd.f32 %v92, %v368
  %v370 = vpop.f32.mrb[0].mxu0
  %371 = vmatprep.mubr.f32.mxu0 0.0
  %372 = vmatmul.mubr.f32.gmra.mrb[0].mxu0 %v108
  %v373 = vpop.f32.mrb[0].mxu0
  %v374 = vadd.f32 %v92, %v373
  %v375 = vpop.f32.mrb[0].mxu0
  %376 = vmatprep.mubr.f32.mxu0 0.0
  %377 = vmatmul.mubr.f32.gmra.mrb[0].mxu0 %v111
  %v378 = vpop.f32.mrb[0].mxu0
  %v379 = vadd.f32 %v92, %v378
  %v380 = vpop.f32.mrb[0].mxu0
  %381 = vmatprep.mubr.f32.mxu0 0.0
  %382 = vmatmul.mubr.f32.gmra.mrb[0].mxu0 %v114
  %v383 = vpop.f32.mrb[0].mxu0
  %v384 = vadd.f32 %v92, %v383
  %v385 = vpop.f32.mrb[0].mxu0
  %386 = vmatprep.mubr.f32.mxu0 0.0
  %387 = vmatmul.mubr.f32.gmra.mrb[0].mxu0 %v117
  %v388 = vpop.f32.mrb[0].mxu0
  %v389 = vadd.f32 %v92, %v388
  %v390 = vpop.f32.mrb[0].mxu0
  %391 = vmatprep.mubr.f32.mxu0 0.0
  %392 = vmatmul.mubr.f32.gmra.mrb[0].mxu0 %v120
  %v393 = vpop.f32.mrb[0].mxu0
  %v394 = vadd.f32 %v92, %v393
  %v395 = vpop.f32.mrb[0].mxu0
  %396 = vmatprep.mubr.f32.mxu0 0.0
  %397 = vmatmul.mubr.f32.gmra.mrb[0].mxu0 %v123
  %v398 = vpop.f32.mrb[0].mxu0
  %v399 = vadd.f32 %v92, %v398
  %v400 = vpop.f32.mrb[0].mxu0
  %401 = vmatprep.mubr.f32.mxu0 0.0
  %402 = vmatmul.mubr.f32.gmra.mrb[0].mxu0 %v126
  %v403 = vpop.f32.mrb[0].mxu0
  %v404 = vadd.f32 %v92, %v403
  %v405 = vpop.f32.mrb[0].mxu0
  %406 = vmatprep.mubr.f32.mxu0 0.0
  %407 = vmatmul.mubr.f32.gmra.mrb[0].mxu0 %v129
  %v408 = vpop.f32.mrb[0].mxu0
  %v409 = vadd.f32 %v92, %v408
  %v410 = vpop.f32.mrb[0].mxu0
  %411 = vmatprep.mubr.f32.mxu0 0.0
  %412 = vmatmul.mubr.f32.gmra.mrb[0].mxu0 %v132
  %v413 = vpop.f32.mrb[0].mxu0
  %v414 = vadd.f32 %v92, %v413
  %v415 = vpop.f32.mrb[0].mxu0
  %416 = vmatprep.mubr.f32.mxu0 0.0
  %417 = vmatmul.mubr.f32.gmra.mrb[0].mxu0 %v135
  %v418 = vpop.f32.mrb[0].mxu0
  %v419 = vadd.f32 %v92, %v418
  %v420 = vpop.f32.mrb[0].mxu0
  %421 = vmatprep.mubr.f32.mxu0 0.0
  %422 = vmatmul.mubr.f32.gmra.mrb[0].mxu0 %v138
  %v423 = vpop.f32.mrb[0].mxu0
  %v424 = vadd.f32 %v92, %v423
  %v425 = vpop.f32.mrb[0].mxu0
  %426 = vmatprep.mubr.f32.mxu0 0.0
  %427 = vmatmul.mubr.f32.gmra.mrb[0].mxu0 %v141
  %v428 = vpop.f32.mrb[0].mxu0
  %v429 = vadd.f32 %v92, %v428
  %v430 = vpop.f32.mrb[0].mxu0
  %431 = vmatprep.mubr.f32.mxu0 0.0
  %432 = vmatmul.mubr.f32.gmra.mrb[0].mxu0 %v144
  %v433 = vpop.f32.mrb[0].mxu0
  %v434 = vadd.f32 %v92, %v433
  %v435 = vpop.f32.mrb[0].mxu0
  %436 = vmatprep.mubr.f32.mxu0 0.0
  %437 = vmatmul.mubr.f32.gmra.mrb[0].mxu0 %v147
  %v438 = vpop.f32.mrb[0].mxu0
  %v439 = vadd.f32 %v92, %v438
  %v440 = vpop.f32.mrb[0].mxu0
  %441 = vmatprep.mubr.f32.mxu0 0.0
  %442 = vmatmul.mubr.f32.gmra.mrb[0].mxu0 %v150
  %v443 = vpop.f32.mrb[0].mxu0
  %v444 = vadd.f32 %v92, %v443
  %v445 = vpop.f32.mrb[0].mxu0
  %446 = vmatprep.mubr.f32.mxu0 0.0
  %447 = vmatmul.mubr.f32.gmra.mrb[0].mxu0 %v153
  %v448 = vpop.f32.mrb[0].mxu0
  %v449 = vadd.f32 %v92, %v448
  %v450 = vpop.f32.mrb[0].mxu0
  %451 = vmatprep.mubr.f32.mxu0 0.0
  %452 = vmatmul.mubr.f32.gmra.mrb[0].mxu0 %v156
  %v453 = vpop.f32.mrb[0].mxu0
  %v454 = vadd.f32 %v92, %v453
  %v455 = vpop.f32.mrb[0].mxu0
  %456 = vmatprep.mubr.f32.mxu0 0.0
  %457 = vmatmul.mubr.f32.gmra.mrb[0].mxu0 %v159
  %v458 = vpop.f32.mrb[0].mxu0
  %v459 = vadd.f32 %v92, %v458
  %v460 = vpop.f32.mrb[0].mxu0
  %461 = vmatprep.mubr.f32.mxu0 0.0
  %462 = vmatmul.mubr.f32.gmra.mrb[0].mxu0 %v162
  %v463 = vpop.f32.mrb[0].mxu0
  %v464 = vadd.f32 %v92, %v463
  %v465 = vpop.f32.mrb[0].mxu0
  %466 = vmatprep.mubr.f32.mxu0 0.0
  %467 = vmatmul.mubr.f32.gmra.mrb[0].mxu0 %v165
  %v468 = vpop.f32.mrb[0].mxu0
  %v469 = vadd.f32 %v92, %v468
  %v470 = vpop.f32.mrb[0].mxu0
  %471 = vmatprep.mubr.f32.mxu0 0.0
  %472 = vmatmul.mubr.f32.gmra.mrb[0].mxu0 %v168
  %v473 = vpop.f32.mrb[0].mxu0
  %v474 = vadd.f32 %v92, %v473
  %v475 = vpop.f32.mrb[0].mxu0
  %476 = vmatprep.mubr.f32.mxu0 0.0
  %477 = vmatmul.mubr.f32.gmra.mrb[0].mxu0 %v171
  %v478 = vpop.f32.mrb[0].mxu0
  %v479 = vadd.f32 %v92, %v478
  %v480 = vpop.f32.mrb[0].mxu0
  %481 = vmatprep.mubr.f32.mxu0 0.0
  %482 = vmatmul.mubr.f32.gmra.mrb[0].mxu0 %v174
  %v483 = vpop.f32.mrb[0].mxu0
  %v484 = vadd.f32 %v92, %v483
  %v485 = vpop.f32.mrb[0].mxu0
  %486 = vmatprep.mubr.f32.mxu0 0.0
  %487 = vmatmul.mubr.f32.gmra.mrb[0].mxu0 %v177
  %v488 = vpop.f32.mrb[0].mxu0
  %v489 = vadd.f32 %v92, %v488
  %v490 = vpop.f32.mrb[0].mxu0
  %491 = vmatprep.mubr.f32.mxu0 0.0
  %492 = vmatmul.mubr.f32.gmra.mrb[0].mxu0 %v180
  %v493 = vpop.f32.mrb[0].mxu0
  %v494 = vadd.f32 %v92, %v493
  %v495 = vpop.f32.mrb[0].mxu0
  %496 = vmatprep.mubr.f32.mxu0 0.0
  %497 = vmatmul.mubr.f32.gmra.mrb[0].mxu0 %v183
  %v498 = vpop.f32.mrb[0].mxu0
  %v499 = vadd.f32 %v92, %v498
  %v500 = vpop.f32.mrb[0].mxu0
  %501 = vmatprep.mubr.f32.mxu0 0.0
  %502 = vmatmul.mubr.f32.gmra.mrb[0].mxu0 %v186
  %v503 = vpop.f32.mrb[0].mxu0
  %v504 = vadd.f32 %v92, %v503
  %v505 = vpop.f32.mrb[0].mxu0
  %506 = vmatprep.mubr.f32.mxu0 0.0
  %507 = vmatmul.mubr.f32.gmra.mrb[0].mxu0 %v189
  %v508 = vpop.f32.mrb[0].mxu0
  %v509 = vadd.f32 %v92, %v508
  %v510 = vpop.f32.mrb[0].mxu0
  %511 = vmatprep.mubr.f32.mxu0 0.0
  %512 = vmatmul.mubr.f32.gmra.mrb[0].mxu0 %v192
  %v513 = vpop.f32.mrb[0].mxu0
  %v514 = vadd.f32 %v92, %v513
  %v515 = vpop.f32.mrb[0].mxu0
  %516 = vmatprep.mubr.f32.mxu0 0.0
  %517 = vmatmul.mubr.f32.gmra.mrb[0].mxu0 %v195
  %v518 = vpop.f32.mrb[0].mxu0
  %v519 = vadd.f32 %v92, %v518
  %v520 = vpop.f32.mrb[0].mxu0
  %521 = vmatprep.mubr.f32.mxu0 0.0
  %522 = vmatmul.mubr.f32.gmra.mrb[0].mxu0 %v198
  %v523 = vpop.f32.mrb[0].mxu0
  %v524 = vadd.f32 %v92, %v523
  %v525 = vpop.f32.mrb[0].mxu0
  %526 = vmatprep.mubr.f32.mxu0 0.0
  %527 = vmatmul.mubr.f32.gmra.mrb[0].mxu0 %v201
  %v528 = vpop.f32.mrb[0].mxu0
  %v529 = vadd.f32 %v92, %v528
  %v530 = vpop.f32.mrb[0].mxu0
  %531 = vmatprep.mubr.f32.mxu0 0.0
  %532 = vmatmul.mubr.f32.gmra.mrb[0].mxu0 %v204
  %v533 = vpop.f32.mrb[0].mxu0
  %v534 = vadd.f32 %v92, %v533
  %v535 = vpop.f32.mrb[0].mxu0
  %536 = vmatprep.mubr.f32.mxu0 0.0
  %537 = vmatmul.mubr.f32.gmra.mrb[0].mxu0 %v207
  %v538 = vpop.f32.mrb[0].mxu0
  %v539 = vadd.f32 %v92, %v538
  %v540 = vpop.f32.mrb[0].mxu0
  %541 = vmatprep.mubr.f32.mxu0 0.0
  %542 = vmatmul.mubr.f32.gmra.mrb[0].mxu0 %v210
  %v543 = vpop.f32.mrb[0].mxu0
  %v544 = vadd.f32 %v92, %v543
  %v545 = vpop.f32.mrb[0].mxu0
  %546 = vmatprep.mubr.f32.mxu0 0.0
  %547 = vmatmul.mubr.f32.gmra.mrb[0].mxu0 %v213
  %v548 = vpop.f32.mrb[0].mxu0
  %v549 = vadd.f32 %v92, %v548
  %v550 = vpop.f32.mrb[0].mxu0
  %551 = vmatprep.mubr.f32.mxu0 0.0
  %552 = vmatmul.mubr.f32.gmra.mrb[0].mxu0 %v216
  %v553 = vpop.f32.mrb[0].mxu0
  %v554 = vadd.f32 %v92, %v553
  %v555 = vpop.f32.mrb[0].mxu0
  %556 = vmatprep.mubr.f32.mxu0 0.0
  %557 = vmatmul.mubr.f32.gmra.mrb[0].mxu0 %v219
  %v558 = vpop.f32.mrb[0].mxu0
  %v559 = vadd.f32 %v92, %v558
  %v560 = vpop.f32.mrb[0].mxu0
  %561 = vmatprep.mubr.f32.mxu0 0.0
  %562 = vmatmul.mubr.f32.gmra.mrb[0].mxu0 %v222
  %v563 = vpop.f32.mrb[0].mxu0
  %v564 = vadd.f32 %v92, %v563
  %v565 = vpop.f32.mrb[0].mxu0
  %566 = vmatprep.mubr.f32.mxu0 0.0
  %567 = vmatmul.mubr.f32.gmra.mrb[0].mxu0 %v225
  %v568 = vpop.f32.mrb[0].mxu0
  %v569 = vadd.f32 %v92, %v568
  %v570 = vpop.f32.mrb[0].mxu0
  %571 = vmatprep.mubr.f32.mxu0 0.0
  %572 = vmatmul.mubr.f32.gmra.mrb[0].mxu0 %v228
  %v573 = vpop.f32.mrb[0].mxu0
  %v574 = vadd.f32 %v92, %v573
  %v575 = vpop.f32.mrb[0].mxu0
  %576 = vmatprep.mubr.f32.mxu0 0.0
  %577 = vmatmul.mubr.f32.gmra.mrb[0].mxu0 %v231
  %v578 = vpop.f32.mrb[0].mxu0
  %v579 = vadd.f32 %v92, %v578
  %v580 = vpop.f32.mrb[0].mxu0
  %581 = vmatprep.mubr.f32.mxu0 0.0
  %582 = vmatmul.mubr.f32.gmra.mrb[0].mxu0 %v234
  %v583 = vpop.f32.mrb[0].mxu0
  %v584 = vadd.f32 %v92, %v583
  %v585 = vpop.f32.mrb[0].mxu0
  %586 = vmatprep.mubr.f32.mxu0 0.0
  %587 = vmatmul.mubr.f32.gmra.mrb[0].mxu0 %v237
  %v588 = vpop.f32.mrb[0].mxu0
  %v589 = vadd.f32 %v92, %v588
  %v590 = vpop.f32.mrb[0].mxu0
  %591 = vmatprep.mubr.f32.mxu0 0.0
  %592 = vmatmul.mubr.f32.gmra.mrb[0].mxu0 %v240
  %v593 = vpop.f32.mrb[0].mxu0
  %v594 = vadd.f32 %v92, %v593
  %v595 = vpop.f32.mrb[0].mxu0
  %596 = vmatprep.mubr.f32.mxu0 0.0
  %597 = vmatmul.mubr.f32.gmra.mrb[0].mxu0 %v243
  %v598 = vpop.f32.mrb[0].mxu0
  %v599 = vadd.f32 %v92, %v598
  %v600 = vpop.f32.mrb[0].mxu0
  %601 = vmatprep.mubr.f32.mxu0 0.0
  %602 = vmatmul.mubr.f32.gmra.mrb[0].mxu0 %v246
  %v603 = vpop.f32.mrb[0].mxu0
  %v604 = vadd.f32 %v92, %v603
  %v605 = vpop.f32.mrb[0].mxu0
  %606 = vmatprep.mubr.f32.mxu0 0.0
  %607 = vmatmul.mubr.f32.gmra.mrb[0].mxu0 %v249
  %v608 = vpop.f32.mrb[0].mxu0
  %v609 = vadd.f32 %v92, %v608
  %v610 = vpop.f32.mrb[0].mxu0
  %611 = vmatprep.mubr.f32.mxu0 0.0
  %612 = vmatmul.mubr.f32.gmra.mrb[0].mxu0 %v252
  %v613 = vpop.f32.mrb[0].mxu0
  %v614 = vadd.f32 %v92, %v613
  %v615 = vpop.f32.mrb[0].mxu0
  %616 = vmatprep.mubr.f32.mxu0 0.0
  %617 = vmatmul.mubr.f32.gmra.mrb[0].mxu0 %v255
  %v618 = vpop.f32.mrb[0].mxu0
  %v619 = vadd.f32 %v92, %v618
  %v620 = vpop.f32.mrb[0].mxu0
  %621 = vmatprep.mubr.f32.mxu0 0.0
  %622 = vmatmul.mubr.f32.gmra.mrb[0].mxu0 %v258
  %v623 = vpop.f32.mrb[0].mxu0
  %v624 = vadd.f32 %v92, %v623
  %v625 = vpop.f32.mrb[0].mxu0
  %626 = vmatprep.mubr.f32.mxu0 0.0
  %627 = vmatmul.mubr.f32.gmra.mrb[0].mxu0 %v261
  %v628 = vpop.f32.mrb[0].mxu0
  %v629 = vadd.f32 %v92, %v628
  %v630 = vpop.f32.mrb[0].mxu0
  %631 = vmatprep.mubr.f32.mxu0 0.0
  %632 = vmatmul.mubr.f32.gmra.mrb[0].mxu0 %v264
  %v633 = vpop.f32.mrb[0].mxu0
  %v634 = vadd.f32 %v92, %v633
  %v635 = vpop.f32.mrb[0].mxu0
  %636 = vmatprep.mubr.f32.mxu0 0.0
  %637 = vmatmul.mubr.f32.gmra.mrb[0].mxu0 %v267
  %v638 = vpop.f32.mrb[0].mxu0
  %v639 = vadd.f32 %v92, %v638
  %v640 = vpop.f32.mrb[0].mxu0
  %641 = vmatprep.mubr.f32.mxu0 0.0
  %642 = vmatmul.mubr.f32.gmra.mrb[0].mxu0 %v270
  %v643 = vpop.f32.mrb[0].mxu0
  %v644 = vadd.f32 %v92, %v643
  %v645 = vpop.f32.mrb[0].mxu0
  %646 = vmatprep.mubr.f32.mxu0 0.0
  %647 = vmatmul.mubr.f32.gmra.mrb[0].mxu0 %v273
  %v648 = vpop.f32.mrb[0].mxu0
  %v649 = vadd.f32 %v92, %v648
  %v650 = vpop.f32.mrb[0].mxu0
  %651 = vmatprep.mubr.f32.mxu0 0.0
  %652 = vmatmul.mubr.f32.gmra.mrb[0].mxu0 %v276
  %v653 = vpop.f32.mrb[0].mxu0
  %v654 = vadd.f32 %v92, %v653
  %v655 = vpop.f32.mrb[0].mxu0
  %656 = vmatprep.mubr.f32.mxu0 0.0
  %657 = vmatmul.mubr.f32.gmra.mrb[0].mxu0 %v279
  %v658 = vpop.f32.mrb[0].mxu0
  %v659 = vadd.f32 %v92, %v658
  %v660 = vpop.f32.mrb[0].mxu0
  %661 = vmatprep.mubr.f32.mxu0 0.0
  %662 = vmatmul.mubr.f32.gmra.mrb[0].mxu0 %v282
  %v663 = vpop.f32.mrb[0].mxu0
  %v664 = vadd.f32 %v92, %v663
  %v665 = vpop.f32.mrb[0].mxu0
  %666 = vmatprep.mubr.f32.mxu0 0.0
  %667 = vmatmul.mubr.f32.gmra.mrb[0].mxu0 %v285
  %v668 = vpop.f32.mrb[0].mxu0
  %v669 = vadd.f32 %v92, %v668
  %v670 = vpop.f32.mrb[0].mxu0
  %671 = vdwg.mxu0
  %v672 = vmax.f32 %v354, 0.0
  %v673 = vmax.f32 %v359, 0.0
  %v674 = vmax.f32 %v364, 0.0
  %v675 = vmax.f32 %v369, 0.0
  %v676 = vmax.f32 %v374, 0.0
  %v677 = vmax.f32 %v379, 0.0
  %v678 = vmax.f32 %v384, 0.0
  %v679 = vmax.f32 %v389, 0.0
  %v680 = vmax.f32 %v394, 0.0
  %v681 = vmax.f32 %v399, 0.0
  %v682 = vmax.f32 %v404, 0.0
  %v683 = vmax.f32 %v409, 0.0
  %v684 = vmax.f32 %v414, 0.0
  %v685 = vmax.f32 %v419, 0.0
  %v686 = vmax.f32 %v424, 0.0
  %v687 = vmax.f32 %v429, 0.0
  %v688 = vmax.f32 %v434, 0.0
  %v689 = vmax.f32 %v439, 0.0
  %v690 = vmax.f32 %v444, 0.0
  %v691 = vmax.f32 %v449, 0.0
  %v692 = vmax.f32 %v454, 0.0
  %v693 = vmax.f32 %v459, 0.0
  %v694 = vmax.f32 %v464, 0.0
  %v695 = vmax.f32 %v469, 0.0
  %v696 = vmax.f32 %v474, 0.0
  %v697 = vmax.f32 %v479, 0.0
  %v698 = vmax.f32 %v484, 0.0
  %v699 = vmax.f32 %v489, 0.0
  %v700 = vmax.f32 %v494, 0.0
  %v701 = vmax.f32 %v499, 0.0
  %v702 = vmax.f32 %v504, 0.0
  %v703 = vmax.f32 %v509, 0.0
  %v704 = vmax.f32 %v514, 0.0
  %v705 = vmax.f32 %v519, 0.0
  %v706 = vmax.f32 %v524, 0.0
  %v707 = vmax.f32 %v529, 0.0
  %v708 = vmax.f32 %v534, 0.0
  %v709 = vmax.f32 %v539, 0.0
  %v710 = vmax.f32 %v544, 0.0
  %v711 = vmax.f32 %v549, 0.0
  %v712 = vmax.f32 %v554, 0.0
  %v713 = vmax.f32 %v559, 0.0
  %v714 = vmax.f32 %v564, 0.0
  %v715 = vmax.f32 %v569, 0.0
  %v716 = vmax.f32 %v574, 0.0
  %v717 = vmax.f32 %v579, 0.0
  %v718 = vmax.f32 %v584, 0.0
  %v719 = vmax.f32 %v589, 0.0
  %v720 = vmax.f32 %v594, 0.0
  %v721 = vmax.f32 %v599, 0.0
  %v722 = vmax.f32 %v604, 0.0
  %v723 = vmax.f32 %v609, 0.0
  %v724 = vmax.f32 %v614, 0.0
  %v725 = vmax.f32 %v619, 0.0
  %v726 = vmax.f32 %v624, 0.0
  %v727 = vmax.f32 %v629, 0.0
  %v728 = vmax.f32 %v634, 0.0
  %v729 = vmax.f32 %v639, 0.0
  %v730 = vmax.f32 %v644, 0.0
  %v731 = vmax.f32 %v649, 0.0
  %v732 = vmax.f32 %v654, 0.0
  %v733 = vmax.f32 %v659, 0.0
  %v734 = vmax.f32 %v664, 0.0
  %v735 = vmax.f32 %v669, 0.0
  %vm736 = vcmask 64512
  %v737 = vsel %vm736, %v672, 0.0
  %v738 = vsel %vm736, %v673, 0.0
  %v739 = vadd.f32 %v737, %v738
  %v740 = vsel %vm736, %v674, 0.0
  %v741 = vadd.f32 %v739, %v740
  %v742 = vsel %vm736, %v675, 0.0
  %v743 = vadd.f32 %v741, %v742
  %v744 = vsel %vm736, %v676, 0.0
  %v745 = vadd.f32 %v743, %v744
  %v746 = vsel %vm736, %v677, 0.0
  %v747 = vadd.f32 %v745, %v746
  %v748 = vsel %vm736, %v678, 0.0
  %v749 = vadd.f32 %v747, %v748
  %v750 = vsel %vm736, %v679, 0.0
  %v751 = vadd.f32 %v749, %v750
  %v752 = vsel %vm736, %v680, 0.0
  %v753 = vadd.f32 %v751, %v752
  %v754 = vsel %vm736, %v681, 0.0
  %v755 = vadd.f32 %v753, %v754
  %v756 = vsel %vm736, %v682, 0.0
  %v757 = vadd.f32 %v755, %v756
  %v758 = vsel %vm736, %v683, 0.0
  %v759 = vadd.f32 %v757, %v758
  %v760 = vsel %vm736, %v684, 0.0
  %v761 = vadd.f32 %v759, %v760
  %v762 = vsel %vm736, %v685, 0.0
  %v763 = vadd.f32 %v761, %v762
  %v764 = vsel %vm736, %v686, 0.0
  %v765 = vadd.f32 %v763, %v764
  %v766 = vsel %vm736, %v687, 0.0
  %v767 = vadd.f32 %v765, %v766
  %v768 = vsel %vm736, %v688, 0.0
  %v769 = vadd.f32 %v767, %v768
  %v770 = vsel %vm736, %v689, 0.0
  %v771 = vadd.f32 %v769, %v770
  %v772 = vsel %vm736, %v690, 0.0
  %v773 = vadd.f32 %v771, %v772
  %v774 = vsel %vm736, %v691, 0.0
  %v775 = vadd.f32 %v773, %v774
  %v776 = vsel %vm736, %v692, 0.0
  %v777 = vadd.f32 %v775, %v776
  %v778 = vsel %vm736, %v693, 0.0
  %v779 = vadd.f32 %v777, %v778
  %v780 = vsel %vm736, %v694, 0.0
  %v781 = vadd.f32 %v779, %v780
  %v782 = vsel %vm736, %v695, 0.0
  %v783 = vadd.f32 %v781, %v782
  %v784 = vsel %vm736, %v696, 0.0
  %v785 = vadd.f32 %v783, %v784
  %v786 = vsel %vm736, %v697, 0.0
  %v787 = vadd.f32 %v785, %v786
  %v788 = vsel %vm736, %v698, 0.0
  %v789 = vadd.f32 %v787, %v788
  %v790 = vsel %vm736, %v699, 0.0
  %v791 = vadd.f32 %v789, %v790
  %v792 = vsel %vm736, %v700, 0.0
  %v793 = vadd.f32 %v791, %v792
  %v794 = vsel %vm736, %v701, 0.0
  %v795 = vadd.f32 %v793, %v794
  %v796 = vsel %vm736, %v702, 0.0
  %v797 = vadd.f32 %v795, %v796
  %v798 = vsel %vm736, %v703, 0.0
  %v799 = vadd.f32 %v797, %v798
  %v800 = vsel %vm736, %v704, 0.0
  %v801 = vadd.f32 %v799, %v800
  %v802 = vsel %vm736, %v705, 0.0
  %v803 = vadd.f32 %v801, %v802
  %v804 = vsel %vm736, %v706, 0.0
  %v805 = vadd.f32 %v803, %v804
  %v806 = vsel %vm736, %v707, 0.0
  %v807 = vadd.f32 %v805, %v806
  %v808 = vsel %vm736, %v708, 0.0
  %v809 = vadd.f32 %v807, %v808
  %v810 = vsel %vm736, %v709, 0.0
  %v811 = vadd.f32 %v809, %v810
  %v812 = vsel %vm736, %v710, 0.0
  %v813 = vadd.f32 %v811, %v812
  %v814 = vsel %vm736, %v711, 0.0
  %v815 = vadd.f32 %v813, %v814
  %v816 = vsel %vm736, %v712, 0.0
  %v817 = vadd.f32 %v815, %v816
  %v818 = vsel %vm736, %v713, 0.0
  %v819 = vadd.f32 %v817, %v818
  %v820 = vsel %vm736, %v714, 0.0
  %v821 = vadd.f32 %v819, %v820
  %v822 = vsel %vm736, %v715, 0.0
  %v823 = vadd.f32 %v821, %v822
  %v824 = vsel %vm736, %v716, 0.0
  %v825 = vadd.f32 %v823, %v824
  %v826 = vsel %vm736, %v717, 0.0
  %v827 = vadd.f32 %v825, %v826
  %v828 = vsel %vm736, %v718, 0.0
  %v829 = vadd.f32 %v827, %v828
  %v830 = vsel %vm736, %v719, 0.0
  %v831 = vadd.f32 %v829, %v830
  %v832 = vsel %vm736, %v720, 0.0
  %v833 = vadd.f32 %v831, %v832
  %v834 = vsel %vm736, %v721, 0.0
  %v835 = vadd.f32 %v833, %v834
  %v836 = vsel %vm736, %v722, 0.0
  %v837 = vadd.f32 %v835, %v836
  %v838 = vsel %vm736, %v723, 0.0
  %v839 = vadd.f32 %v837, %v838
  %v840 = vsel %vm736, %v724, 0.0
  %v841 = vadd.f32 %v839, %v840
  %v842 = vsel %vm736, %v725, 0.0
  %v843 = vadd.f32 %v841, %v842
  %v844 = vsel %vm736, %v726, 0.0
  %v845 = vadd.f32 %v843, %v844
  %v846 = vsel %vm736, %v727, 0.0
  %v847 = vadd.f32 %v845, %v846
  %v848 = vsel %vm736, %v728, 0.0
  %v849 = vadd.f32 %v847, %v848
  %v850 = vsel %vm736, %v729, 0.0
  %v851 = vadd.f32 %v849, %v850
  %v852 = vsel %vm736, %v730, 0.0
  %v853 = vadd.f32 %v851, %v852
  %v854 = vsel %vm736, %v731, 0.0
  %v855 = vadd.f32 %v853, %v854
  %v856 = vsel %vm736, %v732, 0.0
  %v857 = vadd.f32 %v855, %v856
  %v858 = vsel %vm736, %v733, 0.0
  %v859 = vadd.f32 %v857, %v858
  %v860 = vsel %vm736, %v734, 0.0
  %v861 = vadd.f32 %v859, %v860
  %v862 = vsel %vm736, %v735, 0.0
  %v863 = vadd.f32 %v861, %v862
  %v864 = vrot.slane %v863, 4
  %v865 = vadd.f32 %v863, %v864
  %v866 = vrot.slane %v865, 2
  %v867 = vadd.f32 %v865, %v866
  %v868 = vrot.slane %v867, 1
  %v869 = vadd.f32 %v867, %v868
  %v870 = vrcp.pop 512.0
  %v871 = vmul.f32 %v869, %v870
  %v872 = vsub.f32 %v672, %v871
  %v873 = vsub.f32 %v673, %v871
  %v874 = vsub.f32 %v674, %v871
  %v875 = vsub.f32 %v675, %v871
  %v876 = vsub.f32 %v676, %v871
  %v877 = vsub.f32 %v677, %v871
  %v878 = vsub.f32 %v678, %v871
  %v879 = vsub.f32 %v679, %v871
  %v880 = vsub.f32 %v680, %v871
  %v881 = vsub.f32 %v681, %v871
  %v882 = vsub.f32 %v682, %v871
  %v883 = vsub.f32 %v683, %v871
  %v884 = vsub.f32 %v684, %v871
  %v885 = vsub.f32 %v685, %v871
  %v886 = vsub.f32 %v686, %v871
  %v887 = vsub.f32 %v687, %v871
  %v888 = vsub.f32 %v688, %v871
  %v889 = vsub.f32 %v689, %v871
  %v890 = vsub.f32 %v690, %v871
  %v891 = vsub.f32 %v691, %v871
  %v892 = vsub.f32 %v692, %v871
  %v893 = vsub.f32 %v693, %v871
  %v894 = vsub.f32 %v694, %v871
  %v895 = vsub.f32 %v695, %v871
  %v896 = vsub.f32 %v696, %v871
  %v897 = vsub.f32 %v697, %v871
  %v898 = vsub.f32 %v698, %v871
  %v899 = vsub.f32 %v699, %v871
  %v900 = vsub.f32 %v700, %v871
  %v901 = vsub.f32 %v701, %v871
  %v902 = vsub.f32 %v702, %v871
  %v903 = vsub.f32 %v703, %v871
  %v904 = vsub.f32 %v704, %v871
  %v905 = vsub.f32 %v705, %v871
  %v906 = vsub.f32 %v706, %v871
  %v907 = vsub.f32 %v707, %v871
  %v908 = vsub.f32 %v708, %v871
  %v909 = vsub.f32 %v709, %v871
  %v910 = vsub.f32 %v710, %v871
  %v911 = vsub.f32 %v711, %v871
  %v912 = vsub.f32 %v712, %v871
  %v913 = vsub.f32 %v713, %v871
  %v914 = vsub.f32 %v714, %v871
  %v915 = vsub.f32 %v715, %v871
  %v916 = vsub.f32 %v716, %v871
  %v917 = vsub.f32 %v717, %v871
  %v918 = vsub.f32 %v718, %v871
  %v919 = vsub.f32 %v719, %v871
  %v920 = vsub.f32 %v720, %v871
  %v921 = vsub.f32 %v721, %v871
  %v922 = vsub.f32 %v722, %v871
  %v923 = vsub.f32 %v723, %v871
  %v924 = vsub.f32 %v724, %v871
  %v925 = vsub.f32 %v725, %v871
  %v926 = vsub.f32 %v726, %v871
  %v927 = vsub.f32 %v727, %v871
  %v928 = vsub.f32 %v728, %v871
  %v929 = vsub.f32 %v729, %v871
  %v930 = vsub.f32 %v730, %v871
  %v931 = vsub.f32 %v731, %v871
  %v932 = vsub.f32 %v732, %v871
  %v933 = vsub.f32 %v733, %v871
  %v934 = vsub.f32 %v734, %v871
  %v935 = vsub.f32 %v735, %v871
  %v936 = vmul.f32 %v872, %v872
  %v937 = vmul.f32 %v873, %v873
  %v938 = vmul.f32 %v874, %v874
  %v939 = vmul.f32 %v875, %v875
  %v940 = vmul.f32 %v876, %v876
  %v941 = vmul.f32 %v877, %v877
  %v942 = vmul.f32 %v878, %v878
  %v943 = vmul.f32 %v879, %v879
  %v944 = vmul.f32 %v880, %v880
  %v945 = vmul.f32 %v881, %v881
  %v946 = vmul.f32 %v882, %v882
  %v947 = vmul.f32 %v883, %v883
  %v948 = vmul.f32 %v884, %v884
  %v949 = vmul.f32 %v885, %v885
  %v950 = vmul.f32 %v886, %v886
  %v951 = vmul.f32 %v887, %v887
  %v952 = vmul.f32 %v888, %v888
  %v953 = vmul.f32 %v889, %v889
  %v954 = vmul.f32 %v890, %v890
  %v955 = vmul.f32 %v891, %v891
  %v956 = vmul.f32 %v892, %v892
  %v957 = vmul.f32 %v893, %v893
  %v958 = vmul.f32 %v894, %v894
  %v959 = vmul.f32 %v895, %v895
  %v960 = vmul.f32 %v896, %v896
  %v961 = vmul.f32 %v897, %v897
  %v962 = vmul.f32 %v898, %v898
  %v963 = vmul.f32 %v899, %v899
  %v964 = vmul.f32 %v900, %v900
  %v965 = vmul.f32 %v901, %v901
  %v966 = vmul.f32 %v902, %v902
  %v967 = vmul.f32 %v903, %v903
  %v968 = vmul.f32 %v904, %v904
  %v969 = vmul.f32 %v905, %v905
  %v970 = vmul.f32 %v906, %v906
  %v971 = vmul.f32 %v907, %v907
  %v972 = vmul.f32 %v908, %v908
  %v973 = vmul.f32 %v909, %v909
  %v974 = vmul.f32 %v910, %v910
  %v975 = vmul.f32 %v911, %v911
  %v976 = vmul.f32 %v912, %v912
  %v977 = vmul.f32 %v913, %v913
  %v978 = vmul.f32 %v914, %v914
  %v979 = vmul.f32 %v915, %v915
  %v980 = vmul.f32 %v916, %v916
  %v981 = vmul.f32 %v917, %v917
  %v982 = vmul.f32 %v918, %v918
  %v983 = vmul.f32 %v919, %v919
  %v984 = vmul.f32 %v920, %v920
  %v985 = vmul.f32 %v921, %v921
  %v986 = vmul.f32 %v922, %v922
  %v987 = vmul.f32 %v923, %v923
  %v988 = vmul.f32 %v924, %v924
  %v989 = vmul.f32 %v925, %v925
  %v990 = vmul.f32 %v926, %v926
  %v991 = vmul.f32 %v927, %v927
  %v992 = vmul.f32 %v928, %v928
  %v993 = vmul.f32 %v929, %v929
  %v994 = vmul.f32 %v930, %v930
  %v995 = vmul.f32 %v931, %v931
  %v996 = vmul.f32 %v932, %v932
  %v997 = vmul.f32 %v933, %v933
  %v998 = vmul.f32 %v934, %v934
  %v999 = vmul.f32 %v935, %v935
  %v1000 = vsel %vm736, %v936, 0.0
  %v1001 = vsel %vm736, %v937, 0.0
  %v1002 = vadd.f32 %v1000, %v1001
  %v1003 = vsel %vm736, %v938, 0.0
  %v1004 = vadd.f32 %v1002, %v1003
  %v1005 = vsel %vm736, %v939, 0.0
  %v1006 = vadd.f32 %v1004, %v1005
  %v1007 = vsel %vm736, %v940, 0.0
  %v1008 = vadd.f32 %v1006, %v1007
  %v1009 = vsel %vm736, %v941, 0.0
  %v1010 = vadd.f32 %v1008, %v1009
  %v1011 = vsel %vm736, %v942, 0.0
  %v1012 = vadd.f32 %v1010, %v1011
  %v1013 = vsel %vm736, %v943, 0.0
  %v1014 = vadd.f32 %v1012, %v1013
  %v1015 = vsel %vm736, %v944, 0.0
  %v1016 = vadd.f32 %v1014, %v1015
  %v1017 = vsel %vm736, %v945, 0.0
  %v1018 = vadd.f32 %v1016, %v1017
  %v1019 = vsel %vm736, %v946, 0.0
  %v1020 = vadd.f32 %v1018, %v1019
  %v1021 = vsel %vm736, %v947, 0.0
  %v1022 = vadd.f32 %v1020, %v1021
  %v1023 = vsel %vm736, %v948, 0.0
  %v1024 = vadd.f32 %v1022, %v1023
  %v1025 = vsel %vm736, %v949, 0.0
  %v1026 = vadd.f32 %v1024, %v1025
  %v1027 = vsel %vm736, %v950, 0.0
  %v1028 = vadd.f32 %v1026, %v1027
  %v1029 = vsel %vm736, %v951, 0.0
  %v1030 = vadd.f32 %v1028, %v1029
  %v1031 = vsel %vm736, %v952, 0.0
  %v1032 = vadd.f32 %v1030, %v1031
  %v1033 = vsel %vm736, %v953, 0.0
  %v1034 = vadd.f32 %v1032, %v1033
  %v1035 = vsel %vm736, %v954, 0.0
  %v1036 = vadd.f32 %v1034, %v1035
  %v1037 = vsel %vm736, %v955, 0.0
  %v1038 = vadd.f32 %v1036, %v1037
  %v1039 = vsel %vm736, %v956, 0.0
  %v1040 = vadd.f32 %v1038, %v1039
  %v1041 = vsel %vm736, %v957, 0.0
  %v1042 = vadd.f32 %v1040, %v1041
  %v1043 = vsel %vm736, %v958, 0.0
  %v1044 = vadd.f32 %v1042, %v1043
  %v1045 = vsel %vm736, %v959, 0.0
  %v1046 = vadd.f32 %v1044, %v1045
  %v1047 = vsel %vm736, %v960, 0.0
  %v1048 = vadd.f32 %v1046, %v1047
  %v1049 = vsel %vm736, %v961, 0.0
  %v1050 = vadd.f32 %v1048, %v1049
  %v1051 = vsel %vm736, %v962, 0.0
  %v1052 = vadd.f32 %v1050, %v1051
  %v1053 = vsel %vm736, %v963, 0.0
  %v1054 = vadd.f32 %v1052, %v1053
  %v1055 = vsel %vm736, %v964, 0.0
  %v1056 = vadd.f32 %v1054, %v1055
  %v1057 = vsel %vm736, %v965, 0.0
  %v1058 = vadd.f32 %v1056, %v1057
  %v1059 = vsel %vm736, %v966, 0.0
  %v1060 = vadd.f32 %v1058, %v1059
  %v1061 = vsel %vm736, %v967, 0.0
  %v1062 = vadd.f32 %v1060, %v1061
  %v1063 = vsel %vm736, %v968, 0.0
  %v1064 = vadd.f32 %v1062, %v1063
  %v1065 = vsel %vm736, %v969, 0.0
  %v1066 = vadd.f32 %v1064, %v1065
  %v1067 = vsel %vm736, %v970, 0.0
  %v1068 = vadd.f32 %v1066, %v1067
  %v1069 = vsel %vm736, %v971, 0.0
  %v1070 = vadd.f32 %v1068, %v1069
  %v1071 = vsel %vm736, %v972, 0.0
  %v1072 = vadd.f32 %v1070, %v1071
  %v1073 = vsel %vm736, %v973, 0.0
  %v1074 = vadd.f32 %v1072, %v1073
  %v1075 = vsel %vm736, %v974, 0.0
  %v1076 = vadd.f32 %v1074, %v1075
  %v1077 = vsel %vm736, %v975, 0.0
  %v1078 = vadd.f32 %v1076, %v1077
  %v1079 = vsel %vm736, %v976, 0.0
  %v1080 = vadd.f32 %v1078, %v1079
  %v1081 = vsel %vm736, %v977, 0.0
  %v1082 = vadd.f32 %v1080, %v1081
  %v1083 = vsel %vm736, %v978, 0.0
  %v1084 = vadd.f32 %v1082, %v1083
  %v1085 = vsel %vm736, %v979, 0.0
  %v1086 = vadd.f32 %v1084, %v1085
  %v1087 = vsel %vm736, %v980, 0.0
  %v1088 = vadd.f32 %v1086, %v1087
  %v1089 = vsel %vm736, %v981, 0.0
  %v1090 = vadd.f32 %v1088, %v1089
  %v1091 = vsel %vm736, %v982, 0.0
  %v1092 = vadd.f32 %v1090, %v1091
  %v1093 = vsel %vm736, %v983, 0.0
  %v1094 = vadd.f32 %v1092, %v1093
  %v1095 = vsel %vm736, %v984, 0.0
  %v1096 = vadd.f32 %v1094, %v1095
  %v1097 = vsel %vm736, %v985, 0.0
  %v1098 = vadd.f32 %v1096, %v1097
  %v1099 = vsel %vm736, %v986, 0.0
  %v1100 = vadd.f32 %v1098, %v1099
  %v1101 = vsel %vm736, %v987, 0.0
  %v1102 = vadd.f32 %v1100, %v1101
  %v1103 = vsel %vm736, %v988, 0.0
  %v1104 = vadd.f32 %v1102, %v1103
  %v1105 = vsel %vm736, %v989, 0.0
  %v1106 = vadd.f32 %v1104, %v1105
  %v1107 = vsel %vm736, %v990, 0.0
  %v1108 = vadd.f32 %v1106, %v1107
  %v1109 = vsel %vm736, %v991, 0.0
  %v1110 = vadd.f32 %v1108, %v1109
  %v1111 = vsel %vm736, %v992, 0.0
  %v1112 = vadd.f32 %v1110, %v1111
  %v1113 = vsel %vm736, %v993, 0.0
  %v1114 = vadd.f32 %v1112, %v1113
  %v1115 = vsel %vm736, %v994, 0.0
  %v1116 = vadd.f32 %v1114, %v1115
  %v1117 = vsel %vm736, %v995, 0.0
  %v1118 = vadd.f32 %v1116, %v1117
  %v1119 = vsel %vm736, %v996, 0.0
  %v1120 = vadd.f32 %v1118, %v1119
  %v1121 = vsel %vm736, %v997, 0.0
  %v1122 = vadd.f32 %v1120, %v1121
  %v1123 = vsel %vm736, %v998, 0.0
  %v1124 = vadd.f32 %v1122, %v1123
  %v1125 = vsel %vm736, %v999, 0.0
  %v1126 = vadd.f32 %v1124, %v1125
  %v1127 = vrot.slane %v1126, 4
  %v1128 = vadd.f32 %v1126, %v1127
  %v1129 = vrot.slane %v1128, 2
  %v1130 = vadd.f32 %v1128, %v1129
  %v1131 = vrot.slane %v1130, 1
  %v1132 = vadd.f32 %v1130, %v1131
  %v1133 = vmul.f32 %v1132, %v870
  %v1134 = vadd.f32 %v1133, 1e-05
  %v1135 = vrsqrt.pop %v1134
  %v1136 = vmul.f32 %v872, %v1135
  %v1137 = vmul.f32 %v873, %v1135
  %v1138 = vmul.f32 %v874, %v1135
  %v1139 = vmul.f32 %v875, %v1135
  %v1140 = vmul.f32 %v876, %v1135
  %v1141 = vmul.f32 %v877, %v1135
  %v1142 = vmul.f32 %v878, %v1135
  %v1143 = vmul.f32 %v879, %v1135
  %v1144 = vmul.f32 %v880, %v1135
  %v1145 = vmul.f32 %v881, %v1135
  %v1146 = vmul.f32 %v882, %v1135
  %v1147 = vmul.f32 %v883, %v1135
  %v1148 = vmul.f32 %v884, %v1135
  %v1149 = vmul.f32 %v885, %v1135
  %v1150 = vmul.f32 %v886, %v1135
  %v1151 = vmul.f32 %v887, %v1135
  %v1152 = vmul.f32 %v888, %v1135
  %v1153 = vmul.f32 %v889, %v1135
  %v1154 = vmul.f32 %v890, %v1135
  %v1155 = vmul.f32 %v891, %v1135
  %v1156 = vmul.f32 %v892, %v1135
  %v1157 = vmul.f32 %v893, %v1135
  %v1158 = vmul.f32 %v894, %v1135
  %v1159 = vmul.f32 %v895, %v1135
  %v1160 = vmul.f32 %v896, %v1135
  %v1161 = vmul.f32 %v897, %v1135
  %v1162 = vmul.f32 %v898, %v1135
  %v1163 = vmul.f32 %v899, %v1135
  %v1164 = vmul.f32 %v900, %v1135
  %v1165 = vmul.f32 %v901, %v1135
  %v1166 = vmul.f32 %v902, %v1135
  %v1167 = vmul.f32 %v903, %v1135
  %v1168 = vmul.f32 %v904, %v1135
  %v1169 = vmul.f32 %v905, %v1135
  %v1170 = vmul.f32 %v906, %v1135
  %v1171 = vmul.f32 %v907, %v1135
  %v1172 = vmul.f32 %v908, %v1135
  %v1173 = vmul.f32 %v909, %v1135
  %v1174 = vmul.f32 %v910, %v1135
  %v1175 = vmul.f32 %v911, %v1135
  %v1176 = vmul.f32 %v912, %v1135
  %v1177 = vmul.f32 %v913, %v1135
  %v1178 = vmul.f32 %v914, %v1135
  %v1179 = vmul.f32 %v915, %v1135
  %v1180 = vmul.f32 %v916, %v1135
  %v1181 = vmul.f32 %v917, %v1135
  %v1182 = vmul.f32 %v918, %v1135
  %v1183 = vmul.f32 %v919, %v1135
  %v1184 = vmul.f32 %v920, %v1135
  %v1185 = vmul.f32 %v921, %v1135
  %v1186 = vmul.f32 %v922, %v1135
  %v1187 = vmul.f32 %v923, %v1135
  %v1188 = vmul.f32 %v924, %v1135
  %v1189 = vmul.f32 %v925, %v1135
  %v1190 = vmul.f32 %v926, %v1135
  %v1191 = vmul.f32 %v927, %v1135
  %v1192 = vmul.f32 %v928, %v1135
  %v1193 = vmul.f32 %v929, %v1135
  %v1194 = vmul.f32 %v930, %v1135
  %v1195 = vmul.f32 %v931, %v1135
  %v1196 = vmul.f32 %v932, %v1135
  %v1197 = vmul.f32 %v933, %v1135
  %v1198 = vmul.f32 %v934, %v1135
  %v1199 = vmul.f32 %v935, %v1135
  %1200 = vst.msk [vmem:[%s3] sm:$0xff] %vm736, %v1136
  %1201 = vst.msk [vmem:[%s3 + $0x8] sm:$0xff] %vm736, %v1137
  %1202 = vst.msk [vmem:[%s3 + $0x10] sm:$0xff] %vm736, %v1138
  %1203 = vst.msk [vmem:[%s3 + $0x18] sm:$0xff] %vm736, %v1139
  %1204 = vst.msk [vmem:[%s3 + $0x20] sm:$0xff] %vm736, %v1140
  %1205 = vst.msk [vmem:[%s3 + $0x28] sm:$0xff] %vm736, %v1141
  %1206 = vst.msk [vmem:[%s3 + $0x30] sm:$0xff] %vm736, %v1142
  %1207 = vst.msk [vmem:[%s3 + $0x38] sm:$0xff] %vm736, %v1143
  %1208 = vst.msk [vmem:[%s3 + $0x40] sm:$0xff] %vm736, %v1144
  %1209 = vst.msk [vmem:[%s3 + $0x48] sm:$0xff] %vm736, %v1145
  %1210 = vst.msk [vmem:[%s3 + $0x50] sm:$0xff] %vm736, %v1146
  %1211 = vst.msk [vmem:[%s3 + $0x58] sm:$0xff] %vm736, %v1147
  %1212 = vst.msk [vmem:[%s3 + $0x60] sm:$0xff] %vm736, %v1148
  %1213 = vst.msk [vmem:[%s3 + $0x68] sm:$0xff] %vm736, %v1149
  %1214 = vst.msk [vmem:[%s3 + $0x70] sm:$0xff] %vm736, %v1150
  %1215 = vst.msk [vmem:[%s3 + $0x78] sm:$0xff] %vm736, %v1151
  %1216 = vst.msk [vmem:[%s3 + $0x80] sm:$0xff] %vm736, %v1152
  %1217 = vst.msk [vmem:[%s3 + $0x88] sm:$0xff] %vm736, %v1153
  %1218 = vst.msk [vmem:[%s3 + $0x90] sm:$0xff] %vm736, %v1154
  %1219 = vst.msk [vmem:[%s3 + $0x98] sm:$0xff] %vm736, %v1155
  %1220 = vst.msk [vmem:[%s3 + $0xa0] sm:$0xff] %vm736, %v1156
  %1221 = vst.msk [vmem:[%s3 + $0xa8] sm:$0xff] %vm736, %v1157
  %1222 = vst.msk [vmem:[%s3 + $0xb0] sm:$0xff] %vm736, %v1158
  %1223 = vst.msk [vmem:[%s3 + $0xb8] sm:$0xff] %vm736, %v1159
  %1224 = vst.msk [vmem:[%s3 + $0xc0] sm:$0xff] %vm736, %v1160
  %1225 = vst.msk [vmem:[%s3 + $0xc8] sm:$0xff] %vm736, %v1161
  %1226 = vst.msk [vmem:[%s3 + $0xd0] sm:$0xff] %vm736, %v1162
  %1227 = vst.msk [vmem:[%s3 + $0xd8] sm:$0xff] %vm736, %v1163
  %1228 = vst.msk [vmem:[%s3 + $0xe0] sm:$0xff] %vm736, %v1164
  %1229 = vst.msk [vmem:[%s3 + $0xe8] sm:$0xff] %vm736, %v1165
  %1230 = vst.msk [vmem:[%s3 + $0xf0] sm:$0xff] %vm736, %v1166
  %1231 = vst.msk [vmem:[%s3 + $0xf8] sm:$0xff] %vm736, %v1167
  %1232 = vst.msk [vmem:[%s3 + $0x100] sm:$0xff] %vm736, %v1168
  %1233 = vst.msk [vmem:[%s3 + $0x108] sm:$0xff] %vm736, %v1169
  %1234 = vst.msk [vmem:[%s3 + $0x110] sm:$0xff] %vm736, %v1170
  %1235 = vst.msk [vmem:[%s3 + $0x118] sm:$0xff] %vm736, %v1171
  %1236 = vst.msk [vmem:[%s3 + $0x120] sm:$0xff] %vm736, %v1172
  %1237 = vst.msk [vmem:[%s3 + $0x128] sm:$0xff] %vm736, %v1173
  %1238 = vst.msk [vmem:[%s3 + $0x130] sm:$0xff] %vm736, %v1174
  %1239 = vst.msk [vmem:[%s3 + $0x138] sm:$0xff] %vm736, %v1175
  %1240 = vst.msk [vmem:[%s3 + $0x140] sm:$0xff] %vm736, %v1176
  %1241 = vst.msk [vmem:[%s3 + $0x148] sm:$0xff] %vm736, %v1177
  %1242 = vst.msk [vmem:[%s3 + $0x150] sm:$0xff] %vm736, %v1178
  %1243 = vst.msk [vmem:[%s3 + $0x158] sm:$0xff] %vm736, %v1179
  %1244 = vst.msk [vmem:[%s3 + $0x160] sm:$0xff] %vm736, %v1180
  %1245 = vst.msk [vmem:[%s3 + $0x168] sm:$0xff] %vm736, %v1181
  %1246 = vst.msk [vmem:[%s3 + $0x170] sm:$0xff] %vm736, %v1182
  %1247 = vst.msk [vmem:[%s3 + $0x178] sm:$0xff] %vm736, %v1183
  %1248 = vst.msk [vmem:[%s3 + $0x180] sm:$0xff] %vm736, %v1184
  %1249 = vst.msk [vmem:[%s3 + $0x188] sm:$0xff] %vm736, %v1185
  %1250 = vst.msk [vmem:[%s3 + $0x190] sm:$0xff] %vm736, %v1186
  %1251 = vst.msk [vmem:[%s3 + $0x198] sm:$0xff] %vm736, %v1187
  %1252 = vst.msk [vmem:[%s3 + $0x1a0] sm:$0xff] %vm736, %v1188
  %1253 = vst.msk [vmem:[%s3 + $0x1a8] sm:$0xff] %vm736, %v1189
  %1254 = vst.msk [vmem:[%s3 + $0x1b0] sm:$0xff] %vm736, %v1190
  %1255 = vst.msk [vmem:[%s3 + $0x1b8] sm:$0xff] %vm736, %v1191
  %1256 = vst.msk [vmem:[%s3 + $0x1c0] sm:$0xff] %vm736, %v1192
  %1257 = vst.msk [vmem:[%s3 + $0x1c8] sm:$0xff] %vm736, %v1193
  %1258 = vst.msk [vmem:[%s3 + $0x1d0] sm:$0xff] %vm736, %v1194
  %1259 = vst.msk [vmem:[%s3 + $0x1d8] sm:$0xff] %vm736, %v1195
  %1260 = vst.msk [vmem:[%s3 + $0x1e0] sm:$0xff] %vm736, %v1196
  %1261 = vst.msk [vmem:[%s3 + $0x1e8] sm:$0xff] %vm736, %v1197
  %1262 = vst.msk [vmem:[%s3 + $0x1f0] sm:$0xff] %vm736, %v1198
  %1263 = vst.msk [vmem:[%s3 + $0x1f8] sm:$0xff] %vm736, %v1199
  // Predicated region
  $region14: #{wnet_forward.47} parent=0 // pred_check
    _
  $region15: #{wnet_forward.47} parent=0 // pred_check_branch
    %1265 = sbr.rel (0) target = $region17
  $region16: #{wnet_forward.47} parent=0 // pred_region
    _
  $region17: #{wnet_forward.47} parent=0 // pred_fallthru
    _
  // Predicated region
  $region18: #{wnet_forward.47} parent=0 // pred_check
    _
  $region19: #{wnet_forward.47} parent=0 // pred_check_branch
    %1267 = sbr.rel (0) target = $region21
  $region20: #{wnet_forward.47} parent=0 // pred_region
    _
  $region21: #{wnet_forward.47} parent=0 // pred_fallthru
    _

// kernel: wnet_forward.50
$region0: #{wnet_forward.50}
  #allocation0 [shape = 'u32[]', space=smem, size = 0x4, offset = 0x4, fixed_abs, tag = 'smem constant byte address 0x4 - core index']
  #allocation1 [shape = 'u32[144,128]{1,0:T(1,128)}', space=vmem, size = 0x12000, scoped, tag = 'internal scratch']
  #allocation2 [shape = 'f32[1,1]{1,0:T(1,128)S(1)}', space=vmem, size = 0x200, scoped, tag = 'scoped memory for wnet_forward.50']
  %s0 = inlined_call_operand.vmem [shape: f32[512,8], index: 0, kind: input, shape index: {}]
  %s1 = inlined_call_operand.vmem [shape: f32[8,1], index: 1, kind: input, shape index: {}]
  %s2 = inlined_call_operand.<no memory space> [shape: f32[1,1], index: 2, kind: input, shape index: {}]
  %s3 = inlined_call_operand.vmem [shape: f32[512,1], index: 3, kind: output, shape index: {}]
  %s4 = sld [smem:[#allocation0]]
  $region22: #{wnet_forward.50} parent=0
    _
  %s6 = ssub.s32 1, %s4
  %s7 = scalar_select 0, %s6, %s4
  %v8 = vstv %s2
  %9 = vst [vmem:[#allocation2] sm:$0x1] %v8
  // Predicated region
  $region2: #{wnet_forward.50} parent=0 // pred_check
    _
  $region3: #{wnet_forward.50} parent=0 // pred_check_branch
    %11 = sbr.rel (0) target = $region5
  $region4: #{wnet_forward.50} parent=0 // pred_region
    _
  $region5: #{wnet_forward.50} parent=0 // pred_fallthru
    _
  // Predicated region
  $region6: #{wnet_forward.50} parent=0 // pred_check
    _
  $region7: #{wnet_forward.50} parent=0 // pred_check_branch
    %13 = sbr.rel (0) target = $region9
  $region8: #{wnet_forward.50} parent=0 // pred_region
    _
  $region9: #{wnet_forward.50} parent=0 // pred_fallthru
    _
  // Predicated region
  $region10: #{wnet_forward.50} parent=0 // pred_check
    _
  $region11: #{wnet_forward.50} parent=0 // pred_check_branch
    %15 = sbr.rel (0) target = $region13
  $region12: #{wnet_forward.50} parent=0 // pred_region
    _
  $region13: #{wnet_forward.50} parent=0 // pred_fallthru
    _
  %v16 = vld [vmem:[%s0] sm:$0xff]
  %v17 = vld [vmem:[%s0 + $0x8] sm:$0xff]
  %v18 = vld [vmem:[%s0 + $0x10] sm:$0xff]
  %v19 = vld [vmem:[%s0 + $0x18] sm:$0xff]
  %v20 = vld [vmem:[%s0 + $0x20] sm:$0xff]
  %v21 = vld [vmem:[%s0 + $0x28] sm:$0xff]
  %v22 = vld [vmem:[%s0 + $0x30] sm:$0xff]
  %v23 = vld [vmem:[%s0 + $0x38] sm:$0xff]
  %v24 = vld [vmem:[%s0 + $0x40] sm:$0xff]
  %v25 = vld [vmem:[%s0 + $0x48] sm:$0xff]
  %v26 = vld [vmem:[%s0 + $0x50] sm:$0xff]
  %v27 = vld [vmem:[%s0 + $0x58] sm:$0xff]
  %v28 = vld [vmem:[%s0 + $0x60] sm:$0xff]
  %v29 = vld [vmem:[%s0 + $0x68] sm:$0xff]
  %v30 = vld [vmem:[%s0 + $0x70] sm:$0xff]
  %v31 = vld [vmem:[%s0 + $0x78] sm:$0xff]
  %v32 = vld [vmem:[%s0 + $0x80] sm:$0xff]
  %v33 = vld [vmem:[%s0 + $0x88] sm:$0xff]
  %v34 = vld [vmem:[%s0 + $0x90] sm:$0xff]
  %v35 = vld [vmem:[%s0 + $0x98] sm:$0xff]
  %v36 = vld [vmem:[%s0 + $0xa0] sm:$0xff]
  %v37 = vld [vmem:[%s0 + $0xa8] sm:$0xff]
  %v38 = vld [vmem:[%s0 + $0xb0] sm:$0xff]
  %v39 = vld [vmem:[%s0 + $0xb8] sm:$0xff]
  %v40 = vld [vmem:[%s0 + $0xc0] sm:$0xff]
  %v41 = vld [vmem:[%s0 + $0xc8] sm:$0xff]
  %v42 = vld [vmem:[%s0 + $0xd0] sm:$0xff]
  %v43 = vld [vmem:[%s0 + $0xd8] sm:$0xff]
  %v44 = vld [vmem:[%s0 + $0xe0] sm:$0xff]
  %v45 = vld [vmem:[%s0 + $0xe8] sm:$0xff]
  %v46 = vld [vmem:[%s0 + $0xf0] sm:$0xff]
  %v47 = vld [vmem:[%s0 + $0xf8] sm:$0xff]
  %v48 = vld [vmem:[%s0 + $0x100] sm:$0xff]
  %v49 = vld [vmem:[%s0 + $0x108] sm:$0xff]
  %v50 = vld [vmem:[%s0 + $0x110] sm:$0xff]
  %v51 = vld [vmem:[%s0 + $0x118] sm:$0xff]
  %v52 = vld [vmem:[%s0 + $0x120] sm:$0xff]
  %v53 = vld [vmem:[%s0 + $0x128] sm:$0xff]
  %v54 = vld [vmem:[%s0 + $0x130] sm:$0xff]
  %v55 = vld [vmem:[%s0 + $0x138] sm:$0xff]
  %v56 = vld [vmem:[%s0 + $0x140] sm:$0xff]
  %v57 = vld [vmem:[%s0 + $0x148] sm:$0xff]
  %v58 = vld [vmem:[%s0 + $0x150] sm:$0xff]
  %v59 = vld [vmem:[%s0 + $0x158] sm:$0xff]
  %v60 = vld [vmem:[%s0 + $0x160] sm:$0xff]
  %v61 = vld [vmem:[%s0 + $0x168] sm:$0xff]
  %v62 = vld [vmem:[%s0 + $0x170] sm:$0xff]
  %v63 = vld [vmem:[%s0 + $0x178] sm:$0xff]
  %v64 = vld [vmem:[%s0 + $0x180] sm:$0xff]
  %v65 = vld [vmem:[%s0 + $0x188] sm:$0xff]
  %v66 = vld [vmem:[%s0 + $0x190] sm:$0xff]
  %v67 = vld [vmem:[%s0 + $0x198] sm:$0xff]
  %v68 = vld [vmem:[%s0 + $0x1a0] sm:$0xff]
  %v69 = vld [vmem:[%s0 + $0x1a8] sm:$0xff]
  %v70 = vld [vmem:[%s0 + $0x1b0] sm:$0xff]
  %v71 = vld [vmem:[%s0 + $0x1b8] sm:$0xff]
  %v72 = vld [vmem:[%s0 + $0x1c0] sm:$0xff]
  %v73 = vld [vmem:[%s0 + $0x1c8] sm:$0xff]
  %v74 = vld [vmem:[%s0 + $0x1d0] sm:$0xff]
  %v75 = vld [vmem:[%s0 + $0x1d8] sm:$0xff]
  %v76 = vld [vmem:[%s0 + $0x1e0] sm:$0xff]
  %v77 = vld [vmem:[%s0 + $0x1e8] sm:$0xff]
  %v78 = vld [vmem:[%s0 + $0x1f0] sm:$0xff]
  %v79 = vld [vmem:[%s0 + $0x1f8] sm:$0xff]
  %v80 = vld [vmem:[%s1] sm:$0xff]
  %v81 = vld [vmem:[#allocation2] sm:$0x1]
  %v83 = vlaneseq
  %v84 = vshrl.u32 %v83, 7
  %v85 = vsub.s32 0, %v84
  %v86 = vrot.slane %v81, %v85
  %vm88 = vcmask 64512
  %v90 = vsel %vm88, %v16, 0
  %v93 = vsel %vm88, %v17, 0
  %v96 = vsel %vm88, %v18, 0
  %v99 = vsel %vm88, %v19, 0
  %v102 = vsel %vm88, %v20, 0
  %v105 = vsel %vm88, %v21, 0
  %v108 = vsel %vm88, %v22, 0
  %v111 = vsel %vm88, %v23, 0
  %v114 = vsel %vm88, %v24, 0
  %v117 = vsel %vm88, %v25, 0
  %v120 = vsel %vm88, %v26, 0
  %v123 = vsel %vm88, %v27, 0
  %v126 = vsel %vm88, %v28, 0
  %v129 = vsel %vm88, %v29, 0
  %v132 = vsel %vm88, %v30, 0
  %v135 = vsel %vm88, %v31, 0
  %v138 = vsel %vm88, %v32, 0
  %v141 = vsel %vm88, %v33, 0
  %v144 = vsel %vm88, %v34, 0
  %v147 = vsel %vm88, %v35, 0
  %v150 = vsel %vm88, %v36, 0
  %v153 = vsel %vm88, %v37, 0
  %v156 = vsel %vm88, %v38, 0
  %v159 = vsel %vm88, %v39, 0
  %v162 = vsel %vm88, %v40, 0
  %v165 = vsel %vm88, %v41, 0
  %v168 = vsel %vm88, %v42, 0
  %v171 = vsel %vm88, %v43, 0
  %v174 = vsel %vm88, %v44, 0
  %v177 = vsel %vm88, %v45, 0
  %v180 = vsel %vm88, %v46, 0
  %v183 = vsel %vm88, %v47, 0
  %v186 = vsel %vm88, %v48, 0
  %v189 = vsel %vm88, %v49, 0
  %v192 = vsel %vm88, %v50, 0
  %v195 = vsel %vm88, %v51, 0
  %v198 = vsel %vm88, %v52, 0
  %v201 = vsel %vm88, %v53, 0
  %v204 = vsel %vm88, %v54, 0
  %v207 = vsel %vm88, %v55, 0
  %v210 = vsel %vm88, %v56, 0
  %v213 = vsel %vm88, %v57, 0
  %v216 = vsel %vm88, %v58, 0
  %v219 = vsel %vm88, %v59, 0
  %v222 = vsel %vm88, %v60, 0
  %v225 = vsel %vm88, %v61, 0
  %v228 = vsel %vm88, %v62, 0
  %v231 = vsel %vm88, %v63, 0
  %v234 = vsel %vm88, %v64, 0
  %v237 = vsel %vm88, %v65, 0
  %v240 = vsel %vm88, %v66, 0
  %v243 = vsel %vm88, %v67, 0
  %v246 = vsel %vm88, %v68, 0
  %v249 = vsel %vm88, %v69, 0
  %v252 = vsel %vm88, %v70, 0
  %v255 = vsel %vm88, %v71, 0
  %v258 = vsel %vm88, %v72, 0
  %v261 = vsel %vm88, %v73, 0
  %v264 = vsel %vm88, %v74, 0
  %v267 = vsel %vm88, %v75, 0
  %v270 = vsel %vm88, %v76, 0
  %v273 = vsel %vm88, %v77, 0
  %v276 = vsel %vm88, %v78, 0
  %v279 = vsel %vm88, %v79, 0
  %281 = vmatprep.subr.mxu0 0.0
  %282 = vmatpush1.msra.mxu0 %v80
  %283 = vmatprep.subr.mxu0 0.0
  %284 = vmatpush1.msra.mxu0 0.0
  %285 = vmatprep.subr.mxu0 0.0
  %286 = vmatpush1.msra.mxu0 0.0
  %287 = vmatprep.subr.mxu0 0.0
  %288 = vmatpush1.msra.mxu0 0.0
  %289 = vmatprep.subr.mxu0 0.0
  %290 = vmatpush1.msra.mxu0 0.0
  %291 = vmatprep.subr.mxu0 0.0
  %292 = vmatpush1.msra.mxu0 0.0
  %293 = vmatprep.subr.mxu0 0.0
  %294 = vmatpush1.msra.mxu0 0.0
  %295 = vmatprep.subr.mxu0 0.0
  %296 = vmatpush1.msra.mxu0 0.0
  %297 = vmatprep.subr.mxu0 0.0
  %298 = vmatpush1.msra.mxu0 0.0
  %299 = vmatprep.subr.mxu0 0.0
  %300 = vmatpush1.msra.mxu0 0.0
  %301 = vmatprep.subr.mxu0 0.0
  %302 = vmatpush1.msra.mxu0 0.0
  %303 = vmatprep.subr.mxu0 0.0
  %304 = vmatpush1.msra.mxu0 0.0
  %305 = vmatprep.subr.mxu0 0.0
  %306 = vmatpush1.msra.mxu0 0.0
  %307 = vmatprep.subr.mxu0 0.0
  %308 = vmatpush1.msra.mxu0 0.0
  %309 = vmatprep.subr.mxu0 0.0
  %310 = vmatpush1.msra.mxu0 0.0
  %311 = vmatprep.subr.mxu0 0.0
  %312 = vmatpush1.msra.mxu0 0.0
  %313 = vmatprep.subr.mxu0 0.0
  %314 = vmatpush1.msra.mxu0 0.0
  %315 = vmatprep.subr.mxu0 0.0
  %316 = vmatpush1.msra.mxu0 0.0
  %317 = vmatprep.subr.mxu0 0.0
  %318 = vmatpush1.msra.mxu0 0.0
  %319 = vmatprep.subr.mxu0 0.0
  %320 = vmatpush1.msra.mxu0 0.0
  %321 = vmatprep.subr.mxu0 0.0
  %322 = vmatpush1.msra.mxu0 0.0
  %323 = vmatprep.subr.mxu0 0.0
  %324 = vmatpush1.msra.mxu0 0.0
  %325 = vmatprep.subr.mxu0 0.0
  %326 = vmatpush1.msra.mxu0 0.0
  %327 = vmatprep.subr.mxu0 0.0
  %328 = vmatpush1.msra.mxu0 0.0
  %329 = vmatprep.subr.mxu0 0.0
  %330 = vmatpush1.msra.mxu0 0.0
  %331 = vmatprep.subr.mxu0 0.0
  %332 = vmatpush1.msra.mxu0 0.0
  %333 = vmatprep.subr.mxu0 0.0
  %334 = vmatpush1.msra.mxu0 0.0
  %335 = vmatprep.subr.mxu0 0.0
  %336 = vmatpush1.msra.mxu0 0.0
  %337 = vmatprep.subr.mxu0 0.0
  %338 = vmatpush1.msra.mxu0 0.0
  %339 = vmatprep.subr.mxu0 0.0
  %340 = vmatpush1.msra.mxu0 0.0
  %341 = vmatprep.subr.mxu0 0.0
  %342 = vmatpush1.msra.mxu0 0.0
  %343 = vmatprep.subr.mxu0 0.0
  %344 = vmatpush1.msra.mxu0 0.0
  %345 = vmatprep.mubr.f32.mxu0 0.0
  %346 = vmatmul.mubr.f32.gmra.mrb[0].mxu0 %v90
  %v347 = vpop.f32.mrb[0].mxu0
  %v348 = vadd.f32 %v86, %v347
  %v349 = vpop.f32.mrb[0].mxu0
  %350 = vmatprep.mubr.f32.mxu0 0.0
  %351 = vmatmul.mubr.f32.gmra.mrb[0].mxu0 %v93
  %v352 = vpop.f32.mrb[0].mxu0
  %v353 = vadd.f32 %v86, %v352
  %v354 = vpop.f32.mrb[0].mxu0
  %355 = vmatprep.mubr.f32.mxu0 0.0
  %356 = vmatmul.mubr.f32.gmra.mrb[0].mxu0 %v96
  %v357 = vpop.f32.mrb[0].mxu0
  %v358 = vadd.f32 %v86, %v357
  %v359 = vpop.f32.mrb[0].mxu0
  %360 = vmatprep.mubr.f32.mxu0 0.0
  %361 = vmatmul.mubr.f32.gmra.mrb[0].mxu0 %v99
  %v362 = vpop.f32.mrb[0].mxu0
  %v363 = vadd.f32 %v86, %v362
  %v364 = vpop.f32.mrb[0].mxu0
  %365 = vmatprep.mubr.f32.mxu0 0.0
  %366 = vmatmul.mubr.f32.gmra.mrb[0].mxu0 %v102
  %v367 = vpop.f32.mrb[0].mxu0
  %v368 = vadd.f32 %v86, %v367
  %v369 = vpop.f32.mrb[0].mxu0
  %370 = vmatprep.mubr.f32.mxu0 0.0
  %371 = vmatmul.mubr.f32.gmra.mrb[0].mxu0 %v105
  %v372 = vpop.f32.mrb[0].mxu0
  %v373 = vadd.f32 %v86, %v372
  %v374 = vpop.f32.mrb[0].mxu0
  %375 = vmatprep.mubr.f32.mxu0 0.0
  %376 = vmatmul.mubr.f32.gmra.mrb[0].mxu0 %v108
  %v377 = vpop.f32.mrb[0].mxu0
  %v378 = vadd.f32 %v86, %v377
  %v379 = vpop.f32.mrb[0].mxu0
  %380 = vmatprep.mubr.f32.mxu0 0.0
  %381 = vmatmul.mubr.f32.gmra.mrb[0].mxu0 %v111
  %v382 = vpop.f32.mrb[0].mxu0
  %v383 = vadd.f32 %v86, %v382
  %v384 = vpop.f32.mrb[0].mxu0
  %385 = vmatprep.mubr.f32.mxu0 0.0
  %386 = vmatmul.mubr.f32.gmra.mrb[0].mxu0 %v114
  %v387 = vpop.f32.mrb[0].mxu0
  %v388 = vadd.f32 %v86, %v387
  %v389 = vpop.f32.mrb[0].mxu0
  %390 = vmatprep.mubr.f32.mxu0 0.0
  %391 = vmatmul.mubr.f32.gmra.mrb[0].mxu0 %v117
  %v392 = vpop.f32.mrb[0].mxu0
  %v393 = vadd.f32 %v86, %v392
  %v394 = vpop.f32.mrb[0].mxu0
  %395 = vmatprep.mubr.f32.mxu0 0.0
  %396 = vmatmul.mubr.f32.gmra.mrb[0].mxu0 %v120
  %v397 = vpop.f32.mrb[0].mxu0
  %v398 = vadd.f32 %v86, %v397
  %v399 = vpop.f32.mrb[0].mxu0
  %400 = vmatprep.mubr.f32.mxu0 0.0
  %401 = vmatmul.mubr.f32.gmra.mrb[0].mxu0 %v123
  %v402 = vpop.f32.mrb[0].mxu0
  %v403 = vadd.f32 %v86, %v402
  %v404 = vpop.f32.mrb[0].mxu0
  %405 = vmatprep.mubr.f32.mxu0 0.0
  %406 = vmatmul.mubr.f32.gmra.mrb[0].mxu0 %v126
  %v407 = vpop.f32.mrb[0].mxu0
  %v408 = vadd.f32 %v86, %v407
  %v409 = vpop.f32.mrb[0].mxu0
  %410 = vmatprep.mubr.f32.mxu0 0.0
  %411 = vmatmul.mubr.f32.gmra.mrb[0].mxu0 %v129
  %v412 = vpop.f32.mrb[0].mxu0
  %v413 = vadd.f32 %v86, %v412
  %v414 = vpop.f32.mrb[0].mxu0
  %415 = vmatprep.mubr.f32.mxu0 0.0
  %416 = vmatmul.mubr.f32.gmra.mrb[0].mxu0 %v132
  %v417 = vpop.f32.mrb[0].mxu0
  %v418 = vadd.f32 %v86, %v417
  %v419 = vpop.f32.mrb[0].mxu0
  %420 = vmatprep.mubr.f32.mxu0 0.0
  %421 = vmatmul.mubr.f32.gmra.mrb[0].mxu0 %v135
  %v422 = vpop.f32.mrb[0].mxu0
  %v423 = vadd.f32 %v86, %v422
  %v424 = vpop.f32.mrb[0].mxu0
  %425 = vmatprep.mubr.f32.mxu0 0.0
  %426 = vmatmul.mubr.f32.gmra.mrb[0].mxu0 %v138
  %v427 = vpop.f32.mrb[0].mxu0
  %v428 = vadd.f32 %v86, %v427
  %v429 = vpop.f32.mrb[0].mxu0
  %430 = vmatprep.mubr.f32.mxu0 0.0
  %431 = vmatmul.mubr.f32.gmra.mrb[0].mxu0 %v141
  %v432 = vpop.f32.mrb[0].mxu0
  %v433 = vadd.f32 %v86, %v432
  %v434 = vpop.f32.mrb[0].mxu0
  %435 = vmatprep.mubr.f32.mxu0 0.0
  %436 = vmatmul.mubr.f32.gmra.mrb[0].mxu0 %v144
  %v437 = vpop.f32.mrb[0].mxu0
  %v438 = vadd.f32 %v86, %v437
  %v439 = vpop.f32.mrb[0].mxu0
  %440 = vmatprep.mubr.f32.mxu0 0.0
  %441 = vmatmul.mubr.f32.gmra.mrb[0].mxu0 %v147
  %v442 = vpop.f32.mrb[0].mxu0
  %v443 = vadd.f32 %v86, %v442
  %v444 = vpop.f32.mrb[0].mxu0
  %445 = vmatprep.mubr.f32.mxu0 0.0
  %446 = vmatmul.mubr.f32.gmra.mrb[0].mxu0 %v150
  %v447 = vpop.f32.mrb[0].mxu0
  %v448 = vadd.f32 %v86, %v447
  %v449 = vpop.f32.mrb[0].mxu0
  %450 = vmatprep.mubr.f32.mxu0 0.0
  %451 = vmatmul.mubr.f32.gmra.mrb[0].mxu0 %v153
  %v452 = vpop.f32.mrb[0].mxu0
  %v453 = vadd.f32 %v86, %v452
  %v454 = vpop.f32.mrb[0].mxu0
  %455 = vmatprep.mubr.f32.mxu0 0.0
  %456 = vmatmul.mubr.f32.gmra.mrb[0].mxu0 %v156
  %v457 = vpop.f32.mrb[0].mxu0
  %v458 = vadd.f32 %v86, %v457
  %v459 = vpop.f32.mrb[0].mxu0
  %460 = vmatprep.mubr.f32.mxu0 0.0
  %461 = vmatmul.mubr.f32.gmra.mrb[0].mxu0 %v159
  %v462 = vpop.f32.mrb[0].mxu0
  %v463 = vadd.f32 %v86, %v462
  %v464 = vpop.f32.mrb[0].mxu0
  %465 = vmatprep.mubr.f32.mxu0 0.0
  %466 = vmatmul.mubr.f32.gmra.mrb[0].mxu0 %v162
  %v467 = vpop.f32.mrb[0].mxu0
  %v468 = vadd.f32 %v86, %v467
  %v469 = vpop.f32.mrb[0].mxu0
  %470 = vmatprep.mubr.f32.mxu0 0.0
  %471 = vmatmul.mubr.f32.gmra.mrb[0].mxu0 %v165
  %v472 = vpop.f32.mrb[0].mxu0
  %v473 = vadd.f32 %v86, %v472
  %v474 = vpop.f32.mrb[0].mxu0
  %475 = vmatprep.mubr.f32.mxu0 0.0
  %476 = vmatmul.mubr.f32.gmra.mrb[0].mxu0 %v168
  %v477 = vpop.f32.mrb[0].mxu0
  %v478 = vadd.f32 %v86, %v477
  %v479 = vpop.f32.mrb[0].mxu0
  %480 = vmatprep.mubr.f32.mxu0 0.0
  %481 = vmatmul.mubr.f32.gmra.mrb[0].mxu0 %v171
  %v482 = vpop.f32.mrb[0].mxu0
  %v483 = vadd.f32 %v86, %v482
  %v484 = vpop.f32.mrb[0].mxu0
  %485 = vmatprep.mubr.f32.mxu0 0.0
  %486 = vmatmul.mubr.f32.gmra.mrb[0].mxu0 %v174
  %v487 = vpop.f32.mrb[0].mxu0
  %v488 = vadd.f32 %v86, %v487
  %v489 = vpop.f32.mrb[0].mxu0
  %490 = vmatprep.mubr.f32.mxu0 0.0
  %491 = vmatmul.mubr.f32.gmra.mrb[0].mxu0 %v177
  %v492 = vpop.f32.mrb[0].mxu0
  %v493 = vadd.f32 %v86, %v492
  %v494 = vpop.f32.mrb[0].mxu0
  %495 = vmatprep.mubr.f32.mxu0 0.0
  %496 = vmatmul.mubr.f32.gmra.mrb[0].mxu0 %v180
  %v497 = vpop.f32.mrb[0].mxu0
  %v498 = vadd.f32 %v86, %v497
  %v499 = vpop.f32.mrb[0].mxu0
  %500 = vmatprep.mubr.f32.mxu0 0.0
  %501 = vmatmul.mubr.f32.gmra.mrb[0].mxu0 %v183
  %v502 = vpop.f32.mrb[0].mxu0
  %v503 = vadd.f32 %v86, %v502
  %v504 = vpop.f32.mrb[0].mxu0
  %505 = vmatprep.mubr.f32.mxu0 0.0
  %506 = vmatmul.mubr.f32.gmra.mrb[0].mxu0 %v186
  %v507 = vpop.f32.mrb[0].mxu0
  %v508 = vadd.f32 %v86, %v507
  %v509 = vpop.f32.mrb[0].mxu0
  %510 = vmatprep.mubr.f32.mxu0 0.0
  %511 = vmatmul.mubr.f32.gmra.mrb[0].mxu0 %v189
  %v512 = vpop.f32.mrb[0].mxu0
  %v513 = vadd.f32 %v86, %v512
  %v514 = vpop.f32.mrb[0].mxu0
  %515 = vmatprep.mubr.f32.mxu0 0.0
  %516 = vmatmul.mubr.f32.gmra.mrb[0].mxu0 %v192
  %v517 = vpop.f32.mrb[0].mxu0
  %v518 = vadd.f32 %v86, %v517
  %v519 = vpop.f32.mrb[0].mxu0
  %520 = vmatprep.mubr.f32.mxu0 0.0
  %521 = vmatmul.mubr.f32.gmra.mrb[0].mxu0 %v195
  %v522 = vpop.f32.mrb[0].mxu0
  %v523 = vadd.f32 %v86, %v522
  %v524 = vpop.f32.mrb[0].mxu0
  %525 = vmatprep.mubr.f32.mxu0 0.0
  %526 = vmatmul.mubr.f32.gmra.mrb[0].mxu0 %v198
  %v527 = vpop.f32.mrb[0].mxu0
  %v528 = vadd.f32 %v86, %v527
  %v529 = vpop.f32.mrb[0].mxu0
  %530 = vmatprep.mubr.f32.mxu0 0.0
  %531 = vmatmul.mubr.f32.gmra.mrb[0].mxu0 %v201
  %v532 = vpop.f32.mrb[0].mxu0
  %v533 = vadd.f32 %v86, %v532
  %v534 = vpop.f32.mrb[0].mxu0
  %535 = vmatprep.mubr.f32.mxu0 0.0
  %536 = vmatmul.mubr.f32.gmra.mrb[0].mxu0 %v204
  %v537 = vpop.f32.mrb[0].mxu0
  %v538 = vadd.f32 %v86, %v537
  %v539 = vpop.f32.mrb[0].mxu0
  %540 = vmatprep.mubr.f32.mxu0 0.0
  %541 = vmatmul.mubr.f32.gmra.mrb[0].mxu0 %v207
  %v542 = vpop.f32.mrb[0].mxu0
  %v543 = vadd.f32 %v86, %v542
  %v544 = vpop.f32.mrb[0].mxu0
  %545 = vmatprep.mubr.f32.mxu0 0.0
  %546 = vmatmul.mubr.f32.gmra.mrb[0].mxu0 %v210
  %v547 = vpop.f32.mrb[0].mxu0
  %v548 = vadd.f32 %v86, %v547
  %v549 = vpop.f32.mrb[0].mxu0
  %550 = vmatprep.mubr.f32.mxu0 0.0
  %551 = vmatmul.mubr.f32.gmra.mrb[0].mxu0 %v213
  %v552 = vpop.f32.mrb[0].mxu0
  %v553 = vadd.f32 %v86, %v552
  %v554 = vpop.f32.mrb[0].mxu0
  %555 = vmatprep.mubr.f32.mxu0 0.0
  %556 = vmatmul.mubr.f32.gmra.mrb[0].mxu0 %v216
  %v557 = vpop.f32.mrb[0].mxu0
  %v558 = vadd.f32 %v86, %v557
  %v559 = vpop.f32.mrb[0].mxu0
  %560 = vmatprep.mubr.f32.mxu0 0.0
  %561 = vmatmul.mubr.f32.gmra.mrb[0].mxu0 %v219
  %v562 = vpop.f32.mrb[0].mxu0
  %v563 = vadd.f32 %v86, %v562
  %v564 = vpop.f32.mrb[0].mxu0
  %565 = vmatprep.mubr.f32.mxu0 0.0
  %566 = vmatmul.mubr.f32.gmra.mrb[0].mxu0 %v222
  %v567 = vpop.f32.mrb[0].mxu0
  %v568 = vadd.f32 %v86, %v567
  %v569 = vpop.f32.mrb[0].mxu0
  %570 = vmatprep.mubr.f32.mxu0 0.0
  %571 = vmatmul.mubr.f32.gmra.mrb[0].mxu0 %v225
  %v572 = vpop.f32.mrb[0].mxu0
  %v573 = vadd.f32 %v86, %v572
  %v574 = vpop.f32.mrb[0].mxu0
  %575 = vmatprep.mubr.f32.mxu0 0.0
  %576 = vmatmul.mubr.f32.gmra.mrb[0].mxu0 %v228
  %v577 = vpop.f32.mrb[0].mxu0
  %v578 = vadd.f32 %v86, %v577
  %v579 = vpop.f32.mrb[0].mxu0
  %580 = vmatprep.mubr.f32.mxu0 0.0
  %581 = vmatmul.mubr.f32.gmra.mrb[0].mxu0 %v231
  %v582 = vpop.f32.mrb[0].mxu0
  %v583 = vadd.f32 %v86, %v582
  %v584 = vpop.f32.mrb[0].mxu0
  %585 = vmatprep.mubr.f32.mxu0 0.0
  %586 = vmatmul.mubr.f32.gmra.mrb[0].mxu0 %v234
  %v587 = vpop.f32.mrb[0].mxu0
  %v588 = vadd.f32 %v86, %v587
  %v589 = vpop.f32.mrb[0].mxu0
  %590 = vmatprep.mubr.f32.mxu0 0.0
  %591 = vmatmul.mubr.f32.gmra.mrb[0].mxu0 %v237
  %v592 = vpop.f32.mrb[0].mxu0
  %v593 = vadd.f32 %v86, %v592
  %v594 = vpop.f32.mrb[0].mxu0
  %595 = vmatprep.mubr.f32.mxu0 0.0
  %596 = vmatmul.mubr.f32.gmra.mrb[0].mxu0 %v240
  %v597 = vpop.f32.mrb[0].mxu0
  %v598 = vadd.f32 %v86, %v597
  %v599 = vpop.f32.mrb[0].mxu0
  %600 = vmatprep.mubr.f32.mxu0 0.0
  %601 = vmatmul.mubr.f32.gmra.mrb[0].mxu0 %v243
  %v602 = vpop.f32.mrb[0].mxu0
  %v603 = vadd.f32 %v86, %v602
  %v604 = vpop.f32.mrb[0].mxu0
  %605 = vmatprep.mubr.f32.mxu0 0.0
  %606 = vmatmul.mubr.f32.gmra.mrb[0].mxu0 %v246
  %v607 = vpop.f32.mrb[0].mxu0
  %v608 = vadd.f32 %v86, %v607
  %v609 = vpop.f32.mrb[0].mxu0
  %610 = vmatprep.mubr.f32.mxu0 0.0
  %611 = vmatmul.mubr.f32.gmra.mrb[0].mxu0 %v249
  %v612 = vpop.f32.mrb[0].mxu0
  %v613 = vadd.f32 %v86, %v612
  %v614 = vpop.f32.mrb[0].mxu0
  %615 = vmatprep.mubr.f32.mxu0 0.0
  %616 = vmatmul.mubr.f32.gmra.mrb[0].mxu0 %v252
  %v617 = vpop.f32.mrb[0].mxu0
  %v618 = vadd.f32 %v86, %v617
  %v619 = vpop.f32.mrb[0].mxu0
  %620 = vmatprep.mubr.f32.mxu0 0.0
  %621 = vmatmul.mubr.f32.gmra.mrb[0].mxu0 %v255
  %v622 = vpop.f32.mrb[0].mxu0
  %v623 = vadd.f32 %v86, %v622
  %v624 = vpop.f32.mrb[0].mxu0
  %625 = vmatprep.mubr.f32.mxu0 0.0
  %626 = vmatmul.mubr.f32.gmra.mrb[0].mxu0 %v258
  %v627 = vpop.f32.mrb[0].mxu0
  %v628 = vadd.f32 %v86, %v627
  %v629 = vpop.f32.mrb[0].mxu0
  %630 = vmatprep.mubr.f32.mxu0 0.0
  %631 = vmatmul.mubr.f32.gmra.mrb[0].mxu0 %v261
  %v632 = vpop.f32.mrb[0].mxu0
  %v633 = vadd.f32 %v86, %v632
  %v634 = vpop.f32.mrb[0].mxu0
  %635 = vmatprep.mubr.f32.mxu0 0.0
  %636 = vmatmul.mubr.f32.gmra.mrb[0].mxu0 %v264
  %v637 = vpop.f32.mrb[0].mxu0
  %v638 = vadd.f32 %v86, %v637
  %v639 = vpop.f32.mrb[0].mxu0
  %640 = vmatprep.mubr.f32.mxu0 0.0
  %641 = vmatmul.mubr.f32.gmra.mrb[0].mxu0 %v267
  %v642 = vpop.f32.mrb[0].mxu0
  %v643 = vadd.f32 %v86, %v642
  %v644 = vpop.f32.mrb[0].mxu0
  %645 = vmatprep.mubr.f32.mxu0 0.0
  %646 = vmatmul.mubr.f32.gmra.mrb[0].mxu0 %v270
  %v647 = vpop.f32.mrb[0].mxu0
  %v648 = vadd.f32 %v86, %v647
  %v649 = vpop.f32.mrb[0].mxu0
  %650 = vmatprep.mubr.f32.mxu0 0.0
  %651 = vmatmul.mubr.f32.gmra.mrb[0].mxu0 %v273
  %v652 = vpop.f32.mrb[0].mxu0
  %v653 = vadd.f32 %v86, %v652
  %v654 = vpop.f32.mrb[0].mxu0
  %655 = vmatprep.mubr.f32.mxu0 0.0
  %656 = vmatmul.mubr.f32.gmra.mrb[0].mxu0 %v276
  %v657 = vpop.f32.mrb[0].mxu0
  %v658 = vadd.f32 %v86, %v657
  %v659 = vpop.f32.mrb[0].mxu0
  %660 = vmatprep.mubr.f32.mxu0 0.0
  %661 = vmatmul.mubr.f32.gmra.mrb[0].mxu0 %v279
  %v662 = vpop.f32.mrb[0].mxu0
  %v663 = vadd.f32 %v86, %v662
  %v664 = vpop.f32.mrb[0].mxu0
  %665 = vdwg.mxu0
  %vm666 = vcmask 7168
  %667 = vst.msk [vmem:[%s3] sm:$0xff] %vm666, %v348
  %668 = vst.msk [vmem:[%s3 + $0x8] sm:$0xff] %vm666, %v353
  %669 = vst.msk [vmem:[%s3 + $0x10] sm:$0xff] %vm666, %v358
  %670 = vst.msk [vmem:[%s3 + $0x18] sm:$0xff] %vm666, %v363
  %671 = vst.msk [vmem:[%s3 + $0x20] sm:$0xff] %vm666, %v368
  %672 = vst.msk [vmem:[%s3 + $0x28] sm:$0xff] %vm666, %v373
  %673 = vst.msk [vmem:[%s3 + $0x30] sm:$0xff] %vm666, %v378
  %674 = vst.msk [vmem:[%s3 + $0x38] sm:$0xff] %vm666, %v383
  %675 = vst.msk [vmem:[%s3 + $0x40] sm:$0xff] %vm666, %v388
  %676 = vst.msk [vmem:[%s3 + $0x48] sm:$0xff] %vm666, %v393
  %677 = vst.msk [vmem:[%s3 + $0x50] sm:$0xff] %vm666, %v398
  %678 = vst.msk [vmem:[%s3 + $0x58] sm:$0xff] %vm666, %v403
  %679 = vst.msk [vmem:[%s3 + $0x60] sm:$0xff] %vm666, %v408
  %680 = vst.msk [vmem:[%s3 + $0x68] sm:$0xff] %vm666, %v413
  %681 = vst.msk [vmem:[%s3 + $0x70] sm:$0xff] %vm666, %v418
  %682 = vst.msk [vmem:[%s3 + $0x78] sm:$0xff] %vm666, %v423
  %683 = vst.msk [vmem:[%s3 + $0x80] sm:$0xff] %vm666, %v428
  %684 = vst.msk [vmem:[%s3 + $0x88] sm:$0xff] %vm666, %v433
  %685 = vst.msk [vmem:[%s3 + $0x90] sm:$0xff] %vm666, %v438
  %686 = vst.msk [vmem:[%s3 + $0x98] sm:$0xff] %vm666, %v443
  %687 = vst.msk [vmem:[%s3 + $0xa0] sm:$0xff] %vm666, %v448
  %688 = vst.msk [vmem:[%s3 + $0xa8] sm:$0xff] %vm666, %v453
  %689 = vst.msk [vmem:[%s3 + $0xb0] sm:$0xff] %vm666, %v458
  %690 = vst.msk [vmem:[%s3 + $0xb8] sm:$0xff] %vm666, %v463
  %691 = vst.msk [vmem:[%s3 + $0xc0] sm:$0xff] %vm666, %v468
  %692 = vst.msk [vmem:[%s3 + $0xc8] sm:$0xff] %vm666, %v473
  %693 = vst.msk [vmem:[%s3 + $0xd0] sm:$0xff] %vm666, %v478
  %694 = vst.msk [vmem:[%s3 + $0xd8] sm:$0xff] %vm666, %v483
  %695 = vst.msk [vmem:[%s3 + $0xe0] sm:$0xff] %vm666, %v488
  %696 = vst.msk [vmem:[%s3 + $0xe8] sm:$0xff] %vm666, %v493
  %697 = vst.msk [vmem:[%s3 + $0xf0] sm:$0xff] %vm666, %v498
  %698 = vst.msk [vmem:[%s3 + $0xf8] sm:$0xff] %vm666, %v503
  %699 = vst.msk [vmem:[%s3 + $0x100] sm:$0xff] %vm666, %v508
  %700 = vst.msk [vmem:[%s3 + $0x108] sm:$0xff] %vm666, %v513
  %701 = vst.msk [vmem:[%s3 + $0x110] sm:$0xff] %vm666, %v518
  %702 = vst.msk [vmem:[%s3 + $0x118] sm:$0xff] %vm666, %v523
  %703 = vst.msk [vmem:[%s3 + $0x120] sm:$0xff] %vm666, %v528
  %704 = vst.msk [vmem:[%s3 + $0x128] sm:$0xff] %vm666, %v533
  %705 = vst.msk [vmem:[%s3 + $0x130] sm:$0xff] %vm666, %v538
  %706 = vst.msk [vmem:[%s3 + $0x138] sm:$0xff] %vm666, %v543
  %707 = vst.msk [vmem:[%s3 + $0x140] sm:$0xff] %vm666, %v548
  %708 = vst.msk [vmem:[%s3 + $0x148] sm:$0xff] %vm666, %v553
  %709 = vst.msk [vmem:[%s3 + $0x150] sm:$0xff] %vm666, %v558
  %710 = vst.msk [vmem:[%s3 + $0x158] sm:$0xff] %vm666, %v563
  %711 = vst.msk [vmem:[%s3 + $0x160] sm:$0xff] %vm666, %v568
  %712 = vst.msk [vmem:[%s3 + $0x168] sm:$0xff] %vm666, %v573
  %713 = vst.msk [vmem:[%s3 + $0x170] sm:$0xff] %vm666, %v578
  %714 = vst.msk [vmem:[%s3 + $0x178] sm:$0xff] %vm666, %v583
  %715 = vst.msk [vmem:[%s3 + $0x180] sm:$0xff] %vm666, %v588
  %716 = vst.msk [vmem:[%s3 + $0x188] sm:$0xff] %vm666, %v593
  %717 = vst.msk [vmem:[%s3 + $0x190] sm:$0xff] %vm666, %v598
  %718 = vst.msk [vmem:[%s3 + $0x198] sm:$0xff] %vm666, %v603
  %719 = vst.msk [vmem:[%s3 + $0x1a0] sm:$0xff] %vm666, %v608
  %720 = vst.msk [vmem:[%s3 + $0x1a8] sm:$0xff] %vm666, %v613
  %721 = vst.msk [vmem:[%s3 + $0x1b0] sm:$0xff] %vm666, %v618
  %722 = vst.msk [vmem:[%s3 + $0x1b8] sm:$0xff] %vm666, %v623
  %723 = vst.msk [vmem:[%s3 + $0x1c0] sm:$0xff] %vm666, %v628
  %724 = vst.msk [vmem:[%s3 + $0x1c8] sm:$0xff] %vm666, %v633
  %725 = vst.msk [vmem:[%s3 + $0x1d0] sm:$0xff] %vm666, %v638
  %726 = vst.msk [vmem:[%s3 + $0x1d8] sm:$0xff] %vm666, %v643
  %727 = vst.msk [vmem:[%s3 + $0x1e0] sm:$0xff] %vm666, %v648
  %728 = vst.msk [vmem:[%s3 + $0x1e8] sm:$0xff] %vm666, %v653
  %729 = vst.msk [vmem:[%s3 + $0x1f0] sm:$0xff] %vm666, %v658
  %730 = vst.msk [vmem:[%s3 + $0x1f8] sm:$0xff] %vm666, %v663
  // Predicated region
  $region14: #{wnet_forward.50} parent=0 // pred_check
    _
  $region15: #{wnet_forward.50} parent=0 // pred_check_branch
    %732 = sbr.rel (0) target = $region17
  $region16: #{wnet_forward.50} parent=0 // pred_region
    _
  $region17: #{wnet_forward.50} parent=0 // pred_fallthru
    _
  // Predicated region
  $region18: #{wnet_forward.50} parent=0 // pred_check
    _
  $region19: #{wnet_forward.50} parent=0 // pred_check_branch
    %734 = sbr.rel (0) target = $region21
  $region20: #{wnet_forward.50} parent=0 // pred_region
    _
  $region21: #{wnet_forward.50} parent=0 // pred_fallthru
    _

// kernel: wnet_forward.48
$region0: #{wnet_forward.48}
  #allocation0 [shape = 'u32[]', space=smem, size = 0x4, offset = 0x4, fixed_abs, tag = 'smem constant byte address 0x4 - core index']
  #allocation1 [shape = 'u32[144,128]{1,0:T(1,128)}', space=vmem, size = 0x12000, scoped, tag = 'internal scratch']
  %s0 = inlined_call_operand.vmem [shape: f32[512,144], index: 0, kind: input, shape index: {}]
  %s1 = inlined_call_operand.vmem [shape: f32[144,16], index: 1, kind: input, shape index: {}]
  %s2 = inlined_call_operand.vmem [shape: f32[1,16], index: 2, kind: input, shape index: {}]
  %s3 = inlined_call_operand.vmem [shape: f32[512,16], index: 3, kind: output, shape index: {}]
  %s4 = sld [smem:[#allocation0]]
  $region22: #{wnet_forward.48} parent=0
    _
  %s6 = ssub.s32 1, %s4
  %s7 = scalar_select 0, %s6, %s4
  // Predicated region
  $region2: #{wnet_forward.48} parent=0 // pred_check
    _
  $region3: #{wnet_forward.48} parent=0 // pred_check_branch
    %9 = sbr.rel (0) target = $region5
  $region4: #{wnet_forward.48} parent=0 // pred_region
    _
  $region5: #{wnet_forward.48} parent=0 // pred_fallthru
    _
  // Predicated region
  $region6: #{wnet_forward.48} parent=0 // pred_check
    _
  $region7: #{wnet_forward.48} parent=0 // pred_check_branch
    %11 = sbr.rel (0) target = $region9
  $region8: #{wnet_forward.48} parent=0 // pred_region
    _
  $region9: #{wnet_forward.48} parent=0 // pred_fallthru
    _
  // Predicated region
  $region10: #{wnet_forward.48} parent=0 // pred_check
    _
  $region11: #{wnet_forward.48} parent=0 // pred_check_branch
    %13 = sbr.rel (0) target = $region13
  $region12: #{wnet_forward.48} parent=0 // pred_region
    _
  $region13: #{wnet_forward.48} parent=0 // pred_fallthru
    _
  %v14 = vld [vmem:[%s0] sm:$0xff]
  %v15 = vld [vmem:[%s0 + $0x8] sm:$0xff]
  %v16 = vld [vmem:[%s0 + $0x10] sm:$0xff]
  %v17 = vld [vmem:[%s0 + $0x18] sm:$0xff]
  %v18 = vld [vmem:[%s0 + $0x20] sm:$0xff]
  %v19 = vld [vmem:[%s0 + $0x28] sm:$0xff]
  %v20 = vld [vmem:[%s0 + $0x30] sm:$0xff]
  %v21 = vld [vmem:[%s0 + $0x38] sm:$0xff]
  %v22 = vld [vmem:[%s0 + $0x40] sm:$0xff]
  %v23 = vld [vmem:[%s0 + $0x48] sm:$0xff]
  %v24 = vld [vmem:[%s0 + $0x50] sm:$0xff]
  %v25 = vld [vmem:[%s0 + $0x58] sm:$0xff]
  %v26 = vld [vmem:[%s0 + $0x60] sm:$0xff]
  %v27 = vld [vmem:[%s0 + $0x68] sm:$0xff]
  %v28 = vld [vmem:[%s0 + $0x70] sm:$0xff]
  %v29 = vld [vmem:[%s0 + $0x78] sm:$0xff]
  %v30 = vld [vmem:[%s0 + $0x80] sm:$0xff]
  %v31 = vld [vmem:[%s0 + $0x88] sm:$0xff]
  %v32 = vld [vmem:[%s0 + $0x90] sm:$0xff]
  %v33 = vld [vmem:[%s0 + $0x98] sm:$0xff]
  %v34 = vld [vmem:[%s0 + $0xa0] sm:$0xff]
  %v35 = vld [vmem:[%s0 + $0xa8] sm:$0xff]
  %v36 = vld [vmem:[%s0 + $0xb0] sm:$0xff]
  %v37 = vld [vmem:[%s0 + $0xb8] sm:$0xff]
  %v38 = vld [vmem:[%s0 + $0xc0] sm:$0xff]
  %v39 = vld [vmem:[%s0 + $0xc8] sm:$0xff]
  %v40 = vld [vmem:[%s0 + $0xd0] sm:$0xff]
  %v41 = vld [vmem:[%s0 + $0xd8] sm:$0xff]
  %v42 = vld [vmem:[%s0 + $0xe0] sm:$0xff]
  %v43 = vld [vmem:[%s0 + $0xe8] sm:$0xff]
  %v44 = vld [vmem:[%s0 + $0xf0] sm:$0xff]
  %v45 = vld [vmem:[%s0 + $0xf8] sm:$0xff]
  %v46 = vld [vmem:[%s0 + $0x100] sm:$0xff]
  %v47 = vld [vmem:[%s0 + $0x108] sm:$0xff]
  %v48 = vld [vmem:[%s0 + $0x110] sm:$0xff]
  %v49 = vld [vmem:[%s0 + $0x118] sm:$0xff]
  %v50 = vld [vmem:[%s0 + $0x120] sm:$0xff]
  %v51 = vld [vmem:[%s0 + $0x128] sm:$0xff]
  %v52 = vld [vmem:[%s0 + $0x130] sm:$0xff]
  %v53 = vld [vmem:[%s0 + $0x138] sm:$0xff]
  %v54 = vld [vmem:[%s0 + $0x140] sm:$0xff]
  %v55 = vld [vmem:[%s0 + $0x148] sm:$0xff]
  %v56 = vld [vmem:[%s0 + $0x150] sm:$0xff]
  %v57 = vld [vmem:[%s0 + $0x158] sm:$0xff]
  %v58 = vld [vmem:[%s0 + $0x160] sm:$0xff]
  %v59 = vld [vmem:[%s0 + $0x168] sm:$0xff]
  %v60 = vld [vmem:[%s0 + $0x170] sm:$0xff]
  %v61 = vld [vmem:[%s0 + $0x178] sm:$0xff]
  %v62 = vld [vmem:[%s0 + $0x180] sm:$0xff]
  %v63 = vld [vmem:[%s0 + $0x188] sm:$0xff]
  %v64 = vld [vmem:[%s0 + $0x190] sm:$0xff]
  %v65 = vld [vmem:[%s0 + $0x198] sm:$0xff]
  %v66 = vld [vmem:[%s0 + $0x1a0] sm:$0xff]
  %v67 = vld [vmem:[%s0 + $0x1a8] sm:$0xff]
  %v68 = vld [vmem:[%s0 + $0x1b0] sm:$0xff]
  %v69 = vld [vmem:[%s0 + $0x1b8] sm:$0xff]
  %v70 = vld [vmem:[%s0 + $0x1c0] sm:$0xff]
  %v71 = vld [vmem:[%s0 + $0x1c8] sm:$0xff]
  %v72 = vld [vmem:[%s0 + $0x1d0] sm:$0xff]
  %v73 = vld [vmem:[%s0 + $0x1d8] sm:$0xff]
  %v74 = vld [vmem:[%s0 + $0x1e0] sm:$0xff]
  %v75 = vld [vmem:[%s0 + $0x1e8] sm:$0xff]
  %v76 = vld [vmem:[%s0 + $0x1f0] sm:$0xff]
  %v77 = vld [vmem:[%s0 + $0x1f8] sm:$0xff]
  %v78 = vld [vmem:[%s0 + $0x200] sm:$0xff]
  %v79 = vld [vmem:[%s0 + $0x208] sm:$0xff]
  %v80 = vld [vmem:[%s0 + $0x210] sm:$0xff]
  %v81 = vld [vmem:[%s0 + $0x218] sm:$0xff]
  %v82 = vld [vmem:[%s0 + $0x220] sm:$0xff]
  %v83 = vld [vmem:[%s0 + $0x228] sm:$0xff]
  %v84 = vld [vmem:[%s0 + $0x230] sm:$0xff]
  %v85 = vld [vmem:[%s0 + $0x238] sm:$0xff]
  %v86 = vld [vmem:[%s0 + $0x240] sm:$0xff]
  %v87 = vld [vmem:[%s0 + $0x248] sm:$0xff]
  %v88 = vld [vmem:[%s0 + $0x250] sm:$0xff]
  %v89 = vld [vmem:[%s0 + $0x258] sm:$0xff]
  %v90 = vld [vmem:[%s0 + $0x260] sm:$0xff]
  %v91 = vld [vmem:[%s0 + $0x268] sm:$0xff]
  %v92 = vld [vmem:[%s0 + $0x270] sm:$0xff]
  %v93 = vld [vmem:[%s0 + $0x278] sm:$0xff]
  %v94 = vld [vmem:[%s0 + $0x280] sm:$0xff]
  %v95 = vld [vmem:[%s0 + $0x288] sm:$0xff]
  %v96 = vld [vmem:[%s0 + $0x290] sm:$0xff]
  %v97 = vld [vmem:[%s0 + $0x298] sm:$0xff]
  %v98 = vld [vmem:[%s0 + $0x2a0] sm:$0xff]
  %v99 = vld [vmem:[%s0 + $0x2a8] sm:$0xff]
  %v100 = vld [vmem:[%s0 + $0x2b0] sm:$0xff]
  %v101 = vld [vmem:[%s0 + $0x2b8] sm:$0xff]
  %v102 = vld [vmem:[%s0 + $0x2c0] sm:$0xff]
  %v103 = vld [vmem:[%s0 + $0x2c8] sm:$0xff]
  %v104 = vld [vmem:[%s0 + $0x2d0] sm:$0xff]
  %v105 = vld [vmem:[%s0 + $0x2d8] sm:$0xff]
  %v106 = vld [vmem:[%s0 + $0x2e0] sm:$0xff]
  %v107 = vld [vmem:[%s0 + $0x2e8] sm:$0xff]
  %v108 = vld [vmem:[%s0 + $0x2f0] sm:$0xff]
  %v109 = vld [vmem:[%s0 + $0x2f8] sm:$0xff]
  %v110 = vld [vmem:[%s0 + $0x300] sm:$0xff]
  %v111 = vld [vmem:[%s0 + $0x308] sm:$0xff]
  %v112 = vld [vmem:[%s0 + $0x310] sm:$0xff]
  %v113 = vld [vmem:[%s0 + $0x318] sm:$0xff]
  %v114 = vld [vmem:[%s0 + $0x320] sm:$0xff]
  %v115 = vld [vmem:[%s0 + $0x328] sm:$0xff]
  %v116 = vld [vmem:[%s0 + $0x330] sm:$0xff]
  %v117 = vld [vmem:[%s0 + $0x338] sm:$0xff]
  %v118 = vld [vmem:[%s0 + $0x340] sm:$0xff]
  %v119 = vld [vmem:[%s0 + $0x348] sm:$0xff]
  %v120 = vld [vmem:[%s0 + $0x350] sm:$0xff]
  %v121 = vld [vmem:[%s0 + $0x358] sm:$0xff]
  %v122 = vld [vmem:[%s0 + $0x360] sm:$0xff]
  %v123 = vld [vmem:[%s0 + $0x368] sm:$0xff]
  %v124 = vld [vmem:[%s0 + $0x370] sm:$0xff]
  %v125 = vld [vmem:[%s0 + $0x378] sm:$0xff]
  %v126 = vld [vmem:[%s0 + $0x380] sm:$0xff]
  %v127 = vld [vmem:[%s0 + $0x388] sm:$0xff]
  %v128 = vld [vmem:[%s0 + $0x390] sm:$0xff]
  %v129 = vld [vmem:[%s0 + $0x398] sm:$0xff]
  %v130 = vld [vmem:[%s0 + $0x3a0] sm:$0xff]
  %v131 = vld [vmem:[%s0 + $0x3a8] sm:$0xff]
  %v132 = vld [vmem:[%s0 + $0x3b0] sm:$0xff]
  %v133 = vld [vmem:[%s0 + $0x3b8] sm:$0xff]
  %v134 = vld [vmem:[%s0 + $0x3c0] sm:$0xff]
  %v135 = vld [vmem:[%s0 + $0x3c8] sm:$0xff]
  %v136 = vld [vmem:[%s0 + $0x3d0] sm:$0xff]
  %v137 = vld [vmem:[%s0 + $0x3d8] sm:$0xff]
  %v138 = vld [vmem:[%s0 + $0x3e0] sm:$0xff]
  %v139 = vld [vmem:[%s0 + $0x3e8] sm:$0xff]
  %v140 = vld [vmem:[%s0 + $0x3f0] sm:$0xff]
  %v141 = vld [vmem:[%s0 + $0x3f8] sm:$0xff]
  %v142 = vld [vmem:[%s1] sm:$0xff]
  %v143 = vld [vmem:[%s1 + $0x8] sm:$0xff]
  %v144 = vld [vmem:[%s1 + $0x10] sm:$0xff]
  %v145 = vld [vmem:[%s1 + $0x18] sm:$0xff]
  %v146 = vld [vmem:[%s1 + $0x20] sm:$0xff]
  %v147 = vld [vmem:[%s1 + $0x28] sm:$0xff]
  %v148 = vld [vmem:[%s1 + $0x30] sm:$0xff]
  %v149 = vld [vmem:[%s1 + $0x38] sm:$0xff]
  %v150 = vld [vmem:[%s1 + $0x40] sm:$0xff]
  %v151 = vld [vmem:[%s1 + $0x48] sm:$0xff]
  %v152 = vld [vmem:[%s1 + $0x50] sm:$0xff]
  %v153 = vld [vmem:[%s1 + $0x58] sm:$0xff]
  %v154 = vld [vmem:[%s1 + $0x60] sm:$0xff]
  %v155 = vld [vmem:[%s1 + $0x68] sm:$0xff]
  %v156 = vld [vmem:[%s1 + $0x70] sm:$0xff]
  %v157 = vld [vmem:[%s1 + $0x78] sm:$0xff]
  %v158 = vld [vmem:[%s1 + $0x80] sm:$0xff]
  %v159 = vld [vmem:[%s1 + $0x88] sm:$0xff]
  %v160 = vld [vmem:[%s2] sm:$0x1]
  %v162 = vlaneseq
  %v163 = vshrl.u32 %v162, 7
  %v164 = vsub.s32 0, %v163
  %v165 = vrot.slane %v160, %v164
  %vm167 = vcmask 130048
  %v169 = vsel %vm167, %v15, 0
  %v172 = vsel %vm167, %v17, 0
  %v175 = vsel %vm167, %v19, 0
  %v178 = vsel %vm167, %v21, 0
  %v181 = vsel %vm167, %v23, 0
  %v184 = vsel %vm167, %v25, 0
  %v187 = vsel %vm167, %v27, 0
  %v190 = vsel %vm167, %v29, 0
  %v193 = vsel %vm167, %v31, 0
  %v196 = vsel %vm167, %v33, 0
  %v199 = vsel %vm167, %v35, 0
  %v202 = vsel %vm167, %v37, 0
  %v205 = vsel %vm167, %v39, 0
  %v208 = vsel %vm167, %v41, 0
  %v211 = vsel %vm167, %v43, 0
  %v214 = vsel %vm167, %v45, 0
  %v217 = vsel %vm167, %v47, 0
  %v220 = vsel %vm167, %v49, 0
  %v223 = vsel %vm167, %v51, 0
  %v226 = vsel %vm167, %v53, 0
  %v229 = vsel %vm167, %v55, 0
  %v232 = vsel %vm167, %v57, 0
  %v235 = vsel %vm167, %v59, 0
  %v238 = vsel %vm167, %v61, 0
  %v241 = vsel %vm167, %v63, 0
  %v244 = vsel %vm167, %v65, 0
  %v247 = vsel %vm167, %v67, 0
  %v250 = vsel %vm167, %v69, 0
  %v253 = vsel %vm167, %v71, 0
  %v256 = vsel %vm167, %v73, 0
  %v259 = vsel %vm167, %v75, 0
  %v262 = vsel %vm167, %v77, 0
  %v265 = vsel %vm167, %v79, 0
  %v268 = vsel %vm167, %v81, 0
  %v271 = vsel %vm167, %v83, 0
  %v274 = vsel %vm167, %v85, 0
  %v277 = vsel %vm167, %v87, 0
  %v280 = vsel %vm167, %v89, 0
  %v283 = vsel %vm167, %v91, 0
  %v286 = vsel %vm167, %v93, 0
  %v289 = vsel %vm167, %v95, 0
  %v292 = vsel %vm167, %v97, 0
  %v295 = vsel %vm167, %v99, 0
  %v298 = vsel %vm167, %v101, 0
  %v301 = vsel %vm167, %v103, 0
  %v304 = vsel %vm167, %v105, 0
  %v307 = vsel %vm167, %v107, 0
  %v310 = vsel %vm167, %v109, 0
  %v313 = vsel %vm167, %v111, 0
  %v316 = vsel %vm167, %v113, 0
  %v319 = vsel %vm167, %v115, 0
  %v322 = vsel %vm167, %v117, 0
  %v325 = vsel %vm167, %v119, 0
  %v328 = vsel %vm167, %v121, 0
  %v331 = vsel %vm167, %v123, 0
  %v334 = vsel %vm167, %v125, 0
  %v337 = vsel %vm167, %v127, 0
  %v340 = vsel %vm167, %v129, 0
  %v343 = vsel %vm167, %v131, 0
  %v346 = vsel %vm167, %v133, 0
  %v349 = vsel %vm167, %v135, 0
  %v352 = vsel %vm167, %v137, 0
  %v355 = vsel %vm167, %v139, 0
  %v358 = vsel %vm167, %v141, 0
  %360 = vmatprep.subr.mxu0 0.0
  %361 = vmatpush1.msra.mxu0 %v142
  %362 = vmatprep.subr.mxu0 0.0
  %363 = vmatpush1.msra.mxu0 %v143
  %364 = vmatprep.subr.mxu0 0.0
  %365 = vmatpush1.msra.mxu0 %v144
  %366 = vmatprep.subr.mxu0 0.0
  %367 = vmatpush1.msra.mxu0 %v145
  %368 = vmatprep.subr.mxu0 0.0
  %369 = vmatpush1.msra.mxu0 %v146
  %370 = vmatprep.subr.mxu0 0.0
  %371 = vmatpush1.msra.mxu0 %v147
  %372 = vmatprep.subr.mxu0 0.0
  %373 = vmatpush1.msra.mxu0 %v148
  %374 = vmatprep.subr.mxu0 0.0
  %375 = vmatpush1.msra.mxu0 %v149
  %376 = vmatprep.subr.mxu0 0.0
  %377 = vmatpush1.msra.mxu0 %v150
  %378 = vmatprep.subr.mxu0 0.0
  %379 = vmatpush1.msra.mxu0 %v151
  %380 = vmatprep.subr.mxu0 0.0
  %381 = vmatpush1.msra.mxu0 %v152
  %382 = vmatprep.subr.mxu0 0.0
  %383 = vmatpush1.msra.mxu0 %v153
  %384 = vmatprep.subr.mxu0 0.0
  %385 = vmatpush1.msra.mxu0 %v154
  %386 = vmatprep.subr.mxu0 0.0
  %387 = vmatpush1.msra.mxu0 %v155
  %388 = vmatprep.subr.mxu0 0.0
  %389 = vmatpush1.msra.mxu0 %v156
  %390 = vmatprep.subr.mxu0 0.0
  %391 = vmatpush1.msra.mxu0 %v157
  %392 = vmatprep.subr.mxu0 0.0
  %393 = vmatpush1.msra.mxu0 %v158
  %394 = vmatprep.subr.mxu0 0.0
  %395 = vmatpush1.msra.mxu0 %v159
  %396 = vmatprep.subr.mxu0 0.0
  %397 = vmatpush1.msra.mxu0 0.0
  %398 = vmatprep.subr.mxu0 0.0
  %399 = vmatpush1.msra.mxu0 0.0
  %400 = vmatprep.subr.mxu0 0.0
  %401 = vmatpush1.msra.mxu0 0.0
  %402 = vmatprep.subr.mxu0 0.0
  %403 = vmatpush1.msra.mxu0 0.0
  %404 = vmatprep.subr.mxu0 0.0
  %405 = vmatpush1.msra.mxu0 0.0
  %406 = vmatprep.subr.mxu0 0.0
  %407 = vmatpush1.msra.mxu0 0.0
  %408 = vmatprep.subr.mxu0 0.0
  %409 = vmatpush1.msra.mxu0 0.0
  %410 = vmatprep.subr.mxu0 0.0
  %411 = vmatpush1.msra.mxu0 0.0
  %412 = vmatprep.subr.mxu0 0.0
  %413 = vmatpush1.msra.mxu0 0.0
  %414 = vmatprep.subr.mxu0 0.0
  %415 = vmatpush1.msra.mxu0 0.0
  %416 = vmatprep.subr.mxu0 0.0
  %417 = vmatpush1.msra.mxu0 0.0
  %418 = vmatprep.subr.mxu0 0.0
  %419 = vmatpush1.msra.mxu0 0.0
  %420 = vmatprep.subr.mxu0 0.0
  %421 = vmatpush1.msra.mxu0 0.0
  %422 = vmatprep.subr.mxu0 0.0
  %423 = vmatpush1.msra.mxu0 0.0
  %424 = vmatprep.mubr.f32.mxu0 %v169
  %425 = vmatmul.mubr.f32.gmra.mrb[0].mxu0 %v14
  %v426 = vpop.f32.mrb[0].mxu0
  %v427 = vadd.f32 %v165, %v426
  %v428 = vpop.f32.mrb[0].mxu0
  %429 = vmatprep.mubr.f32.mxu0 %v172
  %430 = vmatmul.mubr.f32.gmra.mrb[0].mxu0 %v16
  %v431 = vpop.f32.mrb[0].mxu0
  %v432 = vadd.f32 %v165, %v431
  %v433 = vpop.f32.mrb[0].mxu0
  %434 = vmatprep.mubr.f32.mxu0 %v175
  %435 = vmatmul.mubr.f32.gmra.mrb[0].mxu0 %v18
  %v436 = vpop.f32.mrb[0].mxu0
  %v437 = vadd.f32 %v165, %v436
  %v438 = vpop.f32.mrb[0].mxu0
  %439 = vmatprep.mubr.f32.mxu0 %v178
  %440 = vmatmul.mubr.f32.gmra.mrb[0].mxu0 %v20
  %v441 = vpop.f32.mrb[0].mxu0
  %v442 = vadd.f32 %v165, %v441
  %v443 = vpop.f32.mrb[0].mxu0
  %444 = vmatprep.mubr.f32.mxu0 %v181
  %445 = vmatmul.mubr.f32.gmra.mrb[0].mxu0 %v22
  %v446 = vpop.f32.mrb[0].mxu0
  %v447 = vadd.f32 %v165, %v446
  %v448 = vpop.f32.mrb[0].mxu0
  %449 = vmatprep.mubr.f32.mxu0 %v184
  %450 = vmatmul.mubr.f32.gmra.mrb[0].mxu0 %v24
  %v451 = vpop.f32.mrb[0].mxu0
  %v452 = vadd.f32 %v165, %v451
  %v453 = vpop.f32.mrb[0].mxu0
  %454 = vmatprep.mubr.f32.mxu0 %v187
  %455 = vmatmul.mubr.f32.gmra.mrb[0].mxu0 %v26
  %v456 = vpop.f32.mrb[0].mxu0
  %v457 = vadd.f32 %v165, %v456
  %v458 = vpop.f32.mrb[0].mxu0
  %459 = vmatprep.mubr.f32.mxu0 %v190
  %460 = vmatmul.mubr.f32.gmra.mrb[0].mxu0 %v28
  %v461 = vpop.f32.mrb[0].mxu0
  %v462 = vadd.f32 %v165, %v461
  %v463 = vpop.f32.mrb[0].mxu0
  %464 = vmatprep.mubr.f32.mxu0 %v193
  %465 = vmatmul.mubr.f32.gmra.mrb[0].mxu0 %v30
  %v466 = vpop.f32.mrb[0].mxu0
  %v467 = vadd.f32 %v165, %v466
  %v468 = vpop.f32.mrb[0].mxu0
  %469 = vmatprep.mubr.f32.mxu0 %v196
  %470 = vmatmul.mubr.f32.gmra.mrb[0].mxu0 %v32
  %v471 = vpop.f32.mrb[0].mxu0
  %v472 = vadd.f32 %v165, %v471
  %v473 = vpop.f32.mrb[0].mxu0
  %474 = vmatprep.mubr.f32.mxu0 %v199
  %475 = vmatmul.mubr.f32.gmra.mrb[0].mxu0 %v34
  %v476 = vpop.f32.mrb[0].mxu0
  %v477 = vadd.f32 %v165, %v476
  %v478 = vpop.f32.mrb[0].mxu0
  %479 = vmatprep.mubr.f32.mxu0 %v202
  %480 = vmatmul.mubr.f32.gmra.mrb[0].mxu0 %v36
  %v481 = vpop.f32.mrb[0].mxu0
  %v482 = vadd.f32 %v165, %v481
  %v483 = vpop.f32.mrb[0].mxu0
  %484 = vmatprep.mubr.f32.mxu0 %v205
  %485 = vmatmul.mubr.f32.gmra.mrb[0].mxu0 %v38
  %v486 = vpop.f32.mrb[0].mxu0
  %v487 = vadd.f32 %v165, %v486
  %v488 = vpop.f32.mrb[0].mxu0
  %489 = vmatprep.mubr.f32.mxu0 %v208
  %490 = vmatmul.mubr.f32.gmra.mrb[0].mxu0 %v40
  %v491 = vpop.f32.mrb[0].mxu0
  %v492 = vadd.f32 %v165, %v491
  %v493 = vpop.f32.mrb[0].mxu0
  %494 = vmatprep.mubr.f32.mxu0 %v211
  %495 = vmatmul.mubr.f32.gmra.mrb[0].mxu0 %v42
  %v496 = vpop.f32.mrb[0].mxu0
  %v497 = vadd.f32 %v165, %v496
  %v498 = vpop.f32.mrb[0].mxu0
  %499 = vmatprep.mubr.f32.mxu0 %v214
  %500 = vmatmul.mubr.f32.gmra.mrb[0].mxu0 %v44
  %v501 = vpop.f32.mrb[0].mxu0
  %v502 = vadd.f32 %v165, %v501
  %v503 = vpop.f32.mrb[0].mxu0
  %504 = vmatprep.mubr.f32.mxu0 %v217
  %505 = vmatmul.mubr.f32.gmra.mrb[0].mxu0 %v46
  %v506 = vpop.f32.mrb[0].mxu0
  %v507 = vadd.f32 %v165, %v506
  %v508 = vpop.f32.mrb[0].mxu0
  %509 = vmatprep.mubr.f32.mxu0 %v220
  %510 = vmatmul.mubr.f32.gmra.mrb[0].mxu0 %v48
  %v511 = vpop.f32.mrb[0].mxu0
  %v512 = vadd.f32 %v165, %v511
  %v513 = vpop.f32.mrb[0].mxu0
  %514 = vmatprep.mubr.f32.mxu0 %v223
  %515 = vmatmul.mubr.f32.gmra.mrb[0].mxu0 %v50
  %v516 = vpop.f32.mrb[0].mxu0
  %v517 = vadd.f32 %v165, %v516
  %v518 = vpop.f32.mrb[0].mxu0
  %519 = vmatprep.mubr.f32.mxu0 %v226
  %520 = vmatmul.mubr.f32.gmra.mrb[0].mxu0 %v52
  %v521 = vpop.f32.mrb[0].mxu0
  %v522 = vadd.f32 %v165, %v521
  %v523 = vpop.f32.mrb[0].mxu0
  %524 = vmatprep.mubr.f32.mxu0 %v229
  %525 = vmatmul.mubr.f32.gmra.mrb[0].mxu0 %v54
  %v526 = vpop.f32.mrb[0].mxu0
  %v527 = vadd.f32 %v165, %v526
  %v528 = vpop.f32.mrb[0].mxu0
  %529 = vmatprep.mubr.f32.mxu0 %v232
  %530 = vmatmul.mubr.f32.gmra.mrb[0].mxu0 %v56
  %v531 = vpop.f32.mrb[0].mxu0
  %v532 = vadd.f32 %v165, %v531
  %v533 = vpop.f32.mrb[0].mxu0
  %534 = vmatprep.mubr.f32.mxu0 %v235
  %535 = vmatmul.mubr.f32.gmra.mrb[0].mxu0 %v58
  %v536 = vpop.f32.mrb[0].mxu0
  %v537 = vadd.f32 %v165, %v536
  %v538 = vpop.f32.mrb[0].mxu0
  %539 = vmatprep.mubr.f32.mxu0 %v238
  %540 = vmatmul.mubr.f32.gmra.mrb[0].mxu0 %v60
  %v541 = vpop.f32.mrb[0].mxu0
  %v542 = vadd.f32 %v165, %v541
  %v543 = vpop.f32.mrb[0].mxu0
  %544 = vmatprep.mubr.f32.mxu0 %v241
  %545 = vmatmul.mubr.f32.gmra.mrb[0].mxu0 %v62
  %v546 = vpop.f32.mrb[0].mxu0
  %v547 = vadd.f32 %v165, %v546
  %v548 = vpop.f32.mrb[0].mxu0
  %549 = vmatprep.mubr.f32.mxu0 %v244
  %550 = vmatmul.mubr.f32.gmra.mrb[0].mxu0 %v64
  %v551 = vpop.f32.mrb[0].mxu0
  %v552 = vadd.f32 %v165, %v551
  %v553 = vpop.f32.mrb[0].mxu0
  %554 = vmatprep.mubr.f32.mxu0 %v247
  %555 = vmatmul.mubr.f32.gmra.mrb[0].mxu0 %v66
  %v556 = vpop.f32.mrb[0].mxu0
  %v557 = vadd.f32 %v165, %v556
  %v558 = vpop.f32.mrb[0].mxu0
  %559 = vmatprep.mubr.f32.mxu0 %v250
  %560 = vmatmul.mubr.f32.gmra.mrb[0].mxu0 %v68
  %v561 = vpop.f32.mrb[0].mxu0
  %v562 = vadd.f32 %v165, %v561
  %v563 = vpop.f32.mrb[0].mxu0
  %564 = vmatprep.mubr.f32.mxu0 %v253
  %565 = vmatmul.mubr.f32.gmra.mrb[0].mxu0 %v70
  %v566 = vpop.f32.mrb[0].mxu0
  %v567 = vadd.f32 %v165, %v566
  %v568 = vpop.f32.mrb[0].mxu0
  %569 = vmatprep.mubr.f32.mxu0 %v256
  %570 = vmatmul.mubr.f32.gmra.mrb[0].mxu0 %v72
  %v571 = vpop.f32.mrb[0].mxu0
  %v572 = vadd.f32 %v165, %v571
  %v573 = vpop.f32.mrb[0].mxu0
  %574 = vmatprep.mubr.f32.mxu0 %v259
  %575 = vmatmul.mubr.f32.gmra.mrb[0].mxu0 %v74
  %v576 = vpop.f32.mrb[0].mxu0
  %v577 = vadd.f32 %v165, %v576
  %v578 = vpop.f32.mrb[0].mxu0
  %579 = vmatprep.mubr.f32.mxu0 %v262
  %580 = vmatmul.mubr.f32.gmra.mrb[0].mxu0 %v76
  %v581 = vpop.f32.mrb[0].mxu0
  %v582 = vadd.f32 %v165, %v581
  %v583 = vpop.f32.mrb[0].mxu0
  %584 = vmatprep.mubr.f32.mxu0 %v265
  %585 = vmatmul.mubr.f32.gmra.mrb[0].mxu0 %v78
  %v586 = vpop.f32.mrb[0].mxu0
  %v587 = vadd.f32 %v165, %v586
  %v588 = vpop.f32.mrb[0].mxu0
  %589 = vmatprep.mubr.f32.mxu0 %v268
  %590 = vmatmul.mubr.f32.gmra.mrb[0].mxu0 %v80
  %v591 = vpop.f32.mrb[0].mxu0
  %v592 = vadd.f32 %v165, %v591
  %v593 = vpop.f32.mrb[0].mxu0
  %594 = vmatprep.mubr.f32.mxu0 %v271
  %595 = vmatmul.mubr.f32.gmra.mrb[0].mxu0 %v82
  %v596 = vpop.f32.mrb[0].mxu0
  %v597 = vadd.f32 %v165, %v596
  %v598 = vpop.f32.mrb[0].mxu0
  %599 = vmatprep.mubr.f32.mxu0 %v274
  %600 = vmatmul.mubr.f32.gmra.mrb[0].mxu0 %v84
  %v601 = vpop.f32.mrb[0].mxu0
  %v602 = vadd.f32 %v165, %v601
  %v603 = vpop.f32.mrb[0].mxu0
  %604 = vmatprep.mubr.f32.mxu0 %v277
  %605 = vmatmul.mubr.f32.gmra.mrb[0].mxu0 %v86
  %v606 = vpop.f32.mrb[0].mxu0
  %v607 = vadd.f32 %v165, %v606
  %v608 = vpop.f32.mrb[0].mxu0
  %609 = vmatprep.mubr.f32.mxu0 %v280
  %610 = vmatmul.mubr.f32.gmra.mrb[0].mxu0 %v88
  %v611 = vpop.f32.mrb[0].mxu0
  %v612 = vadd.f32 %v165, %v611
  %v613 = vpop.f32.mrb[0].mxu0
  %614 = vmatprep.mubr.f32.mxu0 %v283
  %615 = vmatmul.mubr.f32.gmra.mrb[0].mxu0 %v90
  %v616 = vpop.f32.mrb[0].mxu0
  %v617 = vadd.f32 %v165, %v616
  %v618 = vpop.f32.mrb[0].mxu0
  %619 = vmatprep.mubr.f32.mxu0 %v286
  %620 = vmatmul.mubr.f32.gmra.mrb[0].mxu0 %v92
  %v621 = vpop.f32.mrb[0].mxu0
  %v622 = vadd.f32 %v165, %v621
  %v623 = vpop.f32.mrb[0].mxu0
  %624 = vmatprep.mubr.f32.mxu0 %v289
  %625 = vmatmul.mubr.f32.gmra.mrb[0].mxu0 %v94
  %v626 = vpop.f32.mrb[0].mxu0
  %v627 = vadd.f32 %v165, %v626
  %v628 = vpop.f32.mrb[0].mxu0
  %629 = vmatprep.mubr.f32.mxu0 %v292
  %630 = vmatmul.mubr.f32.gmra.mrb[0].mxu0 %v96
  %v631 = vpop.f32.mrb[0].mxu0
  %v632 = vadd.f32 %v165, %v631
  %v633 = vpop.f32.mrb[0].mxu0
  %634 = vmatprep.mubr.f32.mxu0 %v295
  %635 = vmatmul.mubr.f32.gmra.mrb[0].mxu0 %v98
  %v636 = vpop.f32.mrb[0].mxu0
  %v637 = vadd.f32 %v165, %v636
  %v638 = vpop.f32.mrb[0].mxu0
  %639 = vmatprep.mubr.f32.mxu0 %v298
  %640 = vmatmul.mubr.f32.gmra.mrb[0].mxu0 %v100
  %v641 = vpop.f32.mrb[0].mxu0
  %v642 = vadd.f32 %v165, %v641
  %v643 = vpop.f32.mrb[0].mxu0
  %644 = vmatprep.mubr.f32.mxu0 %v301
  %645 = vmatmul.mubr.f32.gmra.mrb[0].mxu0 %v102
  %v646 = vpop.f32.mrb[0].mxu0
  %v647 = vadd.f32 %v165, %v646
  %v648 = vpop.f32.mrb[0].mxu0
  %649 = vmatprep.mubr.f32.mxu0 %v304
  %650 = vmatmul.mubr.f32.gmra.mrb[0].mxu0 %v104
  %v651 = vpop.f32.mrb[0].mxu0
  %v652 = vadd.f32 %v165, %v651
  %v653 = vpop.f32.mrb[0].mxu0
  %654 = vmatprep.mubr.f32.mxu0 %v307
  %655 = vmatmul.mubr.f32.gmra.mrb[0].mxu0 %v106
  %v656 = vpop.f32.mrb[0].mxu0
  %v657 = vadd.f32 %v165, %v656
  %v658 = vpop.f32.mrb[0].mxu0
  %659 = vmatprep.mubr.f32.mxu0 %v310
  %660 = vmatmul.mubr.f32.gmra.mrb[0].mxu0 %v108
  %v661 = vpop.f32.mrb[0].mxu0
  %v662 = vadd.f32 %v165, %v661
  %v663 = vpop.f32.mrb[0].mxu0
  %664 = vmatprep.mubr.f32.mxu0 %v313
  %665 = vmatmul.mubr.f32.gmra.mrb[0].mxu0 %v110
  %v666 = vpop.f32.mrb[0].mxu0
  %v667 = vadd.f32 %v165, %v666
  %v668 = vpop.f32.mrb[0].mxu0
  %669 = vmatprep.mubr.f32.mxu0 %v316
  %670 = vmatmul.mubr.f32.gmra.mrb[0].mxu0 %v112
  %v671 = vpop.f32.mrb[0].mxu0
  %v672 = vadd.f32 %v165, %v671
  %v673 = vpop.f32.mrb[0].mxu0
  %674 = vmatprep.mubr.f32.mxu0 %v319
  %675 = vmatmul.mubr.f32.gmra.mrb[0].mxu0 %v114
  %v676 = vpop.f32.mrb[0].mxu0
  %v677 = vadd.f32 %v165, %v676
  %v678 = vpop.f32.mrb[0].mxu0
  %679 = vmatprep.mubr.f32.mxu0 %v322
  %680 = vmatmul.mubr.f32.gmra.mrb[0].mxu0 %v116
  %v681 = vpop.f32.mrb[0].mxu0
  %v682 = vadd.f32 %v165, %v681
  %v683 = vpop.f32.mrb[0].mxu0
  %684 = vmatprep.mubr.f32.mxu0 %v325
  %685 = vmatmul.mubr.f32.gmra.mrb[0].mxu0 %v118
  %v686 = vpop.f32.mrb[0].mxu0
  %v687 = vadd.f32 %v165, %v686
  %v688 = vpop.f32.mrb[0].mxu0
  %689 = vmatprep.mubr.f32.mxu0 %v328
  %690 = vmatmul.mubr.f32.gmra.mrb[0].mxu0 %v120
  %v691 = vpop.f32.mrb[0].mxu0
  %v692 = vadd.f32 %v165, %v691
  %v693 = vpop.f32.mrb[0].mxu0
  %694 = vmatprep.mubr.f32.mxu0 %v331
  %695 = vmatmul.mubr.f32.gmra.mrb[0].mxu0 %v122
  %v696 = vpop.f32.mrb[0].mxu0
  %v697 = vadd.f32 %v165, %v696
  %v698 = vpop.f32.mrb[0].mxu0
  %699 = vmatprep.mubr.f32.mxu0 %v334
  %700 = vmatmul.mubr.f32.gmra.mrb[0].mxu0 %v124
  %v701 = vpop.f32.mrb[0].mxu0
  %v702 = vadd.f32 %v165, %v701
  %v703 = vpop.f32.mrb[0].mxu0
  %704 = vmatprep.mubr.f32.mxu0 %v337
  %705 = vmatmul.mubr.f32.gmra.mrb[0].mxu0 %v126
  %v706 = vpop.f32.mrb[0].mxu0
  %v707 = vadd.f32 %v165, %v706
  %v708 = vpop.f32.mrb[0].mxu0
  %709 = vmatprep.mubr.f32.mxu0 %v340
  %710 = vmatmul.mubr.f32.gmra.mrb[0].mxu0 %v128
  %v711 = vpop.f32.mrb[0].mxu0
  %v712 = vadd.f32 %v165, %v711
  %v713 = vpop.f32.mrb[0].mxu0
  %714 = vmatprep.mubr.f32.mxu0 %v343
  %715 = vmatmul.mubr.f32.gmra.mrb[0].mxu0 %v130
  %v716 = vpop.f32.mrb[0].mxu0
  %v717 = vadd.f32 %v165, %v716
  %v718 = vpop.f32.mrb[0].mxu0
  %719 = vmatprep.mubr.f32.mxu0 %v346
  %720 = vmatmul.mubr.f32.gmra.mrb[0].mxu0 %v132
  %v721 = vpop.f32.mrb[0].mxu0
  %v722 = vadd.f32 %v165, %v721
  %v723 = vpop.f32.mrb[0].mxu0
  %724 = vmatprep.mubr.f32.mxu0 %v349
  %725 = vmatmul.mubr.f32.gmra.mrb[0].mxu0 %v134
  %v726 = vpop.f32.mrb[0].mxu0
  %v727 = vadd.f32 %v165, %v726
  %v728 = vpop.f32.mrb[0].mxu0
  %729 = vmatprep.mubr.f32.mxu0 %v352
  %730 = vmatmul.mubr.f32.gmra.mrb[0].mxu0 %v136
  %v731 = vpop.f32.mrb[0].mxu0
  %v732 = vadd.f32 %v165, %v731
  %v733 = vpop.f32.mrb[0].mxu0
  %734 = vmatprep.mubr.f32.mxu0 %v355
  %735 = vmatmul.mubr.f32.gmra.mrb[0].mxu0 %v138
  %v736 = vpop.f32.mrb[0].mxu0
  %v737 = vadd.f32 %v165, %v736
  %v738 = vpop.f32.mrb[0].mxu0
  %739 = vmatprep.mubr.f32.mxu0 %v358
  %740 = vmatmul.mubr.f32.gmra.mrb[0].mxu0 %v140
  %v741 = vpop.f32.mrb[0].mxu0
  %v742 = vadd.f32 %v165, %v741
  %v743 = vpop.f32.mrb[0].mxu0
  %744 = vdwg.mxu0
  %v745 = vlaneseq
  %v746 = vand.u32 %v745, 127
  %vm747 = vcmp.lt.s32.totalorder %v746, 8
  %v748 = vmax.f32 %v427, 0.0
  %v749 = vmax.f32 %v432, 0.0
  %v750 = vmax.f32 %v437, 0.0
  %v751 = vmax.f32 %v442, 0.0
  %v752 = vmax.f32 %v447, 0.0
  %v753 = vmax.f32 %v452, 0.0
  %v754 = vmax.f32 %v457, 0.0
  %v755 = vmax.f32 %v462, 0.0
  %v756 = vmax.f32 %v467, 0.0
  %v757 = vmax.f32 %v472, 0.0
  %v758 = vmax.f32 %v477, 0.0
  %v759 = vmax.f32 %v482, 0.0
  %v760 = vmax.f32 %v487, 0.0
  %v761 = vmax.f32 %v492, 0.0
  %v762 = vmax.f32 %v497, 0.0
  %v763 = vmax.f32 %v502, 0.0
  %v764 = vmax.f32 %v507, 0.0
  %v765 = vmax.f32 %v512, 0.0
  %v766 = vmax.f32 %v517, 0.0
  %v767 = vmax.f32 %v522, 0.0
  %v768 = vmax.f32 %v527, 0.0
  %v769 = vmax.f32 %v532, 0.0
  %v770 = vmax.f32 %v537, 0.0
  %v771 = vmax.f32 %v542, 0.0
  %v772 = vmax.f32 %v547, 0.0
  %v773 = vmax.f32 %v552, 0.0
  %v774 = vmax.f32 %v557, 0.0
  %v775 = vmax.f32 %v562, 0.0
  %v776 = vmax.f32 %v567, 0.0
  %v777 = vmax.f32 %v572, 0.0
  %v778 = vmax.f32 %v577, 0.0
  %v779 = vmax.f32 %v582, 0.0
  %v780 = vmax.f32 %v587, 0.0
  %v781 = vmax.f32 %v592, 0.0
  %v782 = vmax.f32 %v597, 0.0
  %v783 = vmax.f32 %v602, 0.0
  %v784 = vmax.f32 %v607, 0.0
  %v785 = vmax.f32 %v612, 0.0
  %v786 = vmax.f32 %v617, 0.0
  %v787 = vmax.f32 %v622, 0.0
  %v788 = vmax.f32 %v627, 0.0
  %v789 = vmax.f32 %v632, 0.0
  %v790 = vmax.f32 %v637, 0.0
  %v791 = vmax.f32 %v642, 0.0
  %v792 = vmax.f32 %v647, 0.0
  %v793 = vmax.f32 %v652, 0.0
  %v794 = vmax.f32 %v657, 0.0
  %v795 = vmax.f32 %v662, 0.0
  %v796 = vmax.f32 %v667, 0.0
  %v797 = vmax.f32 %v672, 0.0
  %v798 = vmax.f32 %v677, 0.0
  %v799 = vmax.f32 %v682, 0.0
  %v800 = vmax.f32 %v687, 0.0
  %v801 = vmax.f32 %v692, 0.0
  %v802 = vmax.f32 %v697, 0.0
  %v803 = vmax.f32 %v702, 0.0
  %v804 = vmax.f32 %v707, 0.0
  %v805 = vmax.f32 %v712, 0.0
  %v806 = vmax.f32 %v717, 0.0
  %v807 = vmax.f32 %v722, 0.0
  %v808 = vmax.f32 %v727, 0.0
  %v809 = vmax.f32 %v732, 0.0
  %v810 = vmax.f32 %v737, 0.0
  %v811 = vmax.f32 %v742, 0.0
  %v812 = vsel %vm747, %v748, %v427
  %v813 = vsel %vm747, %v749, %v432
  %v814 = vsel %vm747, %v750, %v437
  %v815 = vsel %vm747, %v751, %v442
  %v816 = vsel %vm747, %v752, %v447
  %v817 = vsel %vm747, %v753, %v452
  %v818 = vsel %vm747, %v754, %v457
  %v819 = vsel %vm747, %v755, %v462
  %v820 = vsel %vm747, %v756, %v467
  %v821 = vsel %vm747, %v757, %v472
  %v822 = vsel %vm747, %v758, %v477
  %v823 = vsel %vm747, %v759, %v482
  %v824 = vsel %vm747, %v760, %v487
  %v825 = vsel %vm747, %v761, %v492
  %v826 = vsel %vm747, %v762, %v497
  %v827 = vsel %vm747, %v763, %v502
  %v828 = vsel %vm747, %v764, %v507
  %v829 = vsel %vm747, %v765, %v512
  %v830 = vsel %vm747, %v766, %v517
  %v831 = vsel %vm747, %v767, %v522
  %v832 = vsel %vm747, %v768, %v527
  %v833 = vsel %vm747, %v769, %v532
  %v834 = vsel %vm747, %v770, %v537
  %v835 = vsel %vm747, %v771, %v542
  %v836 = vsel %vm747, %v772, %v547
  %v837 = vsel %vm747, %v773, %v552
  %v838 = vsel %vm747, %v774, %v557
  %v839 = vsel %vm747, %v775, %v562
  %v840 = vsel %vm747, %v776, %v567
  %v841 = vsel %vm747, %v777, %v572
  %v842 = vsel %vm747, %v778, %v577
  %v843 = vsel %vm747, %v779, %v582
  %v844 = vsel %vm747, %v780, %v587
  %v845 = vsel %vm747, %v781, %v592
  %v846 = vsel %vm747, %v782, %v597
  %v847 = vsel %vm747, %v783, %v602
  %v848 = vsel %vm747, %v784, %v607
  %v849 = vsel %vm747, %v785, %v612
  %v850 = vsel %vm747, %v786, %v617
  %v851 = vsel %vm747, %v787, %v622
  %v852 = vsel %vm747, %v788, %v627
  %v853 = vsel %vm747, %v789, %v632
  %v854 = vsel %vm747, %v790, %v637
  %v855 = vsel %vm747, %v791, %v642
  %v856 = vsel %vm747, %v792, %v647
  %v857 = vsel %vm747, %v793, %v652
  %v858 = vsel %vm747, %v794, %v657
  %v859 = vsel %vm747, %v795, %v662
  %v860 = vsel %vm747, %v796, %v667
  %v861 = vsel %vm747, %v797, %v672
  %v862 = vsel %vm747, %v798, %v677
  %v863 = vsel %vm747, %v799, %v682
  %v864 = vsel %vm747, %v800, %v687
  %v865 = vsel %vm747, %v801, %v692
  %v866 = vsel %vm747, %v802, %v697
  %v867 = vsel %vm747, %v803, %v702
  %v868 = vsel %vm747, %v804, %v707
  %v869 = vsel %vm747, %v805, %v712
  %v870 = vsel %vm747, %v806, %v717
  %v871 = vsel %vm747, %v807, %v722
  %v872 = vsel %vm747, %v808, %v727
  %v873 = vsel %vm747, %v809, %v732
  %v874 = vsel %vm747, %v810, %v737
  %v875 = vsel %vm747, %v811, %v742
  %v876 = vsel %vm167, %v812, 0.0
  %v877 = vsel %vm167, %v813, 0.0
  %v878 = vadd.f32 %v876, %v877
  %v879 = vsel %vm167, %v814, 0.0
  %v880 = vadd.f32 %v878, %v879
  %v881 = vsel %vm167, %v815, 0.0
  %v882 = vadd.f32 %v880, %v881
  %v883 = vsel %vm167, %v816, 0.0
  %v884 = vadd.f32 %v882, %v883
  %v885 = vsel %vm167, %v817, 0.0
  %v886 = vadd.f32 %v884, %v885
  %v887 = vsel %vm167, %v818, 0.0
  %v888 = vadd.f32 %v886, %v887
  %v889 = vsel %vm167, %v819, 0.0
  %v890 = vadd.f32 %v888, %v889
  %v891 = vsel %vm167, %v820, 0.0
  %v892 = vadd.f32 %v890, %v891
  %v893 = vsel %vm167, %v821, 0.0
  %v894 = vadd.f32 %v892, %v893
  %v895 = vsel %vm167, %v822, 0.0
  %v896 = vadd.f32 %v894, %v895
  %v897 = vsel %vm167, %v823, 0.0
  %v898 = vadd.f32 %v896, %v897
  %v899 = vsel %vm167, %v824, 0.0
  %v900 = vadd.f32 %v898, %v899
  %v901 = vsel %vm167, %v825, 0.0
  %v902 = vadd.f32 %v900, %v901
  %v903 = vsel %vm167, %v826, 0.0
  %v904 = vadd.f32 %v902, %v903
  %v905 = vsel %vm167, %v827, 0.0
  %v906 = vadd.f32 %v904, %v905
  %v907 = vsel %vm167, %v828, 0.0
  %v908 = vadd.f32 %v906, %v907
  %v909 = vsel %vm167, %v829, 0.0
  %v910 = vadd.f32 %v908, %v909
  %v911 = vsel %vm167, %v830, 0.0
  %v912 = vadd.f32 %v910, %v911
  %v913 = vsel %vm167, %v831, 0.0
  %v914 = vadd.f32 %v912, %v913
  %v915 = vsel %vm167, %v832, 0.0
  %v916 = vadd.f32 %v914, %v915
  %v917 = vsel %vm167, %v833, 0.0
  %v918 = vadd.f32 %v916, %v917
  %v919 = vsel %vm167, %v834, 0.0
  %v920 = vadd.f32 %v918, %v919
  %v921 = vsel %vm167, %v835, 0.0
  %v922 = vadd.f32 %v920, %v921
  %v923 = vsel %vm167, %v836, 0.0
  %v924 = vadd.f32 %v922, %v923
  %v925 = vsel %vm167, %v837, 0.0
  %v926 = vadd.f32 %v924, %v925
  %v927 = vsel %vm167, %v838, 0.0
  %v928 = vadd.f32 %v926, %v927
  %v929 = vsel %vm167, %v839, 0.0
  %v930 = vadd.f32 %v928, %v929
  %v931 = vsel %vm167, %v840, 0.0
  %v932 = vadd.f32 %v930, %v931
  %v933 = vsel %vm167, %v841, 0.0
  %v934 = vadd.f32 %v932, %v933
  %v935 = vsel %vm167, %v842, 0.0
  %v936 = vadd.f32 %v934, %v935
  %v937 = vsel %vm167, %v843, 0.0
  %v938 = vadd.f32 %v936, %v937
  %v939 = vsel %vm167, %v844, 0.0
  %v940 = vadd.f32 %v938, %v939
  %v941 = vsel %vm167, %v845, 0.0
  %v942 = vadd.f32 %v940, %v941
  %v943 = vsel %vm167, %v846, 0.0
  %v944 = vadd.f32 %v942, %v943
  %v945 = vsel %vm167, %v847, 0.0
  %v946 = vadd.f32 %v944, %v945
  %v947 = vsel %vm167, %v848, 0.0
  %v948 = vadd.f32 %v946, %v947
  %v949 = vsel %vm167, %v849, 0.0
  %v950 = vadd.f32 %v948, %v949
  %v951 = vsel %vm167, %v850, 0.0
  %v952 = vadd.f32 %v950, %v951
  %v953 = vsel %vm167, %v851, 0.0
  %v954 = vadd.f32 %v952, %v953
  %v955 = vsel %vm167, %v852, 0.0
  %v956 = vadd.f32 %v954, %v955
  %v957 = vsel %vm167, %v853, 0.0
  %v958 = vadd.f32 %v956, %v957
  %v959 = vsel %vm167, %v854, 0.0
  %v960 = vadd.f32 %v958, %v959
  %v961 = vsel %vm167, %v855, 0.0
  %v962 = vadd.f32 %v960, %v961
  %v963 = vsel %vm167, %v856, 0.0
  %v964 = vadd.f32 %v962, %v963
  %v965 = vsel %vm167, %v857, 0.0
  %v966 = vadd.f32 %v964, %v965
  %v967 = vsel %vm167, %v858, 0.0
  %v968 = vadd.f32 %v966, %v967
  %v969 = vsel %vm167, %v859, 0.0
  %v970 = vadd.f32 %v968, %v969
  %v971 = vsel %vm167, %v860, 0.0
  %v972 = vadd.f32 %v970, %v971
  %v973 = vsel %vm167, %v861, 0.0
  %v974 = vadd.f32 %v972, %v973
  %v975 = vsel %vm167, %v862, 0.0
  %v976 = vadd.f32 %v974, %v975
  %v977 = vsel %vm167, %v863, 0.0
  %v978 = vadd.f32 %v976, %v977
  %v979 = vsel %vm167, %v864, 0.0
  %v980 = vadd.f32 %v978, %v979
  %v981 = vsel %vm167, %v865, 0.0
  %v982 = vadd.f32 %v980, %v981
  %v983 = vsel %vm167, %v866, 0.0
  %v984 = vadd.f32 %v982, %v983
  %v985 = vsel %vm167, %v867, 0.0
  %v986 = vadd.f32 %v984, %v985
  %v987 = vsel %vm167, %v868, 0.0
  %v988 = vadd.f32 %v986, %v987
  %v989 = vsel %vm167, %v869, 0.0
  %v990 = vadd.f32 %v988, %v989
  %v991 = vsel %vm167, %v870, 0.0
  %v992 = vadd.f32 %v990, %v991
  %v993 = vsel %vm167, %v871, 0.0
  %v994 = vadd.f32 %v992, %v993
  %v995 = vsel %vm167, %v872, 0.0
  %v996 = vadd.f32 %v994, %v995
  %v997 = vsel %vm167, %v873, 0.0
  %v998 = vadd.f32 %v996, %v997
  %v999 = vsel %vm167, %v874, 0.0
  %v1000 = vadd.f32 %v998, %v999
  %v1001 = vsel %vm167, %v875, 0.0
  %v1002 = vadd.f32 %v1000, %v1001
  %v1003 = vrot.slane %v1002, 4
  %v1004 = vadd.f32 %v1002, %v1003
  %v1005 = vrot.slane %v1004, 2
  %v1006 = vadd.f32 %v1004, %v1005
  %v1007 = vrot.slane %v1006, 1
  %v1008 = vadd.f32 %v1006, %v1007
  %v1009 = vrcp.pop 512.0
  %v1010 = vmul.f32 %v1008, %v1009
  %v1011 = vsub.f32 %v812, %v1010
  %v1012 = vsub.f32 %v813, %v1010
  %v1013 = vsub.f32 %v814, %v1010
  %v1014 = vsub.f32 %v815, %v1010
  %v1015 = vsub.f32 %v816, %v1010
  %v1016 = vsub.f32 %v817, %v1010
  %v1017 = vsub.f32 %v818, %v1010
  %v1018 = vsub.f32 %v819, %v1010
  %v1019 = vsub.f32 %v820, %v1010
  %v1020 = vsub.f32 %v821, %v1010
  %v1021 = vsub.f32 %v822, %v1010
  %v1022 = vsub.f32 %v823, %v1010
  %v1023 = vsub.f32 %v824, %v1010
  %v1024 = vsub.f32 %v825, %v1010
  %v1025 = vsub.f32 %v826, %v1010
  %v1026 = vsub.f32 %v827, %v1010
  %v1027 = vsub.f32 %v828, %v1010
  %v1028 = vsub.f32 %v829, %v1010
  %v1029 = vsub.f32 %v830, %v1010
  %v1030 = vsub.f32 %v831, %v1010
  %v1031 = vsub.f32 %v832, %v1010
  %v1032 = vsub.f32 %v833, %v1010
  %v1033 = vsub.f32 %v834, %v1010
  %v1034 = vsub.f32 %v835, %v1010
  %v1035 = vsub.f32 %v836, %v1010
  %v1036 = vsub.f32 %v837, %v1010
  %v1037 = vsub.f32 %v838, %v1010
  %v1038 = vsub.f32 %v839, %v1010
  %v1039 = vsub.f32 %v840, %v1010
  %v1040 = vsub.f32 %v841, %v1010
  %v1041 = vsub.f32 %v842, %v1010
  %v1042 = vsub.f32 %v843, %v1010
  %v1043 = vsub.f32 %v844, %v1010
  %v1044 = vsub.f32 %v845, %v1010
  %v1045 = vsub.f32 %v846, %v1010
  %v1046 = vsub.f32 %v847, %v1010
  %v1047 = vsub.f32 %v848, %v1010
  %v1048 = vsub.f32 %v849, %v1010
  %v1049 = vsub.f32 %v850, %v1010
  %v1050 = vsub.f32 %v851, %v1010
  %v1051 = vsub.f32 %v852, %v1010
  %v1052 = vsub.f32 %v853, %v1010
  %v1053 = vsub.f32 %v854, %v1010
  %v1054 = vsub.f32 %v855, %v1010
  %v1055 = vsub.f32 %v856, %v1010
  %v1056 = vsub.f32 %v857, %v1010
  %v1057 = vsub.f32 %v858, %v1010
  %v1058 = vsub.f32 %v859, %v1010
  %v1059 = vsub.f32 %v860, %v1010
  %v1060 = vsub.f32 %v861, %v1010
  %v1061 = vsub.f32 %v862, %v1010
  %v1062 = vsub.f32 %v863, %v1010
  %v1063 = vsub.f32 %v864, %v1010
  %v1064 = vsub.f32 %v865, %v1010
  %v1065 = vsub.f32 %v866, %v1010
  %v1066 = vsub.f32 %v867, %v1010
  %v1067 = vsub.f32 %v868, %v1010
  %v1068 = vsub.f32 %v869, %v1010
  %v1069 = vsub.f32 %v870, %v1010
  %v1070 = vsub.f32 %v871, %v1010
  %v1071 = vsub.f32 %v872, %v1010
  %v1072 = vsub.f32 %v873, %v1010
  %v1073 = vsub.f32 %v874, %v1010
  %v1074 = vsub.f32 %v875, %v1010
  %v1075 = vmul.f32 %v1011, %v1011
  %v1076 = vmul.f32 %v1012, %v1012
  %v1077 = vmul.f32 %v1013, %v1013
  %v1078 = vmul.f32 %v1014, %v1014
  %v1079 = vmul.f32 %v1015, %v1015
  %v1080 = vmul.f32 %v1016, %v1016
  %v1081 = vmul.f32 %v1017, %v1017
  %v1082 = vmul.f32 %v1018, %v1018
  %v1083 = vmul.f32 %v1019, %v1019
  %v1084 = vmul.f32 %v1020, %v1020
  %v1085 = vmul.f32 %v1021, %v1021
  %v1086 = vmul.f32 %v1022, %v1022
  %v1087 = vmul.f32 %v1023, %v1023
  %v1088 = vmul.f32 %v1024, %v1024
  %v1089 = vmul.f32 %v1025, %v1025
  %v1090 = vmul.f32 %v1026, %v1026
  %v1091 = vmul.f32 %v1027, %v1027
  %v1092 = vmul.f32 %v1028, %v1028
  %v1093 = vmul.f32 %v1029, %v1029
  %v1094 = vmul.f32 %v1030, %v1030
  %v1095 = vmul.f32 %v1031, %v1031
  %v1096 = vmul.f32 %v1032, %v1032
  %v1097 = vmul.f32 %v1033, %v1033
  %v1098 = vmul.f32 %v1034, %v1034
  %v1099 = vmul.f32 %v1035, %v1035
  %v1100 = vmul.f32 %v1036, %v1036
  %v1101 = vmul.f32 %v1037, %v1037
  %v1102 = vmul.f32 %v1038, %v1038
  %v1103 = vmul.f32 %v1039, %v1039
  %v1104 = vmul.f32 %v1040, %v1040
  %v1105 = vmul.f32 %v1041, %v1041
  %v1106 = vmul.f32 %v1042, %v1042
  %v1107 = vmul.f32 %v1043, %v1043
  %v1108 = vmul.f32 %v1044, %v1044
  %v1109 = vmul.f32 %v1045, %v1045
  %v1110 = vmul.f32 %v1046, %v1046
  %v1111 = vmul.f32 %v1047, %v1047
  %v1112 = vmul.f32 %v1048, %v1048
  %v1113 = vmul.f32 %v1049, %v1049
  %v1114 = vmul.f32 %v1050, %v1050
  %v1115 = vmul.f32 %v1051, %v1051
  %v1116 = vmul.f32 %v1052, %v1052
  %v1117 = vmul.f32 %v1053, %v1053
  %v1118 = vmul.f32 %v1054, %v1054
  %v1119 = vmul.f32 %v1055, %v1055
  %v1120 = vmul.f32 %v1056, %v1056
  %v1121 = vmul.f32 %v1057, %v1057
  %v1122 = vmul.f32 %v1058, %v1058
  %v1123 = vmul.f32 %v1059, %v1059
  %v1124 = vmul.f32 %v1060, %v1060
  %v1125 = vmul.f32 %v1061, %v1061
  %v1126 = vmul.f32 %v1062, %v1062
  %v1127 = vmul.f32 %v1063, %v1063
  %v1128 = vmul.f32 %v1064, %v1064
  %v1129 = vmul.f32 %v1065, %v1065
  %v1130 = vmul.f32 %v1066, %v1066
  %v1131 = vmul.f32 %v1067, %v1067
  %v1132 = vmul.f32 %v1068, %v1068
  %v1133 = vmul.f32 %v1069, %v1069
  %v1134 = vmul.f32 %v1070, %v1070
  %v1135 = vmul.f32 %v1071, %v1071
  %v1136 = vmul.f32 %v1072, %v1072
  %v1137 = vmul.f32 %v1073, %v1073
  %v1138 = vmul.f32 %v1074, %v1074
  %v1139 = vsel %vm167, %v1075, 0.0
  %v1140 = vsel %vm167, %v1076, 0.0
  %v1141 = vadd.f32 %v1139, %v1140
  %v1142 = vsel %vm167, %v1077, 0.0
  %v1143 = vadd.f32 %v1141, %v1142
  %v1144 = vsel %vm167, %v1078, 0.0
  %v1145 = vadd.f32 %v1143, %v1144
  %v1146 = vsel %vm167, %v1079, 0.0
  %v1147 = vadd.f32 %v1145, %v1146
  %v1148 = vsel %vm167, %v1080, 0.0
  %v1149 = vadd.f32 %v1147, %v1148
  %v1150 = vsel %vm167, %v1081, 0.0
  %v1151 = vadd.f32 %v1149, %v1150
  %v1152 = vsel %vm167, %v1082, 0.0
  %v1153 = vadd.f32 %v1151, %v1152
  %v1154 = vsel %vm167, %v1083, 0.0
  %v1155 = vadd.f32 %v1153, %v1154
  %v1156 = vsel %vm167, %v1084, 0.0
  %v1157 = vadd.f32 %v1155, %v1156
  %v1158 = vsel %vm167, %v1085, 0.0
  %v1159 = vadd.f32 %v1157, %v1158
  %v1160 = vsel %vm167, %v1086, 0.0
  %v1161 = vadd.f32 %v1159, %v1160
  %v1162 = vsel %vm167, %v1087, 0.0
  %v1163 = vadd.f32 %v1161, %v1162
  %v1164 = vsel %vm167, %v1088, 0.0
  %v1165 = vadd.f32 %v1163, %v1164
  %v1166 = vsel %vm167, %v1089, 0.0
  %v1167 = vadd.f32 %v1165, %v1166
  %v1168 = vsel %vm167, %v1090, 0.0
  %v1169 = vadd.f32 %v1167, %v1168
  %v1170 = vsel %vm167, %v1091, 0.0
  %v1171 = vadd.f32 %v1169, %v1170
  %v1172 = vsel %vm167, %v1092, 0.0
  %v1173 = vadd.f32 %v1171, %v1172
  %v1174 = vsel %vm167, %v1093, 0.0
  %v1175 = vadd.f32 %v1173, %v1174
  %v1176 = vsel %vm167, %v1094, 0.0
  %v1177 = vadd.f32 %v1175, %v1176
  %v1178 = vsel %vm167, %v1095, 0.0
  %v1179 = vadd.f32 %v1177, %v1178
  %v1180 = vsel %vm167, %v1096, 0.0
  %v1181 = vadd.f32 %v1179, %v1180
  %v1182 = vsel %vm167, %v1097, 0.0
  %v1183 = vadd.f32 %v1181, %v1182
  %v1184 = vsel %vm167, %v1098, 0.0
  %v1185 = vadd.f32 %v1183, %v1184
  %v1186 = vsel %vm167, %v1099, 0.0
  %v1187 = vadd.f32 %v1185, %v1186
  %v1188 = vsel %vm167, %v1100, 0.0
  %v1189 = vadd.f32 %v1187, %v1188
  %v1190 = vsel %vm167, %v1101, 0.0
  %v1191 = vadd.f32 %v1189, %v1190
  %v1192 = vsel %vm167, %v1102, 0.0
  %v1193 = vadd.f32 %v1191, %v1192
  %v1194 = vsel %vm167, %v1103, 0.0
  %v1195 = vadd.f32 %v1193, %v1194
  %v1196 = vsel %vm167, %v1104, 0.0
  %v1197 = vadd.f32 %v1195, %v1196
  %v1198 = vsel %vm167, %v1105, 0.0
  %v1199 = vadd.f32 %v1197, %v1198
  %v1200 = vsel %vm167, %v1106, 0.0
  %v1201 = vadd.f32 %v1199, %v1200
  %v1202 = vsel %vm167, %v1107, 0.0
  %v1203 = vadd.f32 %v1201, %v1202
  %v1204 = vsel %vm167, %v1108, 0.0
  %v1205 = vadd.f32 %v1203, %v1204
  %v1206 = vsel %vm167, %v1109, 0.0
  %v1207 = vadd.f32 %v1205, %v1206
  %v1208 = vsel %vm167, %v1110, 0.0
  %v1209 = vadd.f32 %v1207, %v1208
  %v1210 = vsel %vm167, %v1111, 0.0
  %v1211 = vadd.f32 %v1209, %v1210
  %v1212 = vsel %vm167, %v1112, 0.0
  %v1213 = vadd.f32 %v1211, %v1212
  %v1214 = vsel %vm167, %v1113, 0.0
  %v1215 = vadd.f32 %v1213, %v1214
  %v1216 = vsel %vm167, %v1114, 0.0
  %v1217 = vadd.f32 %v1215, %v1216
  %v1218 = vsel %vm167, %v1115, 0.0
  %v1219 = vadd.f32 %v1217, %v1218
  %v1220 = vsel %vm167, %v1116, 0.0
  %v1221 = vadd.f32 %v1219, %v1220
  %v1222 = vsel %vm167, %v1117, 0.0
  %v1223 = vadd.f32 %v1221, %v1222
  %v1224 = vsel %vm167, %v1118, 0.0
  %v1225 = vadd.f32 %v1223, %v1224
  %v1226 = vsel %vm167, %v1119, 0.0
  %v1227 = vadd.f32 %v1225, %v1226
  %v1228 = vsel %vm167, %v1120, 0.0
  %v1229 = vadd.f32 %v1227, %v1228
  %v1230 = vsel %vm167, %v1121, 0.0
  %v1231 = vadd.f32 %v1229, %v1230
  %v1232 = vsel %vm167, %v1122, 0.0
  %v1233 = vadd.f32 %v1231, %v1232
  %v1234 = vsel %vm167, %v1123, 0.0
  %v1235 = vadd.f32 %v1233, %v1234
  %v1236 = vsel %vm167, %v1124, 0.0
  %v1237 = vadd.f32 %v1235, %v1236
  %v1238 = vsel %vm167, %v1125, 0.0
  %v1239 = vadd.f32 %v1237, %v1238
  %v1240 = vsel %vm167, %v1126, 0.0
  %v1241 = vadd.f32 %v1239, %v1240
  %v1242 = vsel %vm167, %v1127, 0.0
  %v1243 = vadd.f32 %v1241, %v1242
  %v1244 = vsel %vm167, %v1128, 0.0
  %v1245 = vadd.f32 %v1243, %v1244
  %v1246 = vsel %vm167, %v1129, 0.0
  %v1247 = vadd.f32 %v1245, %v1246
  %v1248 = vsel %vm167, %v1130, 0.0
  %v1249 = vadd.f32 %v1247, %v1248
  %v1250 = vsel %vm167, %v1131, 0.0
  %v1251 = vadd.f32 %v1249, %v1250
  %v1252 = vsel %vm167, %v1132, 0.0
  %v1253 = vadd.f32 %v1251, %v1252
  %v1254 = vsel %vm167, %v1133, 0.0
  %v1255 = vadd.f32 %v1253, %v1254
  %v1256 = vsel %vm167, %v1134, 0.0
  %v1257 = vadd.f32 %v1255, %v1256
  %v1258 = vsel %vm167, %v1135, 0.0
  %v1259 = vadd.f32 %v1257, %v1258
  %v1260 = vsel %vm167, %v1136, 0.0
  %v1261 = vadd.f32 %v1259, %v1260
  %v1262 = vsel %vm167, %v1137, 0.0
  %v1263 = vadd.f32 %v1261, %v1262
  %v1264 = vsel %vm167, %v1138, 0.0
  %v1265 = vadd.f32 %v1263, %v1264
  %v1266 = vrot.slane %v1265, 4
  %v1267 = vadd.f32 %v1265, %v1266
  %v1268 = vrot.slane %v1267, 2
  %v1269 = vadd.f32 %v1267, %v1268
  %v1270 = vrot.slane %v1269, 1
  %v1271 = vadd.f32 %v1269, %v1270
  %v1272 = vmul.f32 %v1271, %v1009
  %v1273 = vadd.f32 %v1272, 1e-05
  %v1274 = vrsqrt.pop %v1273
  %v1275 = vmul.f32 %v1011, %v1274
  %v1276 = vmul.f32 %v1012, %v1274
  %v1277 = vmul.f32 %v1013, %v1274
  %v1278 = vmul.f32 %v1014, %v1274
  %v1279 = vmul.f32 %v1015, %v1274
  %v1280 = vmul.f32 %v1016, %v1274
  %v1281 = vmul.f32 %v1017, %v1274
  %v1282 = vmul.f32 %v1018, %v1274
  %v1283 = vmul.f32 %v1019, %v1274
  %v1284 = vmul.f32 %v1020, %v1274
  %v1285 = vmul.f32 %v1021, %v1274
  %v1286 = vmul.f32 %v1022, %v1274
  %v1287 = vmul.f32 %v1023, %v1274
  %v1288 = vmul.f32 %v1024, %v1274
  %v1289 = vmul.f32 %v1025, %v1274
  %v1290 = vmul.f32 %v1026, %v1274
  %v1291 = vmul.f32 %v1027, %v1274
  %v1292 = vmul.f32 %v1028, %v1274
  %v1293 = vmul.f32 %v1029, %v1274
  %v1294 = vmul.f32 %v1030, %v1274
  %v1295 = vmul.f32 %v1031, %v1274
  %v1296 = vmul.f32 %v1032, %v1274
  %v1297 = vmul.f32 %v1033, %v1274
  %v1298 = vmul.f32 %v1034, %v1274
  %v1299 = vmul.f32 %v1035, %v1274
  %v1300 = vmul.f32 %v1036, %v1274
  %v1301 = vmul.f32 %v1037, %v1274
  %v1302 = vmul.f32 %v1038, %v1274
  %v1303 = vmul.f32 %v1039, %v1274
  %v1304 = vmul.f32 %v1040, %v1274
  %v1305 = vmul.f32 %v1041, %v1274
  %v1306 = vmul.f32 %v1042, %v1274
  %v1307 = vmul.f32 %v1043, %v1274
  %v1308 = vmul.f32 %v1044, %v1274
  %v1309 = vmul.f32 %v1045, %v1274
  %v1310 = vmul.f32 %v1046, %v1274
  %v1311 = vmul.f32 %v1047, %v1274
  %v1312 = vmul.f32 %v1048, %v1274
  %v1313 = vmul.f32 %v1049, %v1274
  %v1314 = vmul.f32 %v1050, %v1274
  %v1315 = vmul.f32 %v1051, %v1274
  %v1316 = vmul.f32 %v1052, %v1274
  %v1317 = vmul.f32 %v1053, %v1274
  %v1318 = vmul.f32 %v1054, %v1274
  %v1319 = vmul.f32 %v1055, %v1274
  %v1320 = vmul.f32 %v1056, %v1274
  %v1321 = vmul.f32 %v1057, %v1274
  %v1322 = vmul.f32 %v1058, %v1274
  %v1323 = vmul.f32 %v1059, %v1274
  %v1324 = vmul.f32 %v1060, %v1274
  %v1325 = vmul.f32 %v1061, %v1274
  %v1326 = vmul.f32 %v1062, %v1274
  %v1327 = vmul.f32 %v1063, %v1274
  %v1328 = vmul.f32 %v1064, %v1274
  %v1329 = vmul.f32 %v1065, %v1274
  %v1330 = vmul.f32 %v1066, %v1274
  %v1331 = vmul.f32 %v1067, %v1274
  %v1332 = vmul.f32 %v1068, %v1274
  %v1333 = vmul.f32 %v1069, %v1274
  %v1334 = vmul.f32 %v1070, %v1274
  %v1335 = vmul.f32 %v1071, %v1274
  %v1336 = vmul.f32 %v1072, %v1274
  %v1337 = vmul.f32 %v1073, %v1274
  %v1338 = vmul.f32 %v1074, %v1274
  %1339 = vst.msk [vmem:[%s3] sm:$0xff] %vm167, %v1275
  %1340 = vst.msk [vmem:[%s3 + $0x8] sm:$0xff] %vm167, %v1276
  %1341 = vst.msk [vmem:[%s3 + $0x10] sm:$0xff] %vm167, %v1277
  %1342 = vst.msk [vmem:[%s3 + $0x18] sm:$0xff] %vm167, %v1278
  %1343 = vst.msk [vmem:[%s3 + $0x20] sm:$0xff] %vm167, %v1279
  %1344 = vst.msk [vmem:[%s3 + $0x28] sm:$0xff] %vm167, %v1280
  %1345 = vst.msk [vmem:[%s3 + $0x30] sm:$0xff] %vm167, %v1281
  %1346 = vst.msk [vmem:[%s3 + $0x38] sm:$0xff] %vm167, %v1282
  %1347 = vst.msk [vmem:[%s3 + $0x40] sm:$0xff] %vm167, %v1283
  %1348 = vst.msk [vmem:[%s3 + $0x48] sm:$0xff] %vm167, %v1284
  %1349 = vst.msk [vmem:[%s3 + $0x50] sm:$0xff] %vm167, %v1285
  %1350 = vst.msk [vmem:[%s3 + $0x58] sm:$0xff] %vm167, %v1286
  %1351 = vst.msk [vmem:[%s3 + $0x60] sm:$0xff] %vm167, %v1287
  %1352 = vst.msk [vmem:[%s3 + $0x68] sm:$0xff] %vm167, %v1288
  %1353 = vst.msk [vmem:[%s3 + $0x70] sm:$0xff] %vm167, %v1289
  %1354 = vst.msk [vmem:[%s3 + $0x78] sm:$0xff] %vm167, %v1290
  %1355 = vst.msk [vmem:[%s3 + $0x80] sm:$0xff] %vm167, %v1291
  %1356 = vst.msk [vmem:[%s3 + $0x88] sm:$0xff] %vm167, %v1292
  %1357 = vst.msk [vmem:[%s3 + $0x90] sm:$0xff] %vm167, %v1293
  %1358 = vst.msk [vmem:[%s3 + $0x98] sm:$0xff] %vm167, %v1294
  %1359 = vst.msk [vmem:[%s3 + $0xa0] sm:$0xff] %vm167, %v1295
  %1360 = vst.msk [vmem:[%s3 + $0xa8] sm:$0xff] %vm167, %v1296
  %1361 = vst.msk [vmem:[%s3 + $0xb0] sm:$0xff] %vm167, %v1297
  %1362 = vst.msk [vmem:[%s3 + $0xb8] sm:$0xff] %vm167, %v1298
  %1363 = vst.msk [vmem:[%s3 + $0xc0] sm:$0xff] %vm167, %v1299
  %1364 = vst.msk [vmem:[%s3 + $0xc8] sm:$0xff] %vm167, %v1300
  %1365 = vst.msk [vmem:[%s3 + $0xd0] sm:$0xff] %vm167, %v1301
  %1366 = vst.msk [vmem:[%s3 + $0xd8] sm:$0xff] %vm167, %v1302
  %1367 = vst.msk [vmem:[%s3 + $0xe0] sm:$0xff] %vm167, %v1303
  %1368 = vst.msk [vmem:[%s3 + $0xe8] sm:$0xff] %vm167, %v1304
  %1369 = vst.msk [vmem:[%s3 + $0xf0] sm:$0xff] %vm167, %v1305
  %1370 = vst.msk [vmem:[%s3 + $0xf8] sm:$0xff] %vm167, %v1306
  %1371 = vst.msk [vmem:[%s3 + $0x100] sm:$0xff] %vm167, %v1307
  %1372 = vst.msk [vmem:[%s3 + $0x108] sm:$0xff] %vm167, %v1308
  %1373 = vst.msk [vmem:[%s3 + $0x110] sm:$0xff] %vm167, %v1309
  %1374 = vst.msk [vmem:[%s3 + $0x118] sm:$0xff] %vm167, %v1310
  %1375 = vst.msk [vmem:[%s3 + $0x120] sm:$0xff] %vm167, %v1311
  %1376 = vst.msk [vmem:[%s3 + $0x128] sm:$0xff] %vm167, %v1312
  %1377 = vst.msk [vmem:[%s3 + $0x130] sm:$0xff] %vm167, %v1313
  %1378 = vst.msk [vmem:[%s3 + $0x138] sm:$0xff] %vm167, %v1314
  %1379 = vst.msk [vmem:[%s3 + $0x140] sm:$0xff] %vm167, %v1315
  %1380 = vst.msk [vmem:[%s3 + $0x148] sm:$0xff] %vm167, %v1316
  %1381 = vst.msk [vmem:[%s3 + $0x150] sm:$0xff] %vm167, %v1317
  %1382 = vst.msk [vmem:[%s3 + $0x158] sm:$0xff] %vm167, %v1318
  %1383 = vst.msk [vmem:[%s3 + $0x160] sm:$0xff] %vm167, %v1319
  %1384 = vst.msk [vmem:[%s3 + $0x168] sm:$0xff] %vm167, %v1320
  %1385 = vst.msk [vmem:[%s3 + $0x170] sm:$0xff] %vm167, %v1321
  %1386 = vst.msk [vmem:[%s3 + $0x178] sm:$0xff] %vm167, %v1322
  %1387 = vst.msk [vmem:[%s3 + $0x180] sm:$0xff] %vm167, %v1323
  %1388 = vst.msk [vmem:[%s3 + $0x188] sm:$0xff] %vm167, %v1324
  %1389 = vst.msk [vmem:[%s3 + $0x190] sm:$0xff] %vm167, %v1325
  %1390 = vst.msk [vmem:[%s3 + $0x198] sm:$0xff] %vm167, %v1326
  %1391 = vst.msk [vmem:[%s3 + $0x1a0] sm:$0xff] %vm167, %v1327
  %1392 = vst.msk [vmem:[%s3 + $0x1a8] sm:$0xff] %vm167, %v1328
  %1393 = vst.msk [vmem:[%s3 + $0x1b0] sm:$0xff] %vm167, %v1329
  %1394 = vst.msk [vmem:[%s3 + $0x1b8] sm:$0xff] %vm167, %v1330
  %1395 = vst.msk [vmem:[%s3 + $0x1c0] sm:$0xff] %vm167, %v1331
  %1396 = vst.msk [vmem:[%s3 + $0x1c8] sm:$0xff] %vm167, %v1332
  %1397 = vst.msk [vmem:[%s3 + $0x1d0] sm:$0xff] %vm167, %v1333
  %1398 = vst.msk [vmem:[%s3 + $0x1d8] sm:$0xff] %vm167, %v1334
  %1399 = vst.msk [vmem:[%s3 + $0x1e0] sm:$0xff] %vm167, %v1335
  %1400 = vst.msk [vmem:[%s3 + $0x1e8] sm:$0xff] %vm167, %v1336
  %1401 = vst.msk [vmem:[%s3 + $0x1f0] sm:$0xff] %vm167, %v1337
  %1402 = vst.msk [vmem:[%s3 + $0x1f8] sm:$0xff] %vm167, %v1338
  // Predicated region
  $region14: #{wnet_forward.48} parent=0 // pred_check
    _
  $region15: #{wnet_forward.48} parent=0 // pred_check_branch
    %1404 = sbr.rel (0) target = $region17
  $region16: #{wnet_forward.48} parent=0 // pred_region
    _
  $region17: #{wnet_forward.48} parent=0 // pred_fallthru
    _
  // Predicated region
  $region18: #{wnet_forward.48} parent=0 // pred_check
    _
  $region19: #{wnet_forward.48} parent=0 // pred_check_branch
    %1406 = sbr.rel (0) target = $region21
  $region20: #{wnet_forward.48} parent=0 // pred_region
    _
  $region21: #{wnet_forward.48} parent=0 // pred_fallthru
    _

// kernel: wnet_forward.51
$region0: #{wnet_forward.51}
  #allocation0 [shape = 'u32[]', space=smem, size = 0x4, offset = 0x4, fixed_abs, tag = 'smem constant byte address 0x4 - core index']
  #allocation1 [shape = 'u32[144,128]{1,0:T(1,128)}', space=vmem, size = 0x12000, scoped, tag = 'internal scratch']
  %s0 = inlined_call_operand.vmem [shape: f32[512,24], index: 0, kind: input, shape index: {}]
  %s1 = inlined_call_operand.vmem [shape: f32[24,16], index: 1, kind: input, shape index: {}]
  %s2 = inlined_call_operand.vmem [shape: f32[1,16], index: 2, kind: input, shape index: {}]
  %s3 = inlined_call_operand.vmem [shape: f32[512,16], index: 3, kind: output, shape index: {}]
  %s4 = sld [smem:[#allocation0]]
  $region22: #{wnet_forward.51} parent=0
    _
  %s6 = ssub.s32 1, %s4
  %s7 = scalar_select 0, %s6, %s4
  // Predicated region
  $region2: #{wnet_forward.51} parent=0 // pred_check
    _
  $region3: #{wnet_forward.51} parent=0 // pred_check_branch
    %9 = sbr.rel (0) target = $region5
  $region4: #{wnet_forward.51} parent=0 // pred_region
    _
  $region5: #{wnet_forward.51} parent=0 // pred_fallthru
    _
  // Predicated region
  $region6: #{wnet_forward.51} parent=0 // pred_check
    _
  $region7: #{wnet_forward.51} parent=0 // pred_check_branch
    %11 = sbr.rel (0) target = $region9
  $region8: #{wnet_forward.51} parent=0 // pred_region
    _
  $region9: #{wnet_forward.51} parent=0 // pred_fallthru
    _
  // Predicated region
  $region10: #{wnet_forward.51} parent=0 // pred_check
    _
  $region11: #{wnet_forward.51} parent=0 // pred_check_branch
    %13 = sbr.rel (0) target = $region13
  $region12: #{wnet_forward.51} parent=0 // pred_region
    _
  $region13: #{wnet_forward.51} parent=0 // pred_fallthru
    _
  %v14 = vld [vmem:[%s0] sm:$0xff]
  %v15 = vld [vmem:[%s0 + $0x8] sm:$0xff]
  %v16 = vld [vmem:[%s0 + $0x10] sm:$0xff]
  %v17 = vld [vmem:[%s0 + $0x18] sm:$0xff]
  %v18 = vld [vmem:[%s0 + $0x20] sm:$0xff]
  %v19 = vld [vmem:[%s0 + $0x28] sm:$0xff]
  %v20 = vld [vmem:[%s0 + $0x30] sm:$0xff]
  %v21 = vld [vmem:[%s0 + $0x38] sm:$0xff]
  %v22 = vld [vmem:[%s0 + $0x40] sm:$0xff]
  %v23 = vld [vmem:[%s0 + $0x48] sm:$0xff]
  %v24 = vld [vmem:[%s0 + $0x50] sm:$0xff]
  %v25 = vld [vmem:[%s0 + $0x58] sm:$0xff]
  %v26 = vld [vmem:[%s0 + $0x60] sm:$0xff]
  %v27 = vld [vmem:[%s0 + $0x68] sm:$0xff]
  %v28 = vld [vmem:[%s0 + $0x70] sm:$0xff]
  %v29 = vld [vmem:[%s0 + $0x78] sm:$0xff]
  %v30 = vld [vmem:[%s0 + $0x80] sm:$0xff]
  %v31 = vld [vmem:[%s0 + $0x88] sm:$0xff]
  %v32 = vld [vmem:[%s0 + $0x90] sm:$0xff]
  %v33 = vld [vmem:[%s0 + $0x98] sm:$0xff]
  %v34 = vld [vmem:[%s0 + $0xa0] sm:$0xff]
  %v35 = vld [vmem:[%s0 + $0xa8] sm:$0xff]
  %v36 = vld [vmem:[%s0 + $0xb0] sm:$0xff]
  %v37 = vld [vmem:[%s0 + $0xb8] sm:$0xff]
  %v38 = vld [vmem:[%s0 + $0xc0] sm:$0xff]
  %v39 = vld [vmem:[%s0 + $0xc8] sm:$0xff]
  %v40 = vld [vmem:[%s0 + $0xd0] sm:$0xff]
  %v41 = vld [vmem:[%s0 + $0xd8] sm:$0xff]
  %v42 = vld [vmem:[%s0 + $0xe0] sm:$0xff]
  %v43 = vld [vmem:[%s0 + $0xe8] sm:$0xff]
  %v44 = vld [vmem:[%s0 + $0xf0] sm:$0xff]
  %v45 = vld [vmem:[%s0 + $0xf8] sm:$0xff]
  %v46 = vld [vmem:[%s0 + $0x100] sm:$0xff]
  %v47 = vld [vmem:[%s0 + $0x108] sm:$0xff]
  %v48 = vld [vmem:[%s0 + $0x110] sm:$0xff]
  %v49 = vld [vmem:[%s0 + $0x118] sm:$0xff]
  %v50 = vld [vmem:[%s0 + $0x120] sm:$0xff]
  %v51 = vld [vmem:[%s0 + $0x128] sm:$0xff]
  %v52 = vld [vmem:[%s0 + $0x130] sm:$0xff]
  %v53 = vld [vmem:[%s0 + $0x138] sm:$0xff]
  %v54 = vld [vmem:[%s0 + $0x140] sm:$0xff]
  %v55 = vld [vmem:[%s0 + $0x148] sm:$0xff]
  %v56 = vld [vmem:[%s0 + $0x150] sm:$0xff]
  %v57 = vld [vmem:[%s0 + $0x158] sm:$0xff]
  %v58 = vld [vmem:[%s0 + $0x160] sm:$0xff]
  %v59 = vld [vmem:[%s0 + $0x168] sm:$0xff]
  %v60 = vld [vmem:[%s0 + $0x170] sm:$0xff]
  %v61 = vld [vmem:[%s0 + $0x178] sm:$0xff]
  %v62 = vld [vmem:[%s0 + $0x180] sm:$0xff]
  %v63 = vld [vmem:[%s0 + $0x188] sm:$0xff]
  %v64 = vld [vmem:[%s0 + $0x190] sm:$0xff]
  %v65 = vld [vmem:[%s0 + $0x198] sm:$0xff]
  %v66 = vld [vmem:[%s0 + $0x1a0] sm:$0xff]
  %v67 = vld [vmem:[%s0 + $0x1a8] sm:$0xff]
  %v68 = vld [vmem:[%s0 + $0x1b0] sm:$0xff]
  %v69 = vld [vmem:[%s0 + $0x1b8] sm:$0xff]
  %v70 = vld [vmem:[%s0 + $0x1c0] sm:$0xff]
  %v71 = vld [vmem:[%s0 + $0x1c8] sm:$0xff]
  %v72 = vld [vmem:[%s0 + $0x1d0] sm:$0xff]
  %v73 = vld [vmem:[%s0 + $0x1d8] sm:$0xff]
  %v74 = vld [vmem:[%s0 + $0x1e0] sm:$0xff]
  %v75 = vld [vmem:[%s0 + $0x1e8] sm:$0xff]
  %v76 = vld [vmem:[%s0 + $0x1f0] sm:$0xff]
  %v77 = vld [vmem:[%s0 + $0x1f8] sm:$0xff]
  %v78 = vld [vmem:[%s1] sm:$0xff]
  %v79 = vld [vmem:[%s1 + $0x8] sm:$0xff]
  %v80 = vld [vmem:[%s1 + $0x10] sm:$0xff]
  %v81 = vld [vmem:[%s2] sm:$0x1]
  %v83 = vlaneseq
  %v84 = vshrl.u32 %v83, 7
  %v85 = vsub.s32 0, %v84
  %v86 = vrot.slane %v81, %v85
  %vm88 = vcmask 195584
  %v90 = vsel %vm88, %v14, 0
  %v93 = vsel %vm88, %v15, 0
  %v96 = vsel %vm88, %v16, 0
  %v99 = vsel %vm88, %v17, 0
  %v102 = vsel %vm88, %v18, 0
  %v105 = vsel %vm88, %v19, 0
  %v108 = vsel %vm88, %v20, 0
  %v111 = vsel %vm88, %v21, 0
  %v114 = vsel %vm88, %v22, 0
  %v117 = vsel %vm88, %v23, 0
  %v120 = vsel %vm88, %v24, 0
  %v123 = vsel %vm88, %v25, 0
  %v126 = vsel %vm88, %v26, 0
  %v129 = vsel %vm88, %v27, 0
  %v132 = vsel %vm88, %v28, 0
  %v135 = vsel %vm88, %v29, 0
  %v138 = vsel %vm88, %v30, 0
  %v141 = vsel %vm88, %v31, 0
  %v144 = vsel %vm88, %v32, 0
  %v147 = vsel %vm88, %v33, 0
  %v150 = vsel %vm88, %v34, 0
  %v153 = vsel %vm88, %v35, 0
  %v156 = vsel %vm88, %v36, 0
  %v159 = vsel %vm88, %v37, 0
  %v162 = vsel %vm88, %v38, 0
  %v165 = vsel %vm88, %v39, 0
  %v168 = vsel %vm88, %v40, 0
  %v171 = vsel %vm88, %v41, 0
  %v174 = vsel %vm88, %v42, 0
  %v177 = vsel %vm88, %v43, 0
  %v180 = vsel %vm88, %v44, 0
  %v183 = vsel %vm88, %v45, 0
  %v186 = vsel %vm88, %v46, 0
  %v189 = vsel %vm88, %v47, 0
  %v192 = vsel %vm88, %v48, 0
  %v195 = vsel %vm88, %v49, 0
  %v198 = vsel %vm88, %v50, 0
  %v201 = vsel %vm88, %v51, 0
  %v204 = vsel %vm88, %v52, 0
  %v207 = vsel %vm88, %v53, 0
  %v210 = vsel %vm88, %v54, 0
  %v213 = vsel %vm88, %v55, 0
  %v216 = vsel %vm88, %v56, 0
  %v219 = vsel %vm88, %v57, 0
  %v222 = vsel %vm88, %v58, 0
  %v225 = vsel %vm88, %v59, 0
  %v228 = vsel %vm88, %v60, 0
  %v231 = vsel %vm88, %v61, 0
  %v234 = vsel %vm88, %v62, 0
  %v237 = vsel %vm88, %v63, 0
  %v240 = vsel %vm88, %v64, 0
  %v243 = vsel %vm88, %v65, 0
  %v246 = vsel %vm88, %v66, 0
  %v249 = vsel %vm88, %v67, 0
  %v252 = vsel %vm88, %v68, 0
  %v255 = vsel %vm88, %v69, 0
  %v258 = vsel %vm88, %v70, 0
  %v261 = vsel %vm88, %v71, 0
  %v264 = vsel %vm88, %v72, 0
  %v267 = vsel %vm88, %v73, 0
  %v270 = vsel %vm88, %v74, 0
  %v273 = vsel %vm88, %v75, 0
  %v276 = vsel %vm88, %v76, 0
  %v279 = vsel %vm88, %v77, 0
  %281 = vmatprep.subr.mxu0 0.0
  %282 = vmatpush1.msra.mxu0 %v78
  %283 = vmatprep.subr.mxu0 0.0
  %284 = vmatpush1.msra.mxu0 %v79
  %285 = vmatprep.subr.mxu0 0.0
  %286 = vmatpush1.msra.mxu0 %v80
  %287 = vmatprep.subr.mxu0 0.0
  %288 = vmatpush1.msra.mxu0 0.0
  %289 = vmatprep.subr.mxu0 0.0
  %290 = vmatpush1.msra.mxu0 0.0
  %291 = vmatprep.subr.mxu0 0.0
  %292 = vmatpush1.msra.mxu0 0.0
  %293 = vmatprep.subr.mxu0 0.0
  %294 = vmatpush1.msra.mxu0 0.0
  %295 = vmatprep.subr.mxu0 0.0
  %296 = vmatpush1.msra.mxu0 0.0
  %297 = vmatprep.subr.mxu0 0.0
  %298 = vmatpush1.msra.mxu0 0.0
  %299 = vmatprep.subr.mxu0 0.0
  %300 = vmatpush1.msra.mxu0 0.0
  %301 = vmatprep.subr.mxu0 0.0
  %302 = vmatpush1.msra.mxu0 0.0
  %303 = vmatprep.subr.mxu0 0.0
  %304 = vmatpush1.msra.mxu0 0.0
  %305 = vmatprep.subr.mxu0 0.0
  %306 = vmatpush1.msra.mxu0 0.0
  %307 = vmatprep.subr.mxu0 0.0
  %308 = vmatpush1.msra.mxu0 0.0
  %309 = vmatprep.subr.mxu0 0.0
  %310 = vmatpush1.msra.mxu0 0.0
  %311 = vmatprep.subr.mxu0 0.0
  %312 = vmatpush1.msra.mxu0 0.0
  %313 = vmatprep.subr.mxu0 0.0
  %314 = vmatpush1.msra.mxu0 0.0
  %315 = vmatprep.subr.mxu0 0.0
  %316 = vmatpush1.msra.mxu0 0.0
  %317 = vmatprep.subr.mxu0 0.0
  %318 = vmatpush1.msra.mxu0 0.0
  %319 = vmatprep.subr.mxu0 0.0
  %320 = vmatpush1.msra.mxu0 0.0
  %321 = vmatprep.subr.mxu0 0.0
  %322 = vmatpush1.msra.mxu0 0.0
  %323 = vmatprep.subr.mxu0 0.0
  %324 = vmatpush1.msra.mxu0 0.0
  %325 = vmatprep.subr.mxu0 0.0
  %326 = vmatpush1.msra.mxu0 0.0
  %327 = vmatprep.subr.mxu0 0.0
  %328 = vmatpush1.msra.mxu0 0.0
  %329 = vmatprep.subr.mxu0 0.0
  %330 = vmatpush1.msra.mxu0 0.0
  %331 = vmatprep.subr.mxu0 0.0
  %332 = vmatpush1.msra.mxu0 0.0
  %333 = vmatprep.subr.mxu0 0.0
  %334 = vmatpush1.msra.mxu0 0.0
  %335 = vmatprep.subr.mxu0 0.0
  %336 = vmatpush1.msra.mxu0 0.0
  %337 = vmatprep.subr.mxu0 0.0
  %338 = vmatpush1.msra.mxu0 0.0
  %339 = vmatprep.subr.mxu0 0.0
  %340 = vmatpush1.msra.mxu0 0.0
  %341 = vmatprep.subr.mxu0 0.0
  %342 = vmatpush1.msra.mxu0 0.0
  %343 = vmatprep.subr.mxu0 0.0
  %344 = vmatpush1.msra.mxu0 0.0
  %345 = vmatprep.mubr.f32.mxu0 0.0
  %346 = vmatmul.mubr.f32.gmra.mrb[0].mxu0 %v90
  %v347 = vpop.f32.mrb[0].mxu0
  %v348 = vadd.f32 %v86, %v347
  %v349 = vpop.f32.mrb[0].mxu0
  %350 = vmatprep.mubr.f32.mxu0 0.0
  %351 = vmatmul.mubr.f32.gmra.mrb[0].mxu0 %v93
  %v352 = vpop.f32.mrb[0].mxu0
  %v353 = vadd.f32 %v86, %v352
  %v354 = vpop.f32.mrb[0].mxu0
  %355 = vmatprep.mubr.f32.mxu0 0.0
  %356 = vmatmul.mubr.f32.gmra.mrb[0].mxu0 %v96
  %v357 = vpop.f32.mrb[0].mxu0
  %v358 = vadd.f32 %v86, %v357
  %v359 = vpop.f32.mrb[0].mxu0
  %360 = vmatprep.mubr.f32.mxu0 0.0
  %361 = vmatmul.mubr.f32.gmra.mrb[0].mxu0 %v99
  %v362 = vpop.f32.mrb[0].mxu0
  %v363 = vadd.f32 %v86, %v362
  %v364 = vpop.f32.mrb[0].mxu0
  %365 = vmatprep.mubr.f32.mxu0 0.0
  %366 = vmatmul.mubr.f32.gmra.mrb[0].mxu0 %v102
  %v367 = vpop.f32.mrb[0].mxu0
  %v368 = vadd.f32 %v86, %v367
  %v369 = vpop.f32.mrb[0].mxu0
  %370 = vmatprep.mubr.f32.mxu0 0.0
  %371 = vmatmul.mubr.f32.gmra.mrb[0].mxu0 %v105
  %v372 = vpop.f32.mrb[0].mxu0
  %v373 = vadd.f32 %v86, %v372
  %v374 = vpop.f32.mrb[0].mxu0
  %375 = vmatprep.mubr.f32.mxu0 0.0
  %376 = vmatmul.mubr.f32.gmra.mrb[0].mxu0 %v108
  %v377 = vpop.f32.mrb[0].mxu0
  %v378 = vadd.f32 %v86, %v377
  %v379 = vpop.f32.mrb[0].mxu0
  %380 = vmatprep.mubr.f32.mxu0 0.0
  %381 = vmatmul.mubr.f32.gmra.mrb[0].mxu0 %v111
  %v382 = vpop.f32.mrb[0].mxu0
  %v383 = vadd.f32 %v86, %v382
  %v384 = vpop.f32.mrb[0].mxu0
  %385 = vmatprep.mubr.f32.mxu0 0.0
  %386 = vmatmul.mubr.f32.gmra.mrb[0].mxu0 %v114
  %v387 = vpop.f32.mrb[0].mxu0
  %v388 = vadd.f32 %v86, %v387
  %v389 = vpop.f32.mrb[0].mxu0
  %390 = vmatprep.mubr.f32.mxu0 0.0
  %391 = vmatmul.mubr.f32.gmra.mrb[0].mxu0 %v117
  %v392 = vpop.f32.mrb[0].mxu0
  %v393 = vadd.f32 %v86, %v392
  %v394 = vpop.f32.mrb[0].mxu0
  %395 = vmatprep.mubr.f32.mxu0 0.0
  %396 = vmatmul.mubr.f32.gmra.mrb[0].mxu0 %v120
  %v397 = vpop.f32.mrb[0].mxu0
  %v398 = vadd.f32 %v86, %v397
  %v399 = vpop.f32.mrb[0].mxu0
  %400 = vmatprep.mubr.f32.mxu0 0.0
  %401 = vmatmul.mubr.f32.gmra.mrb[0].mxu0 %v123
  %v402 = vpop.f32.mrb[0].mxu0
  %v403 = vadd.f32 %v86, %v402
  %v404 = vpop.f32.mrb[0].mxu0
  %405 = vmatprep.mubr.f32.mxu0 0.0
  %406 = vmatmul.mubr.f32.gmra.mrb[0].mxu0 %v126
  %v407 = vpop.f32.mrb[0].mxu0
  %v408 = vadd.f32 %v86, %v407
  %v409 = vpop.f32.mrb[0].mxu0
  %410 = vmatprep.mubr.f32.mxu0 0.0
  %411 = vmatmul.mubr.f32.gmra.mrb[0].mxu0 %v129
  %v412 = vpop.f32.mrb[0].mxu0
  %v413 = vadd.f32 %v86, %v412
  %v414 = vpop.f32.mrb[0].mxu0
  %415 = vmatprep.mubr.f32.mxu0 0.0
  %416 = vmatmul.mubr.f32.gmra.mrb[0].mxu0 %v132
  %v417 = vpop.f32.mrb[0].mxu0
  %v418 = vadd.f32 %v86, %v417
  %v419 = vpop.f32.mrb[0].mxu0
  %420 = vmatprep.mubr.f32.mxu0 0.0
  %421 = vmatmul.mubr.f32.gmra.mrb[0].mxu0 %v135
  %v422 = vpop.f32.mrb[0].mxu0
  %v423 = vadd.f32 %v86, %v422
  %v424 = vpop.f32.mrb[0].mxu0
  %425 = vmatprep.mubr.f32.mxu0 0.0
  %426 = vmatmul.mubr.f32.gmra.mrb[0].mxu0 %v138
  %v427 = vpop.f32.mrb[0].mxu0
  %v428 = vadd.f32 %v86, %v427
  %v429 = vpop.f32.mrb[0].mxu0
  %430 = vmatprep.mubr.f32.mxu0 0.0
  %431 = vmatmul.mubr.f32.gmra.mrb[0].mxu0 %v141
  %v432 = vpop.f32.mrb[0].mxu0
  %v433 = vadd.f32 %v86, %v432
  %v434 = vpop.f32.mrb[0].mxu0
  %435 = vmatprep.mubr.f32.mxu0 0.0
  %436 = vmatmul.mubr.f32.gmra.mrb[0].mxu0 %v144
  %v437 = vpop.f32.mrb[0].mxu0
  %v438 = vadd.f32 %v86, %v437
  %v439 = vpop.f32.mrb[0].mxu0
  %440 = vmatprep.mubr.f32.mxu0 0.0
  %441 = vmatmul.mubr.f32.gmra.mrb[0].mxu0 %v147
  %v442 = vpop.f32.mrb[0].mxu0
  %v443 = vadd.f32 %v86, %v442
  %v444 = vpop.f32.mrb[0].mxu0
  %445 = vmatprep.mubr.f32.mxu0 0.0
  %446 = vmatmul.mubr.f32.gmra.mrb[0].mxu0 %v150
  %v447 = vpop.f32.mrb[0].mxu0
  %v448 = vadd.f32 %v86, %v447
  %v449 = vpop.f32.mrb[0].mxu0
  %450 = vmatprep.mubr.f32.mxu0 0.0
  %451 = vmatmul.mubr.f32.gmra.mrb[0].mxu0 %v153
  %v452 = vpop.f32.mrb[0].mxu0
  %v453 = vadd.f32 %v86, %v452
  %v454 = vpop.f32.mrb[0].mxu0
  %455 = vmatprep.mubr.f32.mxu0 0.0
  %456 = vmatmul.mubr.f32.gmra.mrb[0].mxu0 %v156
  %v457 = vpop.f32.mrb[0].mxu0
  %v458 = vadd.f32 %v86, %v457
  %v459 = vpop.f32.mrb[0].mxu0
  %460 = vmatprep.mubr.f32.mxu0 0.0
  %461 = vmatmul.mubr.f32.gmra.mrb[0].mxu0 %v159
  %v462 = vpop.f32.mrb[0].mxu0
  %v463 = vadd.f32 %v86, %v462
  %v464 = vpop.f32.mrb[0].mxu0
  %465 = vmatprep.mubr.f32.mxu0 0.0
  %466 = vmatmul.mubr.f32.gmra.mrb[0].mxu0 %v162
  %v467 = vpop.f32.mrb[0].mxu0
  %v468 = vadd.f32 %v86, %v467
  %v469 = vpop.f32.mrb[0].mxu0
  %470 = vmatprep.mubr.f32.mxu0 0.0
  %471 = vmatmul.mubr.f32.gmra.mrb[0].mxu0 %v165
  %v472 = vpop.f32.mrb[0].mxu0
  %v473 = vadd.f32 %v86, %v472
  %v474 = vpop.f32.mrb[0].mxu0
  %475 = vmatprep.mubr.f32.mxu0 0.0
  %476 = vmatmul.mubr.f32.gmra.mrb[0].mxu0 %v168
  %v477 = vpop.f32.mrb[0].mxu0
  %v478 = vadd.f32 %v86, %v477
  %v479 = vpop.f32.mrb[0].mxu0
  %480 = vmatprep.mubr.f32.mxu0 0.0
  %481 = vmatmul.mubr.f32.gmra.mrb[0].mxu0 %v171
  %v482 = vpop.f32.mrb[0].mxu0
  %v483 = vadd.f32 %v86, %v482
  %v484 = vpop.f32.mrb[0].mxu0
  %485 = vmatprep.mubr.f32.mxu0 0.0
  %486 = vmatmul.mubr.f32.gmra.mrb[0].mxu0 %v174
  %v487 = vpop.f32.mrb[0].mxu0
  %v488 = vadd.f32 %v86, %v487
  %v489 = vpop.f32.mrb[0].mxu0
  %490 = vmatprep.mubr.f32.mxu0 0.0
  %491 = vmatmul.mubr.f32.gmra.mrb[0].mxu0 %v177
  %v492 = vpop.f32.mrb[0].mxu0
  %v493 = vadd.f32 %v86, %v492
  %v494 = vpop.f32.mrb[0].mxu0
  %495 = vmatprep.mubr.f32.mxu0 0.0
  %496 = vmatmul.mubr.f32.gmra.mrb[0].mxu0 %v180
  %v497 = vpop.f32.mrb[0].mxu0
  %v498 = vadd.f32 %v86, %v497
  %v499 = vpop.f32.mrb[0].mxu0
  %500 = vmatprep.mubr.f32.mxu0 0.0
  %501 = vmatmul.mubr.f32.gmra.mrb[0].mxu0 %v183
  %v502 = vpop.f32.mrb[0].mxu0
  %v503 = vadd.f32 %v86, %v502
  %v504 = vpop.f32.mrb[0].mxu0
  %505 = vmatprep.mubr.f32.mxu0 0.0
  %506 = vmatmul.mubr.f32.gmra.mrb[0].mxu0 %v186
  %v507 = vpop.f32.mrb[0].mxu0
  %v508 = vadd.f32 %v86, %v507
  %v509 = vpop.f32.mrb[0].mxu0
  %510 = vmatprep.mubr.f32.mxu0 0.0
  %511 = vmatmul.mubr.f32.gmra.mrb[0].mxu0 %v189
  %v512 = vpop.f32.mrb[0].mxu0
  %v513 = vadd.f32 %v86, %v512
  %v514 = vpop.f32.mrb[0].mxu0
  %515 = vmatprep.mubr.f32.mxu0 0.0
  %516 = vmatmul.mubr.f32.gmra.mrb[0].mxu0 %v192
  %v517 = vpop.f32.mrb[0].mxu0
  %v518 = vadd.f32 %v86, %v517
  %v519 = vpop.f32.mrb[0].mxu0
  %520 = vmatprep.mubr.f32.mxu0 0.0
  %521 = vmatmul.mubr.f32.gmra.mrb[0].mxu0 %v195
  %v522 = vpop.f32.mrb[0].mxu0
  %v523 = vadd.f32 %v86, %v522
  %v524 = vpop.f32.mrb[0].mxu0
  %525 = vmatprep.mubr.f32.mxu0 0.0
  %526 = vmatmul.mubr.f32.gmra.mrb[0].mxu0 %v198
  %v527 = vpop.f32.mrb[0].mxu0
  %v528 = vadd.f32 %v86, %v527
  %v529 = vpop.f32.mrb[0].mxu0
  %530 = vmatprep.mubr.f32.mxu0 0.0
  %531 = vmatmul.mubr.f32.gmra.mrb[0].mxu0 %v201
  %v532 = vpop.f32.mrb[0].mxu0
  %v533 = vadd.f32 %v86, %v532
  %v534 = vpop.f32.mrb[0].mxu0
  %535 = vmatprep.mubr.f32.mxu0 0.0
  %536 = vmatmul.mubr.f32.gmra.mrb[0].mxu0 %v204
  %v537 = vpop.f32.mrb[0].mxu0
  %v538 = vadd.f32 %v86, %v537
  %v539 = vpop.f32.mrb[0].mxu0
  %540 = vmatprep.mubr.f32.mxu0 0.0
  %541 = vmatmul.mubr.f32.gmra.mrb[0].mxu0 %v207
  %v542 = vpop.f32.mrb[0].mxu0
  %v543 = vadd.f32 %v86, %v542
  %v544 = vpop.f32.mrb[0].mxu0
  %545 = vmatprep.mubr.f32.mxu0 0.0
  %546 = vmatmul.mubr.f32.gmra.mrb[0].mxu0 %v210
  %v547 = vpop.f32.mrb[0].mxu0
  %v548 = vadd.f32 %v86, %v547
  %v549 = vpop.f32.mrb[0].mxu0
  %550 = vmatprep.mubr.f32.mxu0 0.0
  %551 = vmatmul.mubr.f32.gmra.mrb[0].mxu0 %v213
  %v552 = vpop.f32.mrb[0].mxu0
  %v553 = vadd.f32 %v86, %v552
  %v554 = vpop.f32.mrb[0].mxu0
  %555 = vmatprep.mubr.f32.mxu0 0.0
  %556 = vmatmul.mubr.f32.gmra.mrb[0].mxu0 %v216
  %v557 = vpop.f32.mrb[0].mxu0
  %v558 = vadd.f32 %v86, %v557
  %v559 = vpop.f32.mrb[0].mxu0
  %560 = vmatprep.mubr.f32.mxu0 0.0
  %561 = vmatmul.mubr.f32.gmra.mrb[0].mxu0 %v219
  %v562 = vpop.f32.mrb[0].mxu0
  %v563 = vadd.f32 %v86, %v562
  %v564 = vpop.f32.mrb[0].mxu0
  %565 = vmatprep.mubr.f32.mxu0 0.0
  %566 = vmatmul.mubr.f32.gmra.mrb[0].mxu0 %v222
  %v567 = vpop.f32.mrb[0].mxu0
  %v568 = vadd.f32 %v86, %v567
  %v569 = vpop.f32.mrb[0].mxu0
  %570 = vmatprep.mubr.f32.mxu0 0.0
  %571 = vmatmul.mubr.f32.gmra.mrb[0].mxu0 %v225
  %v572 = vpop.f32.mrb[0].mxu0
  %v573 = vadd.f32 %v86, %v572
  %v574 = vpop.f32.mrb[0].mxu0
  %575 = vmatprep.mubr.f32.mxu0 0.0
  %576 = vmatmul.mubr.f32.gmra.mrb[0].mxu0 %v228
  %v577 = vpop.f32.mrb[0].mxu0
  %v578 = vadd.f32 %v86, %v577
  %v579 = vpop.f32.mrb[0].mxu0
  %580 = vmatprep.mubr.f32.mxu0 0.0
  %581 = vmatmul.mubr.f32.gmra.mrb[0].mxu0 %v231
  %v582 = vpop.f32.mrb[0].mxu0
  %v583 = vadd.f32 %v86, %v582
  %v584 = vpop.f32.mrb[0].mxu0
  %585 = vmatprep.mubr.f32.mxu0 0.0
  %586 = vmatmul.mubr.f32.gmra.mrb[0].mxu0 %v234
  %v587 = vpop.f32.mrb[0].mxu0
  %v588 = vadd.f32 %v86, %v587
  %v589 = vpop.f32.mrb[0].mxu0
  %590 = vmatprep.mubr.f32.mxu0 0.0
  %591 = vmatmul.mubr.f32.gmra.mrb[0].mxu0 %v237
  %v592 = vpop.f32.mrb[0].mxu0
  %v593 = vadd.f32 %v86, %v592
  %v594 = vpop.f32.mrb[0].mxu0
  %595 = vmatprep.mubr.f32.mxu0 0.0
  %596 = vmatmul.mubr.f32.gmra.mrb[0].mxu0 %v240
  %v597 = vpop.f32.mrb[0].mxu0
  %v598 = vadd.f32 %v86, %v597
  %v599 = vpop.f32.mrb[0].mxu0
  %600 = vmatprep.mubr.f32.mxu0 0.0
  %601 = vmatmul.mubr.f32.gmra.mrb[0].mxu0 %v243
  %v602 = vpop.f32.mrb[0].mxu0
  %v603 = vadd.f32 %v86, %v602
  %v604 = vpop.f32.mrb[0].mxu0
  %605 = vmatprep.mubr.f32.mxu0 0.0
  %606 = vmatmul.mubr.f32.gmra.mrb[0].mxu0 %v246
  %v607 = vpop.f32.mrb[0].mxu0
  %v608 = vadd.f32 %v86, %v607
  %v609 = vpop.f32.mrb[0].mxu0
  %610 = vmatprep.mubr.f32.mxu0 0.0
  %611 = vmatmul.mubr.f32.gmra.mrb[0].mxu0 %v249
  %v612 = vpop.f32.mrb[0].mxu0
  %v613 = vadd.f32 %v86, %v612
  %v614 = vpop.f32.mrb[0].mxu0
  %615 = vmatprep.mubr.f32.mxu0 0.0
  %616 = vmatmul.mubr.f32.gmra.mrb[0].mxu0 %v252
  %v617 = vpop.f32.mrb[0].mxu0
  %v618 = vadd.f32 %v86, %v617
  %v619 = vpop.f32.mrb[0].mxu0
  %620 = vmatprep.mubr.f32.mxu0 0.0
  %621 = vmatmul.mubr.f32.gmra.mrb[0].mxu0 %v255
  %v622 = vpop.f32.mrb[0].mxu0
  %v623 = vadd.f32 %v86, %v622
  %v624 = vpop.f32.mrb[0].mxu0
  %625 = vmatprep.mubr.f32.mxu0 0.0
  %626 = vmatmul.mubr.f32.gmra.mrb[0].mxu0 %v258
  %v627 = vpop.f32.mrb[0].mxu0
  %v628 = vadd.f32 %v86, %v627
  %v629 = vpop.f32.mrb[0].mxu0
  %630 = vmatprep.mubr.f32.mxu0 0.0
  %631 = vmatmul.mubr.f32.gmra.mrb[0].mxu0 %v261
  %v632 = vpop.f32.mrb[0].mxu0
  %v633 = vadd.f32 %v86, %v632
  %v634 = vpop.f32.mrb[0].mxu0
  %635 = vmatprep.mubr.f32.mxu0 0.0
  %636 = vmatmul.mubr.f32.gmra.mrb[0].mxu0 %v264
  %v637 = vpop.f32.mrb[0].mxu0
  %v638 = vadd.f32 %v86, %v637
  %v639 = vpop.f32.mrb[0].mxu0
  %640 = vmatprep.mubr.f32.mxu0 0.0
  %641 = vmatmul.mubr.f32.gmra.mrb[0].mxu0 %v267
  %v642 = vpop.f32.mrb[0].mxu0
  %v643 = vadd.f32 %v86, %v642
  %v644 = vpop.f32.mrb[0].mxu0
  %645 = vmatprep.mubr.f32.mxu0 0.0
  %646 = vmatmul.mubr.f32.gmra.mrb[0].mxu0 %v270
  %v647 = vpop.f32.mrb[0].mxu0
  %v648 = vadd.f32 %v86, %v647
  %v649 = vpop.f32.mrb[0].mxu0
  %650 = vmatprep.mubr.f32.mxu0 0.0
  %651 = vmatmul.mubr.f32.gmra.mrb[0].mxu0 %v273
  %v652 = vpop.f32.mrb[0].mxu0
  %v653 = vadd.f32 %v86, %v652
  %v654 = vpop.f32.mrb[0].mxu0
  %655 = vmatprep.mubr.f32.mxu0 0.0
  %656 = vmatmul.mubr.f32.gmra.mrb[0].mxu0 %v276
  %v657 = vpop.f32.mrb[0].mxu0
  %v658 = vadd.f32 %v86, %v657
  %v659 = vpop.f32.mrb[0].mxu0
  %660 = vmatprep.mubr.f32.mxu0 0.0
  %661 = vmatmul.mubr.f32.gmra.mrb[0].mxu0 %v279
  %v662 = vpop.f32.mrb[0].mxu0
  %v663 = vadd.f32 %v86, %v662
  %v664 = vpop.f32.mrb[0].mxu0
  %665 = vdwg.mxu0
  %v666 = vlaneseq
  %v667 = vand.u32 %v666, 127
  %vm668 = vcmp.lt.s32.totalorder %v667, 8
  %v669 = vmax.f32 %v348, 0.0
  %v670 = vmax.f32 %v353, 0.0
  %v671 = vmax.f32 %v358, 0.0
  %v672 = vmax.f32 %v363, 0.0
  %v673 = vmax.f32 %v368, 0.0
  %v674 = vmax.f32 %v373, 0.0
  %v675 = vmax.f32 %v378, 0.0
  %v676 = vmax.f32 %v383, 0.0
  %v677 = vmax.f32 %v388, 0.0
  %v678 = vmax.f32 %v393, 0.0
  %v679 = vmax.f32 %v398, 0.0
  %v680 = vmax.f32 %v403, 0.0
  %v681 = vmax.f32 %v408, 0.0
  %v682 = vmax.f32 %v413, 0.0
  %v683 = vmax.f32 %v418, 0.0
  %v684 = vmax.f32 %v423, 0.0
  %v685 = vmax.f32 %v428, 0.0
  %v686 = vmax.f32 %v433, 0.0
  %v687 = vmax.f32 %v438, 0.0
  %v688 = vmax.f32 %v443, 0.0
  %v689 = vmax.f32 %v448, 0.0
  %v690 = vmax.f32 %v453, 0.0
  %v691 = vmax.f32 %v458, 0.0
  %v692 = vmax.f32 %v463, 0.0
  %v693 = vmax.f32 %v468, 0.0
  %v694 = vmax.f32 %v473, 0.0
  %v695 = vmax.f32 %v478, 0.0
  %v696 = vmax.f32 %v483, 0.0
  %v697 = vmax.f32 %v488, 0.0
  %v698 = vmax.f32 %v493, 0.0
  %v699 = vmax.f32 %v498, 0.0
  %v700 = vmax.f32 %v503, 0.0
  %v701 = vmax.f32 %v508, 0.0
  %v702 = vmax.f32 %v513, 0.0
  %v703 = vmax.f32 %v518, 0.0
  %v704 = vmax.f32 %v523, 0.0
  %v705 = vmax.f32 %v528, 0.0
  %v706 = vmax.f32 %v533, 0.0
  %v707 = vmax.f32 %v538, 0.0
  %v708 = vmax.f32 %v543, 0.0
  %v709 = vmax.f32 %v548, 0.0
  %v710 = vmax.f32 %v553, 0.0
  %v711 = vmax.f32 %v558, 0.0
  %v712 = vmax.f32 %v563, 0.0
  %v713 = vmax.f32 %v568, 0.0
  %v714 = vmax.f32 %v573, 0.0
  %v715 = vmax.f32 %v578, 0.0
  %v716 = vmax.f32 %v583, 0.0
  %v717 = vmax.f32 %v588, 0.0
  %v718 = vmax.f32 %v593, 0.0
  %v719 = vmax.f32 %v598, 0.0
  %v720 = vmax.f32 %v603, 0.0
  %v721 = vmax.f32 %v608, 0.0
  %v722 = vmax.f32 %v613, 0.0
  %v723 = vmax.f32 %v618, 0.0
  %v724 = vmax.f32 %v623, 0.0
  %v725 = vmax.f32 %v628, 0.0
  %v726 = vmax.f32 %v633, 0.0
  %v727 = vmax.f32 %v638, 0.0
  %v728 = vmax.f32 %v643, 0.0
  %v729 = vmax.f32 %v648, 0.0
  %v730 = vmax.f32 %v653, 0.0
  %v731 = vmax.f32 %v658, 0.0
  %v732 = vmax.f32 %v663, 0.0
  %v733 = vsel %vm668, %v669, %v348
  %v734 = vsel %vm668, %v670, %v353
  %v735 = vsel %vm668, %v671, %v358
  %v736 = vsel %vm668, %v672, %v363
  %v737 = vsel %vm668, %v673, %v368
  %v738 = vsel %vm668, %v674, %v373
  %v739 = vsel %vm668, %v675, %v378
  %v740 = vsel %vm668, %v676, %v383
  %v741 = vsel %vm668, %v677, %v388
  %v742 = vsel %vm668, %v678, %v393
  %v743 = vsel %vm668, %v679, %v398
  %v744 = vsel %vm668, %v680, %v403
  %v745 = vsel %vm668, %v681, %v408
  %v746 = vsel %vm668, %v682, %v413
  %v747 = vsel %vm668, %v683, %v418
  %v748 = vsel %vm668, %v684, %v423
  %v749 = vsel %vm668, %v685, %v428
  %v750 = vsel %vm668, %v686, %v433
  %v751 = vsel %vm668, %v687, %v438
  %v752 = vsel %vm668, %v688, %v443
  %v753 = vsel %vm668, %v689, %v448
  %v754 = vsel %vm668, %v690, %v453
  %v755 = vsel %vm668, %v691, %v458
  %v756 = vsel %vm668, %v692, %v463
  %v757 = vsel %vm668, %v693, %v468
  %v758 = vsel %vm668, %v694, %v473
  %v759 = vsel %vm668, %v695, %v478
  %v760 = vsel %vm668, %v696, %v483
  %v761 = vsel %vm668, %v697, %v488
  %v762 = vsel %vm668, %v698, %v493
  %v763 = vsel %vm668, %v699, %v498
  %v764 = vsel %vm668, %v700, %v503
  %v765 = vsel %vm668, %v701, %v508
  %v766 = vsel %vm668, %v702, %v513
  %v767 = vsel %vm668, %v703, %v518
  %v768 = vsel %vm668, %v704, %v523
  %v769 = vsel %vm668, %v705, %v528
  %v770 = vsel %vm668, %v706, %v533
  %v771 = vsel %vm668, %v707, %v538
  %v772 = vsel %vm668, %v708, %v543
  %v773 = vsel %vm668, %v709, %v548
  %v774 = vsel %vm668, %v710, %v553
  %v775 = vsel %vm668, %v711, %v558
  %v776 = vsel %vm668, %v712, %v563
  %v777 = vsel %vm668, %v713, %v568
  %v778 = vsel %vm668, %v714, %v573
  %v779 = vsel %vm668, %v715, %v578
  %v780 = vsel %vm668, %v716, %v583
  %v781 = vsel %vm668, %v717, %v588
  %v782 = vsel %vm668, %v718, %v593
  %v783 = vsel %vm668, %v719, %v598
  %v784 = vsel %vm668, %v720, %v603
  %v785 = vsel %vm668, %v721, %v608
  %v786 = vsel %vm668, %v722, %v613
  %v787 = vsel %vm668, %v723, %v618
  %v788 = vsel %vm668, %v724, %v623
  %v789 = vsel %vm668, %v725, %v628
  %v790 = vsel %vm668, %v726, %v633
  %v791 = vsel %vm668, %v727, %v638
  %v792 = vsel %vm668, %v728, %v643
  %v793 = vsel %vm668, %v729, %v648
  %v794 = vsel %vm668, %v730, %v653
  %v795 = vsel %vm668, %v731, %v658
  %v796 = vsel %vm668, %v732, %v663
  %vm797 = vcmask 130048
  %v798 = vsel %vm797, %v733, 0.0
  %v799 = vsel %vm797, %v734, 0.0
  %v800 = vadd.f32 %v798, %v799
  %v801 = vsel %vm797, %v735, 0.0
  %v802 = vadd.f32 %v800, %v801
  %v803 = vsel %vm797, %v736, 0.0
  %v804 = vadd.f32 %v802, %v803
  %v805 = vsel %vm797, %v737, 0.0
  %v806 = vadd.f32 %v804, %v805
  %v807 = vsel %vm797, %v738, 0.0
  %v808 = vadd.f32 %v806, %v807
  %v809 = vsel %vm797, %v739, 0.0
  %v810 = vadd.f32 %v808, %v809
  %v811 = vsel %vm797, %v740, 0.0
  %v812 = vadd.f32 %v810, %v811
  %v813 = vsel %vm797, %v741, 0.0
  %v814 = vadd.f32 %v812, %v813
  %v815 = vsel %vm797, %v742, 0.0
  %v816 = vadd.f32 %v814, %v815
  %v817 = vsel %vm797, %v743, 0.0
  %v818 = vadd.f32 %v816, %v817
  %v819 = vsel %vm797, %v744, 0.0
  %v820 = vadd.f32 %v818, %v819
  %v821 = vsel %vm797, %v745, 0.0
  %v822 = vadd.f32 %v820, %v821
  %v823 = vsel %vm797, %v746, 0.0
  %v824 = vadd.f32 %v822, %v823
  %v825 = vsel %vm797, %v747, 0.0
  %v826 = vadd.f32 %v824, %v825
  %v827 = vsel %vm797, %v748, 0.0
  %v828 = vadd.f32 %v826, %v827
  %v829 = vsel %vm797, %v749, 0.0
  %v830 = vadd.f32 %v828, %v829
  %v831 = vsel %vm797, %v750, 0.0
  %v832 = vadd.f32 %v830, %v831
  %v833 = vsel %vm797, %v751, 0.0
  %v834 = vadd.f32 %v832, %v833
  %v835 = vsel %vm797, %v752, 0.0
  %v836 = vadd.f32 %v834, %v835
  %v837 = vsel %vm797, %v753, 0.0
  %v838 = vadd.f32 %v836, %v837
  %v839 = vsel %vm797, %v754, 0.0
  %v840 = vadd.f32 %v838, %v839
  %v841 = vsel %vm797, %v755, 0.0
  %v842 = vadd.f32 %v840, %v841
  %v843 = vsel %vm797, %v756, 0.0
  %v844 = vadd.f32 %v842, %v843
  %v845 = vsel %vm797, %v757, 0.0
  %v846 = vadd.f32 %v844, %v845
  %v847 = vsel %vm797, %v758, 0.0
  %v848 = vadd.f32 %v846, %v847
  %v849 = vsel %vm797, %v759, 0.0
  %v850 = vadd.f32 %v848, %v849
  %v851 = vsel %vm797, %v760, 0.0
  %v852 = vadd.f32 %v850, %v851
  %v853 = vsel %vm797, %v761, 0.0
  %v854 = vadd.f32 %v852, %v853
  %v855 = vsel %vm797, %v762, 0.0
  %v856 = vadd.f32 %v854, %v855
  %v857 = vsel %vm797, %v763, 0.0
  %v858 = vadd.f32 %v856, %v857
  %v859 = vsel %vm797, %v764, 0.0
  %v860 = vadd.f32 %v858, %v859
  %v861 = vsel %vm797, %v765, 0.0
  %v862 = vadd.f32 %v860, %v861
  %v863 = vsel %vm797, %v766, 0.0
  %v864 = vadd.f32 %v862, %v863
  %v865 = vsel %vm797, %v767, 0.0
  %v866 = vadd.f32 %v864, %v865
  %v867 = vsel %vm797, %v768, 0.0
  %v868 = vadd.f32 %v866, %v867
  %v869 = vsel %vm797, %v769, 0.0
  %v870 = vadd.f32 %v868, %v869
  %v871 = vsel %vm797, %v770, 0.0
  %v872 = vadd.f32 %v870, %v871
  %v873 = vsel %vm797, %v771, 0.0
  %v874 = vadd.f32 %v872, %v873
  %v875 = vsel %vm797, %v772, 0.0
  %v876 = vadd.f32 %v874, %v875
  %v877 = vsel %vm797, %v773, 0.0
  %v878 = vadd.f32 %v876, %v877
  %v879 = vsel %vm797, %v774, 0.0
  %v880 = vadd.f32 %v878, %v879
  %v881 = vsel %vm797, %v775, 0.0
  %v882 = vadd.f32 %v880, %v881
  %v883 = vsel %vm797, %v776, 0.0
  %v884 = vadd.f32 %v882, %v883
  %v885 = vsel %vm797, %v777, 0.0
  %v886 = vadd.f32 %v884, %v885
  %v887 = vsel %vm797, %v778, 0.0
  %v888 = vadd.f32 %v886, %v887
  %v889 = vsel %vm797, %v779, 0.0
  %v890 = vadd.f32 %v888, %v889
  %v891 = vsel %vm797, %v780, 0.0
  %v892 = vadd.f32 %v890, %v891
  %v893 = vsel %vm797, %v781, 0.0
  %v894 = vadd.f32 %v892, %v893
  %v895 = vsel %vm797, %v782, 0.0
  %v896 = vadd.f32 %v894, %v895
  %v897 = vsel %vm797, %v783, 0.0
  %v898 = vadd.f32 %v896, %v897
  %v899 = vsel %vm797, %v784, 0.0
  %v900 = vadd.f32 %v898, %v899
  %v901 = vsel %vm797, %v785, 0.0
  %v902 = vadd.f32 %v900, %v901
  %v903 = vsel %vm797, %v786, 0.0
  %v904 = vadd.f32 %v902, %v903
  %v905 = vsel %vm797, %v787, 0.0
  %v906 = vadd.f32 %v904, %v905
  %v907 = vsel %vm797, %v788, 0.0
  %v908 = vadd.f32 %v906, %v907
  %v909 = vsel %vm797, %v789, 0.0
  %v910 = vadd.f32 %v908, %v909
  %v911 = vsel %vm797, %v790, 0.0
  %v912 = vadd.f32 %v910, %v911
  %v913 = vsel %vm797, %v791, 0.0
  %v914 = vadd.f32 %v912, %v913
  %v915 = vsel %vm797, %v792, 0.0
  %v916 = vadd.f32 %v914, %v915
  %v917 = vsel %vm797, %v793, 0.0
  %v918 = vadd.f32 %v916, %v917
  %v919 = vsel %vm797, %v794, 0.0
  %v920 = vadd.f32 %v918, %v919
  %v921 = vsel %vm797, %v795, 0.0
  %v922 = vadd.f32 %v920, %v921
  %v923 = vsel %vm797, %v796, 0.0
  %v924 = vadd.f32 %v922, %v923
  %v925 = vrot.slane %v924, 4
  %v926 = vadd.f32 %v924, %v925
  %v927 = vrot.slane %v926, 2
  %v928 = vadd.f32 %v926, %v927
  %v929 = vrot.slane %v928, 1
  %v930 = vadd.f32 %v928, %v929
  %v931 = vrcp.pop 512.0
  %v932 = vmul.f32 %v930, %v931
  %v933 = vsub.f32 %v733, %v932
  %v934 = vsub.f32 %v734, %v932
  %v935 = vsub.f32 %v735, %v932
  %v936 = vsub.f32 %v736, %v932
  %v937 = vsub.f32 %v737, %v932
  %v938 = vsub.f32 %v738, %v932
  %v939 = vsub.f32 %v739, %v932
  %v940 = vsub.f32 %v740, %v932
  %v941 = vsub.f32 %v741, %v932
  %v942 = vsub.f32 %v742, %v932
  %v943 = vsub.f32 %v743, %v932
  %v944 = vsub.f32 %v744, %v932
  %v945 = vsub.f32 %v745, %v932
  %v946 = vsub.f32 %v746, %v932
  %v947 = vsub.f32 %v747, %v932
  %v948 = vsub.f32 %v748, %v932
  %v949 = vsub.f32 %v749, %v932
  %v950 = vsub.f32 %v750, %v932
  %v951 = vsub.f32 %v751, %v932
  %v952 = vsub.f32 %v752, %v932
  %v953 = vsub.f32 %v753, %v932
  %v954 = vsub.f32 %v754, %v932
  %v955 = vsub.f32 %v755, %v932
  %v956 = vsub.f32 %v756, %v932
  %v957 = vsub.f32 %v757, %v932
  %v958 = vsub.f32 %v758, %v932
  %v959 = vsub.f32 %v759, %v932
  %v960 = vsub.f32 %v760, %v932
  %v961 = vsub.f32 %v761, %v932
  %v962 = vsub.f32 %v762, %v932
  %v963 = vsub.f32 %v763, %v932
  %v964 = vsub.f32 %v764, %v932
  %v965 = vsub.f32 %v765, %v932
  %v966 = vsub.f32 %v766, %v932
  %v967 = vsub.f32 %v767, %v932
  %v968 = vsub.f32 %v768, %v932
  %v969 = vsub.f32 %v769, %v932
  %v970 = vsub.f32 %v770, %v932
  %v971 = vsub.f32 %v771, %v932
  %v972 = vsub.f32 %v772, %v932
  %v973 = vsub.f32 %v773, %v932
  %v974 = vsub.f32 %v774, %v932
  %v975 = vsub.f32 %v775, %v932
  %v976 = vsub.f32 %v776, %v932
  %v977 = vsub.f32 %v777, %v932
  %v978 = vsub.f32 %v778, %v932
  %v979 = vsub.f32 %v779, %v932
  %v980 = vsub.f32 %v780, %v932
  %v981 = vsub.f32 %v781, %v932
  %v982 = vsub.f32 %v782, %v932
  %v983 = vsub.f32 %v783, %v932
  %v984 = vsub.f32 %v784, %v932
  %v985 = vsub.f32 %v785, %v932
  %v986 = vsub.f32 %v786, %v932
  %v987 = vsub.f32 %v787, %v932
  %v988 = vsub.f32 %v788, %v932
  %v989 = vsub.f32 %v789, %v932
  %v990 = vsub.f32 %v790, %v932
  %v991 = vsub.f32 %v791, %v932
  %v992 = vsub.f32 %v792, %v932
  %v993 = vsub.f32 %v793, %v932
  %v994 = vsub.f32 %v794, %v932
  %v995 = vsub.f32 %v795, %v932
  %v996 = vsub.f32 %v796, %v932
  %v997 = vmul.f32 %v933, %v933
  %v998 = vmul.f32 %v934, %v934
  %v999 = vmul.f32 %v935, %v935
  %v1000 = vmul.f32 %v936, %v936
  %v1001 = vmul.f32 %v937, %v937
  %v1002 = vmul.f32 %v938, %v938
  %v1003 = vmul.f32 %v939, %v939
  %v1004 = vmul.f32 %v940, %v940
  %v1005 = vmul.f32 %v941, %v941
  %v1006 = vmul.f32 %v942, %v942
  %v1007 = vmul.f32 %v943, %v943
  %v1008 = vmul.f32 %v944, %v944
  %v1009 = vmul.f32 %v945, %v945
  %v1010 = vmul.f32 %v946, %v946
  %v1011 = vmul.f32 %v947, %v947
  %v1012 = vmul.f32 %v948, %v948
  %v1013 = vmul.f32 %v949, %v949
  %v1014 = vmul.f32 %v950, %v950
  %v1015 = vmul.f32 %v951, %v951
  %v1016 = vmul.f32 %v952, %v952
  %v1017 = vmul.f32 %v953, %v953
  %v1018 = vmul.f32 %v954, %v954
  %v1019 = vmul.f32 %v955, %v955
  %v1020 = vmul.f32 %v956, %v956
  %v1021 = vmul.f32 %v957, %v957
  %v1022 = vmul.f32 %v958, %v958
  %v1023 = vmul.f32 %v959, %v959
  %v1024 = vmul.f32 %v960, %v960
  %v1025 = vmul.f32 %v961, %v961
  %v1026 = vmul.f32 %v962, %v962
  %v1027 = vmul.f32 %v963, %v963
  %v1028 = vmul.f32 %v964, %v964
  %v1029 = vmul.f32 %v965, %v965
  %v1030 = vmul.f32 %v966, %v966
  %v1031 = vmul.f32 %v967, %v967
  %v1032 = vmul.f32 %v968, %v968
  %v1033 = vmul.f32 %v969, %v969
  %v1034 = vmul.f32 %v970, %v970
  %v1035 = vmul.f32 %v971, %v971
  %v1036 = vmul.f32 %v972, %v972
  %v1037 = vmul.f32 %v973, %v973
  %v1038 = vmul.f32 %v974, %v974
  %v1039 = vmul.f32 %v975, %v975
  %v1040 = vmul.f32 %v976, %v976
  %v1041 = vmul.f32 %v977, %v977
  %v1042 = vmul.f32 %v978, %v978
  %v1043 = vmul.f32 %v979, %v979
  %v1044 = vmul.f32 %v980, %v980
  %v1045 = vmul.f32 %v981, %v981
  %v1046 = vmul.f32 %v982, %v982
  %v1047 = vmul.f32 %v983, %v983
  %v1048 = vmul.f32 %v984, %v984
  %v1049 = vmul.f32 %v985, %v985
  %v1050 = vmul.f32 %v986, %v986
  %v1051 = vmul.f32 %v987, %v987
  %v1052 = vmul.f32 %v988, %v988
  %v1053 = vmul.f32 %v989, %v989
  %v1054 = vmul.f32 %v990, %v990
  %v1055 = vmul.f32 %v991, %v991
  %v1056 = vmul.f32 %v992, %v992
  %v1057 = vmul.f32 %v993, %v993
  %v1058 = vmul.f32 %v994, %v994
  %v1059 = vmul.f32 %v995, %v995
  %v1060 = vmul.f32 %v996, %v996
  %v1061 = vsel %vm797, %v997, 0.0
  %v1062 = vsel %vm797, %v998, 0.0
  %v1063 = vadd.f32 %v1061, %v1062
  %v1064 = vsel %vm797, %v999, 0.0
  %v1065 = vadd.f32 %v1063, %v1064
  %v1066 = vsel %vm797, %v1000, 0.0
  %v1067 = vadd.f32 %v1065, %v1066
  %v1068 = vsel %vm797, %v1001, 0.0
  %v1069 = vadd.f32 %v1067, %v1068
  %v1070 = vsel %vm797, %v1002, 0.0
  %v1071 = vadd.f32 %v1069, %v1070
  %v1072 = vsel %vm797, %v1003, 0.0
  %v1073 = vadd.f32 %v1071, %v1072
  %v1074 = vsel %vm797, %v1004, 0.0
  %v1075 = vadd.f32 %v1073, %v1074
  %v1076 = vsel %vm797, %v1005, 0.0
  %v1077 = vadd.f32 %v1075, %v1076
  %v1078 = vsel %vm797, %v1006, 0.0
  %v1079 = vadd.f32 %v1077, %v1078
  %v1080 = vsel %vm797, %v1007, 0.0
  %v1081 = vadd.f32 %v1079, %v1080
  %v1082 = vsel %vm797, %v1008, 0.0
  %v1083 = vadd.f32 %v1081, %v1082
  %v1084 = vsel %vm797, %v1009, 0.0
  %v1085 = vadd.f32 %v1083, %v1084
  %v1086 = vsel %vm797, %v1010, 0.0
  %v1087 = vadd.f32 %v1085, %v1086
  %v1088 = vsel %vm797, %v1011, 0.0
  %v1089 = vadd.f32 %v1087, %v1088
  %v1090 = vsel %vm797, %v1012, 0.0
  %v1091 = vadd.f32 %v1089, %v1090
  %v1092 = vsel %vm797, %v1013, 0.0
  %v1093 = vadd.f32 %v1091, %v1092
  %v1094 = vsel %vm797, %v1014, 0.0
  %v1095 = vadd.f32 %v1093, %v1094
  %v1096 = vsel %vm797, %v1015, 0.0
  %v1097 = vadd.f32 %v1095, %v1096
  %v1098 = vsel %vm797, %v1016, 0.0
  %v1099 = vadd.f32 %v1097, %v1098
  %v1100 = vsel %vm797, %v1017, 0.0
  %v1101 = vadd.f32 %v1099, %v1100
  %v1102 = vsel %vm797, %v1018, 0.0
  %v1103 = vadd.f32 %v1101, %v1102
  %v1104 = vsel %vm797, %v1019, 0.0
  %v1105 = vadd.f32 %v1103, %v1104
  %v1106 = vsel %vm797, %v1020, 0.0
  %v1107 = vadd.f32 %v1105, %v1106
  %v1108 = vsel %vm797, %v1021, 0.0
  %v1109 = vadd.f32 %v1107, %v1108
  %v1110 = vsel %vm797, %v1022, 0.0
  %v1111 = vadd.f32 %v1109, %v1110
  %v1112 = vsel %vm797, %v1023, 0.0
  %v1113 = vadd.f32 %v1111, %v1112
  %v1114 = vsel %vm797, %v1024, 0.0
  %v1115 = vadd.f32 %v1113, %v1114
  %v1116 = vsel %vm797, %v1025, 0.0
  %v1117 = vadd.f32 %v1115, %v1116
  %v1118 = vsel %vm797, %v1026, 0.0
  %v1119 = vadd.f32 %v1117, %v1118
  %v1120 = vsel %vm797, %v1027, 0.0
  %v1121 = vadd.f32 %v1119, %v1120
  %v1122 = vsel %vm797, %v1028, 0.0
  %v1123 = vadd.f32 %v1121, %v1122
  %v1124 = vsel %vm797, %v1029, 0.0
  %v1125 = vadd.f32 %v1123, %v1124
  %v1126 = vsel %vm797, %v1030, 0.0
  %v1127 = vadd.f32 %v1125, %v1126
  %v1128 = vsel %vm797, %v1031, 0.0
  %v1129 = vadd.f32 %v1127, %v1128
  %v1130 = vsel %vm797, %v1032, 0.0
  %v1131 = vadd.f32 %v1129, %v1130
  %v1132 = vsel %vm797, %v1033, 0.0
  %v1133 = vadd.f32 %v1131, %v1132
  %v1134 = vsel %vm797, %v1034, 0.0
  %v1135 = vadd.f32 %v1133, %v1134
  %v1136 = vsel %vm797, %v1035, 0.0
  %v1137 = vadd.f32 %v1135, %v1136
  %v1138 = vsel %vm797, %v1036, 0.0
  %v1139 = vadd.f32 %v1137, %v1138
  %v1140 = vsel %vm797, %v1037, 0.0
  %v1141 = vadd.f32 %v1139, %v1140
  %v1142 = vsel %vm797, %v1038, 0.0
  %v1143 = vadd.f32 %v1141, %v1142
  %v1144 = vsel %vm797, %v1039, 0.0
  %v1145 = vadd.f32 %v1143, %v1144
  %v1146 = vsel %vm797, %v1040, 0.0
  %v1147 = vadd.f32 %v1145, %v1146
  %v1148 = vsel %vm797, %v1041, 0.0
  %v1149 = vadd.f32 %v1147, %v1148
  %v1150 = vsel %vm797, %v1042, 0.0
  %v1151 = vadd.f32 %v1149, %v1150
  %v1152 = vsel %vm797, %v1043, 0.0
  %v1153 = vadd.f32 %v1151, %v1152
  %v1154 = vsel %vm797, %v1044, 0.0
  %v1155 = vadd.f32 %v1153, %v1154
  %v1156 = vsel %vm797, %v1045, 0.0
  %v1157 = vadd.f32 %v1155, %v1156
  %v1158 = vsel %vm797, %v1046, 0.0
  %v1159 = vadd.f32 %v1157, %v1158
  %v1160 = vsel %vm797, %v1047, 0.0
  %v1161 = vadd.f32 %v1159, %v1160
  %v1162 = vsel %vm797, %v1048, 0.0
  %v1163 = vadd.f32 %v1161, %v1162
  %v1164 = vsel %vm797, %v1049, 0.0
  %v1165 = vadd.f32 %v1163, %v1164
  %v1166 = vsel %vm797, %v1050, 0.0
  %v1167 = vadd.f32 %v1165, %v1166
  %v1168 = vsel %vm797, %v1051, 0.0
  %v1169 = vadd.f32 %v1167, %v1168
  %v1170 = vsel %vm797, %v1052, 0.0
  %v1171 = vadd.f32 %v1169, %v1170
  %v1172 = vsel %vm797, %v1053, 0.0
  %v1173 = vadd.f32 %v1171, %v1172
  %v1174 = vsel %vm797, %v1054, 0.0
  %v1175 = vadd.f32 %v1173, %v1174
  %v1176 = vsel %vm797, %v1055, 0.0
  %v1177 = vadd.f32 %v1175, %v1176
  %v1178 = vsel %vm797, %v1056, 0.0
  %v1179 = vadd.f32 %v1177, %v1178
  %v1180 = vsel %vm797, %v1057, 0.0
  %v1181 = vadd.f32 %v1179, %v1180
  %v1182 = vsel %vm797, %v1058, 0.0
  %v1183 = vadd.f32 %v1181, %v1182
  %v1184 = vsel %vm797, %v1059, 0.0
  %v1185 = vadd.f32 %v1183, %v1184
  %v1186 = vsel %vm797, %v1060, 0.0
  %v1187 = vadd.f32 %v1185, %v1186
  %v1188 = vrot.slane %v1187, 4
  %v1189 = vadd.f32 %v1187, %v1188
  %v1190 = vrot.slane %v1189, 2
  %v1191 = vadd.f32 %v1189, %v1190
  %v1192 = vrot.slane %v1191, 1
  %v1193 = vadd.f32 %v1191, %v1192
  %v1194 = vmul.f32 %v1193, %v931
  %v1195 = vadd.f32 %v1194, 1e-05
  %v1196 = vrsqrt.pop %v1195
  %v1197 = vmul.f32 %v933, %v1196
  %v1198 = vmul.f32 %v934, %v1196
  %v1199 = vmul.f32 %v935, %v1196
  %v1200 = vmul.f32 %v936, %v1196
  %v1201 = vmul.f32 %v937, %v1196
  %v1202 = vmul.f32 %v938, %v1196
  %v1203 = vmul.f32 %v939, %v1196
  %v1204 = vmul.f32 %v940, %v1196
  %v1205 = vmul.f32 %v941, %v1196
  %v1206 = vmul.f32 %v942, %v1196
  %v1207 = vmul.f32 %v943, %v1196
  %v1208 = vmul.f32 %v944, %v1196
  %v1209 = vmul.f32 %v945, %v1196
  %v1210 = vmul.f32 %v946, %v1196
  %v1211 = vmul.f32 %v947, %v1196
  %v1212 = vmul.f32 %v948, %v1196
  %v1213 = vmul.f32 %v949, %v1196
  %v1214 = vmul.f32 %v950, %v1196
  %v1215 = vmul.f32 %v951, %v1196
  %v1216 = vmul.f32 %v952, %v1196
  %v1217 = vmul.f32 %v953, %v1196
  %v1218 = vmul.f32 %v954, %v1196
  %v1219 = vmul.f32 %v955, %v1196
  %v1220 = vmul.f32 %v956, %v1196
  %v1221 = vmul.f32 %v957, %v1196
  %v1222 = vmul.f32 %v958, %v1196
  %v1223 = vmul.f32 %v959, %v1196
  %v1224 = vmul.f32 %v960, %v1196
  %v1225 = vmul.f32 %v961, %v1196
  %v1226 = vmul.f32 %v962, %v1196
  %v1227 = vmul.f32 %v963, %v1196
  %v1228 = vmul.f32 %v964, %v1196
  %v1229 = vmul.f32 %v965, %v1196
  %v1230 = vmul.f32 %v966, %v1196
  %v1231 = vmul.f32 %v967, %v1196
  %v1232 = vmul.f32 %v968, %v1196
  %v1233 = vmul.f32 %v969, %v1196
  %v1234 = vmul.f32 %v970, %v1196
  %v1235 = vmul.f32 %v971, %v1196
  %v1236 = vmul.f32 %v972, %v1196
  %v1237 = vmul.f32 %v973, %v1196
  %v1238 = vmul.f32 %v974, %v1196
  %v1239 = vmul.f32 %v975, %v1196
  %v1240 = vmul.f32 %v976, %v1196
  %v1241 = vmul.f32 %v977, %v1196
  %v1242 = vmul.f32 %v978, %v1196
  %v1243 = vmul.f32 %v979, %v1196
  %v1244 = vmul.f32 %v980, %v1196
  %v1245 = vmul.f32 %v981, %v1196
  %v1246 = vmul.f32 %v982, %v1196
  %v1247 = vmul.f32 %v983, %v1196
  %v1248 = vmul.f32 %v984, %v1196
  %v1249 = vmul.f32 %v985, %v1196
  %v1250 = vmul.f32 %v986, %v1196
  %v1251 = vmul.f32 %v987, %v1196
  %v1252 = vmul.f32 %v988, %v1196
  %v1253 = vmul.f32 %v989, %v1196
  %v1254 = vmul.f32 %v990, %v1196
  %v1255 = vmul.f32 %v991, %v1196
  %v1256 = vmul.f32 %v992, %v1196
  %v1257 = vmul.f32 %v993, %v1196
  %v1258 = vmul.f32 %v994, %v1196
  %v1259 = vmul.f32 %v995, %v1196
  %v1260 = vmul.f32 %v996, %v1196
  %1261 = vst.msk [vmem:[%s3] sm:$0xff] %vm797, %v1197
  %1262 = vst.msk [vmem:[%s3 + $0x8] sm:$0xff] %vm797, %v1198
  %1263 = vst.msk [vmem:[%s3 + $0x10] sm:$0xff] %vm797, %v1199
  %1264 = vst.msk [vmem:[%s3 + $0x18] sm:$0xff] %vm797, %v1200
  %1265 = vst.msk [vmem:[%s3 + $0x20] sm:$0xff] %vm797, %v1201
  %1266 = vst.msk [vmem:[%s3 + $0x28] sm:$0xff] %vm797, %v1202
  %1267 = vst.msk [vmem:[%s3 + $0x30] sm:$0xff] %vm797, %v1203
  %1268 = vst.msk [vmem:[%s3 + $0x38] sm:$0xff] %vm797, %v1204
  %1269 = vst.msk [vmem:[%s3 + $0x40] sm:$0xff] %vm797, %v1205
  %1270 = vst.msk [vmem:[%s3 + $0x48] sm:$0xff] %vm797, %v1206
  %1271 = vst.msk [vmem:[%s3 + $0x50] sm:$0xff] %vm797, %v1207
  %1272 = vst.msk [vmem:[%s3 + $0x58] sm:$0xff] %vm797, %v1208
  %1273 = vst.msk [vmem:[%s3 + $0x60] sm:$0xff] %vm797, %v1209
  %1274 = vst.msk [vmem:[%s3 + $0x68] sm:$0xff] %vm797, %v1210
  %1275 = vst.msk [vmem:[%s3 + $0x70] sm:$0xff] %vm797, %v1211
  %1276 = vst.msk [vmem:[%s3 + $0x78] sm:$0xff] %vm797, %v1212
  %1277 = vst.msk [vmem:[%s3 + $0x80] sm:$0xff] %vm797, %v1213
  %1278 = vst.msk [vmem:[%s3 + $0x88] sm:$0xff] %vm797, %v1214
  %1279 = vst.msk [vmem:[%s3 + $0x90] sm:$0xff] %vm797, %v1215
  %1280 = vst.msk [vmem:[%s3 + $0x98] sm:$0xff] %vm797, %v1216
  %1281 = vst.msk [vmem:[%s3 + $0xa0] sm:$0xff] %vm797, %v1217
  %1282 = vst.msk [vmem:[%s3 + $0xa8] sm:$0xff] %vm797, %v1218
  %1283 = vst.msk [vmem:[%s3 + $0xb0] sm:$0xff] %vm797, %v1219
  %1284 = vst.msk [vmem:[%s3 + $0xb8] sm:$0xff] %vm797, %v1220
  %1285 = vst.msk [vmem:[%s3 + $0xc0] sm:$0xff] %vm797, %v1221
  %1286 = vst.msk [vmem:[%s3 + $0xc8] sm:$0xff] %vm797, %v1222
  %1287 = vst.msk [vmem:[%s3 + $0xd0] sm:$0xff] %vm797, %v1223
  %1288 = vst.msk [vmem:[%s3 + $0xd8] sm:$0xff] %vm797, %v1224
  %1289 = vst.msk [vmem:[%s3 + $0xe0] sm:$0xff] %vm797, %v1225
  %1290 = vst.msk [vmem:[%s3 + $0xe8] sm:$0xff] %vm797, %v1226
  %1291 = vst.msk [vmem:[%s3 + $0xf0] sm:$0xff] %vm797, %v1227
  %1292 = vst.msk [vmem:[%s3 + $0xf8] sm:$0xff] %vm797, %v1228
  %1293 = vst.msk [vmem:[%s3 + $0x100] sm:$0xff] %vm797, %v1229
  %1294 = vst.msk [vmem:[%s3 + $0x108] sm:$0xff] %vm797, %v1230
  %1295 = vst.msk [vmem:[%s3 + $0x110] sm:$0xff] %vm797, %v1231
  %1296 = vst.msk [vmem:[%s3 + $0x118] sm:$0xff] %vm797, %v1232
  %1297 = vst.msk [vmem:[%s3 + $0x120] sm:$0xff] %vm797, %v1233
  %1298 = vst.msk [vmem:[%s3 + $0x128] sm:$0xff] %vm797, %v1234
  %1299 = vst.msk [vmem:[%s3 + $0x130] sm:$0xff] %vm797, %v1235
  %1300 = vst.msk [vmem:[%s3 + $0x138] sm:$0xff] %vm797, %v1236
  %1301 = vst.msk [vmem:[%s3 + $0x140] sm:$0xff] %vm797, %v1237
  %1302 = vst.msk [vmem:[%s3 + $0x148] sm:$0xff] %vm797, %v1238
  %1303 = vst.msk [vmem:[%s3 + $0x150] sm:$0xff] %vm797, %v1239
  %1304 = vst.msk [vmem:[%s3 + $0x158] sm:$0xff] %vm797, %v1240
  %1305 = vst.msk [vmem:[%s3 + $0x160] sm:$0xff] %vm797, %v1241
  %1306 = vst.msk [vmem:[%s3 + $0x168] sm:$0xff] %vm797, %v1242
  %1307 = vst.msk [vmem:[%s3 + $0x170] sm:$0xff] %vm797, %v1243
  %1308 = vst.msk [vmem:[%s3 + $0x178] sm:$0xff] %vm797, %v1244
  %1309 = vst.msk [vmem:[%s3 + $0x180] sm:$0xff] %vm797, %v1245
  %1310 = vst.msk [vmem:[%s3 + $0x188] sm:$0xff] %vm797, %v1246
  %1311 = vst.msk [vmem:[%s3 + $0x190] sm:$0xff] %vm797, %v1247
  %1312 = vst.msk [vmem:[%s3 + $0x198] sm:$0xff] %vm797, %v1248
  %1313 = vst.msk [vmem:[%s3 + $0x1a0] sm:$0xff] %vm797, %v1249
  %1314 = vst.msk [vmem:[%s3 + $0x1a8] sm:$0xff] %vm797, %v1250
  %1315 = vst.msk [vmem:[%s3 + $0x1b0] sm:$0xff] %vm797, %v1251
  %1316 = vst.msk [vmem:[%s3 + $0x1b8] sm:$0xff] %vm797, %v1252
  %1317 = vst.msk [vmem:[%s3 + $0x1c0] sm:$0xff] %vm797, %v1253
  %1318 = vst.msk [vmem:[%s3 + $0x1c8] sm:$0xff] %vm797, %v1254
  %1319 = vst.msk [vmem:[%s3 + $0x1d0] sm:$0xff] %vm797, %v1255
  %1320 = vst.msk [vmem:[%s3 + $0x1d8] sm:$0xff] %vm797, %v1256
  %1321 = vst.msk [vmem:[%s3 + $0x1e0] sm:$0xff] %vm797, %v1257
  %1322 = vst.msk [vmem:[%s3 + $0x1e8] sm:$0xff] %vm797, %v1258
  %1323 = vst.msk [vmem:[%s3 + $0x1f0] sm:$0xff] %vm797, %v1259
  %1324 = vst.msk [vmem:[%s3 + $0x1f8] sm:$0xff] %vm797, %v1260
  // Predicated region
  $region14: #{wnet_forward.51} parent=0 // pred_check
    _
  $region15: #{wnet_forward.51} parent=0 // pred_check_branch
    %1326 = sbr.rel (0) target = $region17
  $region16: #{wnet_forward.51} parent=0 // pred_region
    _
  $region17: #{wnet_forward.51} parent=0 // pred_fallthru
    _
  // Predicated region
  $region18: #{wnet_forward.51} parent=0 // pred_check
    _
  $region19: #{wnet_forward.51} parent=0 // pred_check_branch
    %1328 = sbr.rel (0) target = $region21
  $region20: #{wnet_forward.51} parent=0 // pred_region
    _
  $region21: #{wnet_forward.51} parent=0 // pred_fallthru
    _

// kernel: wnet_forward.67
$region0: #{wnet_forward.67}
  #allocation0 [shape = 'u32[]', space=smem, size = 0x4, offset = 0x4, fixed_abs, tag = 'smem constant byte address 0x4 - core index']
  #allocation1 [shape = 'u32[144,128]{1,0:T(1,128)}', space=vmem, size = 0x12000, scoped, tag = 'internal scratch']
  #allocation2 [shape = 'f32[1,1]{1,0:T(1,128)S(1)}', space=vmem, size = 0x200, scoped, tag = 'scoped memory for wnet_forward.67']
  %s0 = inlined_call_operand.vmem [shape: f32[512,8], index: 0, kind: input, shape index: {}]
  %s1 = inlined_call_operand.vmem [shape: f32[8,1], index: 1, kind: input, shape index: {}]
  %s2 = inlined_call_operand.<no memory space> [shape: f32[1,1], index: 2, kind: input, shape index: {}]
  %s3 = inlined_call_operand.vmem [shape: f32[512,1], index: 3, kind: output, shape index: {}]
  %s4 = sld [smem:[#allocation0]]
  $region22: #{wnet_forward.67} parent=0
    _
  %s6 = ssub.s32 1, %s4
  %s7 = scalar_select 0, %s6, %s4
  %v8 = vstv %s2
  %9 = vst [vmem:[#allocation2] sm:$0x1] %v8
  // Predicated region
  $region2: #{wnet_forward.67} parent=0 // pred_check
    _
  $region3: #{wnet_forward.67} parent=0 // pred_check_branch
    %11 = sbr.rel (0) target = $region5
  $region4: #{wnet_forward.67} parent=0 // pred_region
    _
  $region5: #{wnet_forward.67} parent=0 // pred_fallthru
    _
  // Predicated region
  $region6: #{wnet_forward.67} parent=0 // pred_check
    _
  $region7: #{wnet_forward.67} parent=0 // pred_check_branch
    %13 = sbr.rel (0) target = $region9
  $region8: #{wnet_forward.67} parent=0 // pred_region
    _
  $region9: #{wnet_forward.67} parent=0 // pred_fallthru
    _
  // Predicated region
  $region10: #{wnet_forward.67} parent=0 // pred_check
    _
  $region11: #{wnet_forward.67} parent=0 // pred_check_branch
    %15 = sbr.rel (0) target = $region13
  $region12: #{wnet_forward.67} parent=0 // pred_region
    _
  $region13: #{wnet_forward.67} parent=0 // pred_fallthru
    _
  %v16 = vld [vmem:[%s0] sm:$0xff]
  %v17 = vld [vmem:[%s0 + $0x8] sm:$0xff]
  %v18 = vld [vmem:[%s0 + $0x10] sm:$0xff]
  %v19 = vld [vmem:[%s0 + $0x18] sm:$0xff]
  %v20 = vld [vmem:[%s0 + $0x20] sm:$0xff]
  %v21 = vld [vmem:[%s0 + $0x28] sm:$0xff]
  %v22 = vld [vmem:[%s0 + $0x30] sm:$0xff]
  %v23 = vld [vmem:[%s0 + $0x38] sm:$0xff]
  %v24 = vld [vmem:[%s0 + $0x40] sm:$0xff]
  %v25 = vld [vmem:[%s0 + $0x48] sm:$0xff]
  %v26 = vld [vmem:[%s0 + $0x50] sm:$0xff]
  %v27 = vld [vmem:[%s0 + $0x58] sm:$0xff]
  %v28 = vld [vmem:[%s0 + $0x60] sm:$0xff]
  %v29 = vld [vmem:[%s0 + $0x68] sm:$0xff]
  %v30 = vld [vmem:[%s0 + $0x70] sm:$0xff]
  %v31 = vld [vmem:[%s0 + $0x78] sm:$0xff]
  %v32 = vld [vmem:[%s0 + $0x80] sm:$0xff]
  %v33 = vld [vmem:[%s0 + $0x88] sm:$0xff]
  %v34 = vld [vmem:[%s0 + $0x90] sm:$0xff]
  %v35 = vld [vmem:[%s0 + $0x98] sm:$0xff]
  %v36 = vld [vmem:[%s0 + $0xa0] sm:$0xff]
  %v37 = vld [vmem:[%s0 + $0xa8] sm:$0xff]
  %v38 = vld [vmem:[%s0 + $0xb0] sm:$0xff]
  %v39 = vld [vmem:[%s0 + $0xb8] sm:$0xff]
  %v40 = vld [vmem:[%s0 + $0xc0] sm:$0xff]
  %v41 = vld [vmem:[%s0 + $0xc8] sm:$0xff]
  %v42 = vld [vmem:[%s0 + $0xd0] sm:$0xff]
  %v43 = vld [vmem:[%s0 + $0xd8] sm:$0xff]
  %v44 = vld [vmem:[%s0 + $0xe0] sm:$0xff]
  %v45 = vld [vmem:[%s0 + $0xe8] sm:$0xff]
  %v46 = vld [vmem:[%s0 + $0xf0] sm:$0xff]
  %v47 = vld [vmem:[%s0 + $0xf8] sm:$0xff]
  %v48 = vld [vmem:[%s0 + $0x100] sm:$0xff]
  %v49 = vld [vmem:[%s0 + $0x108] sm:$0xff]
  %v50 = vld [vmem:[%s0 + $0x110] sm:$0xff]
  %v51 = vld [vmem:[%s0 + $0x118] sm:$0xff]
  %v52 = vld [vmem:[%s0 + $0x120] sm:$0xff]
  %v53 = vld [vmem:[%s0 + $0x128] sm:$0xff]
  %v54 = vld [vmem:[%s0 + $0x130] sm:$0xff]
  %v55 = vld [vmem:[%s0 + $0x138] sm:$0xff]
  %v56 = vld [vmem:[%s0 + $0x140] sm:$0xff]
  %v57 = vld [vmem:[%s0 + $0x148] sm:$0xff]
  %v58 = vld [vmem:[%s0 + $0x150] sm:$0xff]
  %v59 = vld [vmem:[%s0 + $0x158] sm:$0xff]
  %v60 = vld [vmem:[%s0 + $0x160] sm:$0xff]
  %v61 = vld [vmem:[%s0 + $0x168] sm:$0xff]
  %v62 = vld [vmem:[%s0 + $0x170] sm:$0xff]
  %v63 = vld [vmem:[%s0 + $0x178] sm:$0xff]
  %v64 = vld [vmem:[%s0 + $0x180] sm:$0xff]
  %v65 = vld [vmem:[%s0 + $0x188] sm:$0xff]
  %v66 = vld [vmem:[%s0 + $0x190] sm:$0xff]
  %v67 = vld [vmem:[%s0 + $0x198] sm:$0xff]
  %v68 = vld [vmem:[%s0 + $0x1a0] sm:$0xff]
  %v69 = vld [vmem:[%s0 + $0x1a8] sm:$0xff]
  %v70 = vld [vmem:[%s0 + $0x1b0] sm:$0xff]
  %v71 = vld [vmem:[%s0 + $0x1b8] sm:$0xff]
  %v72 = vld [vmem:[%s0 + $0x1c0] sm:$0xff]
  %v73 = vld [vmem:[%s0 + $0x1c8] sm:$0xff]
  %v74 = vld [vmem:[%s0 + $0x1d0] sm:$0xff]
  %v75 = vld [vmem:[%s0 + $0x1d8] sm:$0xff]
  %v76 = vld [vmem:[%s0 + $0x1e0] sm:$0xff]
  %v77 = vld [vmem:[%s0 + $0x1e8] sm:$0xff]
  %v78 = vld [vmem:[%s0 + $0x1f0] sm:$0xff]
  %v79 = vld [vmem:[%s0 + $0x1f8] sm:$0xff]
  %v80 = vld [vmem:[%s1] sm:$0xff]
  %v81 = vld [vmem:[#allocation2] sm:$0x1]
  %v83 = vlaneseq
  %v84 = vshrl.u32 %v83, 7
  %v85 = vsub.s32 0, %v84
  %v86 = vrot.slane %v81, %v85
  %vm88 = vcmask 64512
  %v90 = vsel %vm88, %v16, 0
  %v93 = vsel %vm88, %v17, 0
  %v96 = vsel %vm88, %v18, 0
  %v99 = vsel %vm88, %v19, 0
  %v102 = vsel %vm88, %v20, 0
  %v105 = vsel %vm88, %v21, 0
  %v108 = vsel %vm88, %v22, 0
  %v111 = vsel %vm88, %v23, 0
  %v114 = vsel %vm88, %v24, 0
  %v117 = vsel %vm88, %v25, 0
  %v120 = vsel %vm88, %v26, 0
  %v123 = vsel %vm88, %v27, 0
  %v126 = vsel %vm88, %v28, 0
  %v129 = vsel %vm88, %v29, 0
  %v132 = vsel %vm88, %v30, 0
  %v135 = vsel %vm88, %v31, 0
  %v138 = vsel %vm88, %v32, 0
  %v141 = vsel %vm88, %v33, 0
  %v144 = vsel %vm88, %v34, 0
  %v147 = vsel %vm88, %v35, 0
  %v150 = vsel %vm88, %v36, 0
  %v153 = vsel %vm88, %v37, 0
  %v156 = vsel %vm88, %v38, 0
  %v159 = vsel %vm88, %v39, 0
  %v162 = vsel %vm88, %v40, 0
  %v165 = vsel %vm88, %v41, 0
  %v168 = vsel %vm88, %v42, 0
  %v171 = vsel %vm88, %v43, 0
  %v174 = vsel %vm88, %v44, 0
  %v177 = vsel %vm88, %v45, 0
  %v180 = vsel %vm88, %v46, 0
  %v183 = vsel %vm88, %v47, 0
  %v186 = vsel %vm88, %v48, 0
  %v189 = vsel %vm88, %v49, 0
  %v192 = vsel %vm88, %v50, 0
  %v195 = vsel %vm88, %v51, 0
  %v198 = vsel %vm88, %v52, 0
  %v201 = vsel %vm88, %v53, 0
  %v204 = vsel %vm88, %v54, 0
  %v207 = vsel %vm88, %v55, 0
  %v210 = vsel %vm88, %v56, 0
  %v213 = vsel %vm88, %v57, 0
  %v216 = vsel %vm88, %v58, 0
  %v219 = vsel %vm88, %v59, 0
  %v222 = vsel %vm88, %v60, 0
  %v225 = vsel %vm88, %v61, 0
  %v228 = vsel %vm88, %v62, 0
  %v231 = vsel %vm88, %v63, 0
  %v234 = vsel %vm88, %v64, 0
  %v237 = vsel %vm88, %v65, 0
  %v240 = vsel %vm88, %v66, 0
  %v243 = vsel %vm88, %v67, 0
  %v246 = vsel %vm88, %v68, 0
  %v249 = vsel %vm88, %v69, 0
  %v252 = vsel %vm88, %v70, 0
  %v255 = vsel %vm88, %v71, 0
  %v258 = vsel %vm88, %v72, 0
  %v261 = vsel %vm88, %v73, 0
  %v264 = vsel %vm88, %v74, 0
  %v267 = vsel %vm88, %v75, 0
  %v270 = vsel %vm88, %v76, 0
  %v273 = vsel %vm88, %v77, 0
  %v276 = vsel %vm88, %v78, 0
  %v279 = vsel %vm88, %v79, 0
  %281 = vmatprep.subr.mxu0 0.0
  %282 = vmatpush1.msra.mxu0 %v80
  %283 = vmatprep.subr.mxu0 0.0
  %284 = vmatpush1.msra.mxu0 0.0
  %285 = vmatprep.subr.mxu0 0.0
  %286 = vmatpush1.msra.mxu0 0.0
  %287 = vmatprep.subr.mxu0 0.0
  %288 = vmatpush1.msra.mxu0 0.0
  %289 = vmatprep.subr.mxu0 0.0
  %290 = vmatpush1.msra.mxu0 0.0
  %291 = vmatprep.subr.mxu0 0.0
  %292 = vmatpush1.msra.mxu0 0.0
  %293 = vmatprep.subr.mxu0 0.0
  %294 = vmatpush1.msra.mxu0 0.0
  %295 = vmatprep.subr.mxu0 0.0
  %296 = vmatpush1.msra.mxu0 0.0
  %297 = vmatprep.subr.mxu0 0.0
  %298 = vmatpush1.msra.mxu0 0.0
  %299 = vmatprep.subr.mxu0 0.0
  %300 = vmatpush1.msra.mxu0 0.0
  %301 = vmatprep.subr.mxu0 0.0
  %302 = vmatpush1.msra.mxu0 0.0
  %303 = vmatprep.subr.mxu0 0.0
  %304 = vmatpush1.msra.mxu0 0.0
  %305 = vmatprep.subr.mxu0 0.0
  %306 = vmatpush1.msra.mxu0 0.0
  %307 = vmatprep.subr.mxu0 0.0
  %308 = vmatpush1.msra.mxu0 0.0
  %309 = vmatprep.subr.mxu0 0.0
  %310 = vmatpush1.msra.mxu0 0.0
  %311 = vmatprep.subr.mxu0 0.0
  %312 = vmatpush1.msra.mxu0 0.0
  %313 = vmatprep.subr.mxu0 0.0
  %314 = vmatpush1.msra.mxu0 0.0
  %315 = vmatprep.subr.mxu0 0.0
  %316 = vmatpush1.msra.mxu0 0.0
  %317 = vmatprep.subr.mxu0 0.0
  %318 = vmatpush1.msra.mxu0 0.0
  %319 = vmatprep.subr.mxu0 0.0
  %320 = vmatpush1.msra.mxu0 0.0
  %321 = vmatprep.subr.mxu0 0.0
  %322 = vmatpush1.msra.mxu0 0.0
  %323 = vmatprep.subr.mxu0 0.0
  %324 = vmatpush1.msra.mxu0 0.0
  %325 = vmatprep.subr.mxu0 0.0
  %326 = vmatpush1.msra.mxu0 0.0
  %327 = vmatprep.subr.mxu0 0.0
  %328 = vmatpush1.msra.mxu0 0.0
  %329 = vmatprep.subr.mxu0 0.0
  %330 = vmatpush1.msra.mxu0 0.0
  %331 = vmatprep.subr.mxu0 0.0
  %332 = vmatpush1.msra.mxu0 0.0
  %333 = vmatprep.subr.mxu0 0.0
  %334 = vmatpush1.msra.mxu0 0.0
  %335 = vmatprep.subr.mxu0 0.0
  %336 = vmatpush1.msra.mxu0 0.0
  %337 = vmatprep.subr.mxu0 0.0
  %338 = vmatpush1.msra.mxu0 0.0
  %339 = vmatprep.subr.mxu0 0.0
  %340 = vmatpush1.msra.mxu0 0.0
  %341 = vmatprep.subr.mxu0 0.0
  %342 = vmatpush1.msra.mxu0 0.0
  %343 = vmatprep.subr.mxu0 0.0
  %344 = vmatpush1.msra.mxu0 0.0
  %345 = vmatprep.mubr.f32.mxu0 0.0
  %346 = vmatmul.mubr.f32.gmra.mrb[0].mxu0 %v90
  %v347 = vpop.f32.mrb[0].mxu0
  %v348 = vadd.f32 %v86, %v347
  %v349 = vpop.f32.mrb[0].mxu0
  %350 = vmatprep.mubr.f32.mxu0 0.0
  %351 = vmatmul.mubr.f32.gmra.mrb[0].mxu0 %v93
  %v352 = vpop.f32.mrb[0].mxu0
  %v353 = vadd.f32 %v86, %v352
  %v354 = vpop.f32.mrb[0].mxu0
  %355 = vmatprep.mubr.f32.mxu0 0.0
  %356 = vmatmul.mubr.f32.gmra.mrb[0].mxu0 %v96
  %v357 = vpop.f32.mrb[0].mxu0
  %v358 = vadd.f32 %v86, %v357
  %v359 = vpop.f32.mrb[0].mxu0
  %360 = vmatprep.mubr.f32.mxu0 0.0
  %361 = vmatmul.mubr.f32.gmra.mrb[0].mxu0 %v99
  %v362 = vpop.f32.mrb[0].mxu0
  %v363 = vadd.f32 %v86, %v362
  %v364 = vpop.f32.mrb[0].mxu0
  %365 = vmatprep.mubr.f32.mxu0 0.0
  %366 = vmatmul.mubr.f32.gmra.mrb[0].mxu0 %v102
  %v367 = vpop.f32.mrb[0].mxu0
  %v368 = vadd.f32 %v86, %v367
  %v369 = vpop.f32.mrb[0].mxu0
  %370 = vmatprep.mubr.f32.mxu0 0.0
  %371 = vmatmul.mubr.f32.gmra.mrb[0].mxu0 %v105
  %v372 = vpop.f32.mrb[0].mxu0
  %v373 = vadd.f32 %v86, %v372
  %v374 = vpop.f32.mrb[0].mxu0
  %375 = vmatprep.mubr.f32.mxu0 0.0
  %376 = vmatmul.mubr.f32.gmra.mrb[0].mxu0 %v108
  %v377 = vpop.f32.mrb[0].mxu0
  %v378 = vadd.f32 %v86, %v377
  %v379 = vpop.f32.mrb[0].mxu0
  %380 = vmatprep.mubr.f32.mxu0 0.0
  %381 = vmatmul.mubr.f32.gmra.mrb[0].mxu0 %v111
  %v382 = vpop.f32.mrb[0].mxu0
  %v383 = vadd.f32 %v86, %v382
  %v384 = vpop.f32.mrb[0].mxu0
  %385 = vmatprep.mubr.f32.mxu0 0.0
  %386 = vmatmul.mubr.f32.gmra.mrb[0].mxu0 %v114
  %v387 = vpop.f32.mrb[0].mxu0
  %v388 = vadd.f32 %v86, %v387
  %v389 = vpop.f32.mrb[0].mxu0
  %390 = vmatprep.mubr.f32.mxu0 0.0
  %391 = vmatmul.mubr.f32.gmra.mrb[0].mxu0 %v117
  %v392 = vpop.f32.mrb[0].mxu0
  %v393 = vadd.f32 %v86, %v392
  %v394 = vpop.f32.mrb[0].mxu0
  %395 = vmatprep.mubr.f32.mxu0 0.0
  %396 = vmatmul.mubr.f32.gmra.mrb[0].mxu0 %v120
  %v397 = vpop.f32.mrb[0].mxu0
  %v398 = vadd.f32 %v86, %v397
  %v399 = vpop.f32.mrb[0].mxu0
  %400 = vmatprep.mubr.f32.mxu0 0.0
  %401 = vmatmul.mubr.f32.gmra.mrb[0].mxu0 %v123
  %v402 = vpop.f32.mrb[0].mxu0
  %v403 = vadd.f32 %v86, %v402
  %v404 = vpop.f32.mrb[0].mxu0
  %405 = vmatprep.mubr.f32.mxu0 0.0
  %406 = vmatmul.mubr.f32.gmra.mrb[0].mxu0 %v126
  %v407 = vpop.f32.mrb[0].mxu0
  %v408 = vadd.f32 %v86, %v407
  %v409 = vpop.f32.mrb[0].mxu0
  %410 = vmatprep.mubr.f32.mxu0 0.0
  %411 = vmatmul.mubr.f32.gmra.mrb[0].mxu0 %v129
  %v412 = vpop.f32.mrb[0].mxu0
  %v413 = vadd.f32 %v86, %v412
  %v414 = vpop.f32.mrb[0].mxu0
  %415 = vmatprep.mubr.f32.mxu0 0.0
  %416 = vmatmul.mubr.f32.gmra.mrb[0].mxu0 %v132
  %v417 = vpop.f32.mrb[0].mxu0
  %v418 = vadd.f32 %v86, %v417
  %v419 = vpop.f32.mrb[0].mxu0
  %420 = vmatprep.mubr.f32.mxu0 0.0
  %421 = vmatmul.mubr.f32.gmra.mrb[0].mxu0 %v135
  %v422 = vpop.f32.mrb[0].mxu0
  %v423 = vadd.f32 %v86, %v422
  %v424 = vpop.f32.mrb[0].mxu0
  %425 = vmatprep.mubr.f32.mxu0 0.0
  %426 = vmatmul.mubr.f32.gmra.mrb[0].mxu0 %v138
  %v427 = vpop.f32.mrb[0].mxu0
  %v428 = vadd.f32 %v86, %v427
  %v429 = vpop.f32.mrb[0].mxu0
  %430 = vmatprep.mubr.f32.mxu0 0.0
  %431 = vmatmul.mubr.f32.gmra.mrb[0].mxu0 %v141
  %v432 = vpop.f32.mrb[0].mxu0
  %v433 = vadd.f32 %v86, %v432
  %v434 = vpop.f32.mrb[0].mxu0
  %435 = vmatprep.mubr.f32.mxu0 0.0
  %436 = vmatmul.mubr.f32.gmra.mrb[0].mxu0 %v144
  %v437 = vpop.f32.mrb[0].mxu0
  %v438 = vadd.f32 %v86, %v437
  %v439 = vpop.f32.mrb[0].mxu0
  %440 = vmatprep.mubr.f32.mxu0 0.0
  %441 = vmatmul.mubr.f32.gmra.mrb[0].mxu0 %v147
  %v442 = vpop.f32.mrb[0].mxu0
  %v443 = vadd.f32 %v86, %v442
  %v444 = vpop.f32.mrb[0].mxu0
  %445 = vmatprep.mubr.f32.mxu0 0.0
  %446 = vmatmul.mubr.f32.gmra.mrb[0].mxu0 %v150
  %v447 = vpop.f32.mrb[0].mxu0
  %v448 = vadd.f32 %v86, %v447
  %v449 = vpop.f32.mrb[0].mxu0
  %450 = vmatprep.mubr.f32.mxu0 0.0
  %451 = vmatmul.mubr.f32.gmra.mrb[0].mxu0 %v153
  %v452 = vpop.f32.mrb[0].mxu0
  %v453 = vadd.f32 %v86, %v452
  %v454 = vpop.f32.mrb[0].mxu0
  %455 = vmatprep.mubr.f32.mxu0 0.0
  %456 = vmatmul.mubr.f32.gmra.mrb[0].mxu0 %v156
  %v457 = vpop.f32.mrb[0].mxu0
  %v458 = vadd.f32 %v86, %v457
  %v459 = vpop.f32.mrb[0].mxu0
  %460 = vmatprep.mubr.f32.mxu0 0.0
  %461 = vmatmul.mubr.f32.gmra.mrb[0].mxu0 %v159
  %v462 = vpop.f32.mrb[0].mxu0
  %v463 = vadd.f32 %v86, %v462
  %v464 = vpop.f32.mrb[0].mxu0
  %465 = vmatprep.mubr.f32.mxu0 0.0
  %466 = vmatmul.mubr.f32.gmra.mrb[0].mxu0 %v162
  %v467 = vpop.f32.mrb[0].mxu0
  %v468 = vadd.f32 %v86, %v467
  %v469 = vpop.f32.mrb[0].mxu0
  %470 = vmatprep.mubr.f32.mxu0 0.0
  %471 = vmatmul.mubr.f32.gmra.mrb[0].mxu0 %v165
  %v472 = vpop.f32.mrb[0].mxu0
  %v473 = vadd.f32 %v86, %v472
  %v474 = vpop.f32.mrb[0].mxu0
  %475 = vmatprep.mubr.f32.mxu0 0.0
  %476 = vmatmul.mubr.f32.gmra.mrb[0].mxu0 %v168
  %v477 = vpop.f32.mrb[0].mxu0
  %v478 = vadd.f32 %v86, %v477
  %v479 = vpop.f32.mrb[0].mxu0
  %480 = vmatprep.mubr.f32.mxu0 0.0
  %481 = vmatmul.mubr.f32.gmra.mrb[0].mxu0 %v171
  %v482 = vpop.f32.mrb[0].mxu0
  %v483 = vadd.f32 %v86, %v482
  %v484 = vpop.f32.mrb[0].mxu0
  %485 = vmatprep.mubr.f32.mxu0 0.0
  %486 = vmatmul.mubr.f32.gmra.mrb[0].mxu0 %v174
  %v487 = vpop.f32.mrb[0].mxu0
  %v488 = vadd.f32 %v86, %v487
  %v489 = vpop.f32.mrb[0].mxu0
  %490 = vmatprep.mubr.f32.mxu0 0.0
  %491 = vmatmul.mubr.f32.gmra.mrb[0].mxu0 %v177
  %v492 = vpop.f32.mrb[0].mxu0
  %v493 = vadd.f32 %v86, %v492
  %v494 = vpop.f32.mrb[0].mxu0
  %495 = vmatprep.mubr.f32.mxu0 0.0
  %496 = vmatmul.mubr.f32.gmra.mrb[0].mxu0 %v180
  %v497 = vpop.f32.mrb[0].mxu0
  %v498 = vadd.f32 %v86, %v497
  %v499 = vpop.f32.mrb[0].mxu0
  %500 = vmatprep.mubr.f32.mxu0 0.0
  %501 = vmatmul.mubr.f32.gmra.mrb[0].mxu0 %v183
  %v502 = vpop.f32.mrb[0].mxu0
  %v503 = vadd.f32 %v86, %v502
  %v504 = vpop.f32.mrb[0].mxu0
  %505 = vmatprep.mubr.f32.mxu0 0.0
  %506 = vmatmul.mubr.f32.gmra.mrb[0].mxu0 %v186
  %v507 = vpop.f32.mrb[0].mxu0
  %v508 = vadd.f32 %v86, %v507
  %v509 = vpop.f32.mrb[0].mxu0
  %510 = vmatprep.mubr.f32.mxu0 0.0
  %511 = vmatmul.mubr.f32.gmra.mrb[0].mxu0 %v189
  %v512 = vpop.f32.mrb[0].mxu0
  %v513 = vadd.f32 %v86, %v512
  %v514 = vpop.f32.mrb[0].mxu0
  %515 = vmatprep.mubr.f32.mxu0 0.0
  %516 = vmatmul.mubr.f32.gmra.mrb[0].mxu0 %v192
  %v517 = vpop.f32.mrb[0].mxu0
  %v518 = vadd.f32 %v86, %v517
  %v519 = vpop.f32.mrb[0].mxu0
  %520 = vmatprep.mubr.f32.mxu0 0.0
  %521 = vmatmul.mubr.f32.gmra.mrb[0].mxu0 %v195
  %v522 = vpop.f32.mrb[0].mxu0
  %v523 = vadd.f32 %v86, %v522
  %v524 = vpop.f32.mrb[0].mxu0
  %525 = vmatprep.mubr.f32.mxu0 0.0
  %526 = vmatmul.mubr.f32.gmra.mrb[0].mxu0 %v198
  %v527 = vpop.f32.mrb[0].mxu0
  %v528 = vadd.f32 %v86, %v527
  %v529 = vpop.f32.mrb[0].mxu0
  %530 = vmatprep.mubr.f32.mxu0 0.0
  %531 = vmatmul.mubr.f32.gmra.mrb[0].mxu0 %v201
  %v532 = vpop.f32.mrb[0].mxu0
  %v533 = vadd.f32 %v86, %v532
  %v534 = vpop.f32.mrb[0].mxu0
  %535 = vmatprep.mubr.f32.mxu0 0.0
  %536 = vmatmul.mubr.f32.gmra.mrb[0].mxu0 %v204
  %v537 = vpop.f32.mrb[0].mxu0
  %v538 = vadd.f32 %v86, %v537
  %v539 = vpop.f32.mrb[0].mxu0
  %540 = vmatprep.mubr.f32.mxu0 0.0
  %541 = vmatmul.mubr.f32.gmra.mrb[0].mxu0 %v207
  %v542 = vpop.f32.mrb[0].mxu0
  %v543 = vadd.f32 %v86, %v542
  %v544 = vpop.f32.mrb[0].mxu0
  %545 = vmatprep.mubr.f32.mxu0 0.0
  %546 = vmatmul.mubr.f32.gmra.mrb[0].mxu0 %v210
  %v547 = vpop.f32.mrb[0].mxu0
  %v548 = vadd.f32 %v86, %v547
  %v549 = vpop.f32.mrb[0].mxu0
  %550 = vmatprep.mubr.f32.mxu0 0.0
  %551 = vmatmul.mubr.f32.gmra.mrb[0].mxu0 %v213
  %v552 = vpop.f32.mrb[0].mxu0
  %v553 = vadd.f32 %v86, %v552
  %v554 = vpop.f32.mrb[0].mxu0
  %555 = vmatprep.mubr.f32.mxu0 0.0
  %556 = vmatmul.mubr.f32.gmra.mrb[0].mxu0 %v216
  %v557 = vpop.f32.mrb[0].mxu0
  %v558 = vadd.f32 %v86, %v557
  %v559 = vpop.f32.mrb[0].mxu0
  %560 = vmatprep.mubr.f32.mxu0 0.0
  %561 = vmatmul.mubr.f32.gmra.mrb[0].mxu0 %v219
  %v562 = vpop.f32.mrb[0].mxu0
  %v563 = vadd.f32 %v86, %v562
  %v564 = vpop.f32.mrb[0].mxu0
  %565 = vmatprep.mubr.f32.mxu0 0.0
  %566 = vmatmul.mubr.f32.gmra.mrb[0].mxu0 %v222
  %v567 = vpop.f32.mrb[0].mxu0
  %v568 = vadd.f32 %v86, %v567
  %v569 = vpop.f32.mrb[0].mxu0
  %570 = vmatprep.mubr.f32.mxu0 0.0
  %571 = vmatmul.mubr.f32.gmra.mrb[0].mxu0 %v225
  %v572 = vpop.f32.mrb[0].mxu0
  %v573 = vadd.f32 %v86, %v572
  %v574 = vpop.f32.mrb[0].mxu0
  %575 = vmatprep.mubr.f32.mxu0 0.0
  %576 = vmatmul.mubr.f32.gmra.mrb[0].mxu0 %v228
  %v577 = vpop.f32.mrb[0].mxu0
  %v578 = vadd.f32 %v86, %v577
  %v579 = vpop.f32.mrb[0].mxu0
  %580 = vmatprep.mubr.f32.mxu0 0.0
  %581 = vmatmul.mubr.f32.gmra.mrb[0].mxu0 %v231
  %v582 = vpop.f32.mrb[0].mxu0
  %v583 = vadd.f32 %v86, %v582
  %v584 = vpop.f32.mrb[0].mxu0
  %585 = vmatprep.mubr.f32.mxu0 0.0
  %586 = vmatmul.mubr.f32.gmra.mrb[0].mxu0 %v234
  %v587 = vpop.f32.mrb[0].mxu0
  %v588 = vadd.f32 %v86, %v587
  %v589 = vpop.f32.mrb[0].mxu0
  %590 = vmatprep.mubr.f32.mxu0 0.0
  %591 = vmatmul.mubr.f32.gmra.mrb[0].mxu0 %v237
  %v592 = vpop.f32.mrb[0].mxu0
  %v593 = vadd.f32 %v86, %v592
  %v594 = vpop.f32.mrb[0].mxu0
  %595 = vmatprep.mubr.f32.mxu0 0.0
  %596 = vmatmul.mubr.f32.gmra.mrb[0].mxu0 %v240
  %v597 = vpop.f32.mrb[0].mxu0
  %v598 = vadd.f32 %v86, %v597
  %v599 = vpop.f32.mrb[0].mxu0
  %600 = vmatprep.mubr.f32.mxu0 0.0
  %601 = vmatmul.mubr.f32.gmra.mrb[0].mxu0 %v243
  %v602 = vpop.f32.mrb[0].mxu0
  %v603 = vadd.f32 %v86, %v602
  %v604 = vpop.f32.mrb[0].mxu0
  %605 = vmatprep.mubr.f32.mxu0 0.0
  %606 = vmatmul.mubr.f32.gmra.mrb[0].mxu0 %v246
  %v607 = vpop.f32.mrb[0].mxu0
  %v608 = vadd.f32 %v86, %v607
  %v609 = vpop.f32.mrb[0].mxu0
  %610 = vmatprep.mubr.f32.mxu0 0.0
  %611 = vmatmul.mubr.f32.gmra.mrb[0].mxu0 %v249
  %v612 = vpop.f32.mrb[0].mxu0
  %v613 = vadd.f32 %v86, %v612
  %v614 = vpop.f32.mrb[0].mxu0
  %615 = vmatprep.mubr.f32.mxu0 0.0
  %616 = vmatmul.mubr.f32.gmra.mrb[0].mxu0 %v252
  %v617 = vpop.f32.mrb[0].mxu0
  %v618 = vadd.f32 %v86, %v617
  %v619 = vpop.f32.mrb[0].mxu0
  %620 = vmatprep.mubr.f32.mxu0 0.0
  %621 = vmatmul.mubr.f32.gmra.mrb[0].mxu0 %v255
  %v622 = vpop.f32.mrb[0].mxu0
  %v623 = vadd.f32 %v86, %v622
  %v624 = vpop.f32.mrb[0].mxu0
  %625 = vmatprep.mubr.f32.mxu0 0.0
  %626 = vmatmul.mubr.f32.gmra.mrb[0].mxu0 %v258
  %v627 = vpop.f32.mrb[0].mxu0
  %v628 = vadd.f32 %v86, %v627
  %v629 = vpop.f32.mrb[0].mxu0
  %630 = vmatprep.mubr.f32.mxu0 0.0
  %631 = vmatmul.mubr.f32.gmra.mrb[0].mxu0 %v261
  %v632 = vpop.f32.mrb[0].mxu0
  %v633 = vadd.f32 %v86, %v632
  %v634 = vpop.f32.mrb[0].mxu0
  %635 = vmatprep.mubr.f32.mxu0 0.0
  %636 = vmatmul.mubr.f32.gmra.mrb[0].mxu0 %v264
  %v637 = vpop.f32.mrb[0].mxu0
  %v638 = vadd.f32 %v86, %v637
  %v639 = vpop.f32.mrb[0].mxu0
  %640 = vmatprep.mubr.f32.mxu0 0.0
  %641 = vmatmul.mubr.f32.gmra.mrb[0].mxu0 %v267
  %v642 = vpop.f32.mrb[0].mxu0
  %v643 = vadd.f32 %v86, %v642
  %v644 = vpop.f32.mrb[0].mxu0
  %645 = vmatprep.mubr.f32.mxu0 0.0
  %646 = vmatmul.mubr.f32.gmra.mrb[0].mxu0 %v270
  %v647 = vpop.f32.mrb[0].mxu0
  %v648 = vadd.f32 %v86, %v647
  %v649 = vpop.f32.mrb[0].mxu0
  %650 = vmatprep.mubr.f32.mxu0 0.0
  %651 = vmatmul.mubr.f32.gmra.mrb[0].mxu0 %v273
  %v652 = vpop.f32.mrb[0].mxu0
  %v653 = vadd.f32 %v86, %v652
  %v654 = vpop.f32.mrb[0].mxu0
  %655 = vmatprep.mubr.f32.mxu0 0.0
  %656 = vmatmul.mubr.f32.gmra.mrb[0].mxu0 %v276
  %v657 = vpop.f32.mrb[0].mxu0
  %v658 = vadd.f32 %v86, %v657
  %v659 = vpop.f32.mrb[0].mxu0
  %660 = vmatprep.mubr.f32.mxu0 0.0
  %661 = vmatmul.mubr.f32.gmra.mrb[0].mxu0 %v279
  %v662 = vpop.f32.mrb[0].mxu0
  %v663 = vadd.f32 %v86, %v662
  %v664 = vpop.f32.mrb[0].mxu0
  %665 = vdwg.mxu0
  %v666 = vxor.u32 %v348, 2147483648
  %v667 = vxor.u32 %v353, 2147483648
  %v668 = vxor.u32 %v358, 2147483648
  %v669 = vxor.u32 %v363, 2147483648
  %v670 = vxor.u32 %v368, 2147483648
  %v671 = vxor.u32 %v373, 2147483648
  %v672 = vxor.u32 %v378, 2147483648
  %v673 = vxor.u32 %v383, 2147483648
  %v674 = vxor.u32 %v388, 2147483648
  %v675 = vxor.u32 %v393, 2147483648
  %v676 = vxor.u32 %v398, 2147483648
  %v677 = vxor.u32 %v403, 2147483648
  %v678 = vxor.u32 %v408, 2147483648
  %v679 = vxor.u32 %v413, 2147483648
  %v680 = vxor.u32 %v418, 2147483648
  %v681 = vxor.u32 %v423, 2147483648
  %v682 = vxor.u32 %v428, 2147483648
  %v683 = vxor.u32 %v433, 2147483648
  %v684 = vxor.u32 %v438, 2147483648
  %v685 = vxor.u32 %v443, 2147483648
  %v686 = vxor.u32 %v448, 2147483648
  %v687 = vxor.u32 %v453, 2147483648
  %v688 = vxor.u32 %v458, 2147483648
  %v689 = vxor.u32 %v463, 2147483648
  %v690 = vxor.u32 %v468, 2147483648
  %v691 = vxor.u32 %v473, 2147483648
  %v692 = vxor.u32 %v478, 2147483648
  %v693 = vxor.u32 %v483, 2147483648
  %v694 = vxor.u32 %v488, 2147483648
  %v695 = vxor.u32 %v493, 2147483648
  %v696 = vxor.u32 %v498, 2147483648
  %v697 = vxor.u32 %v503, 2147483648
  %v698 = vxor.u32 %v508, 2147483648
  %v699 = vxor.u32 %v513, 2147483648
  %v700 = vxor.u32 %v518, 2147483648
  %v701 = vxor.u32 %v523, 2147483648
  %v702 = vxor.u32 %v528, 2147483648
  %v703 = vxor.u32 %v533, 2147483648
  %v704 = vxor.u32 %v538, 2147483648
  %v705 = vxor.u32 %v543, 2147483648
  %v706 = vxor.u32 %v548, 2147483648
  %v707 = vxor.u32 %v553, 2147483648
  %v708 = vxor.u32 %v558, 2147483648
  %v709 = vxor.u32 %v563, 2147483648
  %v710 = vxor.u32 %v568, 2147483648
  %v711 = vxor.u32 %v573, 2147483648
  %v712 = vxor.u32 %v578, 2147483648
  %v713 = vxor.u32 %v583, 2147483648
  %v714 = vxor.u32 %v588, 2147483648
  %v715 = vxor.u32 %v593, 2147483648
  %v716 = vxor.u32 %v598, 2147483648
  %v717 = vxor.u32 %v603, 2147483648
  %v718 = vxor.u32 %v608, 2147483648
  %v719 = vxor.u32 %v613, 2147483648
  %v720 = vxor.u32 %v618, 2147483648
  %v721 = vxor.u32 %v623, 2147483648
  %v722 = vxor.u32 %v628, 2147483648
  %v723 = vxor.u32 %v633, 2147483648
  %v724 = vxor.u32 %v638, 2147483648
  %v725 = vxor.u32 %v643, 2147483648
  %v726 = vxor.u32 %v648, 2147483648
  %v727 = vxor.u32 %v653, 2147483648
  %v728 = vxor.u32 %v658, 2147483648
  %v729 = vxor.u32 %v663, 2147483648
  %v730 = vmul.f32 %v666, 1.442695
  %v731 = vpow.pop %v730
  %v732 = vmul.f32 %v667, 1.442695
  %v733 = vpow.pop %v732
  %v734 = vmul.f32 %v668, 1.442695
  %v735 = vpow.pop %v734
  %v736 = vmul.f32 %v669, 1.442695
  %v737 = vpow.pop %v736
  %v738 = vmul.f32 %v670, 1.442695
  %v739 = vpow.pop %v738
  %v740 = vmul.f32 %v671, 1.442695
  %v741 = vpow.pop %v740
  %v742 = vmul.f32 %v672, 1.442695
  %v743 = vpow.pop %v742
  %v744 = vmul.f32 %v673, 1.442695
  %v745 = vpow.pop %v744
  %v746 = vmul.f32 %v674, 1.442695
  %v747 = vpow.pop %v746
  %v748 = vmul.f32 %v675, 1.442695
  %v749 = vpow.pop %v748
  %v750 = vmul.f32 %v676, 1.442695
  %v751 = vpow.pop %v750
  %v752 = vmul.f32 %v677, 1.442695
  %v753 = vpow.pop %v752
  %v754 = vmul.f32 %v678, 1.442695
  %v755 = vpow.pop %v754
  %v756 = vmul.f32 %v679, 1.442695
  %v757 = vpow.pop %v756
  %v758 = vmul.f32 %v680, 1.442695
  %v759 = vpow.pop %v758
  %v760 = vmul.f32 %v681, 1.442695
  %v761 = vpow.pop %v760
  %v762 = vmul.f32 %v682, 1.442695
  %v763 = vpow.pop %v762
  %v764 = vmul.f32 %v683, 1.442695
  %v765 = vpow.pop %v764
  %v766 = vmul.f32 %v684, 1.442695
  %v767 = vpow.pop %v766
  %v768 = vmul.f32 %v685, 1.442695
  %v769 = vpow.pop %v768
  %v770 = vmul.f32 %v686, 1.442695
  %v771 = vpow.pop %v770
  %v772 = vmul.f32 %v687, 1.442695
  %v773 = vpow.pop %v772
  %v774 = vmul.f32 %v688, 1.442695
  %v775 = vpow.pop %v774
  %v776 = vmul.f32 %v689, 1.442695
  %v777 = vpow.pop %v776
  %v778 = vmul.f32 %v690, 1.442695
  %v779 = vpow.pop %v778
  %v780 = vmul.f32 %v691, 1.442695
  %v781 = vpow.pop %v780
  %v782 = vmul.f32 %v692, 1.442695
  %v783 = vpow.pop %v782
  %v784 = vmul.f32 %v693, 1.442695
  %v785 = vpow.pop %v784
  %v786 = vmul.f32 %v694, 1.442695
  %v787 = vpow.pop %v786
  %v788 = vmul.f32 %v695, 1.442695
  %v789 = vpow.pop %v788
  %v790 = vmul.f32 %v696, 1.442695
  %v791 = vpow.pop %v790
  %v792 = vmul.f32 %v697, 1.442695
  %v793 = vpow.pop %v792
  %v794 = vmul.f32 %v698, 1.442695
  %v795 = vpow.pop %v794
  %v796 = vmul.f32 %v699, 1.442695
  %v797 = vpow.pop %v796
  %v798 = vmul.f32 %v700, 1.442695
  %v799 = vpow.pop %v798
  %v800 = vmul.f32 %v701, 1.442695
  %v801 = vpow.pop %v800
  %v802 = vmul.f32 %v702, 1.442695
  %v803 = vpow.pop %v802
  %v804 = vmul.f32 %v703, 1.442695
  %v805 = vpow.pop %v804
  %v806 = vmul.f32 %v704, 1.442695
  %v807 = vpow.pop %v806
  %v808 = vmul.f32 %v705, 1.442695
  %v809 = vpow.pop %v808
  %v810 = vmul.f32 %v706, 1.442695
  %v811 = vpow.pop %v810
  %v812 = vmul.f32 %v707, 1.442695
  %v813 = vpow.pop %v812
  %v814 = vmul.f32 %v708, 1.442695
  %v815 = vpow.pop %v814
  %v816 = vmul.f32 %v709, 1.442695
  %v817 = vpow.pop %v816
  %v818 = vmul.f32 %v710, 1.442695
  %v819 = vpow.pop %v818
  %v820 = vmul.f32 %v711, 1.442695
  %v821 = vpow.pop %v820
  %v822 = vmul.f32 %v712, 1.442695
  %v823 = vpow.pop %v822
  %v824 = vmul.f32 %v713, 1.442695
  %v825 = vpow.pop %v824
  %v826 = vmul.f32 %v714, 1.442695
  %v827 = vpow.pop %v826
  %v828 = vmul.f32 %v715, 1.442695
  %v829 = vpow.pop %v828
  %v830 = vmul.f32 %v716, 1.442695
  %v831 = vpow.pop %v830
  %v832 = vmul.f32 %v717, 1.442695
  %v833 = vpow.pop %v832
  %v834 = vmul.f32 %v718, 1.442695
  %v835 = vpow.pop %v834
  %v836 = vmul.f32 %v719, 1.442695
  %v837 = vpow.pop %v836
  %v838 = vmul.f32 %v720, 1.442695
  %v839 = vpow.pop %v838
  %v840 = vmul.f32 %v721, 1.442695
  %v841 = vpow.pop %v840
  %v842 = vmul.f32 %v722, 1.442695
  %v843 = vpow.pop %v842
  %v844 = vmul.f32 %v723, 1.442695
  %v845 = vpow.pop %v844
  %v846 = vmul.f32 %v724, 1.442695
  %v847 = vpow.pop %v846
  %v848 = vmul.f32 %v725, 1.442695
  %v849 = vpow.pop %v848
  %v850 = vmul.f32 %v726, 1.442695
  %v851 = vpow.pop %v850
  %v852 = vmul.f32 %v727, 1.442695
  %v853 = vpow.pop %v852
  %v854 = vmul.f32 %v728, 1.442695
  %v855 = vpow.pop %v854
  %v856 = vmul.f32 %v729, 1.442695
  %v857 = vpow.pop %v856
  %v858 = vadd.f32 %v731, 1.0
  %v859 = vadd.f32 %v733, 1.0
  %v860 = vadd.f32 %v735, 1.0
  %v861 = vadd.f32 %v737, 1.0
  %v862 = vadd.f32 %v739, 1.0
  %v863 = vadd.f32 %v741, 1.0
  %v864 = vadd.f32 %v743, 1.0
  %v865 = vadd.f32 %v745, 1.0
  %v866 = vadd.f32 %v747, 1.0
  %v867 = vadd.f32 %v749, 1.0
  %v868 = vadd.f32 %v751, 1.0
  %v869 = vadd.f32 %v753, 1.0
  %v870 = vadd.f32 %v755, 1.0
  %v871 = vadd.f32 %v757, 1.0
  %v872 = vadd.f32 %v759, 1.0
  %v873 = vadd.f32 %v761, 1.0
  %v874 = vadd.f32 %v763, 1.0
  %v875 = vadd.f32 %v765, 1.0
  %v876 = vadd.f32 %v767, 1.0
  %v877 = vadd.f32 %v769, 1.0
  %v878 = vadd.f32 %v771, 1.0
  %v879 = vadd.f32 %v773, 1.0
  %v880 = vadd.f32 %v775, 1.0
  %v881 = vadd.f32 %v777, 1.0
  %v882 = vadd.f32 %v779, 1.0
  %v883 = vadd.f32 %v781, 1.0
  %v884 = vadd.f32 %v783, 1.0
  %v885 = vadd.f32 %v785, 1.0
  %v886 = vadd.f32 %v787, 1.0
  %v887 = vadd.f32 %v789, 1.0
  %v888 = vadd.f32 %v791, 1.0
  %v889 = vadd.f32 %v793, 1.0
  %v890 = vadd.f32 %v795, 1.0
  %v891 = vadd.f32 %v797, 1.0
  %v892 = vadd.f32 %v799, 1.0
  %v893 = vadd.f32 %v801, 1.0
  %v894 = vadd.f32 %v803, 1.0
  %v895 = vadd.f32 %v805, 1.0
  %v896 = vadd.f32 %v807, 1.0
  %v897 = vadd.f32 %v809, 1.0
  %v898 = vadd.f32 %v811, 1.0
  %v899 = vadd.f32 %v813, 1.0
  %v900 = vadd.f32 %v815, 1.0
  %v901 = vadd.f32 %v817, 1.0
  %v902 = vadd.f32 %v819, 1.0
  %v903 = vadd.f32 %v821, 1.0
  %v904 = vadd.f32 %v823, 1.0
  %v905 = vadd.f32 %v825, 1.0
  %v906 = vadd.f32 %v827, 1.0
  %v907 = vadd.f32 %v829, 1.0
  %v908 = vadd.f32 %v831, 1.0
  %v909 = vadd.f32 %v833, 1.0
  %v910 = vadd.f32 %v835, 1.0
  %v911 = vadd.f32 %v837, 1.0
  %v912 = vadd.f32 %v839, 1.0
  %v913 = vadd.f32 %v841, 1.0
  %v914 = vadd.f32 %v843, 1.0
  %v915 = vadd.f32 %v845, 1.0
  %v916 = vadd.f32 %v847, 1.0
  %v917 = vadd.f32 %v849, 1.0
  %v918 = vadd.f32 %v851, 1.0
  %v919 = vadd.f32 %v853, 1.0
  %v920 = vadd.f32 %v855, 1.0
  %v921 = vadd.f32 %v857, 1.0
  %v922 = vrcp.pop %v858
  %v923 = vmul.f32 1.0, %v922
  %v924 = vrcp.pop %v859
  %v925 = vmul.f32 1.0, %v924
  %v926 = vrcp.pop %v860
  %v927 = vmul.f32 1.0, %v926
  %v928 = vrcp.pop %v861
  %v929 = vmul.f32 1.0, %v928
  %v930 = vrcp.pop %v862
  %v931 = vmul.f32 1.0, %v930
  %v932 = vrcp.pop %v863
  %v933 = vmul.f32 1.0, %v932
  %v934 = vrcp.pop %v864
  %v935 = vmul.f32 1.0, %v934
  %v936 = vrcp.pop %v865
  %v937 = vmul.f32 1.0, %v936
  %v938 = vrcp.pop %v866
  %v939 = vmul.f32 1.0, %v938
  %v940 = vrcp.pop %v867
  %v941 = vmul.f32 1.0, %v940
  %v942 = vrcp.pop %v868
  %v943 = vmul.f32 1.0, %v942
  %v944 = vrcp.pop %v869
  %v945 = vmul.f32 1.0, %v944
  %v946 = vrcp.pop %v870
  %v947 = vmul.f32 1.0, %v946
  %v948 = vrcp.pop %v871
  %v949 = vmul.f32 1.0, %v948
  %v950 = vrcp.pop %v872
  %v951 = vmul.f32 1.0, %v950
  %v952 = vrcp.pop %v873
  %v953 = vmul.f32 1.0, %v952
  %v954 = vrcp.pop %v874
  %v955 = vmul.f32 1.0, %v954
  %v956 = vrcp.pop %v875
  %v957 = vmul.f32 1.0, %v956
  %v958 = vrcp.pop %v876
  %v959 = vmul.f32 1.0, %v958
  %v960 = vrcp.pop %v877
  %v961 = vmul.f32 1.0, %v960
  %v962 = vrcp.pop %v878
  %v963 = vmul.f32 1.0, %v962
  %v964 = vrcp.pop %v879
  %v965 = vmul.f32 1.0, %v964
  %v966 = vrcp.pop %v880
  %v967 = vmul.f32 1.0, %v966
  %v968 = vrcp.pop %v881
  %v969 = vmul.f32 1.0, %v968
  %v970 = vrcp.pop %v882
  %v971 = vmul.f32 1.0, %v970
  %v972 = vrcp.pop %v883
  %v973 = vmul.f32 1.0, %v972
  %v974 = vrcp.pop %v884
  %v975 = vmul.f32 1.0, %v974
  %v976 = vrcp.pop %v885
  %v977 = vmul.f32 1.0, %v976
  %v978 = vrcp.pop %v886
  %v979 = vmul.f32 1.0, %v978
  %v980 = vrcp.pop %v887
  %v981 = vmul.f32 1.0, %v980
  %v982 = vrcp.pop %v888
  %v983 = vmul.f32 1.0, %v982
  %v984 = vrcp.pop %v889
  %v985 = vmul.f32 1.0, %v984
  %v986 = vrcp.pop %v890
  %v987 = vmul.f32 1.0, %v986
  %v988 = vrcp.pop %v891
  %v989 = vmul.f32 1.0, %v988
  %v990 = vrcp.pop %v892
  %v991 = vmul.f32 1.0, %v990
  %v992 = vrcp.pop %v893
  %v993 = vmul.f32 1.0, %v992
  %v994 = vrcp.pop %v894
  %v995 = vmul.f32 1.0, %v994
  %v996 = vrcp.pop %v895
  %v997 = vmul.f32 1.0, %v996
  %v998 = vrcp.pop %v896
  %v999 = vmul.f32 1.0, %v998
  %v1000 = vrcp.pop %v897
  %v1001 = vmul.f32 1.0, %v1000
  %v1002 = vrcp.pop %v898
  %v1003 = vmul.f32 1.0, %v1002
  %v1004 = vrcp.pop %v899
  %v1005 = vmul.f32 1.0, %v1004
  %v1006 = vrcp.pop %v900
  %v1007 = vmul.f32 1.0, %v1006
  %v1008 = vrcp.pop %v901
  %v1009 = vmul.f32 1.0, %v1008
  %v1010 = vrcp.pop %v902
  %v1011 = vmul.f32 1.0, %v1010
  %v1012 = vrcp.pop %v903
  %v1013 = vmul.f32 1.0, %v1012
  %v1014 = vrcp.pop %v904
  %v1015 = vmul.f32 1.0, %v1014
  %v1016 = vrcp.pop %v905
  %v1017 = vmul.f32 1.0, %v1016
  %v1018 = vrcp.pop %v906
  %v1019 = vmul.f32 1.0, %v1018
  %v1020 = vrcp.pop %v907
  %v1021 = vmul.f32 1.0, %v1020
  %v1022 = vrcp.pop %v908
  %v1023 = vmul.f32 1.0, %v1022
  %v1024 = vrcp.pop %v909
  %v1025 = vmul.f32 1.0, %v1024
  %v1026 = vrcp.pop %v910
  %v1027 = vmul.f32 1.0, %v1026
  %v1028 = vrcp.pop %v911
  %v1029 = vmul.f32 1.0, %v1028
  %v1030 = vrcp.pop %v912
  %v1031 = vmul.f32 1.0, %v1030
  %v1032 = vrcp.pop %v913
  %v1033 = vmul.f32 1.0, %v1032
  %v1034 = vrcp.pop %v914
  %v1035 = vmul.f32 1.0, %v1034
  %v1036 = vrcp.pop %v915
  %v1037 = vmul.f32 1.0, %v1036
  %v1038 = vrcp.pop %v916
  %v1039 = vmul.f32 1.0, %v1038
  %v1040 = vrcp.pop %v917
  %v1041 = vmul.f32 1.0, %v1040
  %v1042 = vrcp.pop %v918
  %v1043 = vmul.f32 1.0, %v1042
  %v1044 = vrcp.pop %v919
  %v1045 = vmul.f32 1.0, %v1044
  %v1046 = vrcp.pop %v920
  %v1047 = vmul.f32 1.0, %v1046
  %v1048 = vrcp.pop %v921
  %v1049 = vmul.f32 1.0, %v1048
  %vm1050 = vcmask 7168
  %1051 = vst.msk [vmem:[%s3] sm:$0xff] %vm1050, %v923
  %1052 = vst.msk [vmem:[%s3 + $0x8] sm:$0xff] %vm1050, %v925
  %1053 = vst.msk [vmem:[%s3 + $0x10] sm:$0xff] %vm1050, %v927
  %1054 = vst.msk [vmem:[%s3 + $0x18] sm:$0xff] %vm1050, %v929
  %1055 = vst.msk [vmem:[%s3 + $0x20] sm:$0xff] %vm1050, %v931
  %1056 = vst.msk [vmem:[%s3 + $0x28] sm:$0xff] %vm1050, %v933
  %1057 = vst.msk [vmem:[%s3 + $0x30] sm:$0xff] %vm1050, %v935
  %1058 = vst.msk [vmem:[%s3 + $0x38] sm:$0xff] %vm1050, %v937
  %1059 = vst.msk [vmem:[%s3 + $0x40] sm:$0xff] %vm1050, %v939
  %1060 = vst.msk [vmem:[%s3 + $0x48] sm:$0xff] %vm1050, %v941
  %1061 = vst.msk [vmem:[%s3 + $0x50] sm:$0xff] %vm1050, %v943
  %1062 = vst.msk [vmem:[%s3 + $0x58] sm:$0xff] %vm1050, %v945
  %1063 = vst.msk [vmem:[%s3 + $0x60] sm:$0xff] %vm1050, %v947
  %1064 = vst.msk [vmem:[%s3 + $0x68] sm:$0xff] %vm1050, %v949
  %1065 = vst.msk [vmem:[%s3 + $0x70] sm:$0xff] %vm1050, %v951
  %1066 = vst.msk [vmem:[%s3 + $0x78] sm:$0xff] %vm1050, %v953
  %1067 = vst.msk [vmem:[%s3 + $0x80] sm:$0xff] %vm1050, %v955
  %1068 = vst.msk [vmem:[%s3 + $0x88] sm:$0xff] %vm1050, %v957
  %1069 = vst.msk [vmem:[%s3 + $0x90] sm:$0xff] %vm1050, %v959
  %1070 = vst.msk [vmem:[%s3 + $0x98] sm:$0xff] %vm1050, %v961
  %1071 = vst.msk [vmem:[%s3 + $0xa0] sm:$0xff] %vm1050, %v963
  %1072 = vst.msk [vmem:[%s3 + $0xa8] sm:$0xff] %vm1050, %v965
  %1073 = vst.msk [vmem:[%s3 + $0xb0] sm:$0xff] %vm1050, %v967
  %1074 = vst.msk [vmem:[%s3 + $0xb8] sm:$0xff] %vm1050, %v969
  %1075 = vst.msk [vmem:[%s3 + $0xc0] sm:$0xff] %vm1050, %v971
  %1076 = vst.msk [vmem:[%s3 + $0xc8] sm:$0xff] %vm1050, %v973
  %1077 = vst.msk [vmem:[%s3 + $0xd0] sm:$0xff] %vm1050, %v975
  %1078 = vst.msk [vmem:[%s3 + $0xd8] sm:$0xff] %vm1050, %v977
  %1079 = vst.msk [vmem:[%s3 + $0xe0] sm:$0xff] %vm1050, %v979
  %1080 = vst.msk [vmem:[%s3 + $0xe8] sm:$0xff] %vm1050, %v981
  %1081 = vst.msk [vmem:[%s3 + $0xf0] sm:$0xff] %vm1050, %v983
  %1082 = vst.msk [vmem:[%s3 + $0xf8] sm:$0xff] %vm1050, %v985
  %1083 = vst.msk [vmem:[%s3 + $0x100] sm:$0xff] %vm1050, %v987
  %1084 = vst.msk [vmem:[%s3 + $0x108] sm:$0xff] %vm1050, %v989
  %1085 = vst.msk [vmem:[%s3 + $0x110] sm:$0xff] %vm1050, %v991
  %1086 = vst.msk [vmem:[%s3 + $0x118] sm:$0xff] %vm1050, %v993
  %1087 = vst.msk [vmem:[%s3 + $0x120] sm:$0xff] %vm1050, %v995
  %1088 = vst.msk [vmem:[%s3 + $0x128] sm:$0xff] %vm1050, %v997
  %1089 = vst.msk [vmem:[%s3 + $0x130] sm:$0xff] %vm1050, %v999
  %1090 = vst.msk [vmem:[%s3 + $0x138] sm:$0xff] %vm1050, %v1001
  %1091 = vst.msk [vmem:[%s3 + $0x140] sm:$0xff] %vm1050, %v1003
  %1092 = vst.msk [vmem:[%s3 + $0x148] sm:$0xff] %vm1050, %v1005
  %1093 = vst.msk [vmem:[%s3 + $0x150] sm:$0xff] %vm1050, %v1007
  %1094 = vst.msk [vmem:[%s3 + $0x158] sm:$0xff] %vm1050, %v1009
  %1095 = vst.msk [vmem:[%s3 + $0x160] sm:$0xff] %vm1050, %v1011
  %1096 = vst.msk [vmem:[%s3 + $0x168] sm:$0xff] %vm1050, %v1013
  %1097 = vst.msk [vmem:[%s3 + $0x170] sm:$0xff] %vm1050, %v1015
  %1098 = vst.msk [vmem:[%s3 + $0x178] sm:$0xff] %vm1050, %v1017
  %1099 = vst.msk [vmem:[%s3 + $0x180] sm:$0xff] %vm1050, %v1019
  %1100 = vst.msk [vmem:[%s3 + $0x188] sm:$0xff] %vm1050, %v1021
  %1101 = vst.msk [vmem:[%s3 + $0x190] sm:$0xff] %vm1050, %v1023
  %1102 = vst.msk [vmem:[%s3 + $0x198] sm:$0xff] %vm1050, %v1025
  %1103 = vst.msk [vmem:[%s3 + $0x1a0] sm:$0xff] %vm1050, %v1027
  %1104 = vst.msk [vmem:[%s3 + $0x1a8] sm:$0xff] %vm1050, %v1029
  %1105 = vst.msk [vmem:[%s3 + $0x1b0] sm:$0xff] %vm1050, %v1031
  %1106 = vst.msk [vmem:[%s3 + $0x1b8] sm:$0xff] %vm1050, %v1033
  %1107 = vst.msk [vmem:[%s3 + $0x1c0] sm:$0xff] %vm1050, %v1035
  %1108 = vst.msk [vmem:[%s3 + $0x1c8] sm:$0xff] %vm1050, %v1037
  %1109 = vst.msk [vmem:[%s3 + $0x1d0] sm:$0xff] %vm1050, %v1039
  %1110 = vst.msk [vmem:[%s3 + $0x1d8] sm:$0xff] %vm1050, %v1041
  %1111 = vst.msk [vmem:[%s3 + $0x1e0] sm:$0xff] %vm1050, %v1043
  %1112 = vst.msk [vmem:[%s3 + $0x1e8] sm:$0xff] %vm1050, %v1045
  %1113 = vst.msk [vmem:[%s3 + $0x1f0] sm:$0xff] %vm1050, %v1047
  %1114 = vst.msk [vmem:[%s3 + $0x1f8] sm:$0xff] %vm1050, %v1049
  // Predicated region
  $region14: #{wnet_forward.67} parent=0 // pred_check
    _
  $region15: #{wnet_forward.67} parent=0 // pred_check_branch
    %1116 = sbr.rel (0) target = $region17
  $region16: #{wnet_forward.67} parent=0 // pred_region
    _
  $region17: #{wnet_forward.67} parent=0 // pred_fallthru
    _
  // Predicated region
  $region18: #{wnet_forward.67} parent=0 // pred_check
    _
  $region19: #{wnet_forward.67} parent=0 // pred_check_branch
    %1118 = sbr.rel (0) target = $region21
  $region20: #{wnet_forward.67} parent=0 // pred_region
    _
  $region21: #{wnet_forward.67} parent=0 // pred_fallthru
    _

</llo_original>
